<compile_context>
chip_gen: v5e
topology: v5e:2x2
jax: 0.10.0
libtpu: 0.0.40
codegen_flags: <defaults>
</compile_context>

<pallas_src>
import functools

import jax
import jax.numpy as jnp
from jax.experimental import pallas as pl
from jax.experimental.pallas import tpu as pltpu

BN_EPS = 1e-5
LANE = 128            # channel dims are zero-padded to the TPU lane width
ROW_TILE = 512        # conv output rows (spatial positions) per grid step
HALO_BLK = 128        # rows per halo block (must cover Wp+1; ROW_TILE % HALO_BLK == 0)
VMEM_LIMIT = 48 * 1024 * 1024


def _round_up(x, m):
    return (x + m - 1) // m * m


# ----------------------------- Pallas kernels ------------------------------

def _maxpool_pad_kernel(x_ref, o_ref, *, cin, cin_p):
    # x_ref: (1, th, 2, Wo, 2*cin) f32  -- row-pair split, col-pair packed in lanes
    # o_ref: (1, th, Wo, cin_p)    bf16 -- channels zero-padded to the lane width
    v = x_ref[0]
    m = jnp.maximum(v[:, 0], v[:, 1])              # vertical taps   -> (th, Wo, 2*cin)
    m = jnp.maximum(m[..., :cin], m[..., cin:])    # horizontal taps -> (th, Wo, cin)
    if cin_p > cin:
        m = jnp.concatenate(
            [m, jnp.zeros(m.shape[:-1] + (cin_p - cin,), m.dtype)], axis=-1)
    o_ref[0] = m.astype(o_ref.dtype)


def _conv_stats_kernel(xm_ref, xt_ref, xb_ref, w_ref, mask_ref,
                       y_ref, part_ref, xw_ref, *, wp, cin_p, halo, tile_m):
    # xm_ref:   (tile_m, cin_p)          bf16  main row tile
    # xt_ref:   (halo, cin_p)            bf16  top halo rows
    # xb_ref:   (halo, cin_p)            bf16  bottom halo rows
    # w_ref:    (9*cin_p, cout_p)        bf16  packed 3x3 weights
    # mask_ref: (tile_m, 1)              f32   1.0 on valid (interior) output rows
    # y_ref:    (tile_m, cout_p)         bf16  raw conv output (pre-BN)
    # part_ref: (8, cout_p)              f32   row0 = sum, row1 = sumsq (BN partials)
    # xw_ref:   (tile_m + 2*halo, cin_p) bf16  scratch window [top | main | bottom]
    cout_p = y_ref.shape[-1]

    xw_ref[0:halo, :] = xt_ref[...]
    xw_ref[halo:halo + tile_m, :] = xm_ref[...]
    xw_ref[halo + tile_m:, :] = xb_ref[...]

    acc = jnp.zeros((tile_m, cout_p), jnp.float32)
    for k in range(9):                       # 3x3 taps -> 9 shifted MXU matmuls
        dy, dx = k // 3, k % 3
        off = (dy - 1) * wp + (dx - 1)       # static row shift in the flat layout
        xs = xw_ref[halo + off:halo + off + tile_m, :]
        wk = w_ref[k * cin_p:(k + 1) * cin_p, :]
        acc += jnp.dot(xs, wk, preferred_element_type=jnp.float32)
    y_ref[...] = acc.astype(y_ref.dtype)

    # Per-tile BatchNorm partials over valid rows only (select, so garbage in
    # guard / border rows cannot poison the statistics).
    valid = mask_ref[...] > 0.5
    ym = jnp.where(valid, acc, 0.0)
    s0 = jnp.sum(ym, axis=0, keepdims=True)
    s1 = jnp.sum(ym * ym, axis=0, keepdims=True)
    part_ref[...] = jnp.concatenate(
        [s0, s1, jnp.zeros((6, cout_p), jnp.float32)], axis=0)


def _bn_relu_kernel(y_ref, scale_ref, shift_ref, mask_ref, o_ref):
    # Folded BatchNorm (single FMA) + ReLU; invalid rows (conv border, tile
    # rounding, lead/tail guards) are forced to zero so the output is a valid
    # zero-bordered flat input for the next conv.
    y = y_ref[...].astype(jnp.float32)
    out = jnp.maximum(y * scale_ref[...] + shift_ref[...], 0.0)
    out = jnp.where(mask_ref[...] > 0.5, out, 0.0)
    o_ref[...] = out.astype(o_ref.dtype)


# ------------------------------- wrappers -----------------------------------

def maxpool_pad_to_bf16(x_nhwc, cin_p):
    """(N,H,W,C) f32 -> (N, H//2, W//2, cin_p) bf16; 2x2 max pool fused with the
    channel pad to the 128-lane width (reads only the original C channels)."""
    N, H, W, C = x_nhwc.shape
    Ho, Wo = H // 2, W // 2
    # Free reshape: split H into (Ho, 2), pack the horizontal pixel pair into lanes.
    x5 = x_nhwc.reshape(N, Ho, 2, Wo, 2 * C)
    th = max(d for d in range(1, min(Ho, 64) + 1) if Ho % d == 0)   # row tile
    kern = functools.partial(_maxpool_pad_kernel, cin=C, cin_p=cin_p)
    return pl.pallas_call(
        kern,
        out_shape=jax.ShapeDtypeStruct((N, Ho, Wo, cin_p), jnp.bfloat16),
        grid=(N, Ho // th),
        in_specs=[pl.BlockSpec((1, th, 2, Wo, 2 * C),
                               lambda n, r: (n, r, 0, 0, 0))],
        out_specs=pl.BlockSpec((1, th, Wo, cin_p), lambda n, r: (n, r, 0, 0)),
        compiler_params=pltpu.CompilerParams(
            dimension_semantics=("parallel", "parallel"),
            vmem_limit_bytes=VMEM_LIMIT),
    )(x5)


def _geometry(N, Ho, Wo):
    Hp, Wp = Ho + 2, Wo + 2
    assert ROW_TILE % HALO_BLK == 0
    assert Wp + 1 <= HALO_BLK, "3x3 halo must fit in one halo block (Wo <= 125)"
    Mp = N * Hp * Wp                           # rows of the padded spatial grid
    T = -(-Mp // ROW_TILE)                     # conv grid size (row tiles)
    Mp_pad = T * ROW_TILE
    lead = ROW_TILE                            # zero guard rows before the data
    M_in = lead + Mp_pad + ROW_TILE            # + tail guard (covers the last halo)
    bn_tile = 1024 if M_in % 1024 == 0 else 512
    return dict(N=N, Ho=Ho, Wo=Wo, Hp=Hp, Wp=Wp, Mp=Mp, Mp_pad=Mp_pad,
                lead=lead, M_in=M_in, T=T, bn_tile=bn_tile,
                count=float(N * Ho * Wo))


def _valid_row_mask(g):
    s = jnp.arange(g["M_in"], dtype=jnp.int32)
    d = s - g["lead"]
    r = jnp.where(d >= 0, d, 0) % (g["Hp"] * g["Wp"])
    y = r // g["Wp"]
    x = r % g["Wp"]
    valid = ((d >= 0) & (d < g["Mp"]) &
             (y >= 1) & (y <= g["Ho"]) & (x >= 1) & (x <= g["Wo"]))
    return valid.astype(jnp.float32).reshape(g["M_in"], 1)


def _to_padded_flat(pooled, g):
    # (N, Ho, Wo, Cp) -> (M_in, Cp): zero conv border + zero lead/tail guard rows.
    # TODO(synk): this border/guard pad is one bf16-level XLA copy; it could be
    # folded into the maxpool out_specs with element-offset output indexing.
    xp = jnp.pad(pooled, ((0, 0), (1, 1), (1, 1), (0, 0)))
    flat = xp.reshape(g["Mp"], pooled.shape[-1])
    return jnp.pad(flat, ((g["lead"], g["M_in"] - g["lead"] - g["Mp"]), (0, 0)))


def _from_padded_flat(flat, g, cout):
    wide = flat[g["lead"]:g["lead"] + g["Mp"]].reshape(g["N"], g["Hp"], g["Wp"], -1)
    return wide[:, 1:1 + g["Ho"], 1:1 + g["Wo"], :cout]


def conv3x3_bn_relu(x_flat, w_mat, gamma_p, beta_p, mask, g, out_dtype):
    """Conv2d(3x3, pad=1, no bias) + BatchNorm2d(train) + ReLU on the flat layout."""
    cin_p = x_flat.shape[-1]
    cout_p = w_mat.shape[-1]
    T, tile, halo = g["T"], ROW_TILE, HALO_BLK
    R = tile // halo

    kern = functools.partial(_conv_stats_kernel, wp=g["Wp"], cin_p=cin_p,
                             halo=halo, tile_m=tile)
    y, part = pl.pallas_call(
        kern,
        out_shape=(jax.ShapeDtypeStruct((g["M_in"], cout_p), jnp.bfloat16),
                   jax.ShapeDtypeStruct((8 * T, cout_p), jnp.float32)),
        grid=(T,),
        in_specs=[pl.BlockSpec((tile, cin_p), lambda t: (t + 1, 0)),       # main rows
                  pl.BlockSpec((halo, cin_p), lambda t: (R * (t + 1) - 1, 0)),  # top halo
                  pl.BlockSpec((halo, cin_p), lambda t: (R * (t + 2), 0)),      # bottom halo
                  pl.BlockSpec((9 * cin_p, cout_p), lambda t: (0, 0)),
                  pl.BlockSpec((tile, 1), lambda t: (t + 1, 0))],
        out_specs=(pl.BlockSpec((tile, cout_p), lambda t: (t + 1, 0)),
                   pl.BlockSpec((8, cout_p), lambda t: (t, 0))),
        scratch_shapes=[pltpu.VMEM((tile + 2 * halo, cin_p), jnp.bfloat16)],
        compiler_params=pltpu.CompilerParams(
            dimension_semantics=("parallel",),
            vmem_limit_bytes=VMEM_LIMIT),
    )(x_flat, x_flat, x_flat, w_mat, mask)

    # Global batch statistics + folded scale/shift (tiny per-channel glue).
    # TODO(synk): single-pass E[y^2]-E[y]^2 variance; switch to mean-shifted
    # partials if tighter agreement with PyTorch's two-pass variance is needed.
    tot = jnp.sum(part.reshape(T, 8, cout_p), axis=0)
    mean = tot[0] / g["count"]
    var = jnp.maximum(tot[1] / g["count"] - mean * mean, 0.0)
    scale = gamma_p * jax.lax.rsqrt(var + BN_EPS)
    shift = beta_p - mean * scale

    bn_tile = g["bn_tile"]
    return pl.pallas_call(
        _bn_relu_kernel,
        out_shape=jax.ShapeDtypeStruct((g["M_in"], cout_p), out_dtype),
        grid=(g["M_in"] // bn_tile,),
        in_specs=[pl.BlockSpec((bn_tile, cout_p), lambda b: (b, 0)),
                  pl.BlockSpec((1, cout_p), lambda b: (0, 0)),
                  pl.BlockSpec((1, cout_p), lambda b: (0, 0)),
                  pl.BlockSpec((bn_tile, 1), lambda b: (b, 0))],
        out_specs=pl.BlockSpec((bn_tile, cout_p), lambda b: (b, 0)),
        compiler_params=pltpu.CompilerParams(
            dimension_semantics=("parallel",),
            vmem_limit_bytes=VMEM_LIMIT),
    )(y, scale.reshape(1, cout_p), shift.reshape(1, cout_p), mask)


# ------------------------------ Down module ---------------------------------

def init_down_params(key, in_channels, out_channels, mid_channels=None):
    if mid_channels is None:
        mid_channels = out_channels
    k1, k2 = jax.random.split(key)
    # Conv weights stored HWIO; PyTorch default BN affine: gamma=1, beta=0.
    w1 = 0.1 * jax.random.normal(k1, (3, 3, in_channels, mid_channels), jnp.float32)
    w2 = 0.1 * jax.random.normal(k2, (3, 3, mid_channels, out_channels), jnp.float32)
    return dict(
        w1=w1, gamma1=jnp.ones((mid_channels,), jnp.float32),
        beta1=jnp.zeros((mid_channels,), jnp.float32),
        w2=w2, gamma2=jnp.ones((out_channels,), jnp.float32),
        beta2=jnp.zeros((out_channels,), jnp.float32),
    )


def _pack_weight(w_hwio):
    """(3,3,Cin,Cout) f32 -> (9*Cin_p, Cout_p) bf16, channels padded to lane width."""
    _, _, cin, cout = w_hwio.shape
    cin_p, cout_p = _round_up(cin, LANE), _round_up(cout, LANE)
    w = jnp.pad(w_hwio, ((0, 0), (0, 0), (0, cin_p - cin), (0, cout_p - cout)))
    return w.reshape(9 * cin_p, cout_p).astype(jnp.bfloat16)


def _pad_channels_vec(v, fill):
    c = v.shape[0]
    return jnp.pad(v, (0, _round_up(c, LANE) - c), constant_values=fill)


@jax.jit
def down_forward(params, x_nchw):
    """Down.forward: MaxPool2d(2) then DoubleConv.  Input/output NCHW float32."""
    N, cin, H, W = x_nchw.shape
    Ho, Wo = H // 2, W // 2
    cout = params["gamma2"].shape[0]
    cin_p = _round_up(cin, LANE)
    g = _geometry(N, Ho, Wo)

    x = jnp.transpose(x_nchw, (0, 2, 3, 1))            # NCHW -> NHWC (original C)
    pooled = maxpool_pad_to_bf16(x, cin_p)             # (N, Ho, Wo, cin_p) bf16
    x_flat = _to_padded_flat(pooled, g)                # (M_in, cin_p) bf16
    mask = _valid_row_mask(g)                          # (M_in, 1) f32

    w1 = _pack_weight(params["w1"])
    w2 = _pack_weight(params["w2"])
    g1 = _pad_channels_vec(params["gamma1"], 1.0)
    b1 = _pad_channels_vec(params["beta1"], 0.0)
    g2 = _pad_channels_vec(params["gamma2"], 1.0)
    b2 = _pad_channels_vec(params["beta2"], 0.0)

    # TODO(synk): if profiling shows the pipeline is HBM-bound, fuse conv1's
    # BN+ReLU into conv2's tap loads to remove the h1 HBM round trip.
    h1 = conv3x3_bn_relu(x_flat, w1, g1, b1, mask, g, jnp.bfloat16)  # conv1+BN+ReLU
    h2 = conv3x3_bn_relu(h1, w2, g2, b2, mask, g, jnp.float32)       # conv2+BN+ReLU

    out = _from_padded_flat(h2, g, cout)               # (N, Ho, Wo, cout) f32
    return jnp.transpose(out, (0, 3, 1, 2))            # NHWC -> NCHW


# ------------------------- pure-JAX reference check --------------------------

def _reference_down(params, x_nchw):
    x = jnp.transpose(x_nchw, (0, 2, 3, 1))
    N, H, W, C = x.shape
    p = x.reshape(N, H // 2, 2, W // 2, 2, C).max(axis=(2, 4))

    def conv_bn_relu(h, w, gamma, beta):
        y = jax.lax.conv_general_dilated(
            h, w, window_strides=(1, 1), padding=((1, 1), (1, 1)),
            dimension_numbers=("NHWC", "HWIO", "NHWC"))
        mean = jnp.mean(y, axis=(0, 1, 2))
        var = jnp.mean((y - mean) ** 2, axis=(0, 1, 2))
        return jax.nn.relu((y - mean) * jax.lax.rsqrt(var + BN_EPS) * gamma + beta)

    h = conv_bn_relu(p, params["w1"], params["gamma1"], params["beta1"])
    h = conv_bn_relu(h, params["w2"], params["gamma2"], params["beta2"])
    return jnp.transpose(h, (0, 3, 1, 2))


if __name__ == "__main__":
    key = jax.random.PRNGKey(0)
    kx, kp = jax.random.split(key)

    N, Cin, H, W = 2, 4, 16, 16
    Cout = 8
    x = jax.random.normal(kx, (N, Cin, H, W), jnp.float32)   # NCHW input
    params = init_down_params(kp, Cin, Cout)

    y = down_forward(params, x)
    jax.block_until_ready(y)

    assert y.shape == (N, Cout, H // 2, W // 2), y.shape
    assert y.dtype == jnp.float32

    ref = _reference_down(params, x)
    err = float(jnp.max(jnp.abs(y - ref)))
    assert err < 0.1, f"max abs error vs reference: {err}"

    print("KERNEL_OK")
</pallas_src>

<mosaic_0001>
module attributes {stable_mosaic.version = 11 : i64} {
  func.func @_maxpool_pad_kernel(%arg0: i32, %arg1: i32, %arg2: memref<1x8x2x8x8xf32, #tpu.memory_space<vmem>>, %arg3: memref<1x8x8x128xbf16, #tpu.memory_space<vmem>>) attributes {dimension_semantics = [#tpu.dimension_semantics<parallel>, #tpu.dimension_semantics<parallel>], iteration_bounds = array<i64: 2, 1>, scalar_prefetch = 0 : i64, scratch_operands = 0 : i64, tpu.core_type = #tpu.core_type<tc>, window_params = [{transform_indices = @transform_0, window_bounds = array<i64: 1, 8, 2, 8, 8>}, {transform_indices = @transform_1, window_bounds = array<i64: 1, 8, 8, 128>}]} {
    %c0 = arith.constant 0 : index
    %c0_0 = arith.constant 0 : index
    %c0_1 = arith.constant 0 : index
    %c0_2 = arith.constant 0 : index
    %c0_3 = arith.constant 0 : index
    %0 = vector.load %arg2[%c0, %c0_0, %c0_1, %c0_2, %c0_3] : memref<1x8x2x8x8xf32, #tpu.memory_space<vmem>>, vector<1x8x2x8x8xf32>
    %1 = vector.shape_cast %0 : vector<1x8x2x8x8xf32> to vector<8x2x8x8xf32>
    %2 = vector.extract_strided_slice %1 {offsets = [0, 0, 0, 0], sizes = [8, 1, 8, 8], strides = [1, 1, 1, 1]} : vector<8x2x8x8xf32> to vector<8x1x8x8xf32>
    %3 = vector.shape_cast %2 : vector<8x1x8x8xf32> to vector<8x8x8xf32>
    %4 = vector.extract_strided_slice %1 {offsets = [0, 1, 0, 0], sizes = [8, 1, 8, 8], strides = [1, 1, 1, 1]} : vector<8x2x8x8xf32> to vector<8x1x8x8xf32>
    %5 = vector.shape_cast %4 : vector<8x1x8x8xf32> to vector<8x8x8xf32>
    %6 = arith.maximumf %3, %5 : vector<8x8x8xf32>
    %7 = vector.extract_strided_slice %6 {offsets = [0, 0, 0], sizes = [8, 8, 4], strides = [1, 1, 1]} : vector<8x8x8xf32> to vector<8x8x4xf32>
    %8 = vector.extract_strided_slice %6 {offsets = [0, 0, 4], sizes = [8, 8, 4], strides = [1, 1, 1]} : vector<8x8x8xf32> to vector<8x8x4xf32>
    %9 = arith.maximumf %7, %8 : vector<8x8x4xf32>
    %cst = arith.constant 0.000000e+00 : f32
    %10 = vector.broadcast %cst : f32 to vector<8x8x124xf32>
    %11 = tpu.concatenate %9, %10 in 2 : vector<8x8x4xf32>, vector<8x8x124xf32> -> vector<8x8x128xf32>
    %12 = arith.truncf %11 : vector<8x8x128xf32> to vector<8x8x128xbf16>
    %c0_4 = arith.constant 0 : index
    %c0_5 = arith.constant 0 : index
    %c0_6 = arith.constant 0 : index
    %c0_7 = arith.constant 0 : index
    %13 = vector.load %arg3[%c0_4, %c0_5, %c0_6, %c0_7] : memref<1x8x8x128xbf16, #tpu.memory_space<vmem>>, vector<1x8x8x128xbf16>
    %14 = vector.shape_cast %13 : vector<1x8x8x128xbf16> to vector<8x8x128xbf16>
    %15 = vector.shape_cast %12 : vector<8x8x128xbf16> to vector<1x8x8x128xbf16>
    tpu.vector_store %arg3[%c0_4, %c0_5, %c0_6, %c0_7], %15 {strides = array<i32>} : memref<1x8x8x128xbf16, #tpu.memory_space<vmem>>, vector<1x8x8x128xbf16>,
    return
  }
  func.func @transform_0(%arg0: i32, %arg1: i32) -> (i32, i32, i32, i32, i32) {
    %c0_i32 = arith.constant 0 : i32
    %c0_i32_0 = arith.constant 0 : i32
    %c0_i32_1 = arith.constant 0 : i32
    %c0_i32_2 = arith.constant 0 : i32
    return %arg0, %arg1, %c0_i32, %c0_i32_0, %c0_i32_1 : i32, i32, i32, i32, i32
  }
  func.func @transform_1(%arg0: i32, %arg1: i32) -> (i32, i32, i32, i32) {
    %c0_i32 = arith.constant 0 : i32
    %c0_i32_0 = arith.constant 0 : i32
    %c0_i32_1 = arith.constant 0 : i32
    return %arg0, %arg1, %c0_i32, %c0_i32_0 : i32, i32, i32, i32
  }
}

module attributes {stable_mosaic.version = 11 : i64} {
  func.func @_conv_stats_kernel(%arg0: i32, %arg1: memref<512x128xbf16, #tpu.memory_space<vmem>>, %arg2: memref<128x128xbf16, #tpu.memory_space<vmem>>, %arg3: memref<128x128xbf16, #tpu.memory_space<vmem>>, %arg4: memref<1152x128xbf16, #tpu.memory_space<vmem>>, %arg5: memref<512x1xf32, #tpu.memory_space<vmem>>, %arg6: memref<512x128xbf16, #tpu.memory_space<vmem>>, %arg7: memref<8x128xf32, #tpu.memory_space<vmem>>, %arg8: memref<768x128xbf16, #tpu.memory_space<vmem>>) attributes {dimension_semantics = [#tpu.dimension_semantics<parallel>], iteration_bounds = array<i64: 1>, scalar_prefetch = 0 : i64, scratch_operands = 1 : i64, tpu.core_type = #tpu.core_type<tc>, window_params = [{transform_indices = @transform_0, window_bounds = array<i64: 512, 128>}, {transform_indices = @transform_1, window_bounds = array<i64: 128, 128>}, {transform_indices = @transform_2, window_bounds = array<i64: 128, 128>}, {pipeline_mode = #tpu.pipeline_mode<synchronous>, transform_indices = @transform_3, window_bounds = array<i64: 1152, 128>}, {transform_indices = @transform_4, window_bounds = array<i64: 512, 1>}, {transform_indices = @transform_5, window_bounds = array<i64: 512, 128>}, {transform_indices = @transform_6, window_bounds = array<i64: 8, 128>}]} {
    %c0 = arith.constant 0 : index
    %c0_0 = arith.constant 0 : index
    %0 = vector.load %arg2[%c0, %c0_0] : memref<128x128xbf16, #tpu.memory_space<vmem>>, vector<128x128xbf16>
    %c0_1 = arith.constant 0 : index
    %c0_2 = arith.constant 0 : index
    %1 = vector.load %arg8[%c0_1, %c0_2] : memref<768x128xbf16, #tpu.memory_space<vmem>>, vector<128x128xbf16>
    tpu.vector_store %arg8[%c0_1, %c0_2], %0 {strides = array<i32>} : memref<768x128xbf16, #tpu.memory_space<vmem>>, vector<128x128xbf16>,
    %c0_3 = arith.constant 0 : index
    %c0_4 = arith.constant 0 : index
    %2 = vector.load %arg1[%c0_3, %c0_4] : memref<512x128xbf16, #tpu.memory_space<vmem>>, vector<512x128xbf16>
    %c128 = arith.constant 128 : index
    %c0_5 = arith.constant 0 : index
    %3 = vector.load %arg8[%c128, %c0_5] : memref<768x128xbf16, #tpu.memory_space<vmem>>, vector<512x128xbf16>
    tpu.vector_store %arg8[%c128, %c0_5], %2 {strides = array<i32>} : memref<768x128xbf16, #tpu.memory_space<vmem>>, vector<512x128xbf16>,
    %c0_6 = arith.constant 0 : index
    %c0_7 = arith.constant 0 : index
    %4 = vector.load %arg3[%c0_6, %c0_7] : memref<128x128xbf16, #tpu.memory_space<vmem>>, vector<128x128xbf16>
    %c640 = arith.constant 640 : index
    %c0_8 = arith.constant 0 : index
    %5 = vector.load %arg8[%c640, %c0_8] : memref<768x128xbf16, #tpu.memory_space<vmem>>, vector<128x128xbf16>
    tpu.vector_store %arg8[%c640, %c0_8], %4 {strides = array<i32>} : memref<768x128xbf16, #tpu.memory_space<vmem>>, vector<128x128xbf16>,
    %cst = arith.constant 0.000000e+00 : f32
    %6 = vector.broadcast %cst : f32 to vector<512x128xf32>
    %c117 = arith.constant 117 : index
    %c0_9 = arith.constant 0 : index
    %7 = vector.load %arg8[%c117, %c0_9] : memref<768x128xbf16, #tpu.memory_space<vmem>>, vector<512x128xbf16>
    %c0_10 = arith.constant 0 : index
    %c0_11 = arith.constant 0 : index
    %8 = vector.load %arg4[%c0_10, %c0_11] : memref<1152x128xbf16, #tpu.memory_space<vmem>>, vector<128x128xbf16>
    %cst_12 = arith.constant dense<0.000000e+00> : vector<512x128xf32>
    %9 = tpu.matmul %7, %8, %cst_12 {dimension_numbers = #tpu.dot_dimension_numbers<[1], [0], [0], [1], [0, 0, 1, 1], [], []>} : vector<512x128xbf16>, vector<128x128xbf16>, vector<512x128xf32> -> vector<512x128xf32>
    %10 = arith.addf %6, %9 : vector<512x128xf32>
    %c118 = arith.constant 118 : index
    %c0_13 = arith.constant 0 : index
    %11 = vector.load %arg8[%c118, %c0_13] : memref<768x128xbf16, #tpu.memory_space<vmem>>, vector<512x128xbf16>
    %c128_14 = arith.constant 128 : index
    %c0_15 = arith.constant 0 : index
    %12 = vector.load %arg4[%c128_14, %c0_15] : memref<1152x128xbf16, #tpu.memory_space<vmem>>, vector<128x128xbf16>
    %cst_16 = arith.constant dense<0.000000e+00> : vector<512x128xf32>
    %13 = tpu.matmul %11, %12, %cst_16 {dimension_numbers = #tpu.dot_dimension_numbers<[1], [0], [0], [1], [0, 0, 1, 1], [], []>} : vector<512x128xbf16>, vector<128x128xbf16>, vector<512x128xf32> -> vector<512x128xf32>
    %14 = arith.addf %10, %13 : vector<512x128xf32>
    %c119 = arith.constant 119 : index
    %c0_17 = arith.constant 0 : index
    %15 = vector.load %arg8[%c119, %c0_17] : memref<768x128xbf16, #tpu.memory_space<vmem>>, vector<512x128xbf16>
    %c256 = arith.constant 256 : index
    %c0_18 = arith.constant 0 : index
    %16 = vector.load %arg4[%c256, %c0_18] : memref<1152x128xbf16, #tpu.memory_space<vmem>>, vector<128x128xbf16>
    %cst_19 = arith.constant dense<0.000000e+00> : vector<512x128xf32>
    %17 = tpu.matmul %15, %16, %cst_19 {dimension_numbers = #tpu.dot_dimension_numbers<[1], [0], [0], [1], [0, 0, 1, 1], [], []>} : vector<512x128xbf16>, vector<128x128xbf16>, vector<512x128xf32> -> vector<512x128xf32>
    %18 = arith.addf %14, %17 : vector<512x128xf32>
    %c127 = arith.constant 127 : index
    %c0_20 = arith.constant 0 : index
    %19 = vector.load %arg8[%c127, %c0_20] : memref<768x128xbf16, #tpu.memory_space<vmem>>, vector<512x128xbf16>
    %c384 = arith.constant 384 : index
    %c0_21 = arith.constant 0 : index
    %20 = vector.load %arg4[%c384, %c0_21] : memref<1152x128xbf16, #tpu.memory_space<vmem>>, vector<128x128xbf16>
    %cst_22 = arith.constant dense<0.000000e+00> : vector<512x128xf32>
    %21 = tpu.matmul %19, %20, %cst_22 {dimension_numbers = #tpu.dot_dimension_numbers<[1], [0], [0], [1], [0, 0, 1, 1], [], []>} : vector<512x128xbf16>, vector<128x128xbf16>, vector<512x128xf32> -> vector<512x128xf32>
    %22 = arith.addf %18, %21 : vector<512x128xf32>
    %c128_23 = arith.constant 128 : index
    %c0_24 = arith.constant 0 : index
    %23 = vector.load %arg8[%c128_23, %c0_24] : memref<768x128xbf16, #tpu.memory_space<vmem>>, vector<512x128xbf16>
    %c512 = arith.constant 512 : index
    %c0_25 = arith.constant 0 : index
    %24 = vector.load %arg4[%c512, %c0_25] : memref<1152x128xbf16, #tpu.memory_space<vmem>>, vector<128x128xbf16>
    %cst_26 = arith.constant dense<0.000000e+00> : vector<512x128xf32>
    %25 = tpu.matmul %23, %24, %cst_26 {dimension_numbers = #tpu.dot_dimension_numbers<[1], [0], [0], [1], [0, 0, 1, 1], [], []>} : vector<512x128xbf16>, vector<128x128xbf16>, vector<512x128xf32> -> vector<512x128xf32>
    %26 = arith.addf %22, %25 : vector<512x128xf32>
    %c129 = arith.constant 129 : index
    %c0_27 = arith.constant 0 : index
    %27 = vector.load %arg8[%c129, %c0_27] : memref<768x128xbf16, #tpu.memory_space<vmem>>, vector<512x128xbf16>
    %c640_28 = arith.constant 640 : index
    %c0_29 = arith.constant 0 : index
    %28 = vector.load %arg4[%c640_28, %c0_29] : memref<1152x128xbf16, #tpu.memory_space<vmem>>, vector<128x128xbf16>
    %cst_30 = arith.constant dense<0.000000e+00> : vector<512x128xf32>
    %29 = tpu.matmul %27, %28, %cst_30 {dimension_numbers = #tpu.dot_dimension_numbers<[1], [0], [0], [1], [0, 0, 1, 1], [], []>} : vector<512x128xbf16>, vector<128x128xbf16>, vector<512x128xf32> -> vector<512x128xf32>
    %30 = arith.addf %26, %29 : vector<512x128xf32>
    %c137 = arith.constant 137 : index
    %c0_31 = arith.constant 0 : index
    %31 = vector.load %arg8[%c137, %c0_31] : memref<768x128xbf16, #tpu.memory_space<vmem>>, vector<512x128xbf16>
    %c768 = arith.constant 768 : index
    %c0_32 = arith.constant 0 : index
    %32 = vector.load %arg4[%c768, %c0_32] : memref<1152x128xbf16, #tpu.memory_space<vmem>>, vector<128x128xbf16>
    %cst_33 = arith.constant dense<0.000000e+00> : vector<512x128xf32>
    %33 = tpu.matmul %31, %32, %cst_33 {dimension_numbers = #tpu.dot_dimension_numbers<[1], [0], [0], [1], [0, 0, 1, 1], [], []>} : vector<512x128xbf16>, vector<128x128xbf16>, vector<512x128xf32> -> vector<512x128xf32>
    %34 = arith.addf %30, %33 : vector<512x128xf32>
    %c138 = arith.constant 138 : index
    %c0_34 = arith.constant 0 : index
    %35 = vector.load %arg8[%c138, %c0_34] : memref<768x128xbf16, #tpu.memory_space<vmem>>, vector<512x128xbf16>
    %c896 = arith.constant 896 : index
    %c0_35 = arith.constant 0 : index
    %36 = vector.load %arg4[%c896, %c0_35] : memref<1152x128xbf16, #tpu.memory_space<vmem>>, vector<128x128xbf16>
    %cst_36 = arith.constant dense<0.000000e+00> : vector<512x128xf32>
    %37 = tpu.matmul %35, %36, %cst_36 {dimension_numbers = #tpu.dot_dimension_numbers<[1], [0], [0], [1], [0, 0, 1, 1], [], []>} : vector<512x128xbf16>, vector<128x128xbf16>, vector<512x128xf32> -> vector<512x128xf32>
    %38 = arith.addf %34, %37 : vector<512x128xf32>
    %c139 = arith.constant 139 : index
    %c0_37 = arith.constant 0 : index
    %39 = vector.load %arg8[%c139, %c0_37] : memref<768x128xbf16, #tpu.memory_space<vmem>>, vector<512x128xbf16>
    %c1024 = arith.constant 1024 : index
    %c0_38 = arith.constant 0 : index
    %40 = vector.load %arg4[%c1024, %c0_38] : memref<1152x128xbf16, #tpu.memory_space<vmem>>, vector<128x128xbf16>
    %cst_39 = arith.constant dense<0.000000e+00> : vector<512x128xf32>
    %41 = tpu.matmul %39, %40, %cst_39 {dimension_numbers = #tpu.dot_dimension_numbers<[1], [0], [0], [1], [0, 0, 1, 1], [], []>} : vector<512x128xbf16>, vector<128x128xbf16>, vector<512x128xf32> -> vector<512x128xf32>
    %42 = arith.addf %38, %41 : vector<512x128xf32>
    %43 = arith.truncf %42 : vector<512x128xf32> to vector<512x128xbf16>
    %c0_40 = arith.constant 0 : index
    %c0_41 = arith.constant 0 : index
    %44 = vector.load %arg6[%c0_40, %c0_41] : memref<512x128xbf16, #tpu.memory_space<vmem>>, vector<512x128xbf16>
    tpu.vector_store %arg6[%c0_40, %c0_41], %43 {strides = array<i32>} : memref<512x128xbf16, #tpu.memory_space<vmem>>, vector<512x128xbf16>,
    %c0_42 = arith.constant 0 : index
    %c0_43 = arith.constant 0 : index
    %45 = vector.load %arg5[%c0_42, %c0_43] : memref<512x1xf32, #tpu.memory_space<vmem>>, vector<512x1xf32>
    %cst_44 = arith.constant 5.000000e-01 : f32
    %46 = vector.broadcast %cst_44 : f32 to vector<512x1xf32>
    %47 = arith.cmpf ogt, %45, %46 : vector<512x1xf32>
    %cst_45 = arith.constant 0.000000e+00 : f32
    %48 = vector.shape_cast %47 : vector<512x1xi1> to vector<512x1xi1>
    %49 = vector.broadcast %48 : vector<512x1xi1> to vector<512x128xi1>
    %50 = vector.broadcast %cst_45 : f32 to vector<512x128xf32>
    %51 = arith.select %49, %42, %50 : vector<512x128xi1>, vector<512x128xf32>
    %cst_46 = arith.constant dense<0.000000e+00> : vector<128xf32>
    %52 = vector.multi_reduction <add>, %51, %cst_46 [0] : vector<512x128xf32> to vector<128xf32>
    %53 = vector.shape_cast %52 : vector<128xf32> to vector<1x128xf32>
    %54 = arith.mulf %51, %51 : vector<512x128xf32>
    %cst_47 = arith.constant dense<0.000000e+00> : vector<128xf32>
    %55 = vector.multi_reduction <add>, %54, %cst_47 [0] : vector<512x128xf32> to vector<128xf32>
    %56 = vector.shape_cast %55 : vector<128xf32> to vector<1x128xf32>
    %cst_48 = arith.constant 0.000000e+00 : f32
    %57 = vector.broadcast %cst_48 : f32 to vector<6x128xf32>
    %58 = tpu.concatenate %53, %56, %57 in 0 : vector<1x128xf32>, vector<1x128xf32>, vector<6x128xf32> -> vector<8x128xf32>
    %c0_49 = arith.constant 0 : index
    %c0_50 = arith.constant 0 : index
    %59 = vector.load %arg7[%c0_49, %c0_50] : memref<8x128xf32, #tpu.memory_space<vmem>>, vector<8x128xf32>
    tpu.vector_store %arg7[%c0_49, %c0_50], %58 {strides = array<i32>} : memref<8x128xf32, #tpu.memory_space<vmem>>, vector<8x128xf32>,
    return
  }
  func.func @transform_0(%arg0: i32) -> (i32, i32) {
    %c1_i32 = arith.constant 1 : i32
    %0 = arith.addi %arg0, %c1_i32 : i32
    %c0_i32 = arith.constant 0 : i32
    %c0_i32_0 = arith.constant 0 : i32
    return %0, %c0_i32 : i32, i32
  }
  func.func @transform_1(%arg0: i32) -> (i32, i32) {
    %c1_i32 = arith.constant 1 : i32
    %0 = arith.addi %arg0, %c1_i32 : i32
    %c4_i32 = arith.constant 4 : i32
    %1 = arith.muli %c4_i32, %0 : i32
    %c1_i32_0 = arith.constant 1 : i32
    %2 = arith.subi %1, %c1_i32_0 : i32
    %c0_i32 = arith.constant 0 : i32
    %c0_i32_1 = arith.constant 0 : i32
    return %2, %c0_i32 : i32, i32
  }
  func.func @transform_2(%arg0: i32) -> (i32, i32) {
    %c2_i32 = arith.constant 2 : i32
    %0 = arith.addi %arg0, %c2_i32 : i32
    %c4_i32 = arith.constant 4 : i32
    %1 = arith.muli %c4_i32, %0 : i32
    %c0_i32 = arith.constant 0 : i32
    %c0_i32_0 = arith.constant 0 : i32
    return %1, %c0_i32 : i32, i32
  }
  func.func @transform_3(%arg0: i32) -> (i32, i32) {
    %c0_i32 = arith.constant 0 : i32
    %c0_i32_0 = arith.constant 0 : i32
    %c0_i32_1 = arith.constant 0 : i32
    return %c0_i32, %c0_i32_0 : i32, i32
  }
  func.func @transform_4(%arg0: i32) -> (i32, i32) {
    %c1_i32 = arith.constant 1 : i32
    %0 = arith.addi %arg0, %c1_i32 : i32
    %c0_i32 = arith.constant 0 : i32
    %c0_i32_0 = arith.constant 0 : i32
    return %0, %c0_i32 : i32, i32
  }
  func.func @transform_5(%arg0: i32) -> (i32, i32) {
    %c1_i32 = arith.constant 1 : i32
    %0 = arith.addi %arg0, %c1_i32 : i32
    %c0_i32 = arith.constant 0 : i32
    %c0_i32_0 = arith.constant 0 : i32
    return %0, %c0_i32 : i32, i32
  }
  func.func @transform_6(%arg0: i32) -> (i32, i32) {
    %c0_i32 = arith.constant 0 : i32
    %c0_i32_0 = arith.constant 0 : i32
    return %arg0, %c0_i32 : i32, i32
  }
}

module attributes {stable_mosaic.version = 11 : i64} {
  func.func @_bn_relu_kernel(%arg0: i32, %arg1: memref<512x128xbf16, #tpu.memory_space<vmem>>, %arg2: memref<1x128xf32, #tpu.memory_space<vmem>>, %arg3: memref<1x128xf32, #tpu.memory_space<vmem>>, %arg4: memref<512x1xf32, #tpu.memory_space<vmem>>, %arg5: memref<512x128xbf16, #tpu.memory_space<vmem>>) attributes {dimension_semantics = [#tpu.dimension_semantics<parallel>], iteration_bounds = array<i64: 3>, scalar_prefetch = 0 : i64, scratch_operands = 0 : i64, tpu.core_type = #tpu.core_type<tc>, window_params = [{transform_indices = @transform_0, window_bounds = array<i64: 512, 128>}, {pipeline_mode = #tpu.pipeline_mode<synchronous>, transform_indices = @transform_1, window_bounds = array<i64: 1, 128>}, {pipeline_mode = #tpu.pipeline_mode<synchronous>, transform_indices = @transform_2, window_bounds = array<i64: 1, 128>}, {transform_indices = @transform_3, window_bounds = array<i64: 512, 1>}, {transform_indices = @transform_4, window_bounds = array<i64: 512, 128>}]} {
    %c0 = arith.constant 0 : index
    %c0_0 = arith.constant 0 : index
    %0 = vector.load %arg1[%c0, %c0_0] : memref<512x128xbf16, #tpu.memory_space<vmem>>, vector<512x128xbf16>
    %1 = arith.extf %0 : vector<512x128xbf16> to vector<512x128xf32>
    %c0_1 = arith.constant 0 : index
    %c0_2 = arith.constant 0 : index
    %2 = vector.load %arg2[%c0_1, %c0_2] : memref<1x128xf32, #tpu.memory_space<vmem>>, vector<1x128xf32>
    %3 = vector.broadcast %2 : vector<1x128xf32> to vector<512x128xf32>
    %4 = arith.mulf %1, %3 : vector<512x128xf32>
    %c0_3 = arith.constant 0 : index
    %c0_4 = arith.constant 0 : index
    %5 = vector.load %arg3[%c0_3, %c0_4] : memref<1x128xf32, #tpu.memory_space<vmem>>, vector<1x128xf32>
    %6 = vector.broadcast %5 : vector<1x128xf32> to vector<512x128xf32>
    %7 = arith.addf %4, %6 : vector<512x128xf32>
    %cst = arith.constant 0.000000e+00 : f32
    %8 = vector.broadcast %cst : f32 to vector<512x128xf32>
    %9 = arith.maximumf %7, %8 : vector<512x128xf32>
    %c0_5 = arith.constant 0 : index
    %c0_6 = arith.constant 0 : index
    %10 = vector.load %arg4[%c0_5, %c0_6] : memref<512x1xf32, #tpu.memory_space<vmem>>, vector<512x1xf32>
    %cst_7 = arith.constant 5.000000e-01 : f32
    %11 = vector.broadcast %cst_7 : f32 to vector<512x1xf32>
    %12 = arith.cmpf ogt, %10, %11 : vector<512x1xf32>
    %cst_8 = arith.constant 0.000000e+00 : f32
    %13 = vector.shape_cast %12 : vector<512x1xi1> to vector<512x1xi1>
    %14 = vector.broadcast %13 : vector<512x1xi1> to vector<512x128xi1>
    %15 = vector.broadcast %cst_8 : f32 to vector<512x128xf32>
    %16 = arith.select %14, %9, %15 : vector<512x128xi1>, vector<512x128xf32>
    %17 = arith.truncf %16 : vector<512x128xf32> to vector<512x128xbf16>
    %c0_9 = arith.constant 0 : index
    %c0_10 = arith.constant 0 : index
    %18 = vector.load %arg5[%c0_9, %c0_10] : memref<512x128xbf16, #tpu.memory_space<vmem>>, vector<512x128xbf16>
    tpu.vector_store %arg5[%c0_9, %c0_10], %17 {strides = array<i32>} : memref<512x128xbf16, #tpu.memory_space<vmem>>, vector<512x128xbf16>,
    return
  }
  func.func @transform_0(%arg0: i32) -> (i32, i32) {
    %c0_i32 = arith.constant 0 : i32
    %c0_i32_0 = arith.constant 0 : i32
    return %arg0, %c0_i32 : i32, i32
  }
  func.func @transform_1(%arg0: i32) -> (i32, i32) {
    %c0_i32 = arith.constant 0 : i32
    %c0_i32_0 = arith.constant 0 : i32
    %c0_i32_1 = arith.constant 0 : i32
    return %c0_i32, %c0_i32_0 : i32, i32
  }
  func.func @transform_2(%arg0: i32) -> (i32, i32) {
    %c0_i32 = arith.constant 0 : i32
    %c0_i32_0 = arith.constant 0 : i32
    %c0_i32_1 = arith.constant 0 : i32
    return %c0_i32, %c0_i32_0 : i32, i32
  }
  func.func @transform_3(%arg0: i32) -> (i32, i32) {
    %c0_i32 = arith.constant 0 : i32
    %c0_i32_0 = arith.constant 0 : i32
    return %arg0, %c0_i32 : i32, i32
  }
  func.func @transform_4(%arg0: i32) -> (i32, i32) {
    %c0_i32 = arith.constant 0 : i32
    %c0_i32_0 = arith.constant 0 : i32
    return %arg0, %c0_i32 : i32, i32
  }
}

module attributes {stable_mosaic.version = 11 : i64} {
  func.func @_bn_relu_kernel(%arg0: i32, %arg1: memref<512x128xbf16, #tpu.memory_space<vmem>>, %arg2: memref<1x128xf32, #tpu.memory_space<vmem>>, %arg3: memref<1x128xf32, #tpu.memory_space<vmem>>, %arg4: memref<512x1xf32, #tpu.memory_space<vmem>>, %arg5: memref<512x128xf32, #tpu.memory_space<vmem>>) attributes {dimension_semantics = [#tpu.dimension_semantics<parallel>], iteration_bounds = array<i64: 3>, scalar_prefetch = 0 : i64, scratch_operands = 0 : i64, tpu.core_type = #tpu.core_type<tc>, window_params = [{transform_indices = @transform_0, window_bounds = array<i64: 512, 128>}, {pipeline_mode = #tpu.pipeline_mode<synchronous>, transform_indices = @transform_1, window_bounds = array<i64: 1, 128>}, {pipeline_mode = #tpu.pipeline_mode<synchronous>, transform_indices = @transform_2, window_bounds = array<i64: 1, 128>}, {transform_indices = @transform_3, window_bounds = array<i64: 512, 1>}, {transform_indices = @transform_4, window_bounds = array<i64: 512, 128>}]} {
    %c0 = arith.constant 0 : index
    %c0_0 = arith.constant 0 : index
    %0 = vector.load %arg1[%c0, %c0_0] : memref<512x128xbf16, #tpu.memory_space<vmem>>, vector<512x128xbf16>
    %1 = arith.extf %0 : vector<512x128xbf16> to vector<512x128xf32>
    %c0_1 = arith.constant 0 : index
    %c0_2 = arith.constant 0 : index
    %2 = vector.load %arg2[%c0_1, %c0_2] : memref<1x128xf32, #tpu.memory_space<vmem>>, vector<1x128xf32>
    %3 = vector.broadcast %2 : vector<1x128xf32> to vector<512x128xf32>
    %4 = arith.mulf %1, %3 : vector<512x128xf32>
    %c0_3 = arith.constant 0 : index
    %c0_4 = arith.constant 0 : index
    %5 = vector.load %arg3[%c0_3, %c0_4] : memref<1x128xf32, #tpu.memory_space<vmem>>, vector<1x128xf32>
    %6 = vector.broadcast %5 : vector<1x128xf32> to vector<512x128xf32>
    %7 = arith.addf %4, %6 : vector<512x128xf32>
    %cst = arith.constant 0.000000e+00 : f32
    %8 = vector.broadcast %cst : f32 to vector<512x128xf32>
    %9 = arith.maximumf %7, %8 : vector<512x128xf32>
    %c0_5 = arith.constant 0 : index
    %c0_6 = arith.constant 0 : index
    %10 = vector.load %arg4[%c0_5, %c0_6] : memref<512x1xf32, #tpu.memory_space<vmem>>, vector<512x1xf32>
    %cst_7 = arith.constant 5.000000e-01 : f32
    %11 = vector.broadcast %cst_7 : f32 to vector<512x1xf32>
    %12 = arith.cmpf ogt, %10, %11 : vector<512x1xf32>
    %cst_8 = arith.constant 0.000000e+00 : f32
    %13 = vector.shape_cast %12 : vector<512x1xi1> to vector<512x1xi1>
    %14 = vector.broadcast %13 : vector<512x1xi1> to vector<512x128xi1>
    %15 = vector.broadcast %cst_8 : f32 to vector<512x128xf32>
    %16 = arith.select %14, %9, %15 : vector<512x128xi1>, vector<512x128xf32>
    %c0_9 = arith.constant 0 : index
    %c0_10 = arith.constant 0 : index
    %17 = vector.load %arg5[%c0_9, %c0_10] : memref<512x128xf32, #tpu.memory_space<vmem>>, vector<512x128xf32>
    tpu.vector_store %arg5[%c0_9, %c0_10], %16 {strides = array<i32>} : memref<512x128xf32, #tpu.memory_space<vmem>>, vector<512x128xf32>,
    return
  }
  func.func @transform_0(%arg0: i32) -> (i32, i32) {
    %c0_i32 = arith.constant 0 : i32
    %c0_i32_0 = arith.constant 0 : i32
    return %arg0, %c0_i32 : i32, i32
  }
  func.func @transform_1(%arg0: i32) -> (i32, i32) {
    %c0_i32 = arith.constant 0 : i32
    %c0_i32_0 = arith.constant 0 : i32
    %c0_i32_1 = arith.constant 0 : i32
    return %c0_i32, %c0_i32_0 : i32, i32
  }
  func.func @transform_2(%arg0: i32) -> (i32, i32) {
    %c0_i32 = arith.constant 0 : i32
    %c0_i32_0 = arith.constant 0 : i32
    %c0_i32_1 = arith.constant 0 : i32
    return %c0_i32, %c0_i32_0 : i32, i32
  }
  func.func @transform_3(%arg0: i32) -> (i32, i32) {
    %c0_i32 = arith.constant 0 : i32
    %c0_i32_0 = arith.constant 0 : i32
    return %arg0, %c0_i32 : i32, i32
  }
  func.func @transform_4(%arg0: i32) -> (i32, i32) {
    %c0_i32 = arith.constant 0 : i32
    %c0_i32_0 = arith.constant 0 : i32
    return %arg0, %c0_i32 : i32, i32
  }
}

</mosaic_0001>

<llo_original>
// kernel: down_forward.5
$region0: #{down_forward.5}
  #allocation0 [shape = 'u32[]', space=smem, size = 0x4, offset = 0x4, fixed_abs, tag = 'smem constant byte address 0x4 - core index']
  #allocation1 [shape = 'u32[72,128]{1,0:T(1,128)}', space=vmem, size = 0x9000, scoped, tag = 'internal scratch']
  %s0 = inlined_call_operand.vmem [shape: f32[2,8,2,8,8], index: 0, kind: input, shape index: {}]
  %s1 = inlined_call_operand.vmem [shape: bf16[2,8,8,128], index: 1, kind: output, shape index: {}]
  %s2 = sld [smem:[#allocation0]]
  $region37: #{down_forward.5} parent=0
    _
  %s4 = ssub.s32 1, %s2
  %s5 = scalar_select 0, %s4, %s2
  loop: start=0, step=1, limit=4
  $region2: #{down_forward.5} parent=0 // loop_pre_header
    _
  $region3: #{down_forward.5} parent=0 // loop_header
    %s7 = sphi 0, %s11
    %p8 = scmp.ge.s32.totalorder %s7, 4
    %s14 = sphi 0, %s26
    %s15 = sphi 0, %s22
    %s16 = sphi 0, %s14
    %s17 = sphi 0, %s15
    %s18 = sphi 0, %s16
    %s19 = sphi 0, %s17
    %s31 = sphi 0, %s33
    %s34 = sphi 0, %s31
    %s35 = sphi 0, %s34
    %s51 = sphi 0, %s35
    %s59 = sphi 0, %s61
    %s62 = sphi 0, %s59
    %s63 = sphi 0, %s62
    %s79 = sphi 0, %s63
  $region4: #{down_forward.5} parent=0 // loop_header_branch
    %10 = sbr.rel (%p8) target = $region8
  $region5: #{down_forward.5} parent=0 // loop_body
    %s12 = ssub.s32 %s7, 1
    %s13 = ssub.s32 %s7, 2
    %s20 = sadd.s32 1, %s15
    %p21 = scmp.ge.s32.totalorder %s20, 1
    %s22 = scalar_select %p21, 0, %s20
    %s23 = sadd.s32 1, %s14
    %s24 = scalar_select %p21, %s23, %s14
    %p25 = scmp.ge.s32.totalorder %s24, 2
    %s26 = scalar_select %p25, 0, %s24
    %s27 = ssub.s32 %s14, %s26
    %s28 = ssub.s32 %s15, %s22
    %s29 = sor.u32 %s27, %s28
    %p30 = scmp.eq.s32.totalorder %s29, 0
    %s32 = sadd.s32 %s31, 1
    %s33 = scalar_select %p30, %s31, %s32
    %p36 = pneg %p30
    %p37 = scmp.eq.s32.totalorder %s7, 1
    %p38 = por %p36, %p37
    %p39 = scmp.ne.s32.totalorder %s31, %s34
    %p40 = scmp.eq.s32.totalorder %s7, 0
    %p41 = por %p39, %p40
    %p42 = scmp.ne.s32.totalorder %s31, %s34
    %p43 = scmp.eq.s32.totalorder %s12, 1
    %p44 = por %p42, %p43
    %p45 = scmp.ne.s32.totalorder %s34, %s35
    %p46 = scmp.eq.s32.totalorder %s12, 0
    %p47 = por %p45, %p46
    %p48 = scmp.ne.s32.totalorder %s34, %s35
    %p49 = scmp.eq.s32.totalorder %s13, 1
    %p50 = por %p48, %p49
    %p52 = scmp.ne.s32.totalorder %s35, %s51
    %p53 = scmp.eq.s32.totalorder %s13, 0
    %p54 = por %p52, %p53
    %s55 = ssub.s32 %s14, %s26
    %s56 = ssub.s32 %s15, %s22
    %s57 = sor.u32 %s55, %s56
    %p58 = scmp.eq.s32.totalorder %s57, 0
    %s60 = sadd.s32 %s59, 1
    %s61 = scalar_select %p58, %s59, %s60
    %p64 = pneg %p58
    %p65 = scmp.eq.s32.totalorder %s7, 1
    %p66 = por %p64, %p65
    %p67 = scmp.ne.s32.totalorder %s59, %s62
    %p68 = scmp.eq.s32.totalorder %s7, 0
    %p69 = por %p67, %p68
    %p70 = scmp.ne.s32.totalorder %s59, %s62
    %p71 = scmp.eq.s32.totalorder %s12, 1
    %p72 = por %p70, %p71
    %p73 = scmp.ne.s32.totalorder %s62, %s63
    %p74 = scmp.eq.s32.totalorder %s12, 0
    %p75 = por %p73, %p74
    %p76 = scmp.ne.s32.totalorder %s62, %s63
    %p77 = scmp.eq.s32.totalorder %s13, 1
    %p78 = por %p76, %p77
    %p80 = scmp.ne.s32.totalorder %s63, %s79
    %p81 = scmp.eq.s32.totalorder %s13, 0
    %p82 = por %p80, %p81
    %p83 = scmp.le.s32.totalorder 1, %s7
    %p84 = scmp.lt.s32.totalorder %s7, 3
    %p85 = pnand %p83, %p84
    %p86 = pneg %p85
    // Predicated region
    $region9: #{down_forward.5} parent=5 // pred_check
      _
    $region10: #{down_forward.5} parent=5 // pred_check_branch
      %88 = sbr.rel (%p85) target = $region12
    $region11: #{down_forward.5} parent=5 // pred_region
      %s89 = ssub.s32 %s7, 1
    $region12: #{down_forward.5} parent=5 // pred_fallthru
      _
    %p90 = scmp.lt.s32.totalorder %s7, 2
    // Predicated region
    $region13: #{down_forward.5} parent=5 // pred_check
      %p91 = pneg %p90
    $region14: #{down_forward.5} parent=5 // pred_check_branch
      %93 = sbr.rel (%p91) target = $region16
    $region15: #{down_forward.5} parent=5 // pred_region
      // Predicated region
      $region17: #{down_forward.5} parent=15 // pred_check
        %p94 = pneg %p41
      $region18: #{down_forward.5} parent=15 // pred_check_branch
        %96 = sbr.rel (%p94) target = $region20
      $region19: #{down_forward.5} parent=15 // pred_region
        %s97 = smul.u32 8, %s15
        %p98 = scmp.lt.s32.totalorder %s14, 1
        %s99 = scalar_select %p98, %s14, 1
        %p100 = scmp.lt.s32.totalorder %s97, 7
        %s101 = scalar_select %p100, %s97, 7
        %s102 = smul.addr %s101, 2
        %s103 = smul.addr %s99, 16
        %s104 = sadd.s32 %s102, %s103
        %s105 = smul.addr %s104, 8
        %s106 = scalar_lea.vmem %s0, %s105
        %s107 = smul.u32 8, %s15
      $region20: #{down_forward.5} parent=15 // pred_fallthru
        _
    $region16: #{down_forward.5} parent=5 // pred_fallthru
      _
    %p108 = scmp.le.s32.totalorder 1, %s7
    %p109 = scmp.lt.s32.totalorder %s7, 3
    %p110 = pnand %p108, %p109
    %p111 = pneg %p110
    // Predicated region
    $region21: #{down_forward.5} parent=5 // pred_check
      _
    $region22: #{down_forward.5} parent=5 // pred_check_branch
      %113 = sbr.rel (%p110) target = $region24
    $region23: #{down_forward.5} parent=5 // pred_region
      %s114 = ssub.s32 %s7, 1
      %s115 = smul.u32 8, %s17
      %p116 = scmp.lt.s32.totalorder %s16, 1
      %s117 = scalar_select %p116, %s16, 1
      %p118 = scmp.lt.s32.totalorder %s115, 7
      %s119 = scalar_select %p118, %s115, 7
      %s120 = smul.addr %s119, 2
      %s121 = smul.addr %s117, 16
      %s122 = sadd.s32 %s120, %s121
      %s123 = smul.addr %s122, 8
      %s124 = scalar_lea.vmem %s0, %s123
      %p125 = pneg %p47
      %p126 = pneg %p44
      %p127 = pneg %p75
      %p128 = pneg %p72
      %s129 = smul.u32 8, %s17
      %p130 = scmp.lt.s32.totalorder %s16, 1
      %s131 = scalar_select %p130, %s16, 1
      %p132 = scmp.lt.s32.totalorder %s129, 7
      %s133 = scalar_select %p132, %s129, 7
      %s134 = smul.addr %s131, 8
      %s135 = sadd.s32 %s133, %s134
      %s136 = smul.addr %s135, 4
      %s137 = scalar_lea.vmem %s1, %s136
      %s138 = smul.u32 8, %s17
      %p139 = scmp.lt.s32.totalorder %s16, 1
      %s140 = scalar_select %p139, %s16, 1
      %p141 = scmp.lt.s32.totalorder %s138, 7
      %s142 = scalar_select %p141, %s138, 7
      %s143 = smul.addr %s142, 2
      %s144 = smul.addr %s140, 16
      %s145 = sadd.s32 %s143, %s144
      %s146 = smul.addr %s145, 8
      %s147 = scalar_lea.vmem %s0, %s146
      %s148 = smul.u32 8, %s17
      %s149 = smul.u32 8, %s17
      %p150 = scmp.lt.s32.totalorder %s16, 1
      %s151 = scalar_select %p150, %s16, 1
      %p152 = scmp.lt.s32.totalorder %s149, 7
      %s153 = scalar_select %p152, %s149, 7
      %s154 = smul.addr %s151, 8
      %s155 = sadd.s32 %s153, %s154
      %s156 = smul.addr %s155, 4
      %s157 = scalar_lea.vmem %s1, %s156
      %s158 = smul.u32 8, %s17
      %v159 = vld [vmem:[%s147] sm:$0xff]
      %v160 = vld [vmem:[%s147 + $0x8] sm:$0xff]
      %v161 = vld [vmem:[%s147 + $0x10] sm:$0xff]
      %v162 = vld [vmem:[%s147 + $0x18] sm:$0xff]
      %v163 = vld [vmem:[%s147 + $0x20] sm:$0xff]
      %v164 = vld [vmem:[%s147 + $0x28] sm:$0xff]
      %v165 = vld [vmem:[%s147 + $0x30] sm:$0xff]
      %v166 = vld [vmem:[%s147 + $0x38] sm:$0xff]
      %v167 = vld [vmem:[%s147 + $0x40] sm:$0xff]
      %v168 = vld [vmem:[%s147 + $0x48] sm:$0xff]
      %v169 = vld [vmem:[%s147 + $0x50] sm:$0xff]
      %v170 = vld [vmem:[%s147 + $0x58] sm:$0xff]
      %v171 = vld [vmem:[%s147 + $0x60] sm:$0xff]
      %v172 = vld [vmem:[%s147 + $0x68] sm:$0xff]
      %v173 = vld [vmem:[%s147 + $0x70] sm:$0xff]
      %v174 = vld [vmem:[%s147 + $0x78] sm:$0xff]
      %v175 = vmax.f32 %v159, %v160
      %v176 = vmax.f32 %v161, %v162
      %v177 = vmax.f32 %v163, %v164
      %v178 = vmax.f32 %v165, %v166
      %v179 = vmax.f32 %v167, %v168
      %v180 = vmax.f32 %v169, %v170
      %v181 = vmax.f32 %v171, %v172
      %v182 = vmax.f32 %v173, %v174
      %191 = vrot.lane.b32.xlu0 %v175, 124
      %v192 = vpop.permute.xlu0 %191
      %193 = vrot.lane.b32.xlu0 %v176, 124
      %v194 = vpop.permute.xlu0 %193
      %195 = vrot.lane.b32.xlu0 %v177, 124
      %v196 = vpop.permute.xlu0 %195
      %197 = vrot.lane.b32.xlu0 %v178, 124
      %v198 = vpop.permute.xlu0 %197
      %199 = vrot.lane.b32.xlu0 %v179, 124
      %v200 = vpop.permute.xlu0 %199
      %201 = vrot.lane.b32.xlu0 %v180, 124
      %v202 = vpop.permute.xlu0 %201
      %203 = vrot.lane.b32.xlu0 %v181, 124
      %v204 = vpop.permute.xlu0 %203
      %205 = vrot.lane.b32.xlu0 %v182, 124
      %v206 = vpop.permute.xlu0 %205
      %v215 = vmax.f32 %v175, %v192
      %v216 = vmax.f32 %v176, %v194
      %v217 = vmax.f32 %v177, %v196
      %v218 = vmax.f32 %v178, %v198
      %v219 = vmax.f32 %v179, %v200
      %v220 = vmax.f32 %v180, %v202
      %v221 = vmax.f32 %v181, %v204
      %v222 = vmax.f32 %v182, %v206
      %vm223 = vcmask 31744
      %v224 = vsel %vm223, %v215, 0.0
      %v225 = vsel %vm223, %v216, 0.0
      %v226 = vsel %vm223, %v217, 0.0
      %v227 = vsel %vm223, %v218, 0.0
      %v228 = vsel %vm223, %v219, 0.0
      %v229 = vsel %vm223, %v220, 0.0
      %v230 = vsel %vm223, %v221, 0.0
      %v231 = vsel %vm223, %v222, 0.0
      %v232 = vpack.c.bf16 %v224, %v224
      %v233 = vpack.c.bf16 %v225, %v225
      %v234 = vpack.c.bf16 %v226, %v226
      %v235 = vpack.c.bf16 %v227, %v227
      %v236 = vpack.c.bf16 %v228, %v228
      %v237 = vpack.c.bf16 %v229, %v229
      %v238 = vpack.c.bf16 %v230, %v230
      %v239 = vpack.c.bf16 %v231, %v231
      %240 = vst [vmem:[%s157] sm:$0xf] %v232
      %241 = vst [vmem:[%s157 + $0x4] sm:$0xf] %v233
      %242 = vst [vmem:[%s157 + $0x8] sm:$0xf] %v234
      %243 = vst [vmem:[%s157 + $0xc] sm:$0xf] %v235
      %244 = vst [vmem:[%s157 + $0x10] sm:$0xf] %v236
      %245 = vst [vmem:[%s157 + $0x14] sm:$0xf] %v237
      %246 = vst [vmem:[%s157 + $0x18] sm:$0xf] %v238
      %247 = vst [vmem:[%s157 + $0x1c] sm:$0xf] %v239
      %s248 = smul.u32 8, %s17
      %p249 = scmp.lt.s32.totalorder %s16, 1
      %s250 = scalar_select %p249, %s16, 1
      %p251 = scmp.lt.s32.totalorder %s248, 7
      %s252 = scalar_select %p251, %s248, 7
      %s253 = smul.addr %s250, 8
      %s254 = sadd.s32 %s252, %s253
      %s255 = smul.addr %s254, 4
      %s256 = scalar_lea.vmem %s1, %s255
      // Predicated region
      $region25: #{down_forward.5} parent=23 // pred_check
        %p257 = pneg %p72
      $region26: #{down_forward.5} parent=23 // pred_check_branch
        %259 = sbr.rel (%p257) target = $region28
      $region27: #{down_forward.5} parent=23 // pred_region
        %s260 = smul.u32 8, %s17
      $region28: #{down_forward.5} parent=23 // pred_fallthru
        _
    $region24: #{down_forward.5} parent=5 // pred_fallthru
      _
    %p261 = scmp.le.s32.totalorder 2, %s7
    // Predicated region
    $region29: #{down_forward.5} parent=5 // pred_check
      %p262 = pneg %p261
    $region30: #{down_forward.5} parent=5 // pred_check_branch
      %264 = sbr.rel (%p262) target = $region32
    $region31: #{down_forward.5} parent=5 // pred_region
      %s265 = ssub.s32 %s7, 2
      // Predicated region
      $region33: #{down_forward.5} parent=31 // pred_check
        %p266 = pneg %p78
      $region34: #{down_forward.5} parent=31 // pred_check_branch
        %268 = sbr.rel (%p266) target = $region36
      $region35: #{down_forward.5} parent=31 // pred_region
        %s269 = smul.u32 8, %s19
        %p270 = scmp.lt.s32.totalorder %s18, 1
        %s271 = scalar_select %p270, %s18, 1
        %p272 = scmp.lt.s32.totalorder %s269, 7
        %s273 = scalar_select %p272, %s269, 7
        %s274 = smul.addr %s271, 8
        %s275 = sadd.s32 %s273, %s274
        %s276 = smul.addr %s275, 4
        %s277 = scalar_lea.vmem %s1, %s276
      $region36: #{down_forward.5} parent=31 // pred_fallthru
        _
    $region32: #{down_forward.5} parent=5 // pred_fallthru
      _
  $region6: #{down_forward.5} parent=0 // loop_footer
    %s11 = sadd.s32 1, %s7
  $region7: #{down_forward.5} parent=0 // loop_footer_branch
    %6 = sbr.rel target = $region3
  $region8: #{down_forward.5} parent=0 // loop_exit
    _

// kernel: down_forward.7
$region0: #{down_forward.7}
  #allocation0 [shape = 'u32[]', space=smem, size = 0x4, offset = 0x4, fixed_abs, tag = 'smem constant byte address 0x4 - core index']
  #allocation1 [shape = 'u32[72,128]{1,0:T(1,128)}', space=vmem, size = 0x9000, scoped, tag = 'internal scratch']
  %s0 = inlined_call_operand.vmem [shape: bf16[1536,128], index: 0, kind: input, shape index: {}]
  %s1 = inlined_call_operand.vmem [shape: f32[1,128], index: 1, kind: input, shape index: {}]
  %s2 = inlined_call_operand.vmem [shape: f32[1,128], index: 2, kind: input, shape index: {}]
  %s3 = inlined_call_operand.vmem [shape: f32[1536,1], index: 3, kind: input, shape index: {}]
  %s4 = inlined_call_operand.vmem [shape: bf16[1536,128], index: 4, kind: output, shape index: {}]
  %s5 = sld [smem:[#allocation0]]
  $region49: #{down_forward.7} parent=0
    _
  %s7 = ssub.s32 1, %s5
  %s8 = scalar_select 0, %s7, %s5
  loop: start=0, step=1, limit=5
  $region2: #{down_forward.7} parent=0 // loop_pre_header
    _
  $region3: #{down_forward.7} parent=0 // loop_header
    %s10 = sphi 0, %s14
    %p11 = scmp.ge.s32.totalorder %s10, 5
    %s20 = sphi 0, %s22
    %s23 = sphi 0, %s20
    %s24 = sphi 0, %s23
    %s40 = sphi 0, %s24
    %s44 = sphi 0, %s44
    %s46 = sphi 0, %s44
    %s47 = sphi 0, %s46
    %s61 = sphi 0, %s47
    %s65 = sphi 0, %s65
    %s67 = sphi 0, %s65
    %s68 = sphi 0, %s67
    %s82 = sphi 0, %s68
    %s88 = sphi 0, %s90
    %s91 = sphi 0, %s88
    %s92 = sphi 0, %s91
    %s108 = sphi 0, %s92
    %s114 = sphi 0, %s116
    %s117 = sphi 0, %s114
    %s118 = sphi 0, %s117
    %s134 = sphi 0, %s118
  $region4: #{down_forward.7} parent=0 // loop_header_branch
    %13 = sbr.rel (%p11) target = $region8
  $region5: #{down_forward.7} parent=0 // loop_body
    %s15 = ssub.s32 %s10, 1
    %s16 = ssub.s32 %s10, 2
    %s17 = sadd.s32 %s10, 1
    %s18 = ssub.s32 %s10, %s17
    %p19 = scmp.eq.s32.totalorder %s18, 0
    %s21 = sadd.s32 %s20, 1
    %s22 = scalar_select %p19, %s20, %s21
    %p25 = pneg %p19
    %p26 = scmp.eq.s32.totalorder %s10, 2
    %p27 = por %p25, %p26
    %p28 = scmp.ne.s32.totalorder %s20, %s23
    %p29 = scmp.eq.s32.totalorder %s10, 0
    %p30 = por %p28, %p29
    %p31 = scmp.ne.s32.totalorder %s20, %s23
    %p32 = scmp.eq.s32.totalorder %s15, 2
    %p33 = por %p31, %p32
    %p34 = scmp.ne.s32.totalorder %s23, %s24
    %p35 = scmp.eq.s32.totalorder %s15, 0
    %p36 = por %p34, %p35
    %p37 = scmp.ne.s32.totalorder %s23, %s24
    %p38 = scmp.eq.s32.totalorder %s16, 2
    %p39 = por %p37, %p38
    %p41 = scmp.ne.s32.totalorder %s24, %s40
    %p42 = scmp.eq.s32.totalorder %s16, 0
    %p43 = por %p41, %p42
    %s45 = sadd.s32 %s44, 1
    %p48 = scmp.eq.s32.totalorder %s10, 2
    %p49 = scmp.ne.s32.totalorder %s44, %s46
    %p50 = scmp.eq.s32.totalorder %s10, 0
    %p51 = por %p49, %p50
    %p52 = scmp.ne.s32.totalorder %s44, %s46
    %p53 = scmp.eq.s32.totalorder %s15, 2
    %p54 = por %p52, %p53
    %p55 = scmp.ne.s32.totalorder %s46, %s47
    %p56 = scmp.eq.s32.totalorder %s15, 0
    %p57 = por %p55, %p56
    %p58 = scmp.ne.s32.totalorder %s46, %s47
    %p59 = scmp.eq.s32.totalorder %s16, 2
    %p60 = por %p58, %p59
    %p62 = scmp.ne.s32.totalorder %s47, %s61
    %p63 = scmp.eq.s32.totalorder %s16, 0
    %p64 = por %p62, %p63
    %s66 = sadd.s32 %s65, 1
    %p69 = scmp.eq.s32.totalorder %s10, 2
    %p70 = scmp.ne.s32.totalorder %s65, %s67
    %p71 = scmp.eq.s32.totalorder %s10, 0
    %p72 = por %p70, %p71
    %p73 = scmp.ne.s32.totalorder %s65, %s67
    %p74 = scmp.eq.s32.totalorder %s15, 2
    %p75 = por %p73, %p74
    %p76 = scmp.ne.s32.totalorder %s67, %s68
    %p77 = scmp.eq.s32.totalorder %s15, 0
    %p78 = por %p76, %p77
    %p79 = scmp.ne.s32.totalorder %s67, %s68
    %p80 = scmp.eq.s32.totalorder %s16, 2
    %p81 = por %p79, %p80
    %p83 = scmp.ne.s32.totalorder %s68, %s82
    %p84 = scmp.eq.s32.totalorder %s16, 0
    %p85 = por %p83, %p84
    %s86 = ssub.s32 %s10, %s17
    %p87 = scmp.eq.s32.totalorder %s86, 0
    %s89 = sadd.s32 %s88, 1
    %s90 = scalar_select %p87, %s88, %s89
    %p93 = pneg %p87
    %p94 = scmp.eq.s32.totalorder %s10, 2
    %p95 = por %p93, %p94
    %p96 = scmp.ne.s32.totalorder %s88, %s91
    %p97 = scmp.eq.s32.totalorder %s10, 0
    %p98 = por %p96, %p97
    %p99 = scmp.ne.s32.totalorder %s88, %s91
    %p100 = scmp.eq.s32.totalorder %s15, 2
    %p101 = por %p99, %p100
    %p102 = scmp.ne.s32.totalorder %s91, %s92
    %p103 = scmp.eq.s32.totalorder %s15, 0
    %p104 = por %p102, %p103
    %p105 = scmp.ne.s32.totalorder %s91, %s92
    %p106 = scmp.eq.s32.totalorder %s16, 2
    %p107 = por %p105, %p106
    %p109 = scmp.ne.s32.totalorder %s92, %s108
    %p110 = scmp.eq.s32.totalorder %s16, 0
    %p111 = por %p109, %p110
    %s112 = ssub.s32 %s10, %s17
    %p113 = scmp.eq.s32.totalorder %s112, 0
    %s115 = sadd.s32 %s114, 1
    %s116 = scalar_select %p113, %s114, %s115
    %p119 = pneg %p113
    %p120 = scmp.eq.s32.totalorder %s10, 2
    %p121 = por %p119, %p120
    %p122 = scmp.ne.s32.totalorder %s114, %s117
    %p123 = scmp.eq.s32.totalorder %s10, 0
    %p124 = por %p122, %p123
    %p125 = scmp.ne.s32.totalorder %s114, %s117
    %p126 = scmp.eq.s32.totalorder %s15, 2
    %p127 = por %p125, %p126
    %p128 = scmp.ne.s32.totalorder %s117, %s118
    %p129 = scmp.eq.s32.totalorder %s15, 0
    %p130 = por %p128, %p129
    %p131 = scmp.ne.s32.totalorder %s117, %s118
    %p132 = scmp.eq.s32.totalorder %s16, 2
    %p133 = por %p131, %p132
    %p135 = scmp.ne.s32.totalorder %s118, %s134
    %p136 = scmp.eq.s32.totalorder %s16, 0
    %p137 = por %p135, %p136
    %p138 = scmp.le.s32.totalorder 1, %s10
    %p139 = scmp.lt.s32.totalorder %s10, 4
    %p140 = pnand %p138, %p139
    %p141 = pneg %p140
    // Predicated region
    $region9: #{down_forward.7} parent=5 // pred_check
      _
    $region10: #{down_forward.7} parent=5 // pred_check_branch
      %143 = sbr.rel (%p140) target = $region12
    $region11: #{down_forward.7} parent=5 // pred_region
      %s144 = ssub.s32 %s10, 1
      // Predicated region
      $region13: #{down_forward.7} parent=11 // pred_check
        %p145 = pneg %p57
      $region14: #{down_forward.7} parent=11 // pred_check_branch
        %147 = sbr.rel (%p145) target = $region16
      $region15: #{down_forward.7} parent=11 // pred_region
        _
      $region16: #{down_forward.7} parent=11 // pred_fallthru
        _
      // Predicated region
      $region17: #{down_forward.7} parent=11 // pred_check
        %p148 = pneg %p78
      $region18: #{down_forward.7} parent=11 // pred_check_branch
        %150 = sbr.rel (%p148) target = $region20
      $region19: #{down_forward.7} parent=11 // pred_region
        _
      $region20: #{down_forward.7} parent=11 // pred_fallthru
        _
    $region12: #{down_forward.7} parent=5 // pred_fallthru
      _
    %p151 = scmp.lt.s32.totalorder %s10, 3
    // Predicated region
    $region21: #{down_forward.7} parent=5 // pred_check
      %p152 = pneg %p151
    $region22: #{down_forward.7} parent=5 // pred_check_branch
      %154 = sbr.rel (%p152) target = $region24
    $region23: #{down_forward.7} parent=5 // pred_region
      // Predicated region
      $region25: #{down_forward.7} parent=23 // pred_check
        %p155 = pneg %p30
      $region26: #{down_forward.7} parent=23 // pred_check_branch
        %157 = sbr.rel (%p155) target = $region28
      $region27: #{down_forward.7} parent=23 // pred_region
        %s158 = smul.u32 64, %s10
        %p159 = scmp.lt.s32.totalorder %s158, 191
        %s160 = scalar_select %p159, %s158, 191
        %s161 = smul.addr %s160, 4
        %s162 = scalar_lea.vmem %s0, %s161
        %s163 = smul.u32 64, %s10
      $region28: #{down_forward.7} parent=23 // pred_fallthru
        _
      // Predicated region
      $region29: #{down_forward.7} parent=23 // pred_check
        %p164 = pneg %p98
      $region30: #{down_forward.7} parent=23 // pred_check_branch
        %166 = sbr.rel (%p164) target = $region32
      $region31: #{down_forward.7} parent=23 // pred_region
        %s167 = smul.u32 64, %s10
        %p168 = scmp.lt.s32.totalorder %s167, 191
        %s169 = scalar_select %p168, %s167, 191
        %s170 = smul.addr %s169, 8
        %s171 = scalar_lea.vmem %s3, %s170
        %s172 = smul.u32 64, %s10
      $region32: #{down_forward.7} parent=23 // pred_fallthru
        _
    $region24: #{down_forward.7} parent=5 // pred_fallthru
      _
    %p173 = scmp.le.s32.totalorder 1, %s10
    %p174 = scmp.lt.s32.totalorder %s10, 4
    %p175 = pnand %p173, %p174
    %p176 = pneg %p175
    // Predicated region
    $region33: #{down_forward.7} parent=5 // pred_check
      _
    $region34: #{down_forward.7} parent=5 // pred_check_branch
      %178 = sbr.rel (%p175) target = $region36
    $region35: #{down_forward.7} parent=5 // pred_region
      %s179 = ssub.s32 %s10, 1
      %s180 = smul.u32 64, %s15
      %p181 = scmp.lt.s32.totalorder %s180, 191
      %s182 = scalar_select %p181, %s180, 191
      %s183 = smul.addr %s182, 4
      %s184 = scalar_lea.vmem %s0, %s183
      %p185 = pneg %p36
      %p186 = pneg %p33
      %p187 = pneg %p57
      %p188 = pneg %p54
      %p189 = pneg %p78
      %p190 = pneg %p75
      %s191 = smul.u32 64, %s15
      %p192 = scmp.lt.s32.totalorder %s191, 191
      %s193 = scalar_select %p192, %s191, 191
      %s194 = smul.addr %s193, 8
      %s195 = scalar_lea.vmem %s3, %s194
      %p196 = pneg %p104
      %p197 = pneg %p101
      %p198 = pneg %p130
      %p199 = pneg %p127
      %s200 = smul.u32 64, %s15
      %p201 = scmp.lt.s32.totalorder %s200, 191
      %s202 = scalar_select %p201, %s200, 191
      %s203 = smul.addr %s202, 4
      %s204 = scalar_lea.vmem %s4, %s203
      %s205 = smul.u32 64, %s15
      %p206 = scmp.lt.s32.totalorder %s205, 191
      %s207 = scalar_select %p206, %s205, 191
      %s208 = smul.addr %s207, 4
      %s209 = scalar_lea.vmem %s0, %s208
      %s210 = smul.u32 64, %s15
      %s211 = smul.u32 64, %s15
      %p212 = scmp.lt.s32.totalorder %s211, 191
      %s213 = scalar_select %p212, %s211, 191
      %s214 = smul.addr %s213, 8
      %s215 = scalar_lea.vmem %s3, %s214
      %s216 = smul.u32 64, %s15
      %s217 = smul.u32 64, %s15
      %p218 = scmp.lt.s32.totalorder %s217, 191
      %s219 = scalar_select %p218, %s217, 191
      %s220 = smul.addr %s219, 4
      %s221 = scalar_lea.vmem %s4, %s220
      %s222 = smul.u32 64, %s15
      %v223 = vld [vmem:[%s209] sm:$0xf]
      %v224 = vld [vmem:[%s209 + $0x4] sm:$0xf]
      %v225 = vld [vmem:[%s209 + $0x8] sm:$0xf]
      %v226 = vld [vmem:[%s209 + $0xc] sm:$0xf]
      %v227 = vld [vmem:[%s209 + $0x10] sm:$0xf]
      %v228 = vld [vmem:[%s209 + $0x14] sm:$0xf]
      %v229 = vld [vmem:[%s209 + $0x18] sm:$0xf]
      %v230 = vld [vmem:[%s209 + $0x1c] sm:$0xf]
      %v231 = vld [vmem:[%s209 + $0x20] sm:$0xf]
      %v232 = vld [vmem:[%s209 + $0x24] sm:$0xf]
      %v233 = vld [vmem:[%s209 + $0x28] sm:$0xf]
      %v234 = vld [vmem:[%s209 + $0x2c] sm:$0xf]
      %v235 = vld [vmem:[%s209 + $0x30] sm:$0xf]
      %v236 = vld [vmem:[%s209 + $0x34] sm:$0xf]
      %v237 = vld [vmem:[%s209 + $0x38] sm:$0xf]
      %v238 = vld [vmem:[%s209 + $0x3c] sm:$0xf]
      %v239 = vld [vmem:[%s209 + $0x40] sm:$0xf]
      %v240 = vld [vmem:[%s209 + $0x44] sm:$0xf]
      %v241 = vld [vmem:[%s209 + $0x48] sm:$0xf]
      %v242 = vld [vmem:[%s209 + $0x4c] sm:$0xf]
      %v243 = vld [vmem:[%s209 + $0x50] sm:$0xf]
      %v244 = vld [vmem:[%s209 + $0x54] sm:$0xf]
      %v245 = vld [vmem:[%s209 + $0x58] sm:$0xf]
      %v246 = vld [vmem:[%s209 + $0x5c] sm:$0xf]
      %v247 = vld [vmem:[%s209 + $0x60] sm:$0xf]
      %v248 = vld [vmem:[%s209 + $0x64] sm:$0xf]
      %v249 = vld [vmem:[%s209 + $0x68] sm:$0xf]
      %v250 = vld [vmem:[%s209 + $0x6c] sm:$0xf]
      %v251 = vld [vmem:[%s209 + $0x70] sm:$0xf]
      %v252 = vld [vmem:[%s209 + $0x74] sm:$0xf]
      %v253 = vld [vmem:[%s209 + $0x78] sm:$0xf]
      %v254 = vld [vmem:[%s209 + $0x7c] sm:$0xf]
      %v255 = vld [vmem:[%s209 + $0x80] sm:$0xf]
      %v256 = vld [vmem:[%s209 + $0x84] sm:$0xf]
      %v257 = vld [vmem:[%s209 + $0x88] sm:$0xf]
      %v258 = vld [vmem:[%s209 + $0x8c] sm:$0xf]
      %v259 = vld [vmem:[%s209 + $0x90] sm:$0xf]
      %v260 = vld [vmem:[%s209 + $0x94] sm:$0xf]
      %v261 = vld [vmem:[%s209 + $0x98] sm:$0xf]
      %v262 = vld [vmem:[%s209 + $0x9c] sm:$0xf]
      %v263 = vld [vmem:[%s209 + $0xa0] sm:$0xf]
      %v264 = vld [vmem:[%s209 + $0xa4] sm:$0xf]
      %v265 = vld [vmem:[%s209 + $0xa8] sm:$0xf]
      %v266 = vld [vmem:[%s209 + $0xac] sm:$0xf]
      %v267 = vld [vmem:[%s209 + $0xb0] sm:$0xf]
      %v268 = vld [vmem:[%s209 + $0xb4] sm:$0xf]
      %v269 = vld [vmem:[%s209 + $0xb8] sm:$0xf]
      %v270 = vld [vmem:[%s209 + $0xbc] sm:$0xf]
      %v271 = vld [vmem:[%s209 + $0xc0] sm:$0xf]
      %v272 = vld [vmem:[%s209 + $0xc4] sm:$0xf]
      %v273 = vld [vmem:[%s209 + $0xc8] sm:$0xf]
      %v274 = vld [vmem:[%s209 + $0xcc] sm:$0xf]
      %v275 = vld [vmem:[%s209 + $0xd0] sm:$0xf]
      %v276 = vld [vmem:[%s209 + $0xd4] sm:$0xf]
      %v277 = vld [vmem:[%s209 + $0xd8] sm:$0xf]
      %v278 = vld [vmem:[%s209 + $0xdc] sm:$0xf]
      %v279 = vld [vmem:[%s209 + $0xe0] sm:$0xf]
      %v280 = vld [vmem:[%s209 + $0xe4] sm:$0xf]
      %v281 = vld [vmem:[%s209 + $0xe8] sm:$0xf]
      %v282 = vld [vmem:[%s209 + $0xec] sm:$0xf]
      %v283 = vld [vmem:[%s209 + $0xf0] sm:$0xf]
      %v284 = vld [vmem:[%s209 + $0xf4] sm:$0xf]
      %v285 = vld [vmem:[%s209 + $0xf8] sm:$0xf]
      %v286 = vld [vmem:[%s209 + $0xfc] sm:$0xf]
      %v287 = vunpack.c.l.bf16 %v223
      %v288 = vunpack.c.l.bf16 %v224
      %v289 = vunpack.c.l.bf16 %v225
      %v290 = vunpack.c.l.bf16 %v226
      %v291 = vunpack.c.l.bf16 %v227
      %v292 = vunpack.c.l.bf16 %v228
      %v293 = vunpack.c.l.bf16 %v229
      %v294 = vunpack.c.l.bf16 %v230
      %v295 = vunpack.c.l.bf16 %v231
      %v296 = vunpack.c.l.bf16 %v232
      %v297 = vunpack.c.l.bf16 %v233
      %v298 = vunpack.c.l.bf16 %v234
      %v299 = vunpack.c.l.bf16 %v235
      %v300 = vunpack.c.l.bf16 %v236
      %v301 = vunpack.c.l.bf16 %v237
      %v302 = vunpack.c.l.bf16 %v238
      %v303 = vunpack.c.l.bf16 %v239
      %v304 = vunpack.c.l.bf16 %v240
      %v305 = vunpack.c.l.bf16 %v241
      %v306 = vunpack.c.l.bf16 %v242
      %v307 = vunpack.c.l.bf16 %v243
      %v308 = vunpack.c.l.bf16 %v244
      %v309 = vunpack.c.l.bf16 %v245
      %v310 = vunpack.c.l.bf16 %v246
      %v311 = vunpack.c.l.bf16 %v247
      %v312 = vunpack.c.l.bf16 %v248
      %v313 = vunpack.c.l.bf16 %v249
      %v314 = vunpack.c.l.bf16 %v250
      %v315 = vunpack.c.l.bf16 %v251
      %v316 = vunpack.c.l.bf16 %v252
      %v317 = vunpack.c.l.bf16 %v253
      %v318 = vunpack.c.l.bf16 %v254
      %v319 = vunpack.c.l.bf16 %v255
      %v320 = vunpack.c.l.bf16 %v256
      %v321 = vunpack.c.l.bf16 %v257
      %v322 = vunpack.c.l.bf16 %v258
      %v323 = vunpack.c.l.bf16 %v259
      %v324 = vunpack.c.l.bf16 %v260
      %v325 = vunpack.c.l.bf16 %v261
      %v326 = vunpack.c.l.bf16 %v262
      %v327 = vunpack.c.l.bf16 %v263
      %v328 = vunpack.c.l.bf16 %v264
      %v329 = vunpack.c.l.bf16 %v265
      %v330 = vunpack.c.l.bf16 %v266
      %v331 = vunpack.c.l.bf16 %v267
      %v332 = vunpack.c.l.bf16 %v268
      %v333 = vunpack.c.l.bf16 %v269
      %v334 = vunpack.c.l.bf16 %v270
      %v335 = vunpack.c.l.bf16 %v271
      %v336 = vunpack.c.l.bf16 %v272
      %v337 = vunpack.c.l.bf16 %v273
      %v338 = vunpack.c.l.bf16 %v274
      %v339 = vunpack.c.l.bf16 %v275
      %v340 = vunpack.c.l.bf16 %v276
      %v341 = vunpack.c.l.bf16 %v277
      %v342 = vunpack.c.l.bf16 %v278
      %v343 = vunpack.c.l.bf16 %v279
      %v344 = vunpack.c.l.bf16 %v280
      %v345 = vunpack.c.l.bf16 %v281
      %v346 = vunpack.c.l.bf16 %v282
      %v347 = vunpack.c.l.bf16 %v283
      %v348 = vunpack.c.l.bf16 %v284
      %v349 = vunpack.c.l.bf16 %v285
      %v350 = vunpack.c.l.bf16 %v286
      %v351 = vld [vmem:[%s1] sm:$0x1]
      %v353 = vperm.slane %v351, 0
      %v355 = vmul.f32 %v287, %v353
      %v356 = vmul.f32 %v288, %v353
      %v357 = vmul.f32 %v289, %v353
      %v358 = vmul.f32 %v290, %v353
      %v359 = vmul.f32 %v291, %v353
      %v360 = vmul.f32 %v292, %v353
      %v361 = vmul.f32 %v293, %v353
      %v362 = vmul.f32 %v294, %v353
      %v363 = vmul.f32 %v295, %v353
      %v364 = vmul.f32 %v296, %v353
      %v365 = vmul.f32 %v297, %v353
      %v366 = vmul.f32 %v298, %v353
      %v367 = vmul.f32 %v299, %v353
      %v368 = vmul.f32 %v300, %v353
      %v369 = vmul.f32 %v301, %v353
      %v370 = vmul.f32 %v302, %v353
      %v371 = vmul.f32 %v303, %v353
      %v372 = vmul.f32 %v304, %v353
      %v373 = vmul.f32 %v305, %v353
      %v374 = vmul.f32 %v306, %v353
      %v375 = vmul.f32 %v307, %v353
      %v376 = vmul.f32 %v308, %v353
      %v377 = vmul.f32 %v309, %v353
      %v378 = vmul.f32 %v310, %v353
      %v379 = vmul.f32 %v311, %v353
      %v380 = vmul.f32 %v312, %v353
      %v381 = vmul.f32 %v313, %v353
      %v382 = vmul.f32 %v314, %v353
      %v383 = vmul.f32 %v315, %v353
      %v384 = vmul.f32 %v316, %v353
      %v385 = vmul.f32 %v317, %v353
      %v386 = vmul.f32 %v318, %v353
      %v387 = vmul.f32 %v319, %v353
      %v388 = vmul.f32 %v320, %v353
      %v389 = vmul.f32 %v321, %v353
      %v390 = vmul.f32 %v322, %v353
      %v391 = vmul.f32 %v323, %v353
      %v392 = vmul.f32 %v324, %v353
      %v393 = vmul.f32 %v325, %v353
      %v394 = vmul.f32 %v326, %v353
      %v395 = vmul.f32 %v327, %v353
      %v396 = vmul.f32 %v328, %v353
      %v397 = vmul.f32 %v329, %v353
      %v398 = vmul.f32 %v330, %v353
      %v399 = vmul.f32 %v331, %v353
      %v400 = vmul.f32 %v332, %v353
      %v401 = vmul.f32 %v333, %v353
      %v402 = vmul.f32 %v334, %v353
      %v403 = vmul.f32 %v335, %v353
      %v404 = vmul.f32 %v336, %v353
      %v405 = vmul.f32 %v337, %v353
      %v406 = vmul.f32 %v338, %v353
      %v407 = vmul.f32 %v339, %v353
      %v408 = vmul.f32 %v340, %v353
      %v409 = vmul.f32 %v341, %v353
      %v410 = vmul.f32 %v342, %v353
      %v411 = vmul.f32 %v343, %v353
      %v412 = vmul.f32 %v344, %v353
      %v413 = vmul.f32 %v345, %v353
      %v414 = vmul.f32 %v346, %v353
      %v415 = vmul.f32 %v347, %v353
      %v416 = vmul.f32 %v348, %v353
      %v417 = vmul.f32 %v349, %v353
      %v418 = vmul.f32 %v350, %v353
      %v419 = vld [vmem:[%s2] sm:$0x1]
      %v421 = vperm.slane %v419, 0
      %v423 = vadd.f32 %v355, %v421
      %v424 = vadd.f32 %v356, %v421
      %v425 = vadd.f32 %v357, %v421
      %v426 = vadd.f32 %v358, %v421
      %v427 = vadd.f32 %v359, %v421
      %v428 = vadd.f32 %v360, %v421
      %v429 = vadd.f32 %v361, %v421
      %v430 = vadd.f32 %v362, %v421
      %v431 = vadd.f32 %v363, %v421
      %v432 = vadd.f32 %v364, %v421
      %v433 = vadd.f32 %v365, %v421
      %v434 = vadd.f32 %v366, %v421
      %v435 = vadd.f32 %v367, %v421
      %v436 = vadd.f32 %v368, %v421
      %v437 = vadd.f32 %v369, %v421
      %v438 = vadd.f32 %v370, %v421
      %v439 = vadd.f32 %v371, %v421
      %v440 = vadd.f32 %v372, %v421
      %v441 = vadd.f32 %v373, %v421
      %v442 = vadd.f32 %v374, %v421
      %v443 = vadd.f32 %v375, %v421
      %v444 = vadd.f32 %v376, %v421
      %v445 = vadd.f32 %v377, %v421
      %v446 = vadd.f32 %v378, %v421
      %v447 = vadd.f32 %v379, %v421
      %v448 = vadd.f32 %v380, %v421
      %v449 = vadd.f32 %v381, %v421
      %v450 = vadd.f32 %v382, %v421
      %v451 = vadd.f32 %v383, %v421
      %v452 = vadd.f32 %v384, %v421
      %v453 = vadd.f32 %v385, %v421
      %v454 = vadd.f32 %v386, %v421
      %v455 = vadd.f32 %v387, %v421
      %v456 = vadd.f32 %v388, %v421
      %v457 = vadd.f32 %v389, %v421
      %v458 = vadd.f32 %v390, %v421
      %v459 = vadd.f32 %v391, %v421
      %v460 = vadd.f32 %v392, %v421
      %v461 = vadd.f32 %v393, %v421
      %v462 = vadd.f32 %v394, %v421
      %v463 = vadd.f32 %v395, %v421
      %v464 = vadd.f32 %v396, %v421
      %v465 = vadd.f32 %v397, %v421
      %v466 = vadd.f32 %v398, %v421
      %v467 = vadd.f32 %v399, %v421
      %v468 = vadd.f32 %v400, %v421
      %v469 = vadd.f32 %v401, %v421
      %v470 = vadd.f32 %v402, %v421
      %v471 = vadd.f32 %v403, %v421
      %v472 = vadd.f32 %v404, %v421
      %v473 = vadd.f32 %v405, %v421
      %v474 = vadd.f32 %v406, %v421
      %v475 = vadd.f32 %v407, %v421
      %v476 = vadd.f32 %v408, %v421
      %v477 = vadd.f32 %v409, %v421
      %v478 = vadd.f32 %v410, %v421
      %v479 = vadd.f32 %v411, %v421
      %v480 = vadd.f32 %v412, %v421
      %v481 = vadd.f32 %v413, %v421
      %v482 = vadd.f32 %v414, %v421
      %v483 = vadd.f32 %v415, %v421
      %v484 = vadd.f32 %v416, %v421
      %v485 = vadd.f32 %v417, %v421
      %v486 = vadd.f32 %v418, %v421
      %v487 = vmax.f32 %v423, 0.0
      %v488 = vmax.f32 %v424, 0.0
      %v489 = vmax.f32 %v425, 0.0
      %v490 = vmax.f32 %v426, 0.0
      %v491 = vmax.f32 %v427, 0.0
      %v492 = vmax.f32 %v428, 0.0
      %v493 = vmax.f32 %v429, 0.0
      %v494 = vmax.f32 %v430, 0.0
      %v495 = vmax.f32 %v431, 0.0
      %v496 = vmax.f32 %v432, 0.0
      %v497 = vmax.f32 %v433, 0.0
      %v498 = vmax.f32 %v434, 0.0
      %v499 = vmax.f32 %v435, 0.0
      %v500 = vmax.f32 %v436, 0.0
      %v501 = vmax.f32 %v437, 0.0
      %v502 = vmax.f32 %v438, 0.0
      %v503 = vmax.f32 %v439, 0.0
      %v504 = vmax.f32 %v440, 0.0
      %v505 = vmax.f32 %v441, 0.0
      %v506 = vmax.f32 %v442, 0.0
      %v507 = vmax.f32 %v443, 0.0
      %v508 = vmax.f32 %v444, 0.0
      %v509 = vmax.f32 %v445, 0.0
      %v510 = vmax.f32 %v446, 0.0
      %v511 = vmax.f32 %v447, 0.0
      %v512 = vmax.f32 %v448, 0.0
      %v513 = vmax.f32 %v449, 0.0
      %v514 = vmax.f32 %v450, 0.0
      %v515 = vmax.f32 %v451, 0.0
      %v516 = vmax.f32 %v452, 0.0
      %v517 = vmax.f32 %v453, 0.0
      %v518 = vmax.f32 %v454, 0.0
      %v519 = vmax.f32 %v455, 0.0
      %v520 = vmax.f32 %v456, 0.0
      %v521 = vmax.f32 %v457, 0.0
      %v522 = vmax.f32 %v458, 0.0
      %v523 = vmax.f32 %v459, 0.0
      %v524 = vmax.f32 %v460, 0.0
      %v525 = vmax.f32 %v461, 0.0
      %v526 = vmax.f32 %v462, 0.0
      %v527 = vmax.f32 %v463, 0.0
      %v528 = vmax.f32 %v464, 0.0
      %v529 = vmax.f32 %v465, 0.0
      %v530 = vmax.f32 %v466, 0.0
      %v531 = vmax.f32 %v467, 0.0
      %v532 = vmax.f32 %v468, 0.0
      %v533 = vmax.f32 %v469, 0.0
      %v534 = vmax.f32 %v470, 0.0
      %v535 = vmax.f32 %v471, 0.0
      %v536 = vmax.f32 %v472, 0.0
      %v537 = vmax.f32 %v473, 0.0
      %v538 = vmax.f32 %v474, 0.0
      %v539 = vmax.f32 %v475, 0.0
      %v540 = vmax.f32 %v476, 0.0
      %v541 = vmax.f32 %v477, 0.0
      %v542 = vmax.f32 %v478, 0.0
      %v543 = vmax.f32 %v479, 0.0
      %v544 = vmax.f32 %v480, 0.0
      %v545 = vmax.f32 %v481, 0.0
      %v546 = vmax.f32 %v482, 0.0
      %v547 = vmax.f32 %v483, 0.0
      %v548 = vmax.f32 %v484, 0.0
      %v549 = vmax.f32 %v485, 0.0
      %v550 = vmax.f32 %v486, 0.0
      %v551 = vld [vmem:[%s215] sm:$0xff]
      %v552 = vld [vmem:[%s215 + $0x8] sm:$0xff]
      %v553 = vld [vmem:[%s215 + $0x10] sm:$0xff]
      %v554 = vld [vmem:[%s215 + $0x18] sm:$0xff]
      %v555 = vld [vmem:[%s215 + $0x20] sm:$0xff]
      %v556 = vld [vmem:[%s215 + $0x28] sm:$0xff]
      %v557 = vld [vmem:[%s215 + $0x30] sm:$0xff]
      %v558 = vld [vmem:[%s215 + $0x38] sm:$0xff]
      %v559 = vld [vmem:[%s215 + $0x40] sm:$0xff]
      %v560 = vld [vmem:[%s215 + $0x48] sm:$0xff]
      %v561 = vld [vmem:[%s215 + $0x50] sm:$0xff]
      %v562 = vld [vmem:[%s215 + $0x58] sm:$0xff]
      %v563 = vld [vmem:[%s215 + $0x60] sm:$0xff]
      %v564 = vld [vmem:[%s215 + $0x68] sm:$0xff]
      %v565 = vld [vmem:[%s215 + $0x70] sm:$0xff]
      %v566 = vld [vmem:[%s215 + $0x78] sm:$0xff]
      %v567 = vld [vmem:[%s215 + $0x80] sm:$0xff]
      %v568 = vld [vmem:[%s215 + $0x88] sm:$0xff]
      %v569 = vld [vmem:[%s215 + $0x90] sm:$0xff]
      %v570 = vld [vmem:[%s215 + $0x98] sm:$0xff]
      %v571 = vld [vmem:[%s215 + $0xa0] sm:$0xff]
      %v572 = vld [vmem:[%s215 + $0xa8] sm:$0xff]
      %v573 = vld [vmem:[%s215 + $0xb0] sm:$0xff]
      %v574 = vld [vmem:[%s215 + $0xb8] sm:$0xff]
      %v575 = vld [vmem:[%s215 + $0xc0] sm:$0xff]
      %v576 = vld [vmem:[%s215 + $0xc8] sm:$0xff]
      %v577 = vld [vmem:[%s215 + $0xd0] sm:$0xff]
      %v578 = vld [vmem:[%s215 + $0xd8] sm:$0xff]
      %v579 = vld [vmem:[%s215 + $0xe0] sm:$0xff]
      %v580 = vld [vmem:[%s215 + $0xe8] sm:$0xff]
      %v581 = vld [vmem:[%s215 + $0xf0] sm:$0xff]
      %v582 = vld [vmem:[%s215 + $0xf8] sm:$0xff]
      %v583 = vld [vmem:[%s215 + $0x100] sm:$0xff]
      %v584 = vld [vmem:[%s215 + $0x108] sm:$0xff]
      %v585 = vld [vmem:[%s215 + $0x110] sm:$0xff]
      %v586 = vld [vmem:[%s215 + $0x118] sm:$0xff]
      %v587 = vld [vmem:[%s215 + $0x120] sm:$0xff]
      %v588 = vld [vmem:[%s215 + $0x128] sm:$0xff]
      %v589 = vld [vmem:[%s215 + $0x130] sm:$0xff]
      %v590 = vld [vmem:[%s215 + $0x138] sm:$0xff]
      %v591 = vld [vmem:[%s215 + $0x140] sm:$0xff]
      %v592 = vld [vmem:[%s215 + $0x148] sm:$0xff]
      %v593 = vld [vmem:[%s215 + $0x150] sm:$0xff]
      %v594 = vld [vmem:[%s215 + $0x158] sm:$0xff]
      %v595 = vld [vmem:[%s215 + $0x160] sm:$0xff]
      %v596 = vld [vmem:[%s215 + $0x168] sm:$0xff]
      %v597 = vld [vmem:[%s215 + $0x170] sm:$0xff]
      %v598 = vld [vmem:[%s215 + $0x178] sm:$0xff]
      %v599 = vld [vmem:[%s215 + $0x180] sm:$0xff]
      %v600 = vld [vmem:[%s215 + $0x188] sm:$0xff]
      %v601 = vld [vmem:[%s215 + $0x190] sm:$0xff]
      %v602 = vld [vmem:[%s215 + $0x198] sm:$0xff]
      %v603 = vld [vmem:[%s215 + $0x1a0] sm:$0xff]
      %v604 = vld [vmem:[%s215 + $0x1a8] sm:$0xff]
      %v605 = vld [vmem:[%s215 + $0x1b0] sm:$0xff]
      %v606 = vld [vmem:[%s215 + $0x1b8] sm:$0xff]
      %v607 = vld [vmem:[%s215 + $0x1c0] sm:$0xff]
      %v608 = vld [vmem:[%s215 + $0x1c8] sm:$0xff]
      %v609 = vld [vmem:[%s215 + $0x1d0] sm:$0xff]
      %v610 = vld [vmem:[%s215 + $0x1d8] sm:$0xff]
      %v611 = vld [vmem:[%s215 + $0x1e0] sm:$0xff]
      %v612 = vld [vmem:[%s215 + $0x1e8] sm:$0xff]
      %v613 = vld [vmem:[%s215 + $0x1f0] sm:$0xff]
      %v614 = vld [vmem:[%s215 + $0x1f8] sm:$0xff]
      %vm615 = vcmp.gt.f32.partialorder %v551, 0.5
      %vm616 = vcmp.gt.f32.partialorder %v552, 0.5
      %vm617 = vcmp.gt.f32.partialorder %v553, 0.5
      %vm618 = vcmp.gt.f32.partialorder %v554, 0.5
      %vm619 = vcmp.gt.f32.partialorder %v555, 0.5
      %vm620 = vcmp.gt.f32.partialorder %v556, 0.5
      %vm621 = vcmp.gt.f32.partialorder %v557, 0.5
      %vm622 = vcmp.gt.f32.partialorder %v558, 0.5
      %vm623 = vcmp.gt.f32.partialorder %v559, 0.5
      %vm624 = vcmp.gt.f32.partialorder %v560, 0.5
      %vm625 = vcmp.gt.f32.partialorder %v561, 0.5
      %vm626 = vcmp.gt.f32.partialorder %v562, 0.5
      %vm627 = vcmp.gt.f32.partialorder %v563, 0.5
      %vm628 = vcmp.gt.f32.partialorder %v564, 0.5
      %vm629 = vcmp.gt.f32.partialorder %v565, 0.5
      %vm630 = vcmp.gt.f32.partialorder %v566, 0.5
      %vm631 = vcmp.gt.f32.partialorder %v567, 0.5
      %vm632 = vcmp.gt.f32.partialorder %v568, 0.5
      %vm633 = vcmp.gt.f32.partialorder %v569, 0.5
      %vm634 = vcmp.gt.f32.partialorder %v570, 0.5
      %vm635 = vcmp.gt.f32.partialorder %v571, 0.5
      %vm636 = vcmp.gt.f32.partialorder %v572, 0.5
      %vm637 = vcmp.gt.f32.partialorder %v573, 0.5
      %vm638 = vcmp.gt.f32.partialorder %v574, 0.5
      %vm639 = vcmp.gt.f32.partialorder %v575, 0.5
      %vm640 = vcmp.gt.f32.partialorder %v576, 0.5
      %vm641 = vcmp.gt.f32.partialorder %v577, 0.5
      %vm642 = vcmp.gt.f32.partialorder %v578, 0.5
      %vm643 = vcmp.gt.f32.partialorder %v579, 0.5
      %vm644 = vcmp.gt.f32.partialorder %v580, 0.5
      %vm645 = vcmp.gt.f32.partialorder %v581, 0.5
      %vm646 = vcmp.gt.f32.partialorder %v582, 0.5
      %vm647 = vcmp.gt.f32.partialorder %v583, 0.5
      %vm648 = vcmp.gt.f32.partialorder %v584, 0.5
      %vm649 = vcmp.gt.f32.partialorder %v585, 0.5
      %vm650 = vcmp.gt.f32.partialorder %v586, 0.5
      %vm651 = vcmp.gt.f32.partialorder %v587, 0.5
      %vm652 = vcmp.gt.f32.partialorder %v588, 0.5
      %vm653 = vcmp.gt.f32.partialorder %v589, 0.5
      %vm654 = vcmp.gt.f32.partialorder %v590, 0.5
      %vm655 = vcmp.gt.f32.partialorder %v591, 0.5
      %vm656 = vcmp.gt.f32.partialorder %v592, 0.5
      %vm657 = vcmp.gt.f32.partialorder %v593, 0.5
      %vm658 = vcmp.gt.f32.partialorder %v594, 0.5
      %vm659 = vcmp.gt.f32.partialorder %v595, 0.5
      %vm660 = vcmp.gt.f32.partialorder %v596, 0.5
      %vm661 = vcmp.gt.f32.partialorder %v597, 0.5
      %vm662 = vcmp.gt.f32.partialorder %v598, 0.5
      %vm663 = vcmp.gt.f32.partialorder %v599, 0.5
      %vm664 = vcmp.gt.f32.partialorder %v600, 0.5
      %vm665 = vcmp.gt.f32.partialorder %v601, 0.5
      %vm666 = vcmp.gt.f32.partialorder %v602, 0.5
      %vm667 = vcmp.gt.f32.partialorder %v603, 0.5
      %vm668 = vcmp.gt.f32.partialorder %v604, 0.5
      %vm669 = vcmp.gt.f32.partialorder %v605, 0.5
      %vm670 = vcmp.gt.f32.partialorder %v606, 0.5
      %vm671 = vcmp.gt.f32.partialorder %v607, 0.5
      %vm672 = vcmp.gt.f32.partialorder %v608, 0.5
      %vm673 = vcmp.gt.f32.partialorder %v609, 0.5
      %vm674 = vcmp.gt.f32.partialorder %v610, 0.5
      %vm675 = vcmp.gt.f32.partialorder %v611, 0.5
      %vm676 = vcmp.gt.f32.partialorder %v612, 0.5
      %vm677 = vcmp.gt.f32.partialorder %v613, 0.5
      %vm678 = vcmp.gt.f32.partialorder %v614, 0.5
      %v679 = vsel %vm615, 1, 0
      %v680 = vsel %vm616, 1, 0
      %v681 = vsel %vm617, 1, 0
      %v682 = vsel %vm618, 1, 0
      %v683 = vsel %vm619, 1, 0
      %v684 = vsel %vm620, 1, 0
      %v685 = vsel %vm621, 1, 0
      %v686 = vsel %vm622, 1, 0
      %v687 = vsel %vm623, 1, 0
      %v688 = vsel %vm624, 1, 0
      %v689 = vsel %vm625, 1, 0
      %v690 = vsel %vm626, 1, 0
      %v691 = vsel %vm627, 1, 0
      %v692 = vsel %vm628, 1, 0
      %v693 = vsel %vm629, 1, 0
      %v694 = vsel %vm630, 1, 0
      %v695 = vsel %vm631, 1, 0
      %v696 = vsel %vm632, 1, 0
      %v697 = vsel %vm633, 1, 0
      %v698 = vsel %vm634, 1, 0
      %v699 = vsel %vm635, 1, 0
      %v700 = vsel %vm636, 1, 0
      %v701 = vsel %vm637, 1, 0
      %v702 = vsel %vm638, 1, 0
      %v703 = vsel %vm639, 1, 0
      %v704 = vsel %vm640, 1, 0
      %v705 = vsel %vm641, 1, 0
      %v706 = vsel %vm642, 1, 0
      %v707 = vsel %vm643, 1, 0
      %v708 = vsel %vm644, 1, 0
      %v709 = vsel %vm645, 1, 0
      %v710 = vsel %vm646, 1, 0
      %v711 = vsel %vm647, 1, 0
      %v712 = vsel %vm648, 1, 0
      %v713 = vsel %vm649, 1, 0
      %v714 = vsel %vm650, 1, 0
      %v715 = vsel %vm651, 1, 0
      %v716 = vsel %vm652, 1, 0
      %v717 = vsel %vm653, 1, 0
      %v718 = vsel %vm654, 1, 0
      %v719 = vsel %vm655, 1, 0
      %v720 = vsel %vm656, 1, 0
      %v721 = vsel %vm657, 1, 0
      %v722 = vsel %vm658, 1, 0
      %v723 = vsel %vm659, 1, 0
      %v724 = vsel %vm660, 1, 0
      %v725 = vsel %vm661, 1, 0
      %v726 = vsel %vm662, 1, 0
      %v727 = vsel %vm663, 1, 0
      %v728 = vsel %vm664, 1, 0
      %v729 = vsel %vm665, 1, 0
      %v730 = vsel %vm666, 1, 0
      %v731 = vsel %vm667, 1, 0
      %v732 = vsel %vm668, 1, 0
      %v733 = vsel %vm669, 1, 0
      %v734 = vsel %vm670, 1, 0
      %v735 = vsel %vm671, 1, 0
      %v736 = vsel %vm672, 1, 0
      %v737 = vsel %vm673, 1, 0
      %v738 = vsel %vm674, 1, 0
      %v739 = vsel %vm675, 1, 0
      %v740 = vsel %vm676, 1, 0
      %v741 = vsel %vm677, 1, 0
      %v742 = vsel %vm678, 1, 0
      %743 = vset.pattern.permute.xlu0 0
      %744 = vperm.xlu0 %743, %v679
      %v745 = vpop.permute.xlu0 %744
      %746 = vset.pattern.permute.xlu0 0
      %747 = vperm.xlu0 %746, %v680
      %v748 = vpop.permute.xlu0 %747
      %749 = vset.pattern.permute.xlu0 0
      %750 = vperm.xlu0 %749, %v681
      %v751 = vpop.permute.xlu0 %750
      %752 = vset.pattern.permute.xlu0 0
      %753 = vperm.xlu0 %752, %v682
      %v754 = vpop.permute.xlu0 %753
      %755 = vset.pattern.permute.xlu0 0
      %756 = vperm.xlu0 %755, %v683
      %v757 = vpop.permute.xlu0 %756
      %758 = vset.pattern.permute.xlu0 0
      %759 = vperm.xlu0 %758, %v684
      %v760 = vpop.permute.xlu0 %759
      %761 = vset.pattern.permute.xlu0 0
      %762 = vperm.xlu0 %761, %v685
      %v763 = vpop.permute.xlu0 %762
      %764 = vset.pattern.permute.xlu0 0
      %765 = vperm.xlu0 %764, %v686
      %v766 = vpop.permute.xlu0 %765
      %767 = vset.pattern.permute.xlu0 0
      %768 = vperm.xlu0 %767, %v687
      %v769 = vpop.permute.xlu0 %768
      %770 = vset.pattern.permute.xlu0 0
      %771 = vperm.xlu0 %770, %v688
      %v772 = vpop.permute.xlu0 %771
      %773 = vset.pattern.permute.xlu0 0
      %774 = vperm.xlu0 %773, %v689
      %v775 = vpop.permute.xlu0 %774
      %776 = vset.pattern.permute.xlu0 0
      %777 = vperm.xlu0 %776, %v690
      %v778 = vpop.permute.xlu0 %777
      %779 = vset.pattern.permute.xlu0 0
      %780 = vperm.xlu0 %779, %v691
      %v781 = vpop.permute.xlu0 %780
      %782 = vset.pattern.permute.xlu0 0
      %783 = vperm.xlu0 %782, %v692
      %v784 = vpop.permute.xlu0 %783
      %785 = vset.pattern.permute.xlu0 0
      %786 = vperm.xlu0 %785, %v693
      %v787 = vpop.permute.xlu0 %786
      %788 = vset.pattern.permute.xlu0 0
      %789 = vperm.xlu0 %788, %v694
      %v790 = vpop.permute.xlu0 %789
      %791 = vset.pattern.permute.xlu0 0
      %792 = vperm.xlu0 %791, %v695
      %v793 = vpop.permute.xlu0 %792
      %794 = vset.pattern.permute.xlu0 0
      %795 = vperm.xlu0 %794, %v696
      %v796 = vpop.permute.xlu0 %795
      %797 = vset.pattern.permute.xlu0 0
      %798 = vperm.xlu0 %797, %v697
      %v799 = vpop.permute.xlu0 %798
      %800 = vset.pattern.permute.xlu0 0
      %801 = vperm.xlu0 %800, %v698
      %v802 = vpop.permute.xlu0 %801
      %803 = vset.pattern.permute.xlu0 0
      %804 = vperm.xlu0 %803, %v699
      %v805 = vpop.permute.xlu0 %804
      %806 = vset.pattern.permute.xlu0 0
      %807 = vperm.xlu0 %806, %v700
      %v808 = vpop.permute.xlu0 %807
      %809 = vset.pattern.permute.xlu0 0
      %810 = vperm.xlu0 %809, %v701
      %v811 = vpop.permute.xlu0 %810
      %812 = vset.pattern.permute.xlu0 0
      %813 = vperm.xlu0 %812, %v702
      %v814 = vpop.permute.xlu0 %813
      %815 = vset.pattern.permute.xlu0 0
      %816 = vperm.xlu0 %815, %v703
      %v817 = vpop.permute.xlu0 %816
      %818 = vset.pattern.permute.xlu0 0
      %819 = vperm.xlu0 %818, %v704
      %v820 = vpop.permute.xlu0 %819
      %821 = vset.pattern.permute.xlu0 0
      %822 = vperm.xlu0 %821, %v705
      %v823 = vpop.permute.xlu0 %822
      %824 = vset.pattern.permute.xlu0 0
      %825 = vperm.xlu0 %824, %v706
      %v826 = vpop.permute.xlu0 %825
      %827 = vset.pattern.permute.xlu0 0
      %828 = vperm.xlu0 %827, %v707
      %v829 = vpop.permute.xlu0 %828
      %830 = vset.pattern.permute.xlu0 0
      %831 = vperm.xlu0 %830, %v708
      %v832 = vpop.permute.xlu0 %831
      %833 = vset.pattern.permute.xlu0 0
      %834 = vperm.xlu0 %833, %v709
      %v835 = vpop.permute.xlu0 %834
      %836 = vset.pattern.permute.xlu0 0
      %837 = vperm.xlu0 %836, %v710
      %v838 = vpop.permute.xlu0 %837
      %839 = vset.pattern.permute.xlu0 0
      %840 = vperm.xlu0 %839, %v711
      %v841 = vpop.permute.xlu0 %840
      %842 = vset.pattern.permute.xlu0 0
      %843 = vperm.xlu0 %842, %v712
      %v844 = vpop.permute.xlu0 %843
      %845 = vset.pattern.permute.xlu0 0
      %846 = vperm.xlu0 %845, %v713
      %v847 = vpop.permute.xlu0 %846
      %848 = vset.pattern.permute.xlu0 0
      %849 = vperm.xlu0 %848, %v714
      %v850 = vpop.permute.xlu0 %849
      %851 = vset.pattern.permute.xlu0 0
      %852 = vperm.xlu0 %851, %v715
      %v853 = vpop.permute.xlu0 %852
      %854 = vset.pattern.permute.xlu0 0
      %855 = vperm.xlu0 %854, %v716
      %v856 = vpop.permute.xlu0 %855
      %857 = vset.pattern.permute.xlu0 0
      %858 = vperm.xlu0 %857, %v717
      %v859 = vpop.permute.xlu0 %858
      %860 = vset.pattern.permute.xlu0 0
      %861 = vperm.xlu0 %860, %v718
      %v862 = vpop.permute.xlu0 %861
      %863 = vset.pattern.permute.xlu0 0
      %864 = vperm.xlu0 %863, %v719
      %v865 = vpop.permute.xlu0 %864
      %866 = vset.pattern.permute.xlu0 0
      %867 = vperm.xlu0 %866, %v720
      %v868 = vpop.permute.xlu0 %867
      %869 = vset.pattern.permute.xlu0 0
      %870 = vperm.xlu0 %869, %v721
      %v871 = vpop.permute.xlu0 %870
      %872 = vset.pattern.permute.xlu0 0
      %873 = vperm.xlu0 %872, %v722
      %v874 = vpop.permute.xlu0 %873
      %875 = vset.pattern.permute.xlu0 0
      %876 = vperm.xlu0 %875, %v723
      %v877 = vpop.permute.xlu0 %876
      %878 = vset.pattern.permute.xlu0 0
      %879 = vperm.xlu0 %878, %v724
      %v880 = vpop.permute.xlu0 %879
      %881 = vset.pattern.permute.xlu0 0
      %882 = vperm.xlu0 %881, %v725
      %v883 = vpop.permute.xlu0 %882
      %884 = vset.pattern.permute.xlu0 0
      %885 = vperm.xlu0 %884, %v726
      %v886 = vpop.permute.xlu0 %885
      %887 = vset.pattern.permute.xlu0 0
      %888 = vperm.xlu0 %887, %v727
      %v889 = vpop.permute.xlu0 %888
      %890 = vset.pattern.permute.xlu0 0
      %891 = vperm.xlu0 %890, %v728
      %v892 = vpop.permute.xlu0 %891
      %893 = vset.pattern.permute.xlu0 0
      %894 = vperm.xlu0 %893, %v729
      %v895 = vpop.permute.xlu0 %894
      %896 = vset.pattern.permute.xlu0 0
      %897 = vperm.xlu0 %896, %v730
      %v898 = vpop.permute.xlu0 %897
      %899 = vset.pattern.permute.xlu0 0
      %900 = vperm.xlu0 %899, %v731
      %v901 = vpop.permute.xlu0 %900
      %902 = vset.pattern.permute.xlu0 0
      %903 = vperm.xlu0 %902, %v732
      %v904 = vpop.permute.xlu0 %903
      %905 = vset.pattern.permute.xlu0 0
      %906 = vperm.xlu0 %905, %v733
      %v907 = vpop.permute.xlu0 %906
      %908 = vset.pattern.permute.xlu0 0
      %909 = vperm.xlu0 %908, %v734
      %v910 = vpop.permute.xlu0 %909
      %911 = vset.pattern.permute.xlu0 0
      %912 = vperm.xlu0 %911, %v735
      %v913 = vpop.permute.xlu0 %912
      %914 = vset.pattern.permute.xlu0 0
      %915 = vperm.xlu0 %914, %v736
      %v916 = vpop.permute.xlu0 %915
      %917 = vset.pattern.permute.xlu0 0
      %918 = vperm.xlu0 %917, %v737
      %v919 = vpop.permute.xlu0 %918
      %920 = vset.pattern.permute.xlu0 0
      %921 = vperm.xlu0 %920, %v738
      %v922 = vpop.permute.xlu0 %921
      %923 = vset.pattern.permute.xlu0 0
      %924 = vperm.xlu0 %923, %v739
      %v925 = vpop.permute.xlu0 %924
      %926 = vset.pattern.permute.xlu0 0
      %927 = vperm.xlu0 %926, %v740
      %v928 = vpop.permute.xlu0 %927
      %929 = vset.pattern.permute.xlu0 0
      %930 = vperm.xlu0 %929, %v741
      %v931 = vpop.permute.xlu0 %930
      %932 = vset.pattern.permute.xlu0 0
      %933 = vperm.xlu0 %932, %v742
      %v934 = vpop.permute.xlu0 %933
      %vm935 = vcmp.eq.s32.totalorder %v745, 1
      %vm936 = vcmp.eq.s32.totalorder %v748, 1
      %vm937 = vcmp.eq.s32.totalorder %v751, 1
      %vm938 = vcmp.eq.s32.totalorder %v754, 1
      %vm939 = vcmp.eq.s32.totalorder %v757, 1
      %vm940 = vcmp.eq.s32.totalorder %v760, 1
      %vm941 = vcmp.eq.s32.totalorder %v763, 1
      %vm942 = vcmp.eq.s32.totalorder %v766, 1
      %vm943 = vcmp.eq.s32.totalorder %v769, 1
      %vm944 = vcmp.eq.s32.totalorder %v772, 1
      %vm945 = vcmp.eq.s32.totalorder %v775, 1
      %vm946 = vcmp.eq.s32.totalorder %v778, 1
      %vm947 = vcmp.eq.s32.totalorder %v781, 1
      %vm948 = vcmp.eq.s32.totalorder %v784, 1
      %vm949 = vcmp.eq.s32.totalorder %v787, 1
      %vm950 = vcmp.eq.s32.totalorder %v790, 1
      %vm951 = vcmp.eq.s32.totalorder %v793, 1
      %vm952 = vcmp.eq.s32.totalorder %v796, 1
      %vm953 = vcmp.eq.s32.totalorder %v799, 1
      %vm954 = vcmp.eq.s32.totalorder %v802, 1
      %vm955 = vcmp.eq.s32.totalorder %v805, 1
      %vm956 = vcmp.eq.s32.totalorder %v808, 1
      %vm957 = vcmp.eq.s32.totalorder %v811, 1
      %vm958 = vcmp.eq.s32.totalorder %v814, 1
      %vm959 = vcmp.eq.s32.totalorder %v817, 1
      %vm960 = vcmp.eq.s32.totalorder %v820, 1
      %vm961 = vcmp.eq.s32.totalorder %v823, 1
      %vm962 = vcmp.eq.s32.totalorder %v826, 1
      %vm963 = vcmp.eq.s32.totalorder %v829, 1
      %vm964 = vcmp.eq.s32.totalorder %v832, 1
      %vm965 = vcmp.eq.s32.totalorder %v835, 1
      %vm966 = vcmp.eq.s32.totalorder %v838, 1
      %vm967 = vcmp.eq.s32.totalorder %v841, 1
      %vm968 = vcmp.eq.s32.totalorder %v844, 1
      %vm969 = vcmp.eq.s32.totalorder %v847, 1
      %vm970 = vcmp.eq.s32.totalorder %v850, 1
      %vm971 = vcmp.eq.s32.totalorder %v853, 1
      %vm972 = vcmp.eq.s32.totalorder %v856, 1
      %vm973 = vcmp.eq.s32.totalorder %v859, 1
      %vm974 = vcmp.eq.s32.totalorder %v862, 1
      %vm975 = vcmp.eq.s32.totalorder %v865, 1
      %vm976 = vcmp.eq.s32.totalorder %v868, 1
      %vm977 = vcmp.eq.s32.totalorder %v871, 1
      %vm978 = vcmp.eq.s32.totalorder %v874, 1
      %vm979 = vcmp.eq.s32.totalorder %v877, 1
      %vm980 = vcmp.eq.s32.totalorder %v880, 1
      %vm981 = vcmp.eq.s32.totalorder %v883, 1
      %vm982 = vcmp.eq.s32.totalorder %v886, 1
      %vm983 = vcmp.eq.s32.totalorder %v889, 1
      %vm984 = vcmp.eq.s32.totalorder %v892, 1
      %vm985 = vcmp.eq.s32.totalorder %v895, 1
      %vm986 = vcmp.eq.s32.totalorder %v898, 1
      %vm987 = vcmp.eq.s32.totalorder %v901, 1
      %vm988 = vcmp.eq.s32.totalorder %v904, 1
      %vm989 = vcmp.eq.s32.totalorder %v907, 1
      %vm990 = vcmp.eq.s32.totalorder %v910, 1
      %vm991 = vcmp.eq.s32.totalorder %v913, 1
      %vm992 = vcmp.eq.s32.totalorder %v916, 1
      %vm993 = vcmp.eq.s32.totalorder %v919, 1
      %vm994 = vcmp.eq.s32.totalorder %v922, 1
      %vm995 = vcmp.eq.s32.totalorder %v925, 1
      %vm996 = vcmp.eq.s32.totalorder %v928, 1
      %vm997 = vcmp.eq.s32.totalorder %v931, 1
      %vm998 = vcmp.eq.s32.totalorder %v934, 1
      %v999 = vsel %vm935, %v487, 0.0
      %v1000 = vsel %vm936, %v488, 0.0
      %v1001 = vsel %vm937, %v489, 0.0
      %v1002 = vsel %vm938, %v490, 0.0
      %v1003 = vsel %vm939, %v491, 0.0
      %v1004 = vsel %vm940, %v492, 0.0
      %v1005 = vsel %vm941, %v493, 0.0
      %v1006 = vsel %vm942, %v494, 0.0
      %v1007 = vsel %vm943, %v495, 0.0
      %v1008 = vsel %vm944, %v496, 0.0
      %v1009 = vsel %vm945, %v497, 0.0
      %v1010 = vsel %vm946, %v498, 0.0
      %v1011 = vsel %vm947, %v499, 0.0
      %v1012 = vsel %vm948, %v500, 0.0
      %v1013 = vsel %vm949, %v501, 0.0
      %v1014 = vsel %vm950, %v502, 0.0
      %v1015 = vsel %vm951, %v503, 0.0
      %v1016 = vsel %vm952, %v504, 0.0
      %v1017 = vsel %vm953, %v505, 0.0
      %v1018 = vsel %vm954, %v506, 0.0
      %v1019 = vsel %vm955, %v507, 0.0
      %v1020 = vsel %vm956, %v508, 0.0
      %v1021 = vsel %vm957, %v509, 0.0
      %v1022 = vsel %vm958, %v510, 0.0
      %v1023 = vsel %vm959, %v511, 0.0
      %v1024 = vsel %vm960, %v512, 0.0
      %v1025 = vsel %vm961, %v513, 0.0
      %v1026 = vsel %vm962, %v514, 0.0
      %v1027 = vsel %vm963, %v515, 0.0
      %v1028 = vsel %vm964, %v516, 0.0
      %v1029 = vsel %vm965, %v517, 0.0
      %v1030 = vsel %vm966, %v518, 0.0
      %v1031 = vsel %vm967, %v519, 0.0
      %v1032 = vsel %vm968, %v520, 0.0
      %v1033 = vsel %vm969, %v521, 0.0
      %v1034 = vsel %vm970, %v522, 0.0
      %v1035 = vsel %vm971, %v523, 0.0
      %v1036 = vsel %vm972, %v524, 0.0
      %v1037 = vsel %vm973, %v525, 0.0
      %v1038 = vsel %vm974, %v526, 0.0
      %v1039 = vsel %vm975, %v527, 0.0
      %v1040 = vsel %vm976, %v528, 0.0
      %v1041 = vsel %vm977, %v529, 0.0
      %v1042 = vsel %vm978, %v530, 0.0
      %v1043 = vsel %vm979, %v531, 0.0
      %v1044 = vsel %vm980, %v532, 0.0
      %v1045 = vsel %vm981, %v533, 0.0
      %v1046 = vsel %vm982, %v534, 0.0
      %v1047 = vsel %vm983, %v535, 0.0
      %v1048 = vsel %vm984, %v536, 0.0
      %v1049 = vsel %vm985, %v537, 0.0
      %v1050 = vsel %vm986, %v538, 0.0
      %v1051 = vsel %vm987, %v539, 0.0
      %v1052 = vsel %vm988, %v540, 0.0
      %v1053 = vsel %vm989, %v541, 0.0
      %v1054 = vsel %vm990, %v542, 0.0
      %v1055 = vsel %vm991, %v543, 0.0
      %v1056 = vsel %vm992, %v544, 0.0
      %v1057 = vsel %vm993, %v545, 0.0
      %v1058 = vsel %vm994, %v546, 0.0
      %v1059 = vsel %vm995, %v547, 0.0
      %v1060 = vsel %vm996, %v548, 0.0
      %v1061 = vsel %vm997, %v549, 0.0
      %v1062 = vsel %vm998, %v550, 0.0
      %v1063 = vpack.c.bf16 %v999, %v999
      %v1064 = vpack.c.bf16 %v1000, %v1000
      %v1065 = vpack.c.bf16 %v1001, %v1001
      %v1066 = vpack.c.bf16 %v1002, %v1002
      %v1067 = vpack.c.bf16 %v1003, %v1003
      %v1068 = vpack.c.bf16 %v1004, %v1004
      %v1069 = vpack.c.bf16 %v1005, %v1005
      %v1070 = vpack.c.bf16 %v1006, %v1006
      %v1071 = vpack.c.bf16 %v1007, %v1007
      %v1072 = vpack.c.bf16 %v1008, %v1008
      %v1073 = vpack.c.bf16 %v1009, %v1009
      %v1074 = vpack.c.bf16 %v1010, %v1010
      %v1075 = vpack.c.bf16 %v1011, %v1011
      %v1076 = vpack.c.bf16 %v1012, %v1012
      %v1077 = vpack.c.bf16 %v1013, %v1013
      %v1078 = vpack.c.bf16 %v1014, %v1014
      %v1079 = vpack.c.bf16 %v1015, %v1015
      %v1080 = vpack.c.bf16 %v1016, %v1016
      %v1081 = vpack.c.bf16 %v1017, %v1017
      %v1082 = vpack.c.bf16 %v1018, %v1018
      %v1083 = vpack.c.bf16 %v1019, %v1019
      %v1084 = vpack.c.bf16 %v1020, %v1020
      %v1085 = vpack.c.bf16 %v1021, %v1021
      %v1086 = vpack.c.bf16 %v1022, %v1022
      %v1087 = vpack.c.bf16 %v1023, %v1023
      %v1088 = vpack.c.bf16 %v1024, %v1024
      %v1089 = vpack.c.bf16 %v1025, %v1025
      %v1090 = vpack.c.bf16 %v1026, %v1026
      %v1091 = vpack.c.bf16 %v1027, %v1027
      %v1092 = vpack.c.bf16 %v1028, %v1028
      %v1093 = vpack.c.bf16 %v1029, %v1029
      %v1094 = vpack.c.bf16 %v1030, %v1030
      %v1095 = vpack.c.bf16 %v1031, %v1031
      %v1096 = vpack.c.bf16 %v1032, %v1032
      %v1097 = vpack.c.bf16 %v1033, %v1033
      %v1098 = vpack.c.bf16 %v1034, %v1034
      %v1099 = vpack.c.bf16 %v1035, %v1035
      %v1100 = vpack.c.bf16 %v1036, %v1036
      %v1101 = vpack.c.bf16 %v1037, %v1037
      %v1102 = vpack.c.bf16 %v1038, %v1038
      %v1103 = vpack.c.bf16 %v1039, %v1039
      %v1104 = vpack.c.bf16 %v1040, %v1040
      %v1105 = vpack.c.bf16 %v1041, %v1041
      %v1106 = vpack.c.bf16 %v1042, %v1042
      %v1107 = vpack.c.bf16 %v1043, %v1043
      %v1108 = vpack.c.bf16 %v1044, %v1044
      %v1109 = vpack.c.bf16 %v1045, %v1045
      %v1110 = vpack.c.bf16 %v1046, %v1046
      %v1111 = vpack.c.bf16 %v1047, %v1047
      %v1112 = vpack.c.bf16 %v1048, %v1048
      %v1113 = vpack.c.bf16 %v1049, %v1049
      %v1114 = vpack.c.bf16 %v1050, %v1050
      %v1115 = vpack.c.bf16 %v1051, %v1051
      %v1116 = vpack.c.bf16 %v1052, %v1052
      %v1117 = vpack.c.bf16 %v1053, %v1053
      %v1118 = vpack.c.bf16 %v1054, %v1054
      %v1119 = vpack.c.bf16 %v1055, %v1055
      %v1120 = vpack.c.bf16 %v1056, %v1056
      %v1121 = vpack.c.bf16 %v1057, %v1057
      %v1122 = vpack.c.bf16 %v1058, %v1058
      %v1123 = vpack.c.bf16 %v1059, %v1059
      %v1124 = vpack.c.bf16 %v1060, %v1060
      %v1125 = vpack.c.bf16 %v1061, %v1061
      %v1126 = vpack.c.bf16 %v1062, %v1062
      %1127 = vst [vmem:[%s221] sm:$0xf] %v1063
      %1128 = vst [vmem:[%s221 + $0x4] sm:$0xf] %v1064
      %1129 = vst [vmem:[%s221 + $0x8] sm:$0xf] %v1065
      %1130 = vst [vmem:[%s221 + $0xc] sm:$0xf] %v1066
      %1131 = vst [vmem:[%s221 + $0x10] sm:$0xf] %v1067
      %1132 = vst [vmem:[%s221 + $0x14] sm:$0xf] %v1068
      %1133 = vst [vmem:[%s221 + $0x18] sm:$0xf] %v1069
      %1134 = vst [vmem:[%s221 + $0x1c] sm:$0xf] %v1070
      %1135 = vst [vmem:[%s221 + $0x20] sm:$0xf] %v1071
      %1136 = vst [vmem:[%s221 + $0x24] sm:$0xf] %v1072
      %1137 = vst [vmem:[%s221 + $0x28] sm:$0xf] %v1073
      %1138 = vst [vmem:[%s221 + $0x2c] sm:$0xf] %v1074
      %1139 = vst [vmem:[%s221 + $0x30] sm:$0xf] %v1075
      %1140 = vst [vmem:[%s221 + $0x34] sm:$0xf] %v1076
      %1141 = vst [vmem:[%s221 + $0x38] sm:$0xf] %v1077
      %1142 = vst [vmem:[%s221 + $0x3c] sm:$0xf] %v1078
      %1143 = vst [vmem:[%s221 + $0x40] sm:$0xf] %v1079
      %1144 = vst [vmem:[%s221 + $0x44] sm:$0xf] %v1080
      %1145 = vst [vmem:[%s221 + $0x48] sm:$0xf] %v1081
      %1146 = vst [vmem:[%s221 + $0x4c] sm:$0xf] %v1082
      %1147 = vst [vmem:[%s221 + $0x50] sm:$0xf] %v1083
      %1148 = vst [vmem:[%s221 + $0x54] sm:$0xf] %v1084
      %1149 = vst [vmem:[%s221 + $0x58] sm:$0xf] %v1085
      %1150 = vst [vmem:[%s221 + $0x5c] sm:$0xf] %v1086
      %1151 = vst [vmem:[%s221 + $0x60] sm:$0xf] %v1087
      %1152 = vst [vmem:[%s221 + $0x64] sm:$0xf] %v1088
      %1153 = vst [vmem:[%s221 + $0x68] sm:$0xf] %v1089
      %1154 = vst [vmem:[%s221 + $0x6c] sm:$0xf] %v1090
      %1155 = vst [vmem:[%s221 + $0x70] sm:$0xf] %v1091
      %1156 = vst [vmem:[%s221 + $0x74] sm:$0xf] %v1092
      %1157 = vst [vmem:[%s221 + $0x78] sm:$0xf] %v1093
      %1158 = vst [vmem:[%s221 + $0x7c] sm:$0xf] %v1094
      %1159 = vst [vmem:[%s221 + $0x80] sm:$0xf] %v1095
      %1160 = vst [vmem:[%s221 + $0x84] sm:$0xf] %v1096
      %1161 = vst [vmem:[%s221 + $0x88] sm:$0xf] %v1097
      %1162 = vst [vmem:[%s221 + $0x8c] sm:$0xf] %v1098
      %1163 = vst [vmem:[%s221 + $0x90] sm:$0xf] %v1099
      %1164 = vst [vmem:[%s221 + $0x94] sm:$0xf] %v1100
      %1165 = vst [vmem:[%s221 + $0x98] sm:$0xf] %v1101
      %1166 = vst [vmem:[%s221 + $0x9c] sm:$0xf] %v1102
      %1167 = vst [vmem:[%s221 + $0xa0] sm:$0xf] %v1103
      %1168 = vst [vmem:[%s221 + $0xa4] sm:$0xf] %v1104
      %1169 = vst [vmem:[%s221 + $0xa8] sm:$0xf] %v1105
      %1170 = vst [vmem:[%s221 + $0xac] sm:$0xf] %v1106
      %1171 = vst [vmem:[%s221 + $0xb0] sm:$0xf] %v1107
      %1172 = vst [vmem:[%s221 + $0xb4] sm:$0xf] %v1108
      %1173 = vst [vmem:[%s221 + $0xb8] sm:$0xf] %v1109
      %1174 = vst [vmem:[%s221 + $0xbc] sm:$0xf] %v1110
      %1175 = vst [vmem:[%s221 + $0xc0] sm:$0xf] %v1111
      %1176 = vst [vmem:[%s221 + $0xc4] sm:$0xf] %v1112
      %1177 = vst [vmem:[%s221 + $0xc8] sm:$0xf] %v1113
      %1178 = vst [vmem:[%s221 + $0xcc] sm:$0xf] %v1114
      %1179 = vst [vmem:[%s221 + $0xd0] sm:$0xf] %v1115
      %1180 = vst [vmem:[%s221 + $0xd4] sm:$0xf] %v1116
      %1181 = vst [vmem:[%s221 + $0xd8] sm:$0xf] %v1117
      %1182 = vst [vmem:[%s221 + $0xdc] sm:$0xf] %v1118
      %1183 = vst [vmem:[%s221 + $0xe0] sm:$0xf] %v1119
      %1184 = vst [vmem:[%s221 + $0xe4] sm:$0xf] %v1120
      %1185 = vst [vmem:[%s221 + $0xe8] sm:$0xf] %v1121
      %1186 = vst [vmem:[%s221 + $0xec] sm:$0xf] %v1122
      %1187 = vst [vmem:[%s221 + $0xf0] sm:$0xf] %v1123
      %1188 = vst [vmem:[%s221 + $0xf4] sm:$0xf] %v1124
      %1189 = vst [vmem:[%s221 + $0xf8] sm:$0xf] %v1125
      %1190 = vst [vmem:[%s221 + $0xfc] sm:$0xf] %v1126
      %s1191 = smul.u32 64, %s15
      %p1192 = scmp.lt.s32.totalorder %s1191, 191
      %s1193 = scalar_select %p1192, %s1191, 191
      %s1194 = smul.addr %s1193, 4
      %s1195 = scalar_lea.vmem %s4, %s1194
      // Predicated region
      $region37: #{down_forward.7} parent=35 // pred_check
        %p1196 = pneg %p127
      $region38: #{down_forward.7} parent=35 // pred_check_branch
        %1198 = sbr.rel (%p1196) target = $region40
      $region39: #{down_forward.7} parent=35 // pred_region
        %s1199 = smul.u32 64, %s15
      $region40: #{down_forward.7} parent=35 // pred_fallthru
        _
    $region36: #{down_forward.7} parent=5 // pred_fallthru
      _
    %p1200 = scmp.le.s32.totalorder 2, %s10
    // Predicated region
    $region41: #{down_forward.7} parent=5 // pred_check
      %p1201 = pneg %p1200
    $region42: #{down_forward.7} parent=5 // pred_check_branch
      %1203 = sbr.rel (%p1201) target = $region44
    $region43: #{down_forward.7} parent=5 // pred_region
      %s1204 = ssub.s32 %s10, 2
      // Predicated region
      $region45: #{down_forward.7} parent=43 // pred_check
        %p1205 = pneg %p133
      $region46: #{down_forward.7} parent=43 // pred_check_branch
        %1207 = sbr.rel (%p1205) target = $region48
      $region47: #{down_forward.7} parent=43 // pred_region
        %s1208 = smul.u32 64, %s16
        %p1209 = scmp.lt.s32.totalorder %s1208, 191
        %s1210 = scalar_select %p1209, %s1208, 191
        %s1211 = smul.addr %s1210, 4
        %s1212 = scalar_lea.vmem %s4, %s1211
      $region48: #{down_forward.7} parent=43 // pred_fallthru
        _
    $region44: #{down_forward.7} parent=5 // pred_fallthru
      _
  $region6: #{down_forward.7} parent=0 // loop_footer
    %s14 = sadd.s32 1, %s10
  $region7: #{down_forward.7} parent=0 // loop_footer_branch
    %9 = sbr.rel target = $region3
  $region8: #{down_forward.7} parent=0 // loop_exit
    _

// kernel: down_forward.9
$region0: #{down_forward.9}
  #allocation0 [shape = 'u32[]', space=smem, size = 0x4, offset = 0x4, fixed_abs, tag = 'smem constant byte address 0x4 - core index']
  #allocation1 [shape = 'u32[72,128]{1,0:T(1,128)}', space=vmem, size = 0x9000, scoped, tag = 'internal scratch']
  %s0 = inlined_call_operand.vmem [shape: bf16[1536,128], index: 0, kind: input, shape index: {}]
  %s1 = inlined_call_operand.vmem [shape: f32[1,128], index: 1, kind: input, shape index: {}]
  %s2 = inlined_call_operand.vmem [shape: f32[1,128], index: 2, kind: input, shape index: {}]
  %s3 = inlined_call_operand.vmem [shape: f32[1536,1], index: 3, kind: input, shape index: {}]
  %s4 = inlined_call_operand.vmem [shape: f32[1536,128], index: 4, kind: output, shape index: {}]
  %s5 = sld [smem:[#allocation0]]
  $region49: #{down_forward.9} parent=0
    _
  %s7 = ssub.s32 1, %s5
  %s8 = scalar_select 0, %s7, %s5
  loop: start=0, step=1, limit=5
  $region2: #{down_forward.9} parent=0 // loop_pre_header
    _
  $region3: #{down_forward.9} parent=0 // loop_header
    %s10 = sphi 0, %s14
    %p11 = scmp.ge.s32.totalorder %s10, 5
    %s20 = sphi 0, %s22
    %s23 = sphi 0, %s20
    %s24 = sphi 0, %s23
    %s40 = sphi 0, %s24
    %s44 = sphi 0, %s44
    %s46 = sphi 0, %s44
    %s47 = sphi 0, %s46
    %s61 = sphi 0, %s47
    %s65 = sphi 0, %s65
    %s67 = sphi 0, %s65
    %s68 = sphi 0, %s67
    %s82 = sphi 0, %s68
    %s88 = sphi 0, %s90
    %s91 = sphi 0, %s88
    %s92 = sphi 0, %s91
    %s108 = sphi 0, %s92
    %s114 = sphi 0, %s116
    %s117 = sphi 0, %s114
    %s118 = sphi 0, %s117
    %s134 = sphi 0, %s118
  $region4: #{down_forward.9} parent=0 // loop_header_branch
    %13 = sbr.rel (%p11) target = $region8
  $region5: #{down_forward.9} parent=0 // loop_body
    %s15 = ssub.s32 %s10, 1
    %s16 = ssub.s32 %s10, 2
    %s17 = sadd.s32 %s10, 1
    %s18 = ssub.s32 %s10, %s17
    %p19 = scmp.eq.s32.totalorder %s18, 0
    %s21 = sadd.s32 %s20, 1
    %s22 = scalar_select %p19, %s20, %s21
    %p25 = pneg %p19
    %p26 = scmp.eq.s32.totalorder %s10, 2
    %p27 = por %p25, %p26
    %p28 = scmp.ne.s32.totalorder %s20, %s23
    %p29 = scmp.eq.s32.totalorder %s10, 0
    %p30 = por %p28, %p29
    %p31 = scmp.ne.s32.totalorder %s20, %s23
    %p32 = scmp.eq.s32.totalorder %s15, 2
    %p33 = por %p31, %p32
    %p34 = scmp.ne.s32.totalorder %s23, %s24
    %p35 = scmp.eq.s32.totalorder %s15, 0
    %p36 = por %p34, %p35
    %p37 = scmp.ne.s32.totalorder %s23, %s24
    %p38 = scmp.eq.s32.totalorder %s16, 2
    %p39 = por %p37, %p38
    %p41 = scmp.ne.s32.totalorder %s24, %s40
    %p42 = scmp.eq.s32.totalorder %s16, 0
    %p43 = por %p41, %p42
    %s45 = sadd.s32 %s44, 1
    %p48 = scmp.eq.s32.totalorder %s10, 2
    %p49 = scmp.ne.s32.totalorder %s44, %s46
    %p50 = scmp.eq.s32.totalorder %s10, 0
    %p51 = por %p49, %p50
    %p52 = scmp.ne.s32.totalorder %s44, %s46
    %p53 = scmp.eq.s32.totalorder %s15, 2
    %p54 = por %p52, %p53
    %p55 = scmp.ne.s32.totalorder %s46, %s47
    %p56 = scmp.eq.s32.totalorder %s15, 0
    %p57 = por %p55, %p56
    %p58 = scmp.ne.s32.totalorder %s46, %s47
    %p59 = scmp.eq.s32.totalorder %s16, 2
    %p60 = por %p58, %p59
    %p62 = scmp.ne.s32.totalorder %s47, %s61
    %p63 = scmp.eq.s32.totalorder %s16, 0
    %p64 = por %p62, %p63
    %s66 = sadd.s32 %s65, 1
    %p69 = scmp.eq.s32.totalorder %s10, 2
    %p70 = scmp.ne.s32.totalorder %s65, %s67
    %p71 = scmp.eq.s32.totalorder %s10, 0
    %p72 = por %p70, %p71
    %p73 = scmp.ne.s32.totalorder %s65, %s67
    %p74 = scmp.eq.s32.totalorder %s15, 2
    %p75 = por %p73, %p74
    %p76 = scmp.ne.s32.totalorder %s67, %s68
    %p77 = scmp.eq.s32.totalorder %s15, 0
    %p78 = por %p76, %p77
    %p79 = scmp.ne.s32.totalorder %s67, %s68
    %p80 = scmp.eq.s32.totalorder %s16, 2
    %p81 = por %p79, %p80
    %p83 = scmp.ne.s32.totalorder %s68, %s82
    %p84 = scmp.eq.s32.totalorder %s16, 0
    %p85 = por %p83, %p84
    %s86 = ssub.s32 %s10, %s17
    %p87 = scmp.eq.s32.totalorder %s86, 0
    %s89 = sadd.s32 %s88, 1
    %s90 = scalar_select %p87, %s88, %s89
    %p93 = pneg %p87
    %p94 = scmp.eq.s32.totalorder %s10, 2
    %p95 = por %p93, %p94
    %p96 = scmp.ne.s32.totalorder %s88, %s91
    %p97 = scmp.eq.s32.totalorder %s10, 0
    %p98 = por %p96, %p97
    %p99 = scmp.ne.s32.totalorder %s88, %s91
    %p100 = scmp.eq.s32.totalorder %s15, 2
    %p101 = por %p99, %p100
    %p102 = scmp.ne.s32.totalorder %s91, %s92
    %p103 = scmp.eq.s32.totalorder %s15, 0
    %p104 = por %p102, %p103
    %p105 = scmp.ne.s32.totalorder %s91, %s92
    %p106 = scmp.eq.s32.totalorder %s16, 2
    %p107 = por %p105, %p106
    %p109 = scmp.ne.s32.totalorder %s92, %s108
    %p110 = scmp.eq.s32.totalorder %s16, 0
    %p111 = por %p109, %p110
    %s112 = ssub.s32 %s10, %s17
    %p113 = scmp.eq.s32.totalorder %s112, 0
    %s115 = sadd.s32 %s114, 1
    %s116 = scalar_select %p113, %s114, %s115
    %p119 = pneg %p113
    %p120 = scmp.eq.s32.totalorder %s10, 2
    %p121 = por %p119, %p120
    %p122 = scmp.ne.s32.totalorder %s114, %s117
    %p123 = scmp.eq.s32.totalorder %s10, 0
    %p124 = por %p122, %p123
    %p125 = scmp.ne.s32.totalorder %s114, %s117
    %p126 = scmp.eq.s32.totalorder %s15, 2
    %p127 = por %p125, %p126
    %p128 = scmp.ne.s32.totalorder %s117, %s118
    %p129 = scmp.eq.s32.totalorder %s15, 0
    %p130 = por %p128, %p129
    %p131 = scmp.ne.s32.totalorder %s117, %s118
    %p132 = scmp.eq.s32.totalorder %s16, 2
    %p133 = por %p131, %p132
    %p135 = scmp.ne.s32.totalorder %s118, %s134
    %p136 = scmp.eq.s32.totalorder %s16, 0
    %p137 = por %p135, %p136
    %p138 = scmp.le.s32.totalorder 1, %s10
    %p139 = scmp.lt.s32.totalorder %s10, 4
    %p140 = pnand %p138, %p139
    %p141 = pneg %p140
    // Predicated region
    $region9: #{down_forward.9} parent=5 // pred_check
      _
    $region10: #{down_forward.9} parent=5 // pred_check_branch
      %143 = sbr.rel (%p140) target = $region12
    $region11: #{down_forward.9} parent=5 // pred_region
      %s144 = ssub.s32 %s10, 1
      // Predicated region
      $region13: #{down_forward.9} parent=11 // pred_check
        %p145 = pneg %p57
      $region14: #{down_forward.9} parent=11 // pred_check_branch
        %147 = sbr.rel (%p145) target = $region16
      $region15: #{down_forward.9} parent=11 // pred_region
        _
      $region16: #{down_forward.9} parent=11 // pred_fallthru
        _
      // Predicated region
      $region17: #{down_forward.9} parent=11 // pred_check
        %p148 = pneg %p78
      $region18: #{down_forward.9} parent=11 // pred_check_branch
        %150 = sbr.rel (%p148) target = $region20
      $region19: #{down_forward.9} parent=11 // pred_region
        _
      $region20: #{down_forward.9} parent=11 // pred_fallthru
        _
    $region12: #{down_forward.9} parent=5 // pred_fallthru
      _
    %p151 = scmp.lt.s32.totalorder %s10, 3
    // Predicated region
    $region21: #{down_forward.9} parent=5 // pred_check
      %p152 = pneg %p151
    $region22: #{down_forward.9} parent=5 // pred_check_branch
      %154 = sbr.rel (%p152) target = $region24
    $region23: #{down_forward.9} parent=5 // pred_region
      // Predicated region
      $region25: #{down_forward.9} parent=23 // pred_check
        %p155 = pneg %p30
      $region26: #{down_forward.9} parent=23 // pred_check_branch
        %157 = sbr.rel (%p155) target = $region28
      $region27: #{down_forward.9} parent=23 // pred_region
        %s158 = smul.u32 64, %s10
        %p159 = scmp.lt.s32.totalorder %s158, 191
        %s160 = scalar_select %p159, %s158, 191
        %s161 = smul.addr %s160, 4
        %s162 = scalar_lea.vmem %s0, %s161
        %s163 = smul.u32 64, %s10
      $region28: #{down_forward.9} parent=23 // pred_fallthru
        _
      // Predicated region
      $region29: #{down_forward.9} parent=23 // pred_check
        %p164 = pneg %p98
      $region30: #{down_forward.9} parent=23 // pred_check_branch
        %166 = sbr.rel (%p164) target = $region32
      $region31: #{down_forward.9} parent=23 // pred_region
        %s167 = smul.u32 64, %s10
        %p168 = scmp.lt.s32.totalorder %s167, 191
        %s169 = scalar_select %p168, %s167, 191
        %s170 = smul.addr %s169, 8
        %s171 = scalar_lea.vmem %s3, %s170
        %s172 = smul.u32 64, %s10
      $region32: #{down_forward.9} parent=23 // pred_fallthru
        _
    $region24: #{down_forward.9} parent=5 // pred_fallthru
      _
    %p173 = scmp.le.s32.totalorder 1, %s10
    %p174 = scmp.lt.s32.totalorder %s10, 4
    %p175 = pnand %p173, %p174
    %p176 = pneg %p175
    // Predicated region
    $region33: #{down_forward.9} parent=5 // pred_check
      _
    $region34: #{down_forward.9} parent=5 // pred_check_branch
      %178 = sbr.rel (%p175) target = $region36
    $region35: #{down_forward.9} parent=5 // pred_region
      %s179 = ssub.s32 %s10, 1
      %s180 = smul.u32 64, %s15
      %p181 = scmp.lt.s32.totalorder %s180, 191
      %s182 = scalar_select %p181, %s180, 191
      %s183 = smul.addr %s182, 4
      %s184 = scalar_lea.vmem %s0, %s183
      %p185 = pneg %p36
      %p186 = pneg %p33
      %p187 = pneg %p57
      %p188 = pneg %p54
      %p189 = pneg %p78
      %p190 = pneg %p75
      %s191 = smul.u32 64, %s15
      %p192 = scmp.lt.s32.totalorder %s191, 191
      %s193 = scalar_select %p192, %s191, 191
      %s194 = smul.addr %s193, 8
      %s195 = scalar_lea.vmem %s3, %s194
      %p196 = pneg %p104
      %p197 = pneg %p101
      %p198 = pneg %p130
      %p199 = pneg %p127
      %s200 = smul.u32 64, %s15
      %p201 = scmp.lt.s32.totalorder %s200, 191
      %s202 = scalar_select %p201, %s200, 191
      %s203 = smul.addr %s202, 8
      %s204 = scalar_lea.vmem %s4, %s203
      %s205 = smul.u32 64, %s15
      %p206 = scmp.lt.s32.totalorder %s205, 191
      %s207 = scalar_select %p206, %s205, 191
      %s208 = smul.addr %s207, 4
      %s209 = scalar_lea.vmem %s0, %s208
      %s210 = smul.u32 64, %s15
      %s211 = smul.u32 64, %s15
      %p212 = scmp.lt.s32.totalorder %s211, 191
      %s213 = scalar_select %p212, %s211, 191
      %s214 = smul.addr %s213, 8
      %s215 = scalar_lea.vmem %s3, %s214
      %s216 = smul.u32 64, %s15
      %s217 = smul.u32 64, %s15
      %p218 = scmp.lt.s32.totalorder %s217, 191
      %s219 = scalar_select %p218, %s217, 191
      %s220 = smul.addr %s219, 8
      %s221 = scalar_lea.vmem %s4, %s220
      %s222 = smul.u32 64, %s15
      %v223 = vld [vmem:[%s209] sm:$0xf]
      %v224 = vld [vmem:[%s209 + $0x4] sm:$0xf]
      %v225 = vld [vmem:[%s209 + $0x8] sm:$0xf]
      %v226 = vld [vmem:[%s209 + $0xc] sm:$0xf]
      %v227 = vld [vmem:[%s209 + $0x10] sm:$0xf]
      %v228 = vld [vmem:[%s209 + $0x14] sm:$0xf]
      %v229 = vld [vmem:[%s209 + $0x18] sm:$0xf]
      %v230 = vld [vmem:[%s209 + $0x1c] sm:$0xf]
      %v231 = vld [vmem:[%s209 + $0x20] sm:$0xf]
      %v232 = vld [vmem:[%s209 + $0x24] sm:$0xf]
      %v233 = vld [vmem:[%s209 + $0x28] sm:$0xf]
      %v234 = vld [vmem:[%s209 + $0x2c] sm:$0xf]
      %v235 = vld [vmem:[%s209 + $0x30] sm:$0xf]
      %v236 = vld [vmem:[%s209 + $0x34] sm:$0xf]
      %v237 = vld [vmem:[%s209 + $0x38] sm:$0xf]
      %v238 = vld [vmem:[%s209 + $0x3c] sm:$0xf]
      %v239 = vld [vmem:[%s209 + $0x40] sm:$0xf]
      %v240 = vld [vmem:[%s209 + $0x44] sm:$0xf]
      %v241 = vld [vmem:[%s209 + $0x48] sm:$0xf]
      %v242 = vld [vmem:[%s209 + $0x4c] sm:$0xf]
      %v243 = vld [vmem:[%s209 + $0x50] sm:$0xf]
      %v244 = vld [vmem:[%s209 + $0x54] sm:$0xf]
      %v245 = vld [vmem:[%s209 + $0x58] sm:$0xf]
      %v246 = vld [vmem:[%s209 + $0x5c] sm:$0xf]
      %v247 = vld [vmem:[%s209 + $0x60] sm:$0xf]
      %v248 = vld [vmem:[%s209 + $0x64] sm:$0xf]
      %v249 = vld [vmem:[%s209 + $0x68] sm:$0xf]
      %v250 = vld [vmem:[%s209 + $0x6c] sm:$0xf]
      %v251 = vld [vmem:[%s209 + $0x70] sm:$0xf]
      %v252 = vld [vmem:[%s209 + $0x74] sm:$0xf]
      %v253 = vld [vmem:[%s209 + $0x78] sm:$0xf]
      %v254 = vld [vmem:[%s209 + $0x7c] sm:$0xf]
      %v255 = vld [vmem:[%s209 + $0x80] sm:$0xf]
      %v256 = vld [vmem:[%s209 + $0x84] sm:$0xf]
      %v257 = vld [vmem:[%s209 + $0x88] sm:$0xf]
      %v258 = vld [vmem:[%s209 + $0x8c] sm:$0xf]
      %v259 = vld [vmem:[%s209 + $0x90] sm:$0xf]
      %v260 = vld [vmem:[%s209 + $0x94] sm:$0xf]
      %v261 = vld [vmem:[%s209 + $0x98] sm:$0xf]
      %v262 = vld [vmem:[%s209 + $0x9c] sm:$0xf]
      %v263 = vld [vmem:[%s209 + $0xa0] sm:$0xf]
      %v264 = vld [vmem:[%s209 + $0xa4] sm:$0xf]
      %v265 = vld [vmem:[%s209 + $0xa8] sm:$0xf]
      %v266 = vld [vmem:[%s209 + $0xac] sm:$0xf]
      %v267 = vld [vmem:[%s209 + $0xb0] sm:$0xf]
      %v268 = vld [vmem:[%s209 + $0xb4] sm:$0xf]
      %v269 = vld [vmem:[%s209 + $0xb8] sm:$0xf]
      %v270 = vld [vmem:[%s209 + $0xbc] sm:$0xf]
      %v271 = vld [vmem:[%s209 + $0xc0] sm:$0xf]
      %v272 = vld [vmem:[%s209 + $0xc4] sm:$0xf]
      %v273 = vld [vmem:[%s209 + $0xc8] sm:$0xf]
      %v274 = vld [vmem:[%s209 + $0xcc] sm:$0xf]
      %v275 = vld [vmem:[%s209 + $0xd0] sm:$0xf]
      %v276 = vld [vmem:[%s209 + $0xd4] sm:$0xf]
      %v277 = vld [vmem:[%s209 + $0xd8] sm:$0xf]
      %v278 = vld [vmem:[%s209 + $0xdc] sm:$0xf]
      %v279 = vld [vmem:[%s209 + $0xe0] sm:$0xf]
      %v280 = vld [vmem:[%s209 + $0xe4] sm:$0xf]
      %v281 = vld [vmem:[%s209 + $0xe8] sm:$0xf]
      %v282 = vld [vmem:[%s209 + $0xec] sm:$0xf]
      %v283 = vld [vmem:[%s209 + $0xf0] sm:$0xf]
      %v284 = vld [vmem:[%s209 + $0xf4] sm:$0xf]
      %v285 = vld [vmem:[%s209 + $0xf8] sm:$0xf]
      %v286 = vld [vmem:[%s209 + $0xfc] sm:$0xf]
      %v287 = vunpack.c.l.bf16 %v223
      %v288 = vunpack.c.l.bf16 %v224
      %v289 = vunpack.c.l.bf16 %v225
      %v290 = vunpack.c.l.bf16 %v226
      %v291 = vunpack.c.l.bf16 %v227
      %v292 = vunpack.c.l.bf16 %v228
      %v293 = vunpack.c.l.bf16 %v229
      %v294 = vunpack.c.l.bf16 %v230
      %v295 = vunpack.c.l.bf16 %v231
      %v296 = vunpack.c.l.bf16 %v232
      %v297 = vunpack.c.l.bf16 %v233
      %v298 = vunpack.c.l.bf16 %v234
      %v299 = vunpack.c.l.bf16 %v235
      %v300 = vunpack.c.l.bf16 %v236
      %v301 = vunpack.c.l.bf16 %v237
      %v302 = vunpack.c.l.bf16 %v238
      %v303 = vunpack.c.l.bf16 %v239
      %v304 = vunpack.c.l.bf16 %v240
      %v305 = vunpack.c.l.bf16 %v241
      %v306 = vunpack.c.l.bf16 %v242
      %v307 = vunpack.c.l.bf16 %v243
      %v308 = vunpack.c.l.bf16 %v244
      %v309 = vunpack.c.l.bf16 %v245
      %v310 = vunpack.c.l.bf16 %v246
      %v311 = vunpack.c.l.bf16 %v247
      %v312 = vunpack.c.l.bf16 %v248
      %v313 = vunpack.c.l.bf16 %v249
      %v314 = vunpack.c.l.bf16 %v250
      %v315 = vunpack.c.l.bf16 %v251
      %v316 = vunpack.c.l.bf16 %v252
      %v317 = vunpack.c.l.bf16 %v253
      %v318 = vunpack.c.l.bf16 %v254
      %v319 = vunpack.c.l.bf16 %v255
      %v320 = vunpack.c.l.bf16 %v256
      %v321 = vunpack.c.l.bf16 %v257
      %v322 = vunpack.c.l.bf16 %v258
      %v323 = vunpack.c.l.bf16 %v259
      %v324 = vunpack.c.l.bf16 %v260
      %v325 = vunpack.c.l.bf16 %v261
      %v326 = vunpack.c.l.bf16 %v262
      %v327 = vunpack.c.l.bf16 %v263
      %v328 = vunpack.c.l.bf16 %v264
      %v329 = vunpack.c.l.bf16 %v265
      %v330 = vunpack.c.l.bf16 %v266
      %v331 = vunpack.c.l.bf16 %v267
      %v332 = vunpack.c.l.bf16 %v268
      %v333 = vunpack.c.l.bf16 %v269
      %v334 = vunpack.c.l.bf16 %v270
      %v335 = vunpack.c.l.bf16 %v271
      %v336 = vunpack.c.l.bf16 %v272
      %v337 = vunpack.c.l.bf16 %v273
      %v338 = vunpack.c.l.bf16 %v274
      %v339 = vunpack.c.l.bf16 %v275
      %v340 = vunpack.c.l.bf16 %v276
      %v341 = vunpack.c.l.bf16 %v277
      %v342 = vunpack.c.l.bf16 %v278
      %v343 = vunpack.c.l.bf16 %v279
      %v344 = vunpack.c.l.bf16 %v280
      %v345 = vunpack.c.l.bf16 %v281
      %v346 = vunpack.c.l.bf16 %v282
      %v347 = vunpack.c.l.bf16 %v283
      %v348 = vunpack.c.l.bf16 %v284
      %v349 = vunpack.c.l.bf16 %v285
      %v350 = vunpack.c.l.bf16 %v286
      %v351 = vld [vmem:[%s1] sm:$0x1]
      %v353 = vperm.slane %v351, 0
      %v355 = vmul.f32 %v287, %v353
      %v356 = vmul.f32 %v288, %v353
      %v357 = vmul.f32 %v289, %v353
      %v358 = vmul.f32 %v290, %v353
      %v359 = vmul.f32 %v291, %v353
      %v360 = vmul.f32 %v292, %v353
      %v361 = vmul.f32 %v293, %v353
      %v362 = vmul.f32 %v294, %v353
      %v363 = vmul.f32 %v295, %v353
      %v364 = vmul.f32 %v296, %v353
      %v365 = vmul.f32 %v297, %v353
      %v366 = vmul.f32 %v298, %v353
      %v367 = vmul.f32 %v299, %v353
      %v368 = vmul.f32 %v300, %v353
      %v369 = vmul.f32 %v301, %v353
      %v370 = vmul.f32 %v302, %v353
      %v371 = vmul.f32 %v303, %v353
      %v372 = vmul.f32 %v304, %v353
      %v373 = vmul.f32 %v305, %v353
      %v374 = vmul.f32 %v306, %v353
      %v375 = vmul.f32 %v307, %v353
      %v376 = vmul.f32 %v308, %v353
      %v377 = vmul.f32 %v309, %v353
      %v378 = vmul.f32 %v310, %v353
      %v379 = vmul.f32 %v311, %v353
      %v380 = vmul.f32 %v312, %v353
      %v381 = vmul.f32 %v313, %v353
      %v382 = vmul.f32 %v314, %v353
      %v383 = vmul.f32 %v315, %v353
      %v384 = vmul.f32 %v316, %v353
      %v385 = vmul.f32 %v317, %v353
      %v386 = vmul.f32 %v318, %v353
      %v387 = vmul.f32 %v319, %v353
      %v388 = vmul.f32 %v320, %v353
      %v389 = vmul.f32 %v321, %v353
      %v390 = vmul.f32 %v322, %v353
      %v391 = vmul.f32 %v323, %v353
      %v392 = vmul.f32 %v324, %v353
      %v393 = vmul.f32 %v325, %v353
      %v394 = vmul.f32 %v326, %v353
      %v395 = vmul.f32 %v327, %v353
      %v396 = vmul.f32 %v328, %v353
      %v397 = vmul.f32 %v329, %v353
      %v398 = vmul.f32 %v330, %v353
      %v399 = vmul.f32 %v331, %v353
      %v400 = vmul.f32 %v332, %v353
      %v401 = vmul.f32 %v333, %v353
      %v402 = vmul.f32 %v334, %v353
      %v403 = vmul.f32 %v335, %v353
      %v404 = vmul.f32 %v336, %v353
      %v405 = vmul.f32 %v337, %v353
      %v406 = vmul.f32 %v338, %v353
      %v407 = vmul.f32 %v339, %v353
      %v408 = vmul.f32 %v340, %v353
      %v409 = vmul.f32 %v341, %v353
      %v410 = vmul.f32 %v342, %v353
      %v411 = vmul.f32 %v343, %v353
      %v412 = vmul.f32 %v344, %v353
      %v413 = vmul.f32 %v345, %v353
      %v414 = vmul.f32 %v346, %v353
      %v415 = vmul.f32 %v347, %v353
      %v416 = vmul.f32 %v348, %v353
      %v417 = vmul.f32 %v349, %v353
      %v418 = vmul.f32 %v350, %v353
      %v419 = vld [vmem:[%s2] sm:$0x1]
      %v421 = vperm.slane %v419, 0
      %v423 = vadd.f32 %v355, %v421
      %v424 = vadd.f32 %v356, %v421
      %v425 = vadd.f32 %v357, %v421
      %v426 = vadd.f32 %v358, %v421
      %v427 = vadd.f32 %v359, %v421
      %v428 = vadd.f32 %v360, %v421
      %v429 = vadd.f32 %v361, %v421
      %v430 = vadd.f32 %v362, %v421
      %v431 = vadd.f32 %v363, %v421
      %v432 = vadd.f32 %v364, %v421
      %v433 = vadd.f32 %v365, %v421
      %v434 = vadd.f32 %v366, %v421
      %v435 = vadd.f32 %v367, %v421
      %v436 = vadd.f32 %v368, %v421
      %v437 = vadd.f32 %v369, %v421
      %v438 = vadd.f32 %v370, %v421
      %v439 = vadd.f32 %v371, %v421
      %v440 = vadd.f32 %v372, %v421
      %v441 = vadd.f32 %v373, %v421
      %v442 = vadd.f32 %v374, %v421
      %v443 = vadd.f32 %v375, %v421
      %v444 = vadd.f32 %v376, %v421
      %v445 = vadd.f32 %v377, %v421
      %v446 = vadd.f32 %v378, %v421
      %v447 = vadd.f32 %v379, %v421
      %v448 = vadd.f32 %v380, %v421
      %v449 = vadd.f32 %v381, %v421
      %v450 = vadd.f32 %v382, %v421
      %v451 = vadd.f32 %v383, %v421
      %v452 = vadd.f32 %v384, %v421
      %v453 = vadd.f32 %v385, %v421
      %v454 = vadd.f32 %v386, %v421
      %v455 = vadd.f32 %v387, %v421
      %v456 = vadd.f32 %v388, %v421
      %v457 = vadd.f32 %v389, %v421
      %v458 = vadd.f32 %v390, %v421
      %v459 = vadd.f32 %v391, %v421
      %v460 = vadd.f32 %v392, %v421
      %v461 = vadd.f32 %v393, %v421
      %v462 = vadd.f32 %v394, %v421
      %v463 = vadd.f32 %v395, %v421
      %v464 = vadd.f32 %v396, %v421
      %v465 = vadd.f32 %v397, %v421
      %v466 = vadd.f32 %v398, %v421
      %v467 = vadd.f32 %v399, %v421
      %v468 = vadd.f32 %v400, %v421
      %v469 = vadd.f32 %v401, %v421
      %v470 = vadd.f32 %v402, %v421
      %v471 = vadd.f32 %v403, %v421
      %v472 = vadd.f32 %v404, %v421
      %v473 = vadd.f32 %v405, %v421
      %v474 = vadd.f32 %v406, %v421
      %v475 = vadd.f32 %v407, %v421
      %v476 = vadd.f32 %v408, %v421
      %v477 = vadd.f32 %v409, %v421
      %v478 = vadd.f32 %v410, %v421
      %v479 = vadd.f32 %v411, %v421
      %v480 = vadd.f32 %v412, %v421
      %v481 = vadd.f32 %v413, %v421
      %v482 = vadd.f32 %v414, %v421
      %v483 = vadd.f32 %v415, %v421
      %v484 = vadd.f32 %v416, %v421
      %v485 = vadd.f32 %v417, %v421
      %v486 = vadd.f32 %v418, %v421
      %v487 = vmax.f32 %v423, 0.0
      %v488 = vmax.f32 %v424, 0.0
      %v489 = vmax.f32 %v425, 0.0
      %v490 = vmax.f32 %v426, 0.0
      %v491 = vmax.f32 %v427, 0.0
      %v492 = vmax.f32 %v428, 0.0
      %v493 = vmax.f32 %v429, 0.0
      %v494 = vmax.f32 %v430, 0.0
      %v495 = vmax.f32 %v431, 0.0
      %v496 = vmax.f32 %v432, 0.0
      %v497 = vmax.f32 %v433, 0.0
      %v498 = vmax.f32 %v434, 0.0
      %v499 = vmax.f32 %v435, 0.0
      %v500 = vmax.f32 %v436, 0.0
      %v501 = vmax.f32 %v437, 0.0
      %v502 = vmax.f32 %v438, 0.0
      %v503 = vmax.f32 %v439, 0.0
      %v504 = vmax.f32 %v440, 0.0
      %v505 = vmax.f32 %v441, 0.0
      %v506 = vmax.f32 %v442, 0.0
      %v507 = vmax.f32 %v443, 0.0
      %v508 = vmax.f32 %v444, 0.0
      %v509 = vmax.f32 %v445, 0.0
      %v510 = vmax.f32 %v446, 0.0
      %v511 = vmax.f32 %v447, 0.0
      %v512 = vmax.f32 %v448, 0.0
      %v513 = vmax.f32 %v449, 0.0
      %v514 = vmax.f32 %v450, 0.0
      %v515 = vmax.f32 %v451, 0.0
      %v516 = vmax.f32 %v452, 0.0
      %v517 = vmax.f32 %v453, 0.0
      %v518 = vmax.f32 %v454, 0.0
      %v519 = vmax.f32 %v455, 0.0
      %v520 = vmax.f32 %v456, 0.0
      %v521 = vmax.f32 %v457, 0.0
      %v522 = vmax.f32 %v458, 0.0
      %v523 = vmax.f32 %v459, 0.0
      %v524 = vmax.f32 %v460, 0.0
      %v525 = vmax.f32 %v461, 0.0
      %v526 = vmax.f32 %v462, 0.0
      %v527 = vmax.f32 %v463, 0.0
      %v528 = vmax.f32 %v464, 0.0
      %v529 = vmax.f32 %v465, 0.0
      %v530 = vmax.f32 %v466, 0.0
      %v531 = vmax.f32 %v467, 0.0
      %v532 = vmax.f32 %v468, 0.0
      %v533 = vmax.f32 %v469, 0.0
      %v534 = vmax.f32 %v470, 0.0
      %v535 = vmax.f32 %v471, 0.0
      %v536 = vmax.f32 %v472, 0.0
      %v537 = vmax.f32 %v473, 0.0
      %v538 = vmax.f32 %v474, 0.0
      %v539 = vmax.f32 %v475, 0.0
      %v540 = vmax.f32 %v476, 0.0
      %v541 = vmax.f32 %v477, 0.0
      %v542 = vmax.f32 %v478, 0.0
      %v543 = vmax.f32 %v479, 0.0
      %v544 = vmax.f32 %v480, 0.0
      %v545 = vmax.f32 %v481, 0.0
      %v546 = vmax.f32 %v482, 0.0
      %v547 = vmax.f32 %v483, 0.0
      %v548 = vmax.f32 %v484, 0.0
      %v549 = vmax.f32 %v485, 0.0
      %v550 = vmax.f32 %v486, 0.0
      %v551 = vld [vmem:[%s215] sm:$0xff]
      %v552 = vld [vmem:[%s215 + $0x8] sm:$0xff]
      %v553 = vld [vmem:[%s215 + $0x10] sm:$0xff]
      %v554 = vld [vmem:[%s215 + $0x18] sm:$0xff]
      %v555 = vld [vmem:[%s215 + $0x20] sm:$0xff]
      %v556 = vld [vmem:[%s215 + $0x28] sm:$0xff]
      %v557 = vld [vmem:[%s215 + $0x30] sm:$0xff]
      %v558 = vld [vmem:[%s215 + $0x38] sm:$0xff]
      %v559 = vld [vmem:[%s215 + $0x40] sm:$0xff]
      %v560 = vld [vmem:[%s215 + $0x48] sm:$0xff]
      %v561 = vld [vmem:[%s215 + $0x50] sm:$0xff]
      %v562 = vld [vmem:[%s215 + $0x58] sm:$0xff]
      %v563 = vld [vmem:[%s215 + $0x60] sm:$0xff]
      %v564 = vld [vmem:[%s215 + $0x68] sm:$0xff]
      %v565 = vld [vmem:[%s215 + $0x70] sm:$0xff]
      %v566 = vld [vmem:[%s215 + $0x78] sm:$0xff]
      %v567 = vld [vmem:[%s215 + $0x80] sm:$0xff]
      %v568 = vld [vmem:[%s215 + $0x88] sm:$0xff]
      %v569 = vld [vmem:[%s215 + $0x90] sm:$0xff]
      %v570 = vld [vmem:[%s215 + $0x98] sm:$0xff]
      %v571 = vld [vmem:[%s215 + $0xa0] sm:$0xff]
      %v572 = vld [vmem:[%s215 + $0xa8] sm:$0xff]
      %v573 = vld [vmem:[%s215 + $0xb0] sm:$0xff]
      %v574 = vld [vmem:[%s215 + $0xb8] sm:$0xff]
      %v575 = vld [vmem:[%s215 + $0xc0] sm:$0xff]
      %v576 = vld [vmem:[%s215 + $0xc8] sm:$0xff]
      %v577 = vld [vmem:[%s215 + $0xd0] sm:$0xff]
      %v578 = vld [vmem:[%s215 + $0xd8] sm:$0xff]
      %v579 = vld [vmem:[%s215 + $0xe0] sm:$0xff]
      %v580 = vld [vmem:[%s215 + $0xe8] sm:$0xff]
      %v581 = vld [vmem:[%s215 + $0xf0] sm:$0xff]
      %v582 = vld [vmem:[%s215 + $0xf8] sm:$0xff]
      %v583 = vld [vmem:[%s215 + $0x100] sm:$0xff]
      %v584 = vld [vmem:[%s215 + $0x108] sm:$0xff]
      %v585 = vld [vmem:[%s215 + $0x110] sm:$0xff]
      %v586 = vld [vmem:[%s215 + $0x118] sm:$0xff]
      %v587 = vld [vmem:[%s215 + $0x120] sm:$0xff]
      %v588 = vld [vmem:[%s215 + $0x128] sm:$0xff]
      %v589 = vld [vmem:[%s215 + $0x130] sm:$0xff]
      %v590 = vld [vmem:[%s215 + $0x138] sm:$0xff]
      %v591 = vld [vmem:[%s215 + $0x140] sm:$0xff]
      %v592 = vld [vmem:[%s215 + $0x148] sm:$0xff]
      %v593 = vld [vmem:[%s215 + $0x150] sm:$0xff]
      %v594 = vld [vmem:[%s215 + $0x158] sm:$0xff]
      %v595 = vld [vmem:[%s215 + $0x160] sm:$0xff]
      %v596 = vld [vmem:[%s215 + $0x168] sm:$0xff]
      %v597 = vld [vmem:[%s215 + $0x170] sm:$0xff]
      %v598 = vld [vmem:[%s215 + $0x178] sm:$0xff]
      %v599 = vld [vmem:[%s215 + $0x180] sm:$0xff]
      %v600 = vld [vmem:[%s215 + $0x188] sm:$0xff]
      %v601 = vld [vmem:[%s215 + $0x190] sm:$0xff]
      %v602 = vld [vmem:[%s215 + $0x198] sm:$0xff]
      %v603 = vld [vmem:[%s215 + $0x1a0] sm:$0xff]
      %v604 = vld [vmem:[%s215 + $0x1a8] sm:$0xff]
      %v605 = vld [vmem:[%s215 + $0x1b0] sm:$0xff]
      %v606 = vld [vmem:[%s215 + $0x1b8] sm:$0xff]
      %v607 = vld [vmem:[%s215 + $0x1c0] sm:$0xff]
      %v608 = vld [vmem:[%s215 + $0x1c8] sm:$0xff]
      %v609 = vld [vmem:[%s215 + $0x1d0] sm:$0xff]
      %v610 = vld [vmem:[%s215 + $0x1d8] sm:$0xff]
      %v611 = vld [vmem:[%s215 + $0x1e0] sm:$0xff]
      %v612 = vld [vmem:[%s215 + $0x1e8] sm:$0xff]
      %v613 = vld [vmem:[%s215 + $0x1f0] sm:$0xff]
      %v614 = vld [vmem:[%s215 + $0x1f8] sm:$0xff]
      %vm615 = vcmp.gt.f32.partialorder %v551, 0.5
      %vm616 = vcmp.gt.f32.partialorder %v552, 0.5
      %vm617 = vcmp.gt.f32.partialorder %v553, 0.5
      %vm618 = vcmp.gt.f32.partialorder %v554, 0.5
      %vm619 = vcmp.gt.f32.partialorder %v555, 0.5
      %vm620 = vcmp.gt.f32.partialorder %v556, 0.5
      %vm621 = vcmp.gt.f32.partialorder %v557, 0.5
      %vm622 = vcmp.gt.f32.partialorder %v558, 0.5
      %vm623 = vcmp.gt.f32.partialorder %v559, 0.5
      %vm624 = vcmp.gt.f32.partialorder %v560, 0.5
      %vm625 = vcmp.gt.f32.partialorder %v561, 0.5
      %vm626 = vcmp.gt.f32.partialorder %v562, 0.5
      %vm627 = vcmp.gt.f32.partialorder %v563, 0.5
      %vm628 = vcmp.gt.f32.partialorder %v564, 0.5
      %vm629 = vcmp.gt.f32.partialorder %v565, 0.5
      %vm630 = vcmp.gt.f32.partialorder %v566, 0.5
      %vm631 = vcmp.gt.f32.partialorder %v567, 0.5
      %vm632 = vcmp.gt.f32.partialorder %v568, 0.5
      %vm633 = vcmp.gt.f32.partialorder %v569, 0.5
      %vm634 = vcmp.gt.f32.partialorder %v570, 0.5
      %vm635 = vcmp.gt.f32.partialorder %v571, 0.5
      %vm636 = vcmp.gt.f32.partialorder %v572, 0.5
      %vm637 = vcmp.gt.f32.partialorder %v573, 0.5
      %vm638 = vcmp.gt.f32.partialorder %v574, 0.5
      %vm639 = vcmp.gt.f32.partialorder %v575, 0.5
      %vm640 = vcmp.gt.f32.partialorder %v576, 0.5
      %vm641 = vcmp.gt.f32.partialorder %v577, 0.5
      %vm642 = vcmp.gt.f32.partialorder %v578, 0.5
      %vm643 = vcmp.gt.f32.partialorder %v579, 0.5
      %vm644 = vcmp.gt.f32.partialorder %v580, 0.5
      %vm645 = vcmp.gt.f32.partialorder %v581, 0.5
      %vm646 = vcmp.gt.f32.partialorder %v582, 0.5
      %vm647 = vcmp.gt.f32.partialorder %v583, 0.5
      %vm648 = vcmp.gt.f32.partialorder %v584, 0.5
      %vm649 = vcmp.gt.f32.partialorder %v585, 0.5
      %vm650 = vcmp.gt.f32.partialorder %v586, 0.5
      %vm651 = vcmp.gt.f32.partialorder %v587, 0.5
      %vm652 = vcmp.gt.f32.partialorder %v588, 0.5
      %vm653 = vcmp.gt.f32.partialorder %v589, 0.5
      %vm654 = vcmp.gt.f32.partialorder %v590, 0.5
      %vm655 = vcmp.gt.f32.partialorder %v591, 0.5
      %vm656 = vcmp.gt.f32.partialorder %v592, 0.5
      %vm657 = vcmp.gt.f32.partialorder %v593, 0.5
      %vm658 = vcmp.gt.f32.partialorder %v594, 0.5
      %vm659 = vcmp.gt.f32.partialorder %v595, 0.5
      %vm660 = vcmp.gt.f32.partialorder %v596, 0.5
      %vm661 = vcmp.gt.f32.partialorder %v597, 0.5
      %vm662 = vcmp.gt.f32.partialorder %v598, 0.5
      %vm663 = vcmp.gt.f32.partialorder %v599, 0.5
      %vm664 = vcmp.gt.f32.partialorder %v600, 0.5
      %vm665 = vcmp.gt.f32.partialorder %v601, 0.5
      %vm666 = vcmp.gt.f32.partialorder %v602, 0.5
      %vm667 = vcmp.gt.f32.partialorder %v603, 0.5
      %vm668 = vcmp.gt.f32.partialorder %v604, 0.5
      %vm669 = vcmp.gt.f32.partialorder %v605, 0.5
      %vm670 = vcmp.gt.f32.partialorder %v606, 0.5
      %vm671 = vcmp.gt.f32.partialorder %v607, 0.5
      %vm672 = vcmp.gt.f32.partialorder %v608, 0.5
      %vm673 = vcmp.gt.f32.partialorder %v609, 0.5
      %vm674 = vcmp.gt.f32.partialorder %v610, 0.5
      %vm675 = vcmp.gt.f32.partialorder %v611, 0.5
      %vm676 = vcmp.gt.f32.partialorder %v612, 0.5
      %vm677 = vcmp.gt.f32.partialorder %v613, 0.5
      %vm678 = vcmp.gt.f32.partialorder %v614, 0.5
      %v679 = vsel %vm615, 1, 0
      %v680 = vsel %vm616, 1, 0
      %v681 = vsel %vm617, 1, 0
      %v682 = vsel %vm618, 1, 0
      %v683 = vsel %vm619, 1, 0
      %v684 = vsel %vm620, 1, 0
      %v685 = vsel %vm621, 1, 0
      %v686 = vsel %vm622, 1, 0
      %v687 = vsel %vm623, 1, 0
      %v688 = vsel %vm624, 1, 0
      %v689 = vsel %vm625, 1, 0
      %v690 = vsel %vm626, 1, 0
      %v691 = vsel %vm627, 1, 0
      %v692 = vsel %vm628, 1, 0
      %v693 = vsel %vm629, 1, 0
      %v694 = vsel %vm630, 1, 0
      %v695 = vsel %vm631, 1, 0
      %v696 = vsel %vm632, 1, 0
      %v697 = vsel %vm633, 1, 0
      %v698 = vsel %vm634, 1, 0
      %v699 = vsel %vm635, 1, 0
      %v700 = vsel %vm636, 1, 0
      %v701 = vsel %vm637, 1, 0
      %v702 = vsel %vm638, 1, 0
      %v703 = vsel %vm639, 1, 0
      %v704 = vsel %vm640, 1, 0
      %v705 = vsel %vm641, 1, 0
      %v706 = vsel %vm642, 1, 0
      %v707 = vsel %vm643, 1, 0
      %v708 = vsel %vm644, 1, 0
      %v709 = vsel %vm645, 1, 0
      %v710 = vsel %vm646, 1, 0
      %v711 = vsel %vm647, 1, 0
      %v712 = vsel %vm648, 1, 0
      %v713 = vsel %vm649, 1, 0
      %v714 = vsel %vm650, 1, 0
      %v715 = vsel %vm651, 1, 0
      %v716 = vsel %vm652, 1, 0
      %v717 = vsel %vm653, 1, 0
      %v718 = vsel %vm654, 1, 0
      %v719 = vsel %vm655, 1, 0
      %v720 = vsel %vm656, 1, 0
      %v721 = vsel %vm657, 1, 0
      %v722 = vsel %vm658, 1, 0
      %v723 = vsel %vm659, 1, 0
      %v724 = vsel %vm660, 1, 0
      %v725 = vsel %vm661, 1, 0
      %v726 = vsel %vm662, 1, 0
      %v727 = vsel %vm663, 1, 0
      %v728 = vsel %vm664, 1, 0
      %v729 = vsel %vm665, 1, 0
      %v730 = vsel %vm666, 1, 0
      %v731 = vsel %vm667, 1, 0
      %v732 = vsel %vm668, 1, 0
      %v733 = vsel %vm669, 1, 0
      %v734 = vsel %vm670, 1, 0
      %v735 = vsel %vm671, 1, 0
      %v736 = vsel %vm672, 1, 0
      %v737 = vsel %vm673, 1, 0
      %v738 = vsel %vm674, 1, 0
      %v739 = vsel %vm675, 1, 0
      %v740 = vsel %vm676, 1, 0
      %v741 = vsel %vm677, 1, 0
      %v742 = vsel %vm678, 1, 0
      %743 = vset.pattern.permute.xlu0 0
      %744 = vperm.xlu0 %743, %v679
      %v745 = vpop.permute.xlu0 %744
      %746 = vset.pattern.permute.xlu0 0
      %747 = vperm.xlu0 %746, %v680
      %v748 = vpop.permute.xlu0 %747
      %749 = vset.pattern.permute.xlu0 0
      %750 = vperm.xlu0 %749, %v681
      %v751 = vpop.permute.xlu0 %750
      %752 = vset.pattern.permute.xlu0 0
      %753 = vperm.xlu0 %752, %v682
      %v754 = vpop.permute.xlu0 %753
      %755 = vset.pattern.permute.xlu0 0
      %756 = vperm.xlu0 %755, %v683
      %v757 = vpop.permute.xlu0 %756
      %758 = vset.pattern.permute.xlu0 0
      %759 = vperm.xlu0 %758, %v684
      %v760 = vpop.permute.xlu0 %759
      %761 = vset.pattern.permute.xlu0 0
      %762 = vperm.xlu0 %761, %v685
      %v763 = vpop.permute.xlu0 %762
      %764 = vset.pattern.permute.xlu0 0
      %765 = vperm.xlu0 %764, %v686
      %v766 = vpop.permute.xlu0 %765
      %767 = vset.pattern.permute.xlu0 0
      %768 = vperm.xlu0 %767, %v687
      %v769 = vpop.permute.xlu0 %768
      %770 = vset.pattern.permute.xlu0 0
      %771 = vperm.xlu0 %770, %v688
      %v772 = vpop.permute.xlu0 %771
      %773 = vset.pattern.permute.xlu0 0
      %774 = vperm.xlu0 %773, %v689
      %v775 = vpop.permute.xlu0 %774
      %776 = vset.pattern.permute.xlu0 0
      %777 = vperm.xlu0 %776, %v690
      %v778 = vpop.permute.xlu0 %777
      %779 = vset.pattern.permute.xlu0 0
      %780 = vperm.xlu0 %779, %v691
      %v781 = vpop.permute.xlu0 %780
      %782 = vset.pattern.permute.xlu0 0
      %783 = vperm.xlu0 %782, %v692
      %v784 = vpop.permute.xlu0 %783
      %785 = vset.pattern.permute.xlu0 0
      %786 = vperm.xlu0 %785, %v693
      %v787 = vpop.permute.xlu0 %786
      %788 = vset.pattern.permute.xlu0 0
      %789 = vperm.xlu0 %788, %v694
      %v790 = vpop.permute.xlu0 %789
      %791 = vset.pattern.permute.xlu0 0
      %792 = vperm.xlu0 %791, %v695
      %v793 = vpop.permute.xlu0 %792
      %794 = vset.pattern.permute.xlu0 0
      %795 = vperm.xlu0 %794, %v696
      %v796 = vpop.permute.xlu0 %795
      %797 = vset.pattern.permute.xlu0 0
      %798 = vperm.xlu0 %797, %v697
      %v799 = vpop.permute.xlu0 %798
      %800 = vset.pattern.permute.xlu0 0
      %801 = vperm.xlu0 %800, %v698
      %v802 = vpop.permute.xlu0 %801
      %803 = vset.pattern.permute.xlu0 0
      %804 = vperm.xlu0 %803, %v699
      %v805 = vpop.permute.xlu0 %804
      %806 = vset.pattern.permute.xlu0 0
      %807 = vperm.xlu0 %806, %v700
      %v808 = vpop.permute.xlu0 %807
      %809 = vset.pattern.permute.xlu0 0
      %810 = vperm.xlu0 %809, %v701
      %v811 = vpop.permute.xlu0 %810
      %812 = vset.pattern.permute.xlu0 0
      %813 = vperm.xlu0 %812, %v702
      %v814 = vpop.permute.xlu0 %813
      %815 = vset.pattern.permute.xlu0 0
      %816 = vperm.xlu0 %815, %v703
      %v817 = vpop.permute.xlu0 %816
      %818 = vset.pattern.permute.xlu0 0
      %819 = vperm.xlu0 %818, %v704
      %v820 = vpop.permute.xlu0 %819
      %821 = vset.pattern.permute.xlu0 0
      %822 = vperm.xlu0 %821, %v705
      %v823 = vpop.permute.xlu0 %822
      %824 = vset.pattern.permute.xlu0 0
      %825 = vperm.xlu0 %824, %v706
      %v826 = vpop.permute.xlu0 %825
      %827 = vset.pattern.permute.xlu0 0
      %828 = vperm.xlu0 %827, %v707
      %v829 = vpop.permute.xlu0 %828
      %830 = vset.pattern.permute.xlu0 0
      %831 = vperm.xlu0 %830, %v708
      %v832 = vpop.permute.xlu0 %831
      %833 = vset.pattern.permute.xlu0 0
      %834 = vperm.xlu0 %833, %v709
      %v835 = vpop.permute.xlu0 %834
      %836 = vset.pattern.permute.xlu0 0
      %837 = vperm.xlu0 %836, %v710
      %v838 = vpop.permute.xlu0 %837
      %839 = vset.pattern.permute.xlu0 0
      %840 = vperm.xlu0 %839, %v711
      %v841 = vpop.permute.xlu0 %840
      %842 = vset.pattern.permute.xlu0 0
      %843 = vperm.xlu0 %842, %v712
      %v844 = vpop.permute.xlu0 %843
      %845 = vset.pattern.permute.xlu0 0
      %846 = vperm.xlu0 %845, %v713
      %v847 = vpop.permute.xlu0 %846
      %848 = vset.pattern.permute.xlu0 0
      %849 = vperm.xlu0 %848, %v714
      %v850 = vpop.permute.xlu0 %849
      %851 = vset.pattern.permute.xlu0 0
      %852 = vperm.xlu0 %851, %v715
      %v853 = vpop.permute.xlu0 %852
      %854 = vset.pattern.permute.xlu0 0
      %855 = vperm.xlu0 %854, %v716
      %v856 = vpop.permute.xlu0 %855
      %857 = vset.pattern.permute.xlu0 0
      %858 = vperm.xlu0 %857, %v717
      %v859 = vpop.permute.xlu0 %858
      %860 = vset.pattern.permute.xlu0 0
      %861 = vperm.xlu0 %860, %v718
      %v862 = vpop.permute.xlu0 %861
      %863 = vset.pattern.permute.xlu0 0
      %864 = vperm.xlu0 %863, %v719
      %v865 = vpop.permute.xlu0 %864
      %866 = vset.pattern.permute.xlu0 0
      %867 = vperm.xlu0 %866, %v720
      %v868 = vpop.permute.xlu0 %867
      %869 = vset.pattern.permute.xlu0 0
      %870 = vperm.xlu0 %869, %v721
      %v871 = vpop.permute.xlu0 %870
      %872 = vset.pattern.permute.xlu0 0
      %873 = vperm.xlu0 %872, %v722
      %v874 = vpop.permute.xlu0 %873
      %875 = vset.pattern.permute.xlu0 0
      %876 = vperm.xlu0 %875, %v723
      %v877 = vpop.permute.xlu0 %876
      %878 = vset.pattern.permute.xlu0 0
      %879 = vperm.xlu0 %878, %v724
      %v880 = vpop.permute.xlu0 %879
      %881 = vset.pattern.permute.xlu0 0
      %882 = vperm.xlu0 %881, %v725
      %v883 = vpop.permute.xlu0 %882
      %884 = vset.pattern.permute.xlu0 0
      %885 = vperm.xlu0 %884, %v726
      %v886 = vpop.permute.xlu0 %885
      %887 = vset.pattern.permute.xlu0 0
      %888 = vperm.xlu0 %887, %v727
      %v889 = vpop.permute.xlu0 %888
      %890 = vset.pattern.permute.xlu0 0
      %891 = vperm.xlu0 %890, %v728
      %v892 = vpop.permute.xlu0 %891
      %893 = vset.pattern.permute.xlu0 0
      %894 = vperm.xlu0 %893, %v729
      %v895 = vpop.permute.xlu0 %894
      %896 = vset.pattern.permute.xlu0 0
      %897 = vperm.xlu0 %896, %v730
      %v898 = vpop.permute.xlu0 %897
      %899 = vset.pattern.permute.xlu0 0
      %900 = vperm.xlu0 %899, %v731
      %v901 = vpop.permute.xlu0 %900
      %902 = vset.pattern.permute.xlu0 0
      %903 = vperm.xlu0 %902, %v732
      %v904 = vpop.permute.xlu0 %903
      %905 = vset.pattern.permute.xlu0 0
      %906 = vperm.xlu0 %905, %v733
      %v907 = vpop.permute.xlu0 %906
      %908 = vset.pattern.permute.xlu0 0
      %909 = vperm.xlu0 %908, %v734
      %v910 = vpop.permute.xlu0 %909
      %911 = vset.pattern.permute.xlu0 0
      %912 = vperm.xlu0 %911, %v735
      %v913 = vpop.permute.xlu0 %912
      %914 = vset.pattern.permute.xlu0 0
      %915 = vperm.xlu0 %914, %v736
      %v916 = vpop.permute.xlu0 %915
      %917 = vset.pattern.permute.xlu0 0
      %918 = vperm.xlu0 %917, %v737
      %v919 = vpop.permute.xlu0 %918
      %920 = vset.pattern.permute.xlu0 0
      %921 = vperm.xlu0 %920, %v738
      %v922 = vpop.permute.xlu0 %921
      %923 = vset.pattern.permute.xlu0 0
      %924 = vperm.xlu0 %923, %v739
      %v925 = vpop.permute.xlu0 %924
      %926 = vset.pattern.permute.xlu0 0
      %927 = vperm.xlu0 %926, %v740
      %v928 = vpop.permute.xlu0 %927
      %929 = vset.pattern.permute.xlu0 0
      %930 = vperm.xlu0 %929, %v741
      %v931 = vpop.permute.xlu0 %930
      %932 = vset.pattern.permute.xlu0 0
      %933 = vperm.xlu0 %932, %v742
      %v934 = vpop.permute.xlu0 %933
      %vm935 = vcmp.eq.s32.totalorder %v745, 1
      %vm936 = vcmp.eq.s32.totalorder %v748, 1
      %vm937 = vcmp.eq.s32.totalorder %v751, 1
      %vm938 = vcmp.eq.s32.totalorder %v754, 1
      %vm939 = vcmp.eq.s32.totalorder %v757, 1
      %vm940 = vcmp.eq.s32.totalorder %v760, 1
      %vm941 = vcmp.eq.s32.totalorder %v763, 1
      %vm942 = vcmp.eq.s32.totalorder %v766, 1
      %vm943 = vcmp.eq.s32.totalorder %v769, 1
      %vm944 = vcmp.eq.s32.totalorder %v772, 1
      %vm945 = vcmp.eq.s32.totalorder %v775, 1
      %vm946 = vcmp.eq.s32.totalorder %v778, 1
      %vm947 = vcmp.eq.s32.totalorder %v781, 1
      %vm948 = vcmp.eq.s32.totalorder %v784, 1
      %vm949 = vcmp.eq.s32.totalorder %v787, 1
      %vm950 = vcmp.eq.s32.totalorder %v790, 1
      %vm951 = vcmp.eq.s32.totalorder %v793, 1
      %vm952 = vcmp.eq.s32.totalorder %v796, 1
      %vm953 = vcmp.eq.s32.totalorder %v799, 1
      %vm954 = vcmp.eq.s32.totalorder %v802, 1
      %vm955 = vcmp.eq.s32.totalorder %v805, 1
      %vm956 = vcmp.eq.s32.totalorder %v808, 1
      %vm957 = vcmp.eq.s32.totalorder %v811, 1
      %vm958 = vcmp.eq.s32.totalorder %v814, 1
      %vm959 = vcmp.eq.s32.totalorder %v817, 1
      %vm960 = vcmp.eq.s32.totalorder %v820, 1
      %vm961 = vcmp.eq.s32.totalorder %v823, 1
      %vm962 = vcmp.eq.s32.totalorder %v826, 1
      %vm963 = vcmp.eq.s32.totalorder %v829, 1
      %vm964 = vcmp.eq.s32.totalorder %v832, 1
      %vm965 = vcmp.eq.s32.totalorder %v835, 1
      %vm966 = vcmp.eq.s32.totalorder %v838, 1
      %vm967 = vcmp.eq.s32.totalorder %v841, 1
      %vm968 = vcmp.eq.s32.totalorder %v844, 1
      %vm969 = vcmp.eq.s32.totalorder %v847, 1
      %vm970 = vcmp.eq.s32.totalorder %v850, 1
      %vm971 = vcmp.eq.s32.totalorder %v853, 1
      %vm972 = vcmp.eq.s32.totalorder %v856, 1
      %vm973 = vcmp.eq.s32.totalorder %v859, 1
      %vm974 = vcmp.eq.s32.totalorder %v862, 1
      %vm975 = vcmp.eq.s32.totalorder %v865, 1
      %vm976 = vcmp.eq.s32.totalorder %v868, 1
      %vm977 = vcmp.eq.s32.totalorder %v871, 1
      %vm978 = vcmp.eq.s32.totalorder %v874, 1
      %vm979 = vcmp.eq.s32.totalorder %v877, 1
      %vm980 = vcmp.eq.s32.totalorder %v880, 1
      %vm981 = vcmp.eq.s32.totalorder %v883, 1
      %vm982 = vcmp.eq.s32.totalorder %v886, 1
      %vm983 = vcmp.eq.s32.totalorder %v889, 1
      %vm984 = vcmp.eq.s32.totalorder %v892, 1
      %vm985 = vcmp.eq.s32.totalorder %v895, 1
      %vm986 = vcmp.eq.s32.totalorder %v898, 1
      %vm987 = vcmp.eq.s32.totalorder %v901, 1
      %vm988 = vcmp.eq.s32.totalorder %v904, 1
      %vm989 = vcmp.eq.s32.totalorder %v907, 1
      %vm990 = vcmp.eq.s32.totalorder %v910, 1
      %vm991 = vcmp.eq.s32.totalorder %v913, 1
      %vm992 = vcmp.eq.s32.totalorder %v916, 1
      %vm993 = vcmp.eq.s32.totalorder %v919, 1
      %vm994 = vcmp.eq.s32.totalorder %v922, 1
      %vm995 = vcmp.eq.s32.totalorder %v925, 1
      %vm996 = vcmp.eq.s32.totalorder %v928, 1
      %vm997 = vcmp.eq.s32.totalorder %v931, 1
      %vm998 = vcmp.eq.s32.totalorder %v934, 1
      %v999 = vsel %vm935, %v487, 0.0
      %v1000 = vsel %vm936, %v488, 0.0
      %v1001 = vsel %vm937, %v489, 0.0
      %v1002 = vsel %vm938, %v490, 0.0
      %v1003 = vsel %vm939, %v491, 0.0
      %v1004 = vsel %vm940, %v492, 0.0
      %v1005 = vsel %vm941, %v493, 0.0
      %v1006 = vsel %vm942, %v494, 0.0
      %v1007 = vsel %vm943, %v495, 0.0
      %v1008 = vsel %vm944, %v496, 0.0
      %v1009 = vsel %vm945, %v497, 0.0
      %v1010 = vsel %vm946, %v498, 0.0
      %v1011 = vsel %vm947, %v499, 0.0
      %v1012 = vsel %vm948, %v500, 0.0
      %v1013 = vsel %vm949, %v501, 0.0
      %v1014 = vsel %vm950, %v502, 0.0
      %v1015 = vsel %vm951, %v503, 0.0
      %v1016 = vsel %vm952, %v504, 0.0
      %v1017 = vsel %vm953, %v505, 0.0
      %v1018 = vsel %vm954, %v506, 0.0
      %v1019 = vsel %vm955, %v507, 0.0
      %v1020 = vsel %vm956, %v508, 0.0
      %v1021 = vsel %vm957, %v509, 0.0
      %v1022 = vsel %vm958, %v510, 0.0
      %v1023 = vsel %vm959, %v511, 0.0
      %v1024 = vsel %vm960, %v512, 0.0
      %v1025 = vsel %vm961, %v513, 0.0
      %v1026 = vsel %vm962, %v514, 0.0
      %v1027 = vsel %vm963, %v515, 0.0
      %v1028 = vsel %vm964, %v516, 0.0
      %v1029 = vsel %vm965, %v517, 0.0
      %v1030 = vsel %vm966, %v518, 0.0
      %v1031 = vsel %vm967, %v519, 0.0
      %v1032 = vsel %vm968, %v520, 0.0
      %v1033 = vsel %vm969, %v521, 0.0
      %v1034 = vsel %vm970, %v522, 0.0
      %v1035 = vsel %vm971, %v523, 0.0
      %v1036 = vsel %vm972, %v524, 0.0
      %v1037 = vsel %vm973, %v525, 0.0
      %v1038 = vsel %vm974, %v526, 0.0
      %v1039 = vsel %vm975, %v527, 0.0
      %v1040 = vsel %vm976, %v528, 0.0
      %v1041 = vsel %vm977, %v529, 0.0
      %v1042 = vsel %vm978, %v530, 0.0
      %v1043 = vsel %vm979, %v531, 0.0
      %v1044 = vsel %vm980, %v532, 0.0
      %v1045 = vsel %vm981, %v533, 0.0
      %v1046 = vsel %vm982, %v534, 0.0
      %v1047 = vsel %vm983, %v535, 0.0
      %v1048 = vsel %vm984, %v536, 0.0
      %v1049 = vsel %vm985, %v537, 0.0
      %v1050 = vsel %vm986, %v538, 0.0
      %v1051 = vsel %vm987, %v539, 0.0
      %v1052 = vsel %vm988, %v540, 0.0
      %v1053 = vsel %vm989, %v541, 0.0
      %v1054 = vsel %vm990, %v542, 0.0
      %v1055 = vsel %vm991, %v543, 0.0
      %v1056 = vsel %vm992, %v544, 0.0
      %v1057 = vsel %vm993, %v545, 0.0
      %v1058 = vsel %vm994, %v546, 0.0
      %v1059 = vsel %vm995, %v547, 0.0
      %v1060 = vsel %vm996, %v548, 0.0
      %v1061 = vsel %vm997, %v549, 0.0
      %v1062 = vsel %vm998, %v550, 0.0
      %1063 = vst [vmem:[%s221] sm:$0xff] %v999
      %1064 = vst [vmem:[%s221 + $0x8] sm:$0xff] %v1000
      %1065 = vst [vmem:[%s221 + $0x10] sm:$0xff] %v1001
      %1066 = vst [vmem:[%s221 + $0x18] sm:$0xff] %v1002
      %1067 = vst [vmem:[%s221 + $0x20] sm:$0xff] %v1003
      %1068 = vst [vmem:[%s221 + $0x28] sm:$0xff] %v1004
      %1069 = vst [vmem:[%s221 + $0x30] sm:$0xff] %v1005
      %1070 = vst [vmem:[%s221 + $0x38] sm:$0xff] %v1006
      %1071 = vst [vmem:[%s221 + $0x40] sm:$0xff] %v1007
      %1072 = vst [vmem:[%s221 + $0x48] sm:$0xff] %v1008
      %1073 = vst [vmem:[%s221 + $0x50] sm:$0xff] %v1009
      %1074 = vst [vmem:[%s221 + $0x58] sm:$0xff] %v1010
      %1075 = vst [vmem:[%s221 + $0x60] sm:$0xff] %v1011
      %1076 = vst [vmem:[%s221 + $0x68] sm:$0xff] %v1012
      %1077 = vst [vmem:[%s221 + $0x70] sm:$0xff] %v1013
      %1078 = vst [vmem:[%s221 + $0x78] sm:$0xff] %v1014
      %1079 = vst [vmem:[%s221 + $0x80] sm:$0xff] %v1015
      %1080 = vst [vmem:[%s221 + $0x88] sm:$0xff] %v1016
      %1081 = vst [vmem:[%s221 + $0x90] sm:$0xff] %v1017
      %1082 = vst [vmem:[%s221 + $0x98] sm:$0xff] %v1018
      %1083 = vst [vmem:[%s221 + $0xa0] sm:$0xff] %v1019
      %1084 = vst [vmem:[%s221 + $0xa8] sm:$0xff] %v1020
      %1085 = vst [vmem:[%s221 + $0xb0] sm:$0xff] %v1021
      %1086 = vst [vmem:[%s221 + $0xb8] sm:$0xff] %v1022
      %1087 = vst [vmem:[%s221 + $0xc0] sm:$0xff] %v1023
      %1088 = vst [vmem:[%s221 + $0xc8] sm:$0xff] %v1024
      %1089 = vst [vmem:[%s221 + $0xd0] sm:$0xff] %v1025
      %1090 = vst [vmem:[%s221 + $0xd8] sm:$0xff] %v1026
      %1091 = vst [vmem:[%s221 + $0xe0] sm:$0xff] %v1027
      %1092 = vst [vmem:[%s221 + $0xe8] sm:$0xff] %v1028
      %1093 = vst [vmem:[%s221 + $0xf0] sm:$0xff] %v1029
      %1094 = vst [vmem:[%s221 + $0xf8] sm:$0xff] %v1030
      %1095 = vst [vmem:[%s221 + $0x100] sm:$0xff] %v1031
      %1096 = vst [vmem:[%s221 + $0x108] sm:$0xff] %v1032
      %1097 = vst [vmem:[%s221 + $0x110] sm:$0xff] %v1033
      %1098 = vst [vmem:[%s221 + $0x118] sm:$0xff] %v1034
      %1099 = vst [vmem:[%s221 + $0x120] sm:$0xff] %v1035
      %1100 = vst [vmem:[%s221 + $0x128] sm:$0xff] %v1036
      %1101 = vst [vmem:[%s221 + $0x130] sm:$0xff] %v1037
      %1102 = vst [vmem:[%s221 + $0x138] sm:$0xff] %v1038
      %1103 = vst [vmem:[%s221 + $0x140] sm:$0xff] %v1039
      %1104 = vst [vmem:[%s221 + $0x148] sm:$0xff] %v1040
      %1105 = vst [vmem:[%s221 + $0x150] sm:$0xff] %v1041
      %1106 = vst [vmem:[%s221 + $0x158] sm:$0xff] %v1042
      %1107 = vst [vmem:[%s221 + $0x160] sm:$0xff] %v1043
      %1108 = vst [vmem:[%s221 + $0x168] sm:$0xff] %v1044
      %1109 = vst [vmem:[%s221 + $0x170] sm:$0xff] %v1045
      %1110 = vst [vmem:[%s221 + $0x178] sm:$0xff] %v1046
      %1111 = vst [vmem:[%s221 + $0x180] sm:$0xff] %v1047
      %1112 = vst [vmem:[%s221 + $0x188] sm:$0xff] %v1048
      %1113 = vst [vmem:[%s221 + $0x190] sm:$0xff] %v1049
      %1114 = vst [vmem:[%s221 + $0x198] sm:$0xff] %v1050
      %1115 = vst [vmem:[%s221 + $0x1a0] sm:$0xff] %v1051
      %1116 = vst [vmem:[%s221 + $0x1a8] sm:$0xff] %v1052
      %1117 = vst [vmem:[%s221 + $0x1b0] sm:$0xff] %v1053
      %1118 = vst [vmem:[%s221 + $0x1b8] sm:$0xff] %v1054
      %1119 = vst [vmem:[%s221 + $0x1c0] sm:$0xff] %v1055
      %1120 = vst [vmem:[%s221 + $0x1c8] sm:$0xff] %v1056
      %1121 = vst [vmem:[%s221 + $0x1d0] sm:$0xff] %v1057
      %1122 = vst [vmem:[%s221 + $0x1d8] sm:$0xff] %v1058
      %1123 = vst [vmem:[%s221 + $0x1e0] sm:$0xff] %v1059
      %1124 = vst [vmem:[%s221 + $0x1e8] sm:$0xff] %v1060
      %1125 = vst [vmem:[%s221 + $0x1f0] sm:$0xff] %v1061
      %1126 = vst [vmem:[%s221 + $0x1f8] sm:$0xff] %v1062
      %s1127 = smul.u32 64, %s15
      %p1128 = scmp.lt.s32.totalorder %s1127, 191
      %s1129 = scalar_select %p1128, %s1127, 191
      %s1130 = smul.addr %s1129, 8
      %s1131 = scalar_lea.vmem %s4, %s1130
      // Predicated region
      $region37: #{down_forward.9} parent=35 // pred_check
        %p1132 = pneg %p127
      $region38: #{down_forward.9} parent=35 // pred_check_branch
        %1134 = sbr.rel (%p1132) target = $region40
      $region39: #{down_forward.9} parent=35 // pred_region
        %s1135 = smul.u32 64, %s15
      $region40: #{down_forward.9} parent=35 // pred_fallthru
        _
    $region36: #{down_forward.9} parent=5 // pred_fallthru
      _
    %p1136 = scmp.le.s32.totalorder 2, %s10
    // Predicated region
    $region41: #{down_forward.9} parent=5 // pred_check
      %p1137 = pneg %p1136
    $region42: #{down_forward.9} parent=5 // pred_check_branch
      %1139 = sbr.rel (%p1137) target = $region44
    $region43: #{down_forward.9} parent=5 // pred_region
      %s1140 = ssub.s32 %s10, 2
      // Predicated region
      $region45: #{down_forward.9} parent=43 // pred_check
        %p1141 = pneg %p133
      $region46: #{down_forward.9} parent=43 // pred_check_branch
        %1143 = sbr.rel (%p1141) target = $region48
      $region47: #{down_forward.9} parent=43 // pred_region
        %s1144 = smul.u32 64, %s16
        %p1145 = scmp.lt.s32.totalorder %s1144, 191
        %s1146 = scalar_select %p1145, %s1144, 191
        %s1147 = smul.addr %s1146, 8
        %s1148 = scalar_lea.vmem %s4, %s1147
      $region48: #{down_forward.9} parent=43 // pred_fallthru
        _
    $region44: #{down_forward.9} parent=5 // pred_fallthru
      _
  $region6: #{down_forward.9} parent=0 // loop_footer
    %s14 = sadd.s32 1, %s10
  $region7: #{down_forward.9} parent=0 // loop_footer_branch
    %9 = sbr.rel target = $region3
  $region8: #{down_forward.9} parent=0 // loop_exit
    _

// kernel: down_forward.6
$region0: #{down_forward.6}
  #allocation0 [shape = 'u32[]', space=smem, size = 0x4, offset = 0x4, fixed_abs, tag = 'smem constant byte address 0x4 - core index']
  #allocation1 [shape = 'u32[72,128]{1,0:T(1,128)}', space=vmem, size = 0x9000, scoped, tag = 'internal scratch']
  #allocation2 [shape = 'bf16[768,128]{1,0:T(8,128)(2,1)}', space=vmem, size = 0x30000, scoped, tag = 'scratch operand']
  %s0 = inlined_call_operand.vmem [shape: bf16[1536,128], index: 0, kind: input, shape index: {}, may-alias: {0,1,2}]
  %s1 = inlined_call_operand.vmem [shape: bf16[1536,128], index: 1, kind: input, shape index: {}, may-alias: {0,1,2}]
  %s2 = inlined_call_operand.vmem [shape: bf16[1536,128], index: 2, kind: input, shape index: {}, may-alias: {0,1,2}]
  %s3 = inlined_call_operand.vmem [shape: bf16[1152,128], index: 3, kind: input, shape index: {}]
  %s4 = inlined_call_operand.vmem [shape: f32[1536,1], index: 4, kind: input, shape index: {}]
  %s5 = inlined_call_operand.vmem [shape: bf16[1536,128], index: 5, kind: output, shape index: {0}]
  %s6 = inlined_call_operand.vmem [shape: f32[8,128], index: 6, kind: output, shape index: {1}]
  %7 = xla_tuple %s5, %s6
  %s8 = sld [smem:[#allocation0]]
  $region38: #{down_forward.6} parent=0
    _
  %s10 = ssub.s32 1, %s8
  %s11 = scalar_select 0, %s10, %s8
  // Predicated region
  $region2: #{down_forward.6} parent=0 // pred_check
    _
  $region3: #{down_forward.6} parent=0 // pred_check_branch
    %13 = sbr.rel (0) target = $region5
  $region4: #{down_forward.6} parent=0 // pred_region
    %s14 = sadd.s32 0, 1
    %s15 = smul.u32 64, %s14
    %p16 = scmp.lt.s32.totalorder %s15, 191
    %s17 = scalar_select %p16, %s15, 191
    %s18 = smul.addr %s17, 4
    %s19 = scalar_lea.vmem %s0, %s18
    %s20 = sadd.s32 0, 1
    %s21 = smul.u32 64, %s20
  $region5: #{down_forward.6} parent=0 // pred_fallthru
    _
  // Predicated region
  $region6: #{down_forward.6} parent=0 // pred_check
    _
  $region7: #{down_forward.6} parent=0 // pred_check_branch
    %23 = sbr.rel (0) target = $region9
  $region8: #{down_forward.6} parent=0 // pred_region
    %s24 = sadd.s32 0, 1
    %s25 = smul.u32 %s24, 4
    %s26 = ssub.s32 %s25, 1
    %s27 = smul.u32 16, %s26
    %p28 = scmp.lt.s32.totalorder %s27, 191
    %s29 = scalar_select %p28, %s27, 191
    %s30 = smul.addr %s29, 4
    %s31 = scalar_lea.vmem %s1, %s30
    %s32 = sadd.s32 0, 1
    %s33 = smul.u32 %s32, 4
    %s34 = ssub.s32 %s33, 1
    %s35 = smul.u32 16, %s34
  $region9: #{down_forward.6} parent=0 // pred_fallthru
    _
  // Predicated region
  $region10: #{down_forward.6} parent=0 // pred_check
    _
  $region11: #{down_forward.6} parent=0 // pred_check_branch
    %37 = sbr.rel (0) target = $region13
  $region12: #{down_forward.6} parent=0 // pred_region
    %s38 = sadd.s32 0, 2
    %s39 = smul.u32 %s38, 4
    %s40 = smul.u32 16, %s39
    %p41 = scmp.lt.s32.totalorder %s40, 191
    %s42 = scalar_select %p41, %s40, 191
    %s43 = smul.addr %s42, 4
    %s44 = scalar_lea.vmem %s2, %s43
    %s45 = sadd.s32 0, 2
    %s46 = smul.u32 %s45, 4
    %s47 = smul.u32 16, %s46
  $region13: #{down_forward.6} parent=0 // pred_fallthru
    _
  // Predicated region
  $region14: #{down_forward.6} parent=0 // pred_check
    _
  $region15: #{down_forward.6} parent=0 // pred_check_branch
    %49 = sbr.rel (0) target = $region17
  $region16: #{down_forward.6} parent=0 // pred_region
    _
  $region17: #{down_forward.6} parent=0 // pred_fallthru
    _
  // Predicated region
  $region18: #{down_forward.6} parent=0 // pred_check
    _
  $region19: #{down_forward.6} parent=0 // pred_check_branch
    %51 = sbr.rel (0) target = $region21
  $region20: #{down_forward.6} parent=0 // pred_region
    %s52 = sadd.s32 0, 1
    %s53 = smul.u32 64, %s52
    %p54 = scmp.lt.s32.totalorder %s53, 191
    %s55 = scalar_select %p54, %s53, 191
    %s56 = smul.addr %s55, 8
    %s57 = scalar_lea.vmem %s4, %s56
    %s58 = sadd.s32 0, 1
    %s59 = smul.u32 64, %s58
  $region21: #{down_forward.6} parent=0 // pred_fallthru
    _
  %s60 = sadd.s32 0, 1
  %s61 = smul.u32 64, %s60
  %p62 = scmp.lt.s32.totalorder %s61, 191
  %s63 = scalar_select %p62, %s61, 191
  %s64 = smul.addr %s63, 4
  %s65 = scalar_lea.vmem %s0, %s64
  %s66 = sadd.s32 0, 1
  %s67 = smul.u32 %s66, 4
  %s68 = ssub.s32 %s67, 1
  %s69 = smul.u32 16, %s68
  %p70 = scmp.lt.s32.totalorder %s69, 191
  %s71 = scalar_select %p70, %s69, 191
  %s72 = smul.addr %s71, 4
  %s73 = scalar_lea.vmem %s1, %s72
  %s74 = sadd.s32 0, 2
  %s75 = smul.u32 %s74, 4
  %s76 = smul.u32 16, %s75
  %p77 = scmp.lt.s32.totalorder %s76, 191
  %s78 = scalar_select %p77, %s76, 191
  %s79 = smul.addr %s78, 4
  %s80 = scalar_lea.vmem %s2, %s79
  %s81 = sadd.s32 0, 1
  %s82 = smul.u32 64, %s81
  %p83 = scmp.lt.s32.totalorder %s82, 191
  %s84 = scalar_select %p83, %s82, 191
  %s85 = smul.addr %s84, 8
  %s86 = scalar_lea.vmem %s4, %s85
  %s87 = sadd.s32 0, 1
  %s88 = smul.u32 64, %s87
  %p89 = scmp.lt.s32.totalorder %s88, 191
  %s90 = scalar_select %p89, %s88, 191
  %s91 = smul.addr %s90, 4
  %s92 = scalar_lea.vmem %s5, %s91
  %s93 = sadd.s32 0, 1
  %s94 = smul.u32 64, %s93
  %p95 = scmp.lt.s32.totalorder %s94, 191
  %s96 = scalar_select %p95, %s94, 191
  %s97 = smul.addr %s96, 4
  %s98 = scalar_lea.vmem %s0, %s97
  %s99 = sadd.s32 0, 1
  %s100 = smul.u32 64, %s99
  %s101 = sadd.s32 0, 1
  %s102 = smul.u32 %s101, 4
  %s103 = ssub.s32 %s102, 1
  %s104 = smul.u32 16, %s103
  %p105 = scmp.lt.s32.totalorder %s104, 191
  %s106 = scalar_select %p105, %s104, 191
  %s107 = smul.addr %s106, 4
  %s108 = scalar_lea.vmem %s1, %s107
  %s109 = sadd.s32 0, 1
  %s110 = smul.u32 %s109, 4
  %s111 = ssub.s32 %s110, 1
  %s112 = smul.u32 16, %s111
  %s113 = sadd.s32 0, 2
  %s114 = smul.u32 %s113, 4
  %s115 = smul.u32 16, %s114
  %p116 = scmp.lt.s32.totalorder %s115, 191
  %s117 = scalar_select %p116, %s115, 191
  %s118 = smul.addr %s117, 4
  %s119 = scalar_lea.vmem %s2, %s118
  %s120 = sadd.s32 0, 2
  %s121 = smul.u32 %s120, 4
  %s122 = smul.u32 16, %s121
  %s123 = sadd.s32 0, 1
  %s124 = smul.u32 64, %s123
  %p125 = scmp.lt.s32.totalorder %s124, 191
  %s126 = scalar_select %p125, %s124, 191
  %s127 = smul.addr %s126, 8
  %s128 = scalar_lea.vmem %s4, %s127
  %s129 = sadd.s32 0, 1
  %s130 = smul.u32 64, %s129
  %s131 = sadd.s32 0, 1
  %s132 = smul.u32 64, %s131
  %p133 = scmp.lt.s32.totalorder %s132, 191
  %s134 = scalar_select %p133, %s132, 191
  %s135 = smul.addr %s134, 4
  %s136 = scalar_lea.vmem %s5, %s135
  %s137 = sadd.s32 0, 1
  %s138 = smul.u32 64, %s137
  %v139 = vld [vmem:[%s108] sm:$0xf]
  %v140 = vld [vmem:[%s108 + $0x4] sm:$0xf]
  %v141 = vld [vmem:[%s108 + $0x8] sm:$0xf]
  %v142 = vld [vmem:[%s108 + $0xc] sm:$0xf]
  %v143 = vld [vmem:[%s108 + $0x10] sm:$0xf]
  %v144 = vld [vmem:[%s108 + $0x14] sm:$0xf]
  %v145 = vld [vmem:[%s108 + $0x18] sm:$0xf]
  %v146 = vld [vmem:[%s108 + $0x1c] sm:$0xf]
  %v147 = vld [vmem:[%s108 + $0x20] sm:$0xf]
  %v148 = vld [vmem:[%s108 + $0x24] sm:$0xf]
  %v149 = vld [vmem:[%s108 + $0x28] sm:$0xf]
  %v150 = vld [vmem:[%s108 + $0x2c] sm:$0xf]
  %v151 = vld [vmem:[%s108 + $0x30] sm:$0xf]
  %v152 = vld [vmem:[%s108 + $0x34] sm:$0xf]
  %v153 = vld [vmem:[%s108 + $0x38] sm:$0xf]
  %v154 = vld [vmem:[%s108 + $0x3c] sm:$0xf]
  %155 = vst [vmem:[#allocation2] sm:$0xf] %v139
  %156 = vst [vmem:[#allocation2 + $0x4] sm:$0xf] %v140
  %157 = vst [vmem:[#allocation2 + $0x8] sm:$0xf] %v141
  %158 = vst [vmem:[#allocation2 + $0xc] sm:$0xf] %v142
  %159 = vst [vmem:[#allocation2 + $0x10] sm:$0xf] %v143
  %160 = vst [vmem:[#allocation2 + $0x14] sm:$0xf] %v144
  %161 = vst [vmem:[#allocation2 + $0x18] sm:$0xf] %v145
  %162 = vst [vmem:[#allocation2 + $0x1c] sm:$0xf] %v146
  %163 = vst [vmem:[#allocation2 + $0x20] sm:$0xf] %v147
  %164 = vst [vmem:[#allocation2 + $0x24] sm:$0xf] %v148
  %165 = vst [vmem:[#allocation2 + $0x28] sm:$0xf] %v149
  %166 = vst [vmem:[#allocation2 + $0x2c] sm:$0xf] %v150
  %167 = vst [vmem:[#allocation2 + $0x30] sm:$0xf] %v151
  %168 = vst [vmem:[#allocation2 + $0x34] sm:$0xf] %v152
  %169 = vst [vmem:[#allocation2 + $0x38] sm:$0xf] %v153
  %170 = vst [vmem:[#allocation2 + $0x3c] sm:$0xf] %v154
  %v171 = vld [vmem:[%s98] sm:$0xf]
  %v172 = vld [vmem:[%s98 + $0x4] sm:$0xf]
  %v173 = vld [vmem:[%s98 + $0x8] sm:$0xf]
  %v174 = vld [vmem:[%s98 + $0xc] sm:$0xf]
  %v175 = vld [vmem:[%s98 + $0x10] sm:$0xf]
  %v176 = vld [vmem:[%s98 + $0x14] sm:$0xf]
  %v177 = vld [vmem:[%s98 + $0x18] sm:$0xf]
  %v178 = vld [vmem:[%s98 + $0x1c] sm:$0xf]
  %v179 = vld [vmem:[%s98 + $0x20] sm:$0xf]
  %v180 = vld [vmem:[%s98 + $0x24] sm:$0xf]
  %v181 = vld [vmem:[%s98 + $0x28] sm:$0xf]
  %v182 = vld [vmem:[%s98 + $0x2c] sm:$0xf]
  %v183 = vld [vmem:[%s98 + $0x30] sm:$0xf]
  %v184 = vld [vmem:[%s98 + $0x34] sm:$0xf]
  %v185 = vld [vmem:[%s98 + $0x38] sm:$0xf]
  %v186 = vld [vmem:[%s98 + $0x3c] sm:$0xf]
  %v187 = vld [vmem:[%s98 + $0x40] sm:$0xf]
  %v188 = vld [vmem:[%s98 + $0x44] sm:$0xf]
  %v189 = vld [vmem:[%s98 + $0x48] sm:$0xf]
  %v190 = vld [vmem:[%s98 + $0x4c] sm:$0xf]
  %v191 = vld [vmem:[%s98 + $0x50] sm:$0xf]
  %v192 = vld [vmem:[%s98 + $0x54] sm:$0xf]
  %v193 = vld [vmem:[%s98 + $0x58] sm:$0xf]
  %v194 = vld [vmem:[%s98 + $0x5c] sm:$0xf]
  %v195 = vld [vmem:[%s98 + $0x60] sm:$0xf]
  %v196 = vld [vmem:[%s98 + $0x64] sm:$0xf]
  %v197 = vld [vmem:[%s98 + $0x68] sm:$0xf]
  %v198 = vld [vmem:[%s98 + $0x6c] sm:$0xf]
  %v199 = vld [vmem:[%s98 + $0x70] sm:$0xf]
  %v200 = vld [vmem:[%s98 + $0x74] sm:$0xf]
  %v201 = vld [vmem:[%s98 + $0x78] sm:$0xf]
  %v202 = vld [vmem:[%s98 + $0x7c] sm:$0xf]
  %v203 = vld [vmem:[%s98 + $0x80] sm:$0xf]
  %v204 = vld [vmem:[%s98 + $0x84] sm:$0xf]
  %v205 = vld [vmem:[%s98 + $0x88] sm:$0xf]
  %v206 = vld [vmem:[%s98 + $0x8c] sm:$0xf]
  %v207 = vld [vmem:[%s98 + $0x90] sm:$0xf]
  %v208 = vld [vmem:[%s98 + $0x94] sm:$0xf]
  %v209 = vld [vmem:[%s98 + $0x98] sm:$0xf]
  %v210 = vld [vmem:[%s98 + $0x9c] sm:$0xf]
  %v211 = vld [vmem:[%s98 + $0xa0] sm:$0xf]
  %v212 = vld [vmem:[%s98 + $0xa4] sm:$0xf]
  %v213 = vld [vmem:[%s98 + $0xa8] sm:$0xf]
  %v214 = vld [vmem:[%s98 + $0xac] sm:$0xf]
  %v215 = vld [vmem:[%s98 + $0xb0] sm:$0xf]
  %v216 = vld [vmem:[%s98 + $0xb4] sm:$0xf]
  %v217 = vld [vmem:[%s98 + $0xb8] sm:$0xf]
  %v218 = vld [vmem:[%s98 + $0xbc] sm:$0xf]
  %v219 = vld [vmem:[%s98 + $0xc0] sm:$0xf]
  %v220 = vld [vmem:[%s98 + $0xc4] sm:$0xf]
  %v221 = vld [vmem:[%s98 + $0xc8] sm:$0xf]
  %v222 = vld [vmem:[%s98 + $0xcc] sm:$0xf]
  %v223 = vld [vmem:[%s98 + $0xd0] sm:$0xf]
  %v224 = vld [vmem:[%s98 + $0xd4] sm:$0xf]
  %v225 = vld [vmem:[%s98 + $0xd8] sm:$0xf]
  %v226 = vld [vmem:[%s98 + $0xdc] sm:$0xf]
  %v227 = vld [vmem:[%s98 + $0xe0] sm:$0xf]
  %v228 = vld [vmem:[%s98 + $0xe4] sm:$0xf]
  %v229 = vld [vmem:[%s98 + $0xe8] sm:$0xf]
  %v230 = vld [vmem:[%s98 + $0xec] sm:$0xf]
  %v231 = vld [vmem:[%s98 + $0xf0] sm:$0xf]
  %v232 = vld [vmem:[%s98 + $0xf4] sm:$0xf]
  %v233 = vld [vmem:[%s98 + $0xf8] sm:$0xf]
  %v234 = vld [vmem:[%s98 + $0xfc] sm:$0xf]
  %235 = vst [vmem:[#allocation2 + $0x40] sm:$0xf] %v171
  %236 = vst [vmem:[#allocation2 + $0x44] sm:$0xf] %v172
  %237 = vst [vmem:[#allocation2 + $0x48] sm:$0xf] %v173
  %238 = vst [vmem:[#allocation2 + $0x4c] sm:$0xf] %v174
  %239 = vst [vmem:[#allocation2 + $0x50] sm:$0xf] %v175
  %240 = vst [vmem:[#allocation2 + $0x54] sm:$0xf] %v176
  %241 = vst [vmem:[#allocation2 + $0x58] sm:$0xf] %v177
  %242 = vst [vmem:[#allocation2 + $0x5c] sm:$0xf] %v178
  %243 = vst [vmem:[#allocation2 + $0x60] sm:$0xf] %v179
  %244 = vst [vmem:[#allocation2 + $0x64] sm:$0xf] %v180
  %245 = vst [vmem:[#allocation2 + $0x68] sm:$0xf] %v181
  %246 = vst [vmem:[#allocation2 + $0x6c] sm:$0xf] %v182
  %247 = vst [vmem:[#allocation2 + $0x70] sm:$0xf] %v183
  %248 = vst [vmem:[#allocation2 + $0x74] sm:$0xf] %v184
  %249 = vst [vmem:[#allocation2 + $0x78] sm:$0xf] %v185
  %250 = vst [vmem:[#allocation2 + $0x7c] sm:$0xf] %v186
  %251 = vst [vmem:[#allocation2 + $0x80] sm:$0xf] %v187
  %252 = vst [vmem:[#allocation2 + $0x84] sm:$0xf] %v188
  %253 = vst [vmem:[#allocation2 + $0x88] sm:$0xf] %v189
  %254 = vst [vmem:[#allocation2 + $0x8c] sm:$0xf] %v190
  %255 = vst [vmem:[#allocation2 + $0x90] sm:$0xf] %v191
  %256 = vst [vmem:[#allocation2 + $0x94] sm:$0xf] %v192
  %257 = vst [vmem:[#allocation2 + $0x98] sm:$0xf] %v193
  %258 = vst [vmem:[#allocation2 + $0x9c] sm:$0xf] %v194
  %259 = vst [vmem:[#allocation2 + $0xa0] sm:$0xf] %v195
  %260 = vst [vmem:[#allocation2 + $0xa4] sm:$0xf] %v196
  %261 = vst [vmem:[#allocation2 + $0xa8] sm:$0xf] %v197
  %262 = vst [vmem:[#allocation2 + $0xac] sm:$0xf] %v198
  %263 = vst [vmem:[#allocation2 + $0xb0] sm:$0xf] %v199
  %264 = vst [vmem:[#allocation2 + $0xb4] sm:$0xf] %v200
  %265 = vst [vmem:[#allocation2 + $0xb8] sm:$0xf] %v201
  %266 = vst [vmem:[#allocation2 + $0xbc] sm:$0xf] %v202
  %267 = vst [vmem:[#allocation2 + $0xc0] sm:$0xf] %v203
  %268 = vst [vmem:[#allocation2 + $0xc4] sm:$0xf] %v204
  %269 = vst [vmem:[#allocation2 + $0xc8] sm:$0xf] %v205
  %270 = vst [vmem:[#allocation2 + $0xcc] sm:$0xf] %v206
  %271 = vst [vmem:[#allocation2 + $0xd0] sm:$0xf] %v207
  %272 = vst [vmem:[#allocation2 + $0xd4] sm:$0xf] %v208
  %273 = vst [vmem:[#allocation2 + $0xd8] sm:$0xf] %v209
  %274 = vst [vmem:[#allocation2 + $0xdc] sm:$0xf] %v210
  %275 = vst [vmem:[#allocation2 + $0xe0] sm:$0xf] %v211
  %276 = vst [vmem:[#allocation2 + $0xe4] sm:$0xf] %v212
  %277 = vst [vmem:[#allocation2 + $0xe8] sm:$0xf] %v213
  %278 = vst [vmem:[#allocation2 + $0xec] sm:$0xf] %v214
  %279 = vst [vmem:[#allocation2 + $0xf0] sm:$0xf] %v215
  %280 = vst [vmem:[#allocation2 + $0xf4] sm:$0xf] %v216
  %281 = vst [vmem:[#allocation2 + $0xf8] sm:$0xf] %v217
  %282 = vst [vmem:[#allocation2 + $0xfc] sm:$0xf] %v218
  %283 = vst [vmem:[#allocation2 + $0x100] sm:$0xf] %v219
  %284 = vst [vmem:[#allocation2 + $0x104] sm:$0xf] %v220
  %285 = vst [vmem:[#allocation2 + $0x108] sm:$0xf] %v221
  %286 = vst [vmem:[#allocation2 + $0x10c] sm:$0xf] %v222
  %287 = vst [vmem:[#allocation2 + $0x110] sm:$0xf] %v223
  %288 = vst [vmem:[#allocation2 + $0x114] sm:$0xf] %v224
  %289 = vst [vmem:[#allocation2 + $0x118] sm:$0xf] %v225
  %290 = vst [vmem:[#allocation2 + $0x11c] sm:$0xf] %v226
  %291 = vst [vmem:[#allocation2 + $0x120] sm:$0xf] %v227
  %292 = vst [vmem:[#allocation2 + $0x124] sm:$0xf] %v228
  %293 = vst [vmem:[#allocation2 + $0x128] sm:$0xf] %v229
  %294 = vst [vmem:[#allocation2 + $0x12c] sm:$0xf] %v230
  %295 = vst [vmem:[#allocation2 + $0x130] sm:$0xf] %v231
  %296 = vst [vmem:[#allocation2 + $0x134] sm:$0xf] %v232
  %297 = vst [vmem:[#allocation2 + $0x138] sm:$0xf] %v233
  %298 = vst [vmem:[#allocation2 + $0x13c] sm:$0xf] %v234
  %v299 = vld [vmem:[%s119] sm:$0xf]
  %v300 = vld [vmem:[%s119 + $0x4] sm:$0xf]
  %v301 = vld [vmem:[%s119 + $0x8] sm:$0xf]
  %v302 = vld [vmem:[%s119 + $0xc] sm:$0xf]
  %v303 = vld [vmem:[%s119 + $0x10] sm:$0xf]
  %v304 = vld [vmem:[%s119 + $0x14] sm:$0xf]
  %v305 = vld [vmem:[%s119 + $0x18] sm:$0xf]
  %v306 = vld [vmem:[%s119 + $0x1c] sm:$0xf]
  %v307 = vld [vmem:[%s119 + $0x20] sm:$0xf]
  %v308 = vld [vmem:[%s119 + $0x24] sm:$0xf]
  %v309 = vld [vmem:[%s119 + $0x28] sm:$0xf]
  %v310 = vld [vmem:[%s119 + $0x2c] sm:$0xf]
  %v311 = vld [vmem:[%s119 + $0x30] sm:$0xf]
  %v312 = vld [vmem:[%s119 + $0x34] sm:$0xf]
  %v313 = vld [vmem:[%s119 + $0x38] sm:$0xf]
  %v314 = vld [vmem:[%s119 + $0x3c] sm:$0xf]
  %315 = vst [vmem:[#allocation2 + $0x140] sm:$0xf] %v299
  %316 = vst [vmem:[#allocation2 + $0x144] sm:$0xf] %v300
  %317 = vst [vmem:[#allocation2 + $0x148] sm:$0xf] %v301
  %318 = vst [vmem:[#allocation2 + $0x14c] sm:$0xf] %v302
  %319 = vst [vmem:[#allocation2 + $0x150] sm:$0xf] %v303
  %320 = vst [vmem:[#allocation2 + $0x154] sm:$0xf] %v304
  %321 = vst [vmem:[#allocation2 + $0x158] sm:$0xf] %v305
  %322 = vst [vmem:[#allocation2 + $0x15c] sm:$0xf] %v306
  %323 = vst [vmem:[#allocation2 + $0x160] sm:$0xf] %v307
  %324 = vst [vmem:[#allocation2 + $0x164] sm:$0xf] %v308
  %325 = vst [vmem:[#allocation2 + $0x168] sm:$0xf] %v309
  %326 = vst [vmem:[#allocation2 + $0x16c] sm:$0xf] %v310
  %327 = vst [vmem:[#allocation2 + $0x170] sm:$0xf] %v311
  %328 = vst [vmem:[#allocation2 + $0x174] sm:$0xf] %v312
  %329 = vst [vmem:[#allocation2 + $0x178] sm:$0xf] %v313
  %330 = vst [vmem:[#allocation2 + $0x17c] sm:$0xf] %v314
  %v331 = vld [vmem:[#allocation2 + $0x38] sm:$0xc]
  %v332 = vld [vmem:[#allocation2 + $0x3c] sm:$0xf]
  %v333 = vld [vmem:[#allocation2 + $0x40] sm:$0xf]
  %v334 = vld [vmem:[#allocation2 + $0x44] sm:$0xf]
  %v335 = vld [vmem:[#allocation2 + $0x48] sm:$0xf]
  %v336 = vld [vmem:[#allocation2 + $0x4c] sm:$0xf]
  %v337 = vld [vmem:[#allocation2 + $0x50] sm:$0xf]
  %v338 = vld [vmem:[#allocation2 + $0x54] sm:$0xf]
  %v339 = vld [vmem:[#allocation2 + $0x58] sm:$0xf]
  %v340 = vld [vmem:[#allocation2 + $0x5c] sm:$0xf]
  %v341 = vld [vmem:[#allocation2 + $0x60] sm:$0xf]
  %v342 = vld [vmem:[#allocation2 + $0x64] sm:$0xf]
  %v343 = vld [vmem:[#allocation2 + $0x68] sm:$0xf]
  %v344 = vld [vmem:[#allocation2 + $0x6c] sm:$0xf]
  %v345 = vld [vmem:[#allocation2 + $0x70] sm:$0xf]
  %v346 = vld [vmem:[#allocation2 + $0x74] sm:$0xf]
  %v347 = vld [vmem:[#allocation2 + $0x78] sm:$0xf]
  %v348 = vld [vmem:[#allocation2 + $0x7c] sm:$0xf]
  %v349 = vld [vmem:[#allocation2 + $0x80] sm:$0xf]
  %v350 = vld [vmem:[#allocation2 + $0x84] sm:$0xf]
  %v351 = vld [vmem:[#allocation2 + $0x88] sm:$0xf]
  %v352 = vld [vmem:[#allocation2 + $0x8c] sm:$0xf]
  %v353 = vld [vmem:[#allocation2 + $0x90] sm:$0xf]
  %v354 = vld [vmem:[#allocation2 + $0x94] sm:$0xf]
  %v355 = vld [vmem:[#allocation2 + $0x98] sm:$0xf]
  %v356 = vld [vmem:[#allocation2 + $0x9c] sm:$0xf]
  %v357 = vld [vmem:[#allocation2 + $0xa0] sm:$0xf]
  %v358 = vld [vmem:[#allocation2 + $0xa4] sm:$0xf]
  %v359 = vld [vmem:[#allocation2 + $0xa8] sm:$0xf]
  %v360 = vld [vmem:[#allocation2 + $0xac] sm:$0xf]
  %v361 = vld [vmem:[#allocation2 + $0xb0] sm:$0xf]
  %v362 = vld [vmem:[#allocation2 + $0xb4] sm:$0xf]
  %v363 = vld [vmem:[#allocation2 + $0xb8] sm:$0xf]
  %v364 = vld [vmem:[#allocation2 + $0xbc] sm:$0xf]
  %v365 = vld [vmem:[#allocation2 + $0xc0] sm:$0xf]
  %v366 = vld [vmem:[#allocation2 + $0xc4] sm:$0xf]
  %v367 = vld [vmem:[#allocation2 + $0xc8] sm:$0xf]
  %v368 = vld [vmem:[#allocation2 + $0xcc] sm:$0xf]
  %v369 = vld [vmem:[#allocation2 + $0xd0] sm:$0xf]
  %v370 = vld [vmem:[#allocation2 + $0xd4] sm:$0xf]
  %v371 = vld [vmem:[#allocation2 + $0xd8] sm:$0xf]
  %v372 = vld [vmem:[#allocation2 + $0xdc] sm:$0xf]
  %v373 = vld [vmem:[#allocation2 + $0xe0] sm:$0xf]
  %v374 = vld [vmem:[#allocation2 + $0xe4] sm:$0xf]
  %v375 = vld [vmem:[#allocation2 + $0xe8] sm:$0xf]
  %v376 = vld [vmem:[#allocation2 + $0xec] sm:$0xf]
  %v377 = vld [vmem:[#allocation2 + $0xf0] sm:$0xf]
  %v378 = vld [vmem:[#allocation2 + $0xf4] sm:$0xf]
  %v379 = vld [vmem:[#allocation2 + $0xf8] sm:$0xf]
  %v380 = vld [vmem:[#allocation2 + $0xfc] sm:$0xf]
  %v381 = vld [vmem:[#allocation2 + $0x100] sm:$0xf]
  %v382 = vld [vmem:[#allocation2 + $0x104] sm:$0xf]
  %v383 = vld [vmem:[#allocation2 + $0x108] sm:$0xf]
  %v384 = vld [vmem:[#allocation2 + $0x10c] sm:$0xf]
  %v385 = vld [vmem:[#allocation2 + $0x110] sm:$0xf]
  %v386 = vld [vmem:[#allocation2 + $0x114] sm:$0xf]
  %v387 = vld [vmem:[#allocation2 + $0x118] sm:$0xf]
  %v388 = vld [vmem:[#allocation2 + $0x11c] sm:$0xf]
  %v389 = vld [vmem:[#allocation2 + $0x120] sm:$0xf]
  %v390 = vld [vmem:[#allocation2 + $0x124] sm:$0xf]
  %v391 = vld [vmem:[#allocation2 + $0x128] sm:$0xf]
  %v392 = vld [vmem:[#allocation2 + $0x12c] sm:$0xf]
  %v393 = vld [vmem:[#allocation2 + $0x130] sm:$0xf]
  %v394 = vld [vmem:[#allocation2 + $0x134] sm:$0xf]
  %v395 = vld [vmem:[#allocation2 + $0x138] sm:$0x7]
  %v396 = vld [vmem:[%s3] sm:$0xf]
  %v397 = vld [vmem:[%s3 + $0x4] sm:$0xf]
  %v398 = vld [vmem:[%s3 + $0x8] sm:$0xf]
  %v399 = vld [vmem:[%s3 + $0xc] sm:$0xf]
  %v400 = vld [vmem:[%s3 + $0x10] sm:$0xf]
  %v401 = vld [vmem:[%s3 + $0x14] sm:$0xf]
  %v402 = vld [vmem:[%s3 + $0x18] sm:$0xf]
  %v403 = vld [vmem:[%s3 + $0x1c] sm:$0xf]
  %v404 = vld [vmem:[%s3 + $0x20] sm:$0xf]
  %v405 = vld [vmem:[%s3 + $0x24] sm:$0xf]
  %v406 = vld [vmem:[%s3 + $0x28] sm:$0xf]
  %v407 = vld [vmem:[%s3 + $0x2c] sm:$0xf]
  %v408 = vld [vmem:[%s3 + $0x30] sm:$0xf]
  %v409 = vld [vmem:[%s3 + $0x34] sm:$0xf]
  %v410 = vld [vmem:[%s3 + $0x38] sm:$0xf]
  %v411 = vld [vmem:[%s3 + $0x3c] sm:$0xf]
  %v412 = vld [vmem:[#allocation2 + $0x38] sm:$0x8]
  %v413 = vld [vmem:[%s3 + $0x40] sm:$0xf]
  %v414 = vld [vmem:[%s3 + $0x44] sm:$0xf]
  %v415 = vld [vmem:[%s3 + $0x48] sm:$0xf]
  %v416 = vld [vmem:[%s3 + $0x4c] sm:$0xf]
  %v417 = vld [vmem:[%s3 + $0x50] sm:$0xf]
  %v418 = vld [vmem:[%s3 + $0x54] sm:$0xf]
  %v419 = vld [vmem:[%s3 + $0x58] sm:$0xf]
  %v420 = vld [vmem:[%s3 + $0x5c] sm:$0xf]
  %v421 = vld [vmem:[%s3 + $0x60] sm:$0xf]
  %v422 = vld [vmem:[%s3 + $0x64] sm:$0xf]
  %v423 = vld [vmem:[%s3 + $0x68] sm:$0xf]
  %v424 = vld [vmem:[%s3 + $0x6c] sm:$0xf]
  %v425 = vld [vmem:[%s3 + $0x70] sm:$0xf]
  %v426 = vld [vmem:[%s3 + $0x74] sm:$0xf]
  %v427 = vld [vmem:[%s3 + $0x78] sm:$0xf]
  %v428 = vld [vmem:[%s3 + $0x7c] sm:$0xf]
  %v494 = vunpack.c.l.b16 %v412
  %v495 = vunpack.c.l.b16 %v332
  %v496 = vunpack.c.l.b16 %v333
  %v497 = vunpack.c.l.b16 %v334
  %v498 = vunpack.c.l.b16 %v335
  %v499 = vunpack.c.l.b16 %v336
  %v500 = vunpack.c.l.b16 %v337
  %v501 = vunpack.c.l.b16 %v338
  %v502 = vunpack.c.l.b16 %v339
  %v503 = vunpack.c.l.b16 %v340
  %v504 = vunpack.c.l.b16 %v341
  %v505 = vunpack.c.l.b16 %v342
  %v506 = vunpack.c.l.b16 %v343
  %v507 = vunpack.c.l.b16 %v344
  %v508 = vunpack.c.l.b16 %v345
  %v509 = vunpack.c.l.b16 %v346
  %v510 = vunpack.c.l.b16 %v347
  %v511 = vunpack.c.l.b16 %v348
  %v512 = vunpack.c.l.b16 %v349
  %v513 = vunpack.c.l.b16 %v350
  %v514 = vunpack.c.l.b16 %v351
  %v515 = vunpack.c.l.b16 %v352
  %v516 = vunpack.c.l.b16 %v353
  %v517 = vunpack.c.l.b16 %v354
  %v518 = vunpack.c.l.b16 %v355
  %v519 = vunpack.c.l.b16 %v356
  %v520 = vunpack.c.l.b16 %v357
  %v521 = vunpack.c.l.b16 %v358
  %v522 = vunpack.c.l.b16 %v359
  %v523 = vunpack.c.l.b16 %v360
  %v524 = vunpack.c.l.b16 %v361
  %v525 = vunpack.c.l.b16 %v362
  %v526 = vunpack.c.l.b16 %v363
  %v527 = vunpack.c.l.b16 %v364
  %v528 = vunpack.c.l.b16 %v365
  %v529 = vunpack.c.l.b16 %v366
  %v530 = vunpack.c.l.b16 %v367
  %v531 = vunpack.c.l.b16 %v368
  %v532 = vunpack.c.l.b16 %v369
  %v533 = vunpack.c.l.b16 %v370
  %v534 = vunpack.c.l.b16 %v371
  %v535 = vunpack.c.l.b16 %v372
  %v536 = vunpack.c.l.b16 %v373
  %v537 = vunpack.c.l.b16 %v374
  %v538 = vunpack.c.l.b16 %v375
  %v539 = vunpack.c.l.b16 %v376
  %v540 = vunpack.c.l.b16 %v377
  %v541 = vunpack.c.l.b16 %v378
  %v542 = vunpack.c.l.b16 %v379
  %v543 = vunpack.c.l.b16 %v380
  %v544 = vunpack.c.l.b16 %v381
  %v545 = vunpack.c.l.b16 %v382
  %v546 = vunpack.c.l.b16 %v383
  %v547 = vunpack.c.l.b16 %v384
  %v548 = vunpack.c.l.b16 %v385
  %v549 = vunpack.c.l.b16 %v386
  %v550 = vunpack.c.l.b16 %v387
  %v551 = vunpack.c.l.b16 %v388
  %v552 = vunpack.c.l.b16 %v389
  %v553 = vunpack.c.l.b16 %v390
  %v554 = vunpack.c.l.b16 %v391
  %v555 = vunpack.c.l.b16 %v392
  %v556 = vunpack.c.l.b16 %v393
  %v557 = vunpack.c.l.b16 %v394
  %v558 = vunpack.c.l.b16 %v395
  %v559 = vpack.c.b16 %v495, %v494
  %v560 = vpack.c.b16 %v497, %v496
  %v561 = vpack.c.b16 %v499, %v498
  %v562 = vpack.c.b16 %v501, %v500
  %v563 = vpack.c.b16 %v503, %v502
  %v564 = vpack.c.b16 %v505, %v504
  %v565 = vpack.c.b16 %v507, %v506
  %v566 = vpack.c.b16 %v509, %v508
  %v567 = vpack.c.b16 %v511, %v510
  %v568 = vpack.c.b16 %v513, %v512
  %v569 = vpack.c.b16 %v515, %v514
  %v570 = vpack.c.b16 %v517, %v516
  %v571 = vpack.c.b16 %v519, %v518
  %v572 = vpack.c.b16 %v521, %v520
  %v573 = vpack.c.b16 %v523, %v522
  %v574 = vpack.c.b16 %v525, %v524
  %v575 = vpack.c.b16 %v527, %v526
  %v576 = vpack.c.b16 %v529, %v528
  %v577 = vpack.c.b16 %v531, %v530
  %v578 = vpack.c.b16 %v533, %v532
  %v579 = vpack.c.b16 %v535, %v534
  %v580 = vpack.c.b16 %v537, %v536
  %v581 = vpack.c.b16 %v539, %v538
  %v582 = vpack.c.b16 %v541, %v540
  %v583 = vpack.c.b16 %v543, %v542
  %v584 = vpack.c.b16 %v545, %v544
  %v585 = vpack.c.b16 %v547, %v546
  %v586 = vpack.c.b16 %v549, %v548
  %v587 = vpack.c.b16 %v551, %v550
  %v588 = vpack.c.b16 %v553, %v552
  %v589 = vpack.c.b16 %v555, %v554
  %v590 = vpack.c.b16 %v557, %v556
  %v591 = vpack.c.b16 %v558, %v558
  %vm592 = vcmask 1044480
  %v593 = vrot.slane %v559, 3
  %v594 = vrot.slane %v560, 3
  %v595 = vsel %vm592, %v593, %v594
  %v596 = vrot.slane %v561, 3
  %v597 = vsel %vm592, %v594, %v596
  %v598 = vrot.slane %v562, 3
  %v599 = vsel %vm592, %v596, %v598
  %v600 = vrot.slane %v563, 3
  %v601 = vsel %vm592, %v598, %v600
  %v602 = vrot.slane %v564, 3
  %v603 = vsel %vm592, %v600, %v602
  %v604 = vrot.slane %v565, 3
  %v605 = vsel %vm592, %v602, %v604
  %v606 = vrot.slane %v566, 3
  %v607 = vsel %vm592, %v604, %v606
  %v608 = vrot.slane %v567, 3
  %v609 = vsel %vm592, %v606, %v608
  %v610 = vrot.slane %v568, 3
  %v611 = vsel %vm592, %v608, %v610
  %v612 = vrot.slane %v569, 3
  %v613 = vsel %vm592, %v610, %v612
  %v614 = vrot.slane %v570, 3
  %v615 = vsel %vm592, %v612, %v614
  %v616 = vrot.slane %v571, 3
  %v617 = vsel %vm592, %v614, %v616
  %v618 = vrot.slane %v572, 3
  %v619 = vsel %vm592, %v616, %v618
  %v620 = vrot.slane %v573, 3
  %v621 = vsel %vm592, %v618, %v620
  %v622 = vrot.slane %v574, 3
  %v623 = vsel %vm592, %v620, %v622
  %v624 = vrot.slane %v575, 3
  %v625 = vsel %vm592, %v622, %v624
  %v626 = vrot.slane %v576, 3
  %v627 = vsel %vm592, %v624, %v626
  %v628 = vrot.slane %v577, 3
  %v629 = vsel %vm592, %v626, %v628
  %v630 = vrot.slane %v578, 3
  %v631 = vsel %vm592, %v628, %v630
  %v632 = vrot.slane %v579, 3
  %v633 = vsel %vm592, %v630, %v632
  %v634 = vrot.slane %v580, 3
  %v635 = vsel %vm592, %v632, %v634
  %v636 = vrot.slane %v581, 3
  %v637 = vsel %vm592, %v634, %v636
  %v638 = vrot.slane %v582, 3
  %v639 = vsel %vm592, %v636, %v638
  %v640 = vrot.slane %v583, 3
  %v641 = vsel %vm592, %v638, %v640
  %v642 = vrot.slane %v584, 3
  %v643 = vsel %vm592, %v640, %v642
  %v644 = vrot.slane %v585, 3
  %v645 = vsel %vm592, %v642, %v644
  %v646 = vrot.slane %v586, 3
  %v647 = vsel %vm592, %v644, %v646
  %v648 = vrot.slane %v587, 3
  %v649 = vsel %vm592, %v646, %v648
  %v650 = vrot.slane %v588, 3
  %v651 = vsel %vm592, %v648, %v650
  %v652 = vrot.slane %v589, 3
  %v653 = vsel %vm592, %v650, %v652
  %v654 = vrot.slane %v590, 3
  %v655 = vsel %vm592, %v652, %v654
  %v656 = vrot.slane %v591, 3
  %v657 = vsel %vm592, %v654, %v656
  %v706 = vunpack.c.l.b16 %v413
  %v707 = vunpack.c.l.b16 %v414
  %v708 = vunpack.c.l.b16 %v415
  %v709 = vunpack.c.l.b16 %v416
  %v710 = vunpack.c.l.b16 %v417
  %v711 = vunpack.c.l.b16 %v418
  %v712 = vunpack.c.l.b16 %v419
  %v713 = vunpack.c.l.b16 %v420
  %v714 = vunpack.c.l.b16 %v421
  %v715 = vunpack.c.l.b16 %v422
  %v716 = vunpack.c.l.b16 %v423
  %v717 = vunpack.c.l.b16 %v424
  %v718 = vunpack.c.l.b16 %v425
  %v719 = vunpack.c.l.b16 %v426
  %v720 = vunpack.c.l.b16 %v427
  %v721 = vunpack.c.l.b16 %v428
  %v722 = vpack.c.b16 %v707, %v706
  %v723 = vpack.c.b16 %v709, %v708
  %v724 = vpack.c.b16 %v711, %v710
  %v725 = vpack.c.b16 %v713, %v712
  %v726 = vpack.c.b16 %v715, %v714
  %v727 = vpack.c.b16 %v717, %v716
  %v728 = vpack.c.b16 %v719, %v718
  %v729 = vpack.c.b16 %v721, %v720
  %738 = vmatpush.bf16.msra.mxu0 %v729
  %739 = vmatpush.bf16.msra.mxu0 %v728
  %740 = vmatpush.bf16.msra.mxu0 %v727
  %741 = vmatpush.bf16.msra.mxu0 %v726
  %742 = vmatpush.bf16.msra.mxu0 %v725
  %743 = vmatpush.bf16.msra.mxu0 %v724
  %744 = vmatpush.bf16.msra.mxu0 %v723
  %745 = vmatpush.bf16.msra.mxu0 %v722
  %746 = vmatmul.bf16.gmra.mxu0 %v595
  %v747 = vpop.f32.mrf.mxu0
  %v748 = vadd.f32 0.0, %v747
  %v749 = vpop.f32.mrf.mxu0
  %v750 = vadd.f32 0.0, %v749
  %751 = vmatmul.bf16.gmra.mxu0 %v597
  %v752 = vpop.f32.mrf.mxu0
  %v753 = vadd.f32 0.0, %v752
  %v754 = vpop.f32.mrf.mxu0
  %v755 = vadd.f32 0.0, %v754
  %756 = vmatmul.bf16.gmra.mxu0 %v599
  %v757 = vpop.f32.mrf.mxu0
  %v758 = vadd.f32 0.0, %v757
  %v759 = vpop.f32.mrf.mxu0
  %v760 = vadd.f32 0.0, %v759
  %761 = vmatmul.bf16.gmra.mxu0 %v601
  %v762 = vpop.f32.mrf.mxu0
  %v763 = vadd.f32 0.0, %v762
  %v764 = vpop.f32.mrf.mxu0
  %v765 = vadd.f32 0.0, %v764
  %766 = vmatmul.bf16.gmra.mxu0 %v603
  %v767 = vpop.f32.mrf.mxu0
  %v768 = vadd.f32 0.0, %v767
  %v769 = vpop.f32.mrf.mxu0
  %v770 = vadd.f32 0.0, %v769
  %771 = vmatmul.bf16.gmra.mxu0 %v605
  %v772 = vpop.f32.mrf.mxu0
  %v773 = vadd.f32 0.0, %v772
  %v774 = vpop.f32.mrf.mxu0
  %v775 = vadd.f32 0.0, %v774
  %776 = vmatmul.bf16.gmra.mxu0 %v607
  %v777 = vpop.f32.mrf.mxu0
  %v778 = vadd.f32 0.0, %v777
  %v779 = vpop.f32.mrf.mxu0
  %v780 = vadd.f32 0.0, %v779
  %781 = vmatmul.bf16.gmra.mxu0 %v609
  %v782 = vpop.f32.mrf.mxu0
  %v783 = vadd.f32 0.0, %v782
  %v784 = vpop.f32.mrf.mxu0
  %v785 = vadd.f32 0.0, %v784
  %786 = vmatmul.bf16.gmra.mxu0 %v611
  %v787 = vpop.f32.mrf.mxu0
  %v788 = vadd.f32 0.0, %v787
  %v789 = vpop.f32.mrf.mxu0
  %v790 = vadd.f32 0.0, %v789
  %791 = vmatmul.bf16.gmra.mxu0 %v613
  %v792 = vpop.f32.mrf.mxu0
  %v793 = vadd.f32 0.0, %v792
  %v794 = vpop.f32.mrf.mxu0
  %v795 = vadd.f32 0.0, %v794
  %796 = vmatmul.bf16.gmra.mxu0 %v615
  %v797 = vpop.f32.mrf.mxu0
  %v798 = vadd.f32 0.0, %v797
  %v799 = vpop.f32.mrf.mxu0
  %v800 = vadd.f32 0.0, %v799
  %801 = vmatmul.bf16.gmra.mxu0 %v617
  %v802 = vpop.f32.mrf.mxu0
  %v803 = vadd.f32 0.0, %v802
  %v804 = vpop.f32.mrf.mxu0
  %v805 = vadd.f32 0.0, %v804
  %806 = vmatmul.bf16.gmra.mxu0 %v619
  %v807 = vpop.f32.mrf.mxu0
  %v808 = vadd.f32 0.0, %v807
  %v809 = vpop.f32.mrf.mxu0
  %v810 = vadd.f32 0.0, %v809
  %811 = vmatmul.bf16.gmra.mxu0 %v621
  %v812 = vpop.f32.mrf.mxu0
  %v813 = vadd.f32 0.0, %v812
  %v814 = vpop.f32.mrf.mxu0
  %v815 = vadd.f32 0.0, %v814
  %816 = vmatmul.bf16.gmra.mxu0 %v623
  %v817 = vpop.f32.mrf.mxu0
  %v818 = vadd.f32 0.0, %v817
  %v819 = vpop.f32.mrf.mxu0
  %v820 = vadd.f32 0.0, %v819
  %821 = vmatmul.bf16.gmra.mxu0 %v625
  %v822 = vpop.f32.mrf.mxu0
  %v823 = vadd.f32 0.0, %v822
  %v824 = vpop.f32.mrf.mxu0
  %v825 = vadd.f32 0.0, %v824
  %826 = vmatmul.bf16.gmra.mxu0 %v627
  %v827 = vpop.f32.mrf.mxu0
  %v828 = vadd.f32 0.0, %v827
  %v829 = vpop.f32.mrf.mxu0
  %v830 = vadd.f32 0.0, %v829
  %831 = vmatmul.bf16.gmra.mxu0 %v629
  %v832 = vpop.f32.mrf.mxu0
  %v833 = vadd.f32 0.0, %v832
  %v834 = vpop.f32.mrf.mxu0
  %v835 = vadd.f32 0.0, %v834
  %836 = vmatmul.bf16.gmra.mxu0 %v631
  %v837 = vpop.f32.mrf.mxu0
  %v838 = vadd.f32 0.0, %v837
  %v839 = vpop.f32.mrf.mxu0
  %v840 = vadd.f32 0.0, %v839
  %841 = vmatmul.bf16.gmra.mxu0 %v633
  %v842 = vpop.f32.mrf.mxu0
  %v843 = vadd.f32 0.0, %v842
  %v844 = vpop.f32.mrf.mxu0
  %v845 = vadd.f32 0.0, %v844
  %846 = vmatmul.bf16.gmra.mxu0 %v635
  %v847 = vpop.f32.mrf.mxu0
  %v848 = vadd.f32 0.0, %v847
  %v849 = vpop.f32.mrf.mxu0
  %v850 = vadd.f32 0.0, %v849
  %851 = vmatmul.bf16.gmra.mxu0 %v637
  %v852 = vpop.f32.mrf.mxu0
  %v853 = vadd.f32 0.0, %v852
  %v854 = vpop.f32.mrf.mxu0
  %v855 = vadd.f32 0.0, %v854
  %856 = vmatmul.bf16.gmra.mxu0 %v639
  %v857 = vpop.f32.mrf.mxu0
  %v858 = vadd.f32 0.0, %v857
  %v859 = vpop.f32.mrf.mxu0
  %v860 = vadd.f32 0.0, %v859
  %861 = vmatmul.bf16.gmra.mxu0 %v641
  %v862 = vpop.f32.mrf.mxu0
  %v863 = vadd.f32 0.0, %v862
  %v864 = vpop.f32.mrf.mxu0
  %v865 = vadd.f32 0.0, %v864
  %866 = vmatmul.bf16.gmra.mxu0 %v643
  %v867 = vpop.f32.mrf.mxu0
  %v868 = vadd.f32 0.0, %v867
  %v869 = vpop.f32.mrf.mxu0
  %v870 = vadd.f32 0.0, %v869
  %871 = vmatmul.bf16.gmra.mxu0 %v645
  %v872 = vpop.f32.mrf.mxu0
  %v873 = vadd.f32 0.0, %v872
  %v874 = vpop.f32.mrf.mxu0
  %v875 = vadd.f32 0.0, %v874
  %876 = vmatmul.bf16.gmra.mxu0 %v647
  %v877 = vpop.f32.mrf.mxu0
  %v878 = vadd.f32 0.0, %v877
  %v879 = vpop.f32.mrf.mxu0
  %v880 = vadd.f32 0.0, %v879
  %881 = vmatmul.bf16.gmra.mxu0 %v649
  %v882 = vpop.f32.mrf.mxu0
  %v883 = vadd.f32 0.0, %v882
  %v884 = vpop.f32.mrf.mxu0
  %v885 = vadd.f32 0.0, %v884
  %886 = vmatmul.bf16.gmra.mxu0 %v651
  %v887 = vpop.f32.mrf.mxu0
  %v888 = vadd.f32 0.0, %v887
  %v889 = vpop.f32.mrf.mxu0
  %v890 = vadd.f32 0.0, %v889
  %891 = vmatmul.bf16.gmra.mxu0 %v653
  %v892 = vpop.f32.mrf.mxu0
  %v893 = vadd.f32 0.0, %v892
  %v894 = vpop.f32.mrf.mxu0
  %v895 = vadd.f32 0.0, %v894
  %896 = vmatmul.bf16.gmra.mxu0 %v655
  %v897 = vpop.f32.mrf.mxu0
  %v898 = vadd.f32 0.0, %v897
  %v899 = vpop.f32.mrf.mxu0
  %v900 = vadd.f32 0.0, %v899
  %901 = vmatmul.bf16.gmra.mxu0 %v657
  %v902 = vpop.f32.mrf.mxu0
  %v903 = vadd.f32 0.0, %v902
  %v904 = vpop.f32.mrf.mxu0
  %v905 = vadd.f32 0.0, %v904
  %906 = vdwg.mxu0
  %v908 = vunpack.c.l.b16 %v331
  %v909 = vpack.c.b16 %v495, %v908
  %vm910 = vsmask.f32 5376
  %v912 = vshrl.u32 %v909, 16
  %v914 = vrot.slane %v912, 2
  %v915 = vshll.u32 %v909, 16
  %v917 = vrot.slane %v915, 3
  %v918 = vor.u32 %v914, %v917
  %v920 = vshrl.u32 %v560, 16
  %v922 = vrot.slane %v920, 2
  %v923 = vshll.u32 %v560, 16
  %v925 = vrot.slane %v923, 3
  %v926 = vor.u32 %v922, %v925
  %v927 = vsel %vm910, %v918, %v926
  %v929 = vshrl.u32 %v561, 16
  %v931 = vrot.slane %v929, 2
  %v932 = vshll.u32 %v561, 16
  %v934 = vrot.slane %v932, 3
  %v935 = vor.u32 %v931, %v934
  %v936 = vsel %vm910, %v926, %v935
  %v938 = vshrl.u32 %v562, 16
  %v940 = vrot.slane %v938, 2
  %v941 = vshll.u32 %v562, 16
  %v943 = vrot.slane %v941, 3
  %v944 = vor.u32 %v940, %v943
  %v945 = vsel %vm910, %v935, %v944
  %v947 = vshrl.u32 %v563, 16
  %v949 = vrot.slane %v947, 2
  %v950 = vshll.u32 %v563, 16
  %v952 = vrot.slane %v950, 3
  %v953 = vor.u32 %v949, %v952
  %v954 = vsel %vm910, %v944, %v953
  %v956 = vshrl.u32 %v564, 16
  %v958 = vrot.slane %v956, 2
  %v959 = vshll.u32 %v564, 16
  %v961 = vrot.slane %v959, 3
  %v962 = vor.u32 %v958, %v961
  %v963 = vsel %vm910, %v953, %v962
  %v965 = vshrl.u32 %v565, 16
  %v967 = vrot.slane %v965, 2
  %v968 = vshll.u32 %v565, 16
  %v970 = vrot.slane %v968, 3
  %v971 = vor.u32 %v967, %v970
  %v972 = vsel %vm910, %v962, %v971
  %v974 = vshrl.u32 %v566, 16
  %v976 = vrot.slane %v974, 2
  %v977 = vshll.u32 %v566, 16
  %v979 = vrot.slane %v977, 3
  %v980 = vor.u32 %v976, %v979
  %v981 = vsel %vm910, %v971, %v980
  %v983 = vshrl.u32 %v567, 16
  %v985 = vrot.slane %v983, 2
  %v986 = vshll.u32 %v567, 16
  %v988 = vrot.slane %v986, 3
  %v989 = vor.u32 %v985, %v988
  %v990 = vsel %vm910, %v980, %v989
  %v992 = vshrl.u32 %v568, 16
  %v994 = vrot.slane %v992, 2
  %v995 = vshll.u32 %v568, 16
  %v997 = vrot.slane %v995, 3
  %v998 = vor.u32 %v994, %v997
  %v999 = vsel %vm910, %v989, %v998
  %v1001 = vshrl.u32 %v569, 16
  %v1003 = vrot.slane %v1001, 2
  %v1004 = vshll.u32 %v569, 16
  %v1006 = vrot.slane %v1004, 3
  %v1007 = vor.u32 %v1003, %v1006
  %v1008 = vsel %vm910, %v998, %v1007
  %v1010 = vshrl.u32 %v570, 16
  %v1012 = vrot.slane %v1010, 2
  %v1013 = vshll.u32 %v570, 16
  %v1015 = vrot.slane %v1013, 3
  %v1016 = vor.u32 %v1012, %v1015
  %v1017 = vsel %vm910, %v1007, %v1016
  %v1019 = vshrl.u32 %v571, 16
  %v1021 = vrot.slane %v1019, 2
  %v1022 = vshll.u32 %v571, 16
  %v1024 = vrot.slane %v1022, 3
  %v1025 = vor.u32 %v1021, %v1024
  %v1026 = vsel %vm910, %v1016, %v1025
  %v1028 = vshrl.u32 %v572, 16
  %v1030 = vrot.slane %v1028, 2
  %v1031 = vshll.u32 %v572, 16
  %v1033 = vrot.slane %v1031, 3
  %v1034 = vor.u32 %v1030, %v1033
  %v1035 = vsel %vm910, %v1025, %v1034
  %v1037 = vshrl.u32 %v573, 16
  %v1039 = vrot.slane %v1037, 2
  %v1040 = vshll.u32 %v573, 16
  %v1042 = vrot.slane %v1040, 3
  %v1043 = vor.u32 %v1039, %v1042
  %v1044 = vsel %vm910, %v1034, %v1043
  %v1046 = vshrl.u32 %v574, 16
  %v1048 = vrot.slane %v1046, 2
  %v1049 = vshll.u32 %v574, 16
  %v1051 = vrot.slane %v1049, 3
  %v1052 = vor.u32 %v1048, %v1051
  %v1053 = vsel %vm910, %v1043, %v1052
  %v1055 = vshrl.u32 %v575, 16
  %v1057 = vrot.slane %v1055, 2
  %v1058 = vshll.u32 %v575, 16
  %v1060 = vrot.slane %v1058, 3
  %v1061 = vor.u32 %v1057, %v1060
  %v1062 = vsel %vm910, %v1052, %v1061
  %v1064 = vshrl.u32 %v576, 16
  %v1066 = vrot.slane %v1064, 2
  %v1067 = vshll.u32 %v576, 16
  %v1069 = vrot.slane %v1067, 3
  %v1070 = vor.u32 %v1066, %v1069
  %v1071 = vsel %vm910, %v1061, %v1070
  %v1073 = vshrl.u32 %v577, 16
  %v1075 = vrot.slane %v1073, 2
  %v1076 = vshll.u32 %v577, 16
  %v1078 = vrot.slane %v1076, 3
  %v1079 = vor.u32 %v1075, %v1078
  %v1080 = vsel %vm910, %v1070, %v1079
  %v1082 = vshrl.u32 %v578, 16
  %v1084 = vrot.slane %v1082, 2
  %v1085 = vshll.u32 %v578, 16
  %v1087 = vrot.slane %v1085, 3
  %v1088 = vor.u32 %v1084, %v1087
  %v1089 = vsel %vm910, %v1079, %v1088
  %v1091 = vshrl.u32 %v579, 16
  %v1093 = vrot.slane %v1091, 2
  %v1094 = vshll.u32 %v579, 16
  %v1096 = vrot.slane %v1094, 3
  %v1097 = vor.u32 %v1093, %v1096
  %v1098 = vsel %vm910, %v1088, %v1097
  %v1100 = vshrl.u32 %v580, 16
  %v1102 = vrot.slane %v1100, 2
  %v1103 = vshll.u32 %v580, 16
  %v1105 = vrot.slane %v1103, 3
  %v1106 = vor.u32 %v1102, %v1105
  %v1107 = vsel %vm910, %v1097, %v1106
  %v1109 = vshrl.u32 %v581, 16
  %v1111 = vrot.slane %v1109, 2
  %v1112 = vshll.u32 %v581, 16
  %v1114 = vrot.slane %v1112, 3
  %v1115 = vor.u32 %v1111, %v1114
  %v1116 = vsel %vm910, %v1106, %v1115
  %v1118 = vshrl.u32 %v582, 16
  %v1120 = vrot.slane %v1118, 2
  %v1121 = vshll.u32 %v582, 16
  %v1123 = vrot.slane %v1121, 3
  %v1124 = vor.u32 %v1120, %v1123
  %v1125 = vsel %vm910, %v1115, %v1124
  %v1127 = vshrl.u32 %v583, 16
  %v1129 = vrot.slane %v1127, 2
  %v1130 = vshll.u32 %v583, 16
  %v1132 = vrot.slane %v1130, 3
  %v1133 = vor.u32 %v1129, %v1132
  %v1134 = vsel %vm910, %v1124, %v1133
  %v1136 = vshrl.u32 %v584, 16
  %v1138 = vrot.slane %v1136, 2
  %v1139 = vshll.u32 %v584, 16
  %v1141 = vrot.slane %v1139, 3
  %v1142 = vor.u32 %v1138, %v1141
  %v1143 = vsel %vm910, %v1133, %v1142
  %v1145 = vshrl.u32 %v585, 16
  %v1147 = vrot.slane %v1145, 2
  %v1148 = vshll.u32 %v585, 16
  %v1150 = vrot.slane %v1148, 3
  %v1151 = vor.u32 %v1147, %v1150
  %v1152 = vsel %vm910, %v1142, %v1151
  %v1154 = vshrl.u32 %v586, 16
  %v1156 = vrot.slane %v1154, 2
  %v1157 = vshll.u32 %v586, 16
  %v1159 = vrot.slane %v1157, 3
  %v1160 = vor.u32 %v1156, %v1159
  %v1161 = vsel %vm910, %v1151, %v1160
  %v1163 = vshrl.u32 %v587, 16
  %v1165 = vrot.slane %v1163, 2
  %v1166 = vshll.u32 %v587, 16
  %v1168 = vrot.slane %v1166, 3
  %v1169 = vor.u32 %v1165, %v1168
  %v1170 = vsel %vm910, %v1160, %v1169
  %v1172 = vshrl.u32 %v588, 16
  %v1174 = vrot.slane %v1172, 2
  %v1175 = vshll.u32 %v588, 16
  %v1177 = vrot.slane %v1175, 3
  %v1178 = vor.u32 %v1174, %v1177
  %v1179 = vsel %vm910, %v1169, %v1178
  %v1181 = vshrl.u32 %v589, 16
  %v1183 = vrot.slane %v1181, 2
  %v1184 = vshll.u32 %v589, 16
  %v1186 = vrot.slane %v1184, 3
  %v1187 = vor.u32 %v1183, %v1186
  %v1188 = vsel %vm910, %v1178, %v1187
  %v1190 = vshrl.u32 %v590, 16
  %v1192 = vrot.slane %v1190, 2
  %v1193 = vshll.u32 %v590, 16
  %v1195 = vrot.slane %v1193, 3
  %v1196 = vor.u32 %v1192, %v1195
  %v1197 = vsel %vm910, %v1187, %v1196
  %v1199 = vshrl.u32 %v591, 16
  %v1201 = vrot.slane %v1199, 2
  %v1202 = vshll.u32 %v591, 16
  %v1204 = vrot.slane %v1202, 3
  %v1205 = vor.u32 %v1201, %v1204
  %v1206 = vsel %vm910, %v1196, %v1205
  %v1255 = vunpack.c.l.b16 %v396
  %v1256 = vunpack.c.l.b16 %v397
  %v1257 = vunpack.c.l.b16 %v398
  %v1258 = vunpack.c.l.b16 %v399
  %v1259 = vunpack.c.l.b16 %v400
  %v1260 = vunpack.c.l.b16 %v401
  %v1261 = vunpack.c.l.b16 %v402
  %v1262 = vunpack.c.l.b16 %v403
  %v1263 = vunpack.c.l.b16 %v404
  %v1264 = vunpack.c.l.b16 %v405
  %v1265 = vunpack.c.l.b16 %v406
  %v1266 = vunpack.c.l.b16 %v407
  %v1267 = vunpack.c.l.b16 %v408
  %v1268 = vunpack.c.l.b16 %v409
  %v1269 = vunpack.c.l.b16 %v410
  %v1270 = vunpack.c.l.b16 %v411
  %v1271 = vpack.c.b16 %v1256, %v1255
  %v1272 = vpack.c.b16 %v1258, %v1257
  %v1273 = vpack.c.b16 %v1260, %v1259
  %v1274 = vpack.c.b16 %v1262, %v1261
  %v1275 = vpack.c.b16 %v1264, %v1263
  %v1276 = vpack.c.b16 %v1266, %v1265
  %v1277 = vpack.c.b16 %v1268, %v1267
  %v1278 = vpack.c.b16 %v1270, %v1269
  %1287 = vmatpush.bf16.msra.mxu0 %v1278
  %1288 = vmatpush.bf16.msra.mxu0 %v1277
  %1289 = vmatpush.bf16.msra.mxu0 %v1276
  %1290 = vmatpush.bf16.msra.mxu0 %v1275
  %1291 = vmatpush.bf16.msra.mxu0 %v1274
  %1292 = vmatpush.bf16.msra.mxu0 %v1273
  %1293 = vmatpush.bf16.msra.mxu0 %v1272
  %1294 = vmatpush.bf16.msra.mxu0 %v1271
  %1295 = vmatmul.bf16.gmra.mxu0 %v927
  %v1296 = vpop.f32.mrf.mxu0
  %v1297 = vadd.f32 %v748, %v1296
  %v1298 = vpop.f32.mrf.mxu0
  %v1299 = vadd.f32 %v750, %v1298
  %1300 = vmatmul.bf16.gmra.mxu0 %v936
  %v1301 = vpop.f32.mrf.mxu0
  %v1302 = vadd.f32 %v753, %v1301
  %v1303 = vpop.f32.mrf.mxu0
  %v1304 = vadd.f32 %v755, %v1303
  %1305 = vmatmul.bf16.gmra.mxu0 %v945
  %v1306 = vpop.f32.mrf.mxu0
  %v1307 = vadd.f32 %v758, %v1306
  %v1308 = vpop.f32.mrf.mxu0
  %v1309 = vadd.f32 %v760, %v1308
  %1310 = vmatmul.bf16.gmra.mxu0 %v954
  %v1311 = vpop.f32.mrf.mxu0
  %v1312 = vadd.f32 %v763, %v1311
  %v1313 = vpop.f32.mrf.mxu0
  %v1314 = vadd.f32 %v765, %v1313
  %1315 = vmatmul.bf16.gmra.mxu0 %v963
  %v1316 = vpop.f32.mrf.mxu0
  %v1317 = vadd.f32 %v768, %v1316
  %v1318 = vpop.f32.mrf.mxu0
  %v1319 = vadd.f32 %v770, %v1318
  %1320 = vmatmul.bf16.gmra.mxu0 %v972
  %v1321 = vpop.f32.mrf.mxu0
  %v1322 = vadd.f32 %v773, %v1321
  %v1323 = vpop.f32.mrf.mxu0
  %v1324 = vadd.f32 %v775, %v1323
  %1325 = vmatmul.bf16.gmra.mxu0 %v981
  %v1326 = vpop.f32.mrf.mxu0
  %v1327 = vadd.f32 %v778, %v1326
  %v1328 = vpop.f32.mrf.mxu0
  %v1329 = vadd.f32 %v780, %v1328
  %1330 = vmatmul.bf16.gmra.mxu0 %v990
  %v1331 = vpop.f32.mrf.mxu0
  %v1332 = vadd.f32 %v783, %v1331
  %v1333 = vpop.f32.mrf.mxu0
  %v1334 = vadd.f32 %v785, %v1333
  %1335 = vmatmul.bf16.gmra.mxu0 %v999
  %v1336 = vpop.f32.mrf.mxu0
  %v1337 = vadd.f32 %v788, %v1336
  %v1338 = vpop.f32.mrf.mxu0
  %v1339 = vadd.f32 %v790, %v1338
  %1340 = vmatmul.bf16.gmra.mxu0 %v1008
  %v1341 = vpop.f32.mrf.mxu0
  %v1342 = vadd.f32 %v793, %v1341
  %v1343 = vpop.f32.mrf.mxu0
  %v1344 = vadd.f32 %v795, %v1343
  %1345 = vmatmul.bf16.gmra.mxu0 %v1017
  %v1346 = vpop.f32.mrf.mxu0
  %v1347 = vadd.f32 %v798, %v1346
  %v1348 = vpop.f32.mrf.mxu0
  %v1349 = vadd.f32 %v800, %v1348
  %1350 = vmatmul.bf16.gmra.mxu0 %v1026
  %v1351 = vpop.f32.mrf.mxu0
  %v1352 = vadd.f32 %v803, %v1351
  %v1353 = vpop.f32.mrf.mxu0
  %v1354 = vadd.f32 %v805, %v1353
  %1355 = vmatmul.bf16.gmra.mxu0 %v1035
  %v1356 = vpop.f32.mrf.mxu0
  %v1357 = vadd.f32 %v808, %v1356
  %v1358 = vpop.f32.mrf.mxu0
  %v1359 = vadd.f32 %v810, %v1358
  %1360 = vmatmul.bf16.gmra.mxu0 %v1044
  %v1361 = vpop.f32.mrf.mxu0
  %v1362 = vadd.f32 %v813, %v1361
  %v1363 = vpop.f32.mrf.mxu0
  %v1364 = vadd.f32 %v815, %v1363
  %1365 = vmatmul.bf16.gmra.mxu0 %v1053
  %v1366 = vpop.f32.mrf.mxu0
  %v1367 = vadd.f32 %v818, %v1366
  %v1368 = vpop.f32.mrf.mxu0
  %v1369 = vadd.f32 %v820, %v1368
  %1370 = vmatmul.bf16.gmra.mxu0 %v1062
  %v1371 = vpop.f32.mrf.mxu0
  %v1372 = vadd.f32 %v823, %v1371
  %v1373 = vpop.f32.mrf.mxu0
  %v1374 = vadd.f32 %v825, %v1373
  %1375 = vmatmul.bf16.gmra.mxu0 %v1071
  %v1376 = vpop.f32.mrf.mxu0
  %v1377 = vadd.f32 %v828, %v1376
  %v1378 = vpop.f32.mrf.mxu0
  %v1379 = vadd.f32 %v830, %v1378
  %1380 = vmatmul.bf16.gmra.mxu0 %v1080
  %v1381 = vpop.f32.mrf.mxu0
  %v1382 = vadd.f32 %v833, %v1381
  %v1383 = vpop.f32.mrf.mxu0
  %v1384 = vadd.f32 %v835, %v1383
  %1385 = vmatmul.bf16.gmra.mxu0 %v1089
  %v1386 = vpop.f32.mrf.mxu0
  %v1387 = vadd.f32 %v838, %v1386
  %v1388 = vpop.f32.mrf.mxu0
  %v1389 = vadd.f32 %v840, %v1388
  %1390 = vmatmul.bf16.gmra.mxu0 %v1098
  %v1391 = vpop.f32.mrf.mxu0
  %v1392 = vadd.f32 %v843, %v1391
  %v1393 = vpop.f32.mrf.mxu0
  %v1394 = vadd.f32 %v845, %v1393
  %1395 = vmatmul.bf16.gmra.mxu0 %v1107
  %v1396 = vpop.f32.mrf.mxu0
  %v1397 = vadd.f32 %v848, %v1396
  %v1398 = vpop.f32.mrf.mxu0
  %v1399 = vadd.f32 %v850, %v1398
  %1400 = vmatmul.bf16.gmra.mxu0 %v1116
  %v1401 = vpop.f32.mrf.mxu0
  %v1402 = vadd.f32 %v853, %v1401
  %v1403 = vpop.f32.mrf.mxu0
  %v1404 = vadd.f32 %v855, %v1403
  %1405 = vmatmul.bf16.gmra.mxu0 %v1125
  %v1406 = vpop.f32.mrf.mxu0
  %v1407 = vadd.f32 %v858, %v1406
  %v1408 = vpop.f32.mrf.mxu0
  %v1409 = vadd.f32 %v860, %v1408
  %1410 = vmatmul.bf16.gmra.mxu0 %v1134
  %v1411 = vpop.f32.mrf.mxu0
  %v1412 = vadd.f32 %v863, %v1411
  %v1413 = vpop.f32.mrf.mxu0
  %v1414 = vadd.f32 %v865, %v1413
  %1415 = vmatmul.bf16.gmra.mxu0 %v1143
  %v1416 = vpop.f32.mrf.mxu0
  %v1417 = vadd.f32 %v868, %v1416
  %v1418 = vpop.f32.mrf.mxu0
  %v1419 = vadd.f32 %v870, %v1418
  %1420 = vmatmul.bf16.gmra.mxu0 %v1152
  %v1421 = vpop.f32.mrf.mxu0
  %v1422 = vadd.f32 %v873, %v1421
  %v1423 = vpop.f32.mrf.mxu0
  %v1424 = vadd.f32 %v875, %v1423
  %1425 = vmatmul.bf16.gmra.mxu0 %v1161
  %v1426 = vpop.f32.mrf.mxu0
  %v1427 = vadd.f32 %v878, %v1426
  %v1428 = vpop.f32.mrf.mxu0
  %v1429 = vadd.f32 %v880, %v1428
  %1430 = vmatmul.bf16.gmra.mxu0 %v1170
  %v1431 = vpop.f32.mrf.mxu0
  %v1432 = vadd.f32 %v883, %v1431
  %v1433 = vpop.f32.mrf.mxu0
  %v1434 = vadd.f32 %v885, %v1433
  %1435 = vmatmul.bf16.gmra.mxu0 %v1179
  %v1436 = vpop.f32.mrf.mxu0
  %v1437 = vadd.f32 %v888, %v1436
  %v1438 = vpop.f32.mrf.mxu0
  %v1439 = vadd.f32 %v890, %v1438
  %1440 = vmatmul.bf16.gmra.mxu0 %v1188
  %v1441 = vpop.f32.mrf.mxu0
  %v1442 = vadd.f32 %v893, %v1441
  %v1443 = vpop.f32.mrf.mxu0
  %v1444 = vadd.f32 %v895, %v1443
  %1445 = vmatmul.bf16.gmra.mxu0 %v1197
  %v1446 = vpop.f32.mrf.mxu0
  %v1447 = vadd.f32 %v898, %v1446
  %v1448 = vpop.f32.mrf.mxu0
  %v1449 = vadd.f32 %v900, %v1448
  %1450 = vmatmul.bf16.gmra.mxu0 %v1206
  %v1451 = vpop.f32.mrf.mxu0
  %v1452 = vadd.f32 %v903, %v1451
  %v1453 = vpop.f32.mrf.mxu0
  %v1454 = vadd.f32 %v905, %v1453
  %1455 = vdwg.mxu0
  %v1456 = vld [vmem:[#allocation2 + $0x138] sm:$0xf]
  %v1457 = vld [vmem:[%s3 + $0x80] sm:$0xf]
  %v1458 = vld [vmem:[%s3 + $0x84] sm:$0xf]
  %v1459 = vld [vmem:[%s3 + $0x88] sm:$0xf]
  %v1460 = vld [vmem:[%s3 + $0x8c] sm:$0xf]
  %v1461 = vld [vmem:[%s3 + $0x90] sm:$0xf]
  %v1462 = vld [vmem:[%s3 + $0x94] sm:$0xf]
  %v1463 = vld [vmem:[%s3 + $0x98] sm:$0xf]
  %v1464 = vld [vmem:[%s3 + $0x9c] sm:$0xf]
  %v1465 = vld [vmem:[%s3 + $0xa0] sm:$0xf]
  %v1466 = vld [vmem:[%s3 + $0xa4] sm:$0xf]
  %v1467 = vld [vmem:[%s3 + $0xa8] sm:$0xf]
  %v1468 = vld [vmem:[%s3 + $0xac] sm:$0xf]
  %v1469 = vld [vmem:[%s3 + $0xb0] sm:$0xf]
  %v1470 = vld [vmem:[%s3 + $0xb4] sm:$0xf]
  %v1471 = vld [vmem:[%s3 + $0xb8] sm:$0xf]
  %v1472 = vld [vmem:[%s3 + $0xbc] sm:$0xf]
  %v1474 = vunpack.c.l.b16 %v1456
  %v1475 = vpack.c.b16 %v1474, %v1474
  %vm1476 = vsmask.f32 4352
  %v1478 = vshrl.u32 %v559, 16
  %v1480 = vrot.slane %v1478, 3
  %v1481 = vshll.u32 %v559, 16
  %v1483 = vrot.slane %v1481, 4
  %v1484 = vor.u32 %v1480, %v1483
  %v1485 = vrot.slane %v920, 3
  %v1486 = vrot.slane %v923, 4
  %v1487 = vor.u32 %v1485, %v1486
  %v1488 = vsel %vm1476, %v1484, %v1487
  %v1489 = vrot.slane %v929, 3
  %v1490 = vrot.slane %v932, 4
  %v1491 = vor.u32 %v1489, %v1490
  %v1492 = vsel %vm1476, %v1487, %v1491
  %v1493 = vrot.slane %v938, 3
  %v1494 = vrot.slane %v941, 4
  %v1495 = vor.u32 %v1493, %v1494
  %v1496 = vsel %vm1476, %v1491, %v1495
  %v1497 = vrot.slane %v947, 3
  %v1498 = vrot.slane %v950, 4
  %v1499 = vor.u32 %v1497, %v1498
  %v1500 = vsel %vm1476, %v1495, %v1499
  %v1501 = vrot.slane %v956, 3
  %v1502 = vrot.slane %v959, 4
  %v1503 = vor.u32 %v1501, %v1502
  %v1504 = vsel %vm1476, %v1499, %v1503
  %v1505 = vrot.slane %v965, 3
  %v1506 = vrot.slane %v968, 4
  %v1507 = vor.u32 %v1505, %v1506
  %v1508 = vsel %vm1476, %v1503, %v1507
  %v1509 = vrot.slane %v974, 3
  %v1510 = vrot.slane %v977, 4
  %v1511 = vor.u32 %v1509, %v1510
  %v1512 = vsel %vm1476, %v1507, %v1511
  %v1513 = vrot.slane %v983, 3
  %v1514 = vrot.slane %v986, 4
  %v1515 = vor.u32 %v1513, %v1514
  %v1516 = vsel %vm1476, %v1511, %v1515
  %v1517 = vrot.slane %v992, 3
  %v1518 = vrot.slane %v995, 4
  %v1519 = vor.u32 %v1517, %v1518
  %v1520 = vsel %vm1476, %v1515, %v1519
  %v1521 = vrot.slane %v1001, 3
  %v1522 = vrot.slane %v1004, 4
  %v1523 = vor.u32 %v1521, %v1522
  %v1524 = vsel %vm1476, %v1519, %v1523
  %v1525 = vrot.slane %v1010, 3
  %v1526 = vrot.slane %v1013, 4
  %v1527 = vor.u32 %v1525, %v1526
  %v1528 = vsel %vm1476, %v1523, %v1527
  %v1529 = vrot.slane %v1019, 3
  %v1530 = vrot.slane %v1022, 4
  %v1531 = vor.u32 %v1529, %v1530
  %v1532 = vsel %vm1476, %v1527, %v1531
  %v1533 = vrot.slane %v1028, 3
  %v1534 = vrot.slane %v1031, 4
  %v1535 = vor.u32 %v1533, %v1534
  %v1536 = vsel %vm1476, %v1531, %v1535
  %v1537 = vrot.slane %v1037, 3
  %v1538 = vrot.slane %v1040, 4
  %v1539 = vor.u32 %v1537, %v1538
  %v1540 = vsel %vm1476, %v1535, %v1539
  %v1541 = vrot.slane %v1046, 3
  %v1542 = vrot.slane %v1049, 4
  %v1543 = vor.u32 %v1541, %v1542
  %v1544 = vsel %vm1476, %v1539, %v1543
  %v1545 = vrot.slane %v1055, 3
  %v1546 = vrot.slane %v1058, 4
  %v1547 = vor.u32 %v1545, %v1546
  %v1548 = vsel %vm1476, %v1543, %v1547
  %v1549 = vrot.slane %v1064, 3
  %v1550 = vrot.slane %v1067, 4
  %v1551 = vor.u32 %v1549, %v1550
  %v1552 = vsel %vm1476, %v1547, %v1551
  %v1553 = vrot.slane %v1073, 3
  %v1554 = vrot.slane %v1076, 4
  %v1555 = vor.u32 %v1553, %v1554
  %v1556 = vsel %vm1476, %v1551, %v1555
  %v1557 = vrot.slane %v1082, 3
  %v1558 = vrot.slane %v1085, 4
  %v1559 = vor.u32 %v1557, %v1558
  %v1560 = vsel %vm1476, %v1555, %v1559
  %v1561 = vrot.slane %v1091, 3
  %v1562 = vrot.slane %v1094, 4
  %v1563 = vor.u32 %v1561, %v1562
  %v1564 = vsel %vm1476, %v1559, %v1563
  %v1565 = vrot.slane %v1100, 3
  %v1566 = vrot.slane %v1103, 4
  %v1567 = vor.u32 %v1565, %v1566
  %v1568 = vsel %vm1476, %v1563, %v1567
  %v1569 = vrot.slane %v1109, 3
  %v1570 = vrot.slane %v1112, 4
  %v1571 = vor.u32 %v1569, %v1570
  %v1572 = vsel %vm1476, %v1567, %v1571
  %v1573 = vrot.slane %v1118, 3
  %v1574 = vrot.slane %v1121, 4
  %v1575 = vor.u32 %v1573, %v1574
  %v1576 = vsel %vm1476, %v1571, %v1575
  %v1577 = vrot.slane %v1127, 3
  %v1578 = vrot.slane %v1130, 4
  %v1579 = vor.u32 %v1577, %v1578
  %v1580 = vsel %vm1476, %v1575, %v1579
  %v1581 = vrot.slane %v1136, 3
  %v1582 = vrot.slane %v1139, 4
  %v1583 = vor.u32 %v1581, %v1582
  %v1584 = vsel %vm1476, %v1579, %v1583
  %v1585 = vrot.slane %v1145, 3
  %v1586 = vrot.slane %v1148, 4
  %v1587 = vor.u32 %v1585, %v1586
  %v1588 = vsel %vm1476, %v1583, %v1587
  %v1589 = vrot.slane %v1154, 3
  %v1590 = vrot.slane %v1157, 4
  %v1591 = vor.u32 %v1589, %v1590
  %v1592 = vsel %vm1476, %v1587, %v1591
  %v1593 = vrot.slane %v1163, 3
  %v1594 = vrot.slane %v1166, 4
  %v1595 = vor.u32 %v1593, %v1594
  %v1596 = vsel %vm1476, %v1591, %v1595
  %v1597 = vrot.slane %v1172, 3
  %v1598 = vrot.slane %v1175, 4
  %v1599 = vor.u32 %v1597, %v1598
  %v1600 = vsel %vm1476, %v1595, %v1599
  %v1601 = vrot.slane %v1181, 3
  %v1602 = vrot.slane %v1184, 4
  %v1603 = vor.u32 %v1601, %v1602
  %v1604 = vsel %vm1476, %v1599, %v1603
  %v1605 = vrot.slane %v1190, 3
  %v1606 = vrot.slane %v1193, 4
  %v1607 = vor.u32 %v1605, %v1606
  %v1608 = vsel %vm1476, %v1603, %v1607
  %v1610 = vshrl.u32 %v1475, 16
  %v1612 = vrot.slane %v1610, 3
  %v1613 = vshll.u32 %v1475, 16
  %v1615 = vrot.slane %v1613, 4
  %v1616 = vor.u32 %v1612, %v1615
  %v1617 = vsel %vm1476, %v1607, %v1616
  %v1666 = vunpack.c.l.b16 %v1457
  %v1667 = vunpack.c.l.b16 %v1458
  %v1668 = vunpack.c.l.b16 %v1459
  %v1669 = vunpack.c.l.b16 %v1460
  %v1670 = vunpack.c.l.b16 %v1461
  %v1671 = vunpack.c.l.b16 %v1462
  %v1672 = vunpack.c.l.b16 %v1463
  %v1673 = vunpack.c.l.b16 %v1464
  %v1674 = vunpack.c.l.b16 %v1465
  %v1675 = vunpack.c.l.b16 %v1466
  %v1676 = vunpack.c.l.b16 %v1467
  %v1677 = vunpack.c.l.b16 %v1468
  %v1678 = vunpack.c.l.b16 %v1469
  %v1679 = vunpack.c.l.b16 %v1470
  %v1680 = vunpack.c.l.b16 %v1471
  %v1681 = vunpack.c.l.b16 %v1472
  %v1682 = vpack.c.b16 %v1667, %v1666
  %v1683 = vpack.c.b16 %v1669, %v1668
  %v1684 = vpack.c.b16 %v1671, %v1670
  %v1685 = vpack.c.b16 %v1673, %v1672
  %v1686 = vpack.c.b16 %v1675, %v1674
  %v1687 = vpack.c.b16 %v1677, %v1676
  %v1688 = vpack.c.b16 %v1679, %v1678
  %v1689 = vpack.c.b16 %v1681, %v1680
  %1698 = vmatpush.bf16.msra.mxu0 %v1689
  %1699 = vmatpush.bf16.msra.mxu0 %v1688
  %1700 = vmatpush.bf16.msra.mxu0 %v1687
  %1701 = vmatpush.bf16.msra.mxu0 %v1686
  %1702 = vmatpush.bf16.msra.mxu0 %v1685
  %1703 = vmatpush.bf16.msra.mxu0 %v1684
  %1704 = vmatpush.bf16.msra.mxu0 %v1683
  %1705 = vmatpush.bf16.msra.mxu0 %v1682
  %1706 = vmatmul.bf16.gmra.mxu0 %v1488
  %v1707 = vpop.f32.mrf.mxu0
  %v1708 = vadd.f32 0.0, %v1707
  %v1709 = vpop.f32.mrf.mxu0
  %v1710 = vadd.f32 0.0, %v1709
  %1711 = vmatmul.bf16.gmra.mxu0 %v1492
  %v1712 = vpop.f32.mrf.mxu0
  %v1713 = vadd.f32 0.0, %v1712
  %v1714 = vpop.f32.mrf.mxu0
  %v1715 = vadd.f32 0.0, %v1714
  %1716 = vmatmul.bf16.gmra.mxu0 %v1496
  %v1717 = vpop.f32.mrf.mxu0
  %v1718 = vadd.f32 0.0, %v1717
  %v1719 = vpop.f32.mrf.mxu0
  %v1720 = vadd.f32 0.0, %v1719
  %1721 = vmatmul.bf16.gmra.mxu0 %v1500
  %v1722 = vpop.f32.mrf.mxu0
  %v1723 = vadd.f32 0.0, %v1722
  %v1724 = vpop.f32.mrf.mxu0
  %v1725 = vadd.f32 0.0, %v1724
  %1726 = vmatmul.bf16.gmra.mxu0 %v1504
  %v1727 = vpop.f32.mrf.mxu0
  %v1728 = vadd.f32 0.0, %v1727
  %v1729 = vpop.f32.mrf.mxu0
  %v1730 = vadd.f32 0.0, %v1729
  %1731 = vmatmul.bf16.gmra.mxu0 %v1508
  %v1732 = vpop.f32.mrf.mxu0
  %v1733 = vadd.f32 0.0, %v1732
  %v1734 = vpop.f32.mrf.mxu0
  %v1735 = vadd.f32 0.0, %v1734
  %1736 = vmatmul.bf16.gmra.mxu0 %v1512
  %v1737 = vpop.f32.mrf.mxu0
  %v1738 = vadd.f32 0.0, %v1737
  %v1739 = vpop.f32.mrf.mxu0
  %v1740 = vadd.f32 0.0, %v1739
  %1741 = vmatmul.bf16.gmra.mxu0 %v1516
  %v1742 = vpop.f32.mrf.mxu0
  %v1743 = vadd.f32 0.0, %v1742
  %v1744 = vpop.f32.mrf.mxu0
  %v1745 = vadd.f32 0.0, %v1744
  %1746 = vmatmul.bf16.gmra.mxu0 %v1520
  %v1747 = vpop.f32.mrf.mxu0
  %v1748 = vadd.f32 0.0, %v1747
  %v1749 = vpop.f32.mrf.mxu0
  %v1750 = vadd.f32 0.0, %v1749
  %1751 = vmatmul.bf16.gmra.mxu0 %v1524
  %v1752 = vpop.f32.mrf.mxu0
  %v1753 = vadd.f32 0.0, %v1752
  %v1754 = vpop.f32.mrf.mxu0
  %v1755 = vadd.f32 0.0, %v1754
  %1756 = vmatmul.bf16.gmra.mxu0 %v1528
  %v1757 = vpop.f32.mrf.mxu0
  %v1758 = vadd.f32 0.0, %v1757
  %v1759 = vpop.f32.mrf.mxu0
  %v1760 = vadd.f32 0.0, %v1759
  %1761 = vmatmul.bf16.gmra.mxu0 %v1532
  %v1762 = vpop.f32.mrf.mxu0
  %v1763 = vadd.f32 0.0, %v1762
  %v1764 = vpop.f32.mrf.mxu0
  %v1765 = vadd.f32 0.0, %v1764
  %1766 = vmatmul.bf16.gmra.mxu0 %v1536
  %v1767 = vpop.f32.mrf.mxu0
  %v1768 = vadd.f32 0.0, %v1767
  %v1769 = vpop.f32.mrf.mxu0
  %v1770 = vadd.f32 0.0, %v1769
  %1771 = vmatmul.bf16.gmra.mxu0 %v1540
  %v1772 = vpop.f32.mrf.mxu0
  %v1773 = vadd.f32 0.0, %v1772
  %v1774 = vpop.f32.mrf.mxu0
  %v1775 = vadd.f32 0.0, %v1774
  %1776 = vmatmul.bf16.gmra.mxu0 %v1544
  %v1777 = vpop.f32.mrf.mxu0
  %v1778 = vadd.f32 0.0, %v1777
  %v1779 = vpop.f32.mrf.mxu0
  %v1780 = vadd.f32 0.0, %v1779
  %1781 = vmatmul.bf16.gmra.mxu0 %v1548
  %v1782 = vpop.f32.mrf.mxu0
  %v1783 = vadd.f32 0.0, %v1782
  %v1784 = vpop.f32.mrf.mxu0
  %v1785 = vadd.f32 0.0, %v1784
  %1786 = vmatmul.bf16.gmra.mxu0 %v1552
  %v1787 = vpop.f32.mrf.mxu0
  %v1788 = vadd.f32 0.0, %v1787
  %v1789 = vpop.f32.mrf.mxu0
  %v1790 = vadd.f32 0.0, %v1789
  %1791 = vmatmul.bf16.gmra.mxu0 %v1556
  %v1792 = vpop.f32.mrf.mxu0
  %v1793 = vadd.f32 0.0, %v1792
  %v1794 = vpop.f32.mrf.mxu0
  %v1795 = vadd.f32 0.0, %v1794
  %1796 = vmatmul.bf16.gmra.mxu0 %v1560
  %v1797 = vpop.f32.mrf.mxu0
  %v1798 = vadd.f32 0.0, %v1797
  %v1799 = vpop.f32.mrf.mxu0
  %v1800 = vadd.f32 0.0, %v1799
  %1801 = vmatmul.bf16.gmra.mxu0 %v1564
  %v1802 = vpop.f32.mrf.mxu0
  %v1803 = vadd.f32 0.0, %v1802
  %v1804 = vpop.f32.mrf.mxu0
  %v1805 = vadd.f32 0.0, %v1804
  %1806 = vmatmul.bf16.gmra.mxu0 %v1568
  %v1807 = vpop.f32.mrf.mxu0
  %v1808 = vadd.f32 0.0, %v1807
  %v1809 = vpop.f32.mrf.mxu0
  %v1810 = vadd.f32 0.0, %v1809
  %1811 = vmatmul.bf16.gmra.mxu0 %v1572
  %v1812 = vpop.f32.mrf.mxu0
  %v1813 = vadd.f32 0.0, %v1812
  %v1814 = vpop.f32.mrf.mxu0
  %v1815 = vadd.f32 0.0, %v1814
  %1816 = vmatmul.bf16.gmra.mxu0 %v1576
  %v1817 = vpop.f32.mrf.mxu0
  %v1818 = vadd.f32 0.0, %v1817
  %v1819 = vpop.f32.mrf.mxu0
  %v1820 = vadd.f32 0.0, %v1819
  %1821 = vmatmul.bf16.gmra.mxu0 %v1580
  %v1822 = vpop.f32.mrf.mxu0
  %v1823 = vadd.f32 0.0, %v1822
  %v1824 = vpop.f32.mrf.mxu0
  %v1825 = vadd.f32 0.0, %v1824
  %1826 = vmatmul.bf16.gmra.mxu0 %v1584
  %v1827 = vpop.f32.mrf.mxu0
  %v1828 = vadd.f32 0.0, %v1827
  %v1829 = vpop.f32.mrf.mxu0
  %v1830 = vadd.f32 0.0, %v1829
  %1831 = vmatmul.bf16.gmra.mxu0 %v1588
  %v1832 = vpop.f32.mrf.mxu0
  %v1833 = vadd.f32 0.0, %v1832
  %v1834 = vpop.f32.mrf.mxu0
  %v1835 = vadd.f32 0.0, %v1834
  %1836 = vmatmul.bf16.gmra.mxu0 %v1592
  %v1837 = vpop.f32.mrf.mxu0
  %v1838 = vadd.f32 0.0, %v1837
  %v1839 = vpop.f32.mrf.mxu0
  %v1840 = vadd.f32 0.0, %v1839
  %1841 = vmatmul.bf16.gmra.mxu0 %v1596
  %v1842 = vpop.f32.mrf.mxu0
  %v1843 = vadd.f32 0.0, %v1842
  %v1844 = vpop.f32.mrf.mxu0
  %v1845 = vadd.f32 0.0, %v1844
  %1846 = vmatmul.bf16.gmra.mxu0 %v1600
  %v1847 = vpop.f32.mrf.mxu0
  %v1848 = vadd.f32 0.0, %v1847
  %v1849 = vpop.f32.mrf.mxu0
  %v1850 = vadd.f32 0.0, %v1849
  %1851 = vmatmul.bf16.gmra.mxu0 %v1604
  %v1852 = vpop.f32.mrf.mxu0
  %v1853 = vadd.f32 0.0, %v1852
  %v1854 = vpop.f32.mrf.mxu0
  %v1855 = vadd.f32 0.0, %v1854
  %1856 = vmatmul.bf16.gmra.mxu0 %v1608
  %v1857 = vpop.f32.mrf.mxu0
  %v1858 = vadd.f32 0.0, %v1857
  %v1859 = vpop.f32.mrf.mxu0
  %v1860 = vadd.f32 0.0, %v1859
  %1861 = vmatmul.bf16.gmra.mxu0 %v1617
  %v1862 = vpop.f32.mrf.mxu0
  %v1863 = vadd.f32 0.0, %v1862
  %v1864 = vpop.f32.mrf.mxu0
  %v1865 = vadd.f32 0.0, %v1864
  %1866 = vdwg.mxu0
  %v1867 = vadd.f32 %v1297, %v1708
  %v1868 = vadd.f32 %v1299, %v1710
  %v1869 = vadd.f32 %v1302, %v1713
  %v1870 = vadd.f32 %v1304, %v1715
  %v1871 = vadd.f32 %v1307, %v1718
  %v1872 = vadd.f32 %v1309, %v1720
  %v1873 = vadd.f32 %v1312, %v1723
  %v1874 = vadd.f32 %v1314, %v1725
  %v1875 = vadd.f32 %v1317, %v1728
  %v1876 = vadd.f32 %v1319, %v1730
  %v1877 = vadd.f32 %v1322, %v1733
  %v1878 = vadd.f32 %v1324, %v1735
  %v1879 = vadd.f32 %v1327, %v1738
  %v1880 = vadd.f32 %v1329, %v1740
  %v1881 = vadd.f32 %v1332, %v1743
  %v1882 = vadd.f32 %v1334, %v1745
  %v1883 = vadd.f32 %v1337, %v1748
  %v1884 = vadd.f32 %v1339, %v1750
  %v1885 = vadd.f32 %v1342, %v1753
  %v1886 = vadd.f32 %v1344, %v1755
  %v1887 = vadd.f32 %v1347, %v1758
  %v1888 = vadd.f32 %v1349, %v1760
  %v1889 = vadd.f32 %v1352, %v1763
  %v1890 = vadd.f32 %v1354, %v1765
  %v1891 = vadd.f32 %v1357, %v1768
  %v1892 = vadd.f32 %v1359, %v1770
  %v1893 = vadd.f32 %v1362, %v1773
  %v1894 = vadd.f32 %v1364, %v1775
  %v1895 = vadd.f32 %v1367, %v1778
  %v1896 = vadd.f32 %v1369, %v1780
  %v1897 = vadd.f32 %v1372, %v1783
  %v1898 = vadd.f32 %v1374, %v1785
  %v1899 = vadd.f32 %v1377, %v1788
  %v1900 = vadd.f32 %v1379, %v1790
  %v1901 = vadd.f32 %v1382, %v1793
  %v1902 = vadd.f32 %v1384, %v1795
  %v1903 = vadd.f32 %v1387, %v1798
  %v1904 = vadd.f32 %v1389, %v1800
  %v1905 = vadd.f32 %v1392, %v1803
  %v1906 = vadd.f32 %v1394, %v1805
  %v1907 = vadd.f32 %v1397, %v1808
  %v1908 = vadd.f32 %v1399, %v1810
  %v1909 = vadd.f32 %v1402, %v1813
  %v1910 = vadd.f32 %v1404, %v1815
  %v1911 = vadd.f32 %v1407, %v1818
  %v1912 = vadd.f32 %v1409, %v1820
  %v1913 = vadd.f32 %v1412, %v1823
  %v1914 = vadd.f32 %v1414, %v1825
  %v1915 = vadd.f32 %v1417, %v1828
  %v1916 = vadd.f32 %v1419, %v1830
  %v1917 = vadd.f32 %v1422, %v1833
  %v1918 = vadd.f32 %v1424, %v1835
  %v1919 = vadd.f32 %v1427, %v1838
  %v1920 = vadd.f32 %v1429, %v1840
  %v1921 = vadd.f32 %v1432, %v1843
  %v1922 = vadd.f32 %v1434, %v1845
  %v1923 = vadd.f32 %v1437, %v1848
  %v1924 = vadd.f32 %v1439, %v1850
  %v1925 = vadd.f32 %v1442, %v1853
  %v1926 = vadd.f32 %v1444, %v1855
  %v1927 = vadd.f32 %v1447, %v1858
  %v1928 = vadd.f32 %v1449, %v1860
  %v1929 = vadd.f32 %v1452, %v1863
  %v1930 = vadd.f32 %v1454, %v1865
  %v1931 = vld [vmem:[#allocation2 + $0x3c] sm:$0x8]
  %v1932 = vld [vmem:[#allocation2 + $0x40] sm:$0xf]
  %v1933 = vld [vmem:[#allocation2 + $0x44] sm:$0xf]
  %v1934 = vld [vmem:[#allocation2 + $0x48] sm:$0xf]
  %v1935 = vld [vmem:[#allocation2 + $0x4c] sm:$0xf]
  %v1936 = vld [vmem:[#allocation2 + $0x50] sm:$0xf]
  %v1937 = vld [vmem:[#allocation2 + $0x54] sm:$0xf]
  %v1938 = vld [vmem:[#allocation2 + $0x58] sm:$0xf]
  %v1939 = vld [vmem:[#allocation2 + $0x5c] sm:$0xf]
  %v1940 = vld [vmem:[#allocation2 + $0x60] sm:$0xf]
  %v1941 = vld [vmem:[#allocation2 + $0x64] sm:$0xf]
  %v1942 = vld [vmem:[#allocation2 + $0x68] sm:$0xf]
  %v1943 = vld [vmem:[#allocation2 + $0x6c] sm:$0xf]
  %v1944 = vld [vmem:[#allocation2 + $0x70] sm:$0xf]
  %v1945 = vld [vmem:[#allocation2 + $0x74] sm:$0xf]
  %v1946 = vld [vmem:[#allocation2 + $0x78] sm:$0xf]
  %v1947 = vld [vmem:[#allocation2 + $0x7c] sm:$0xf]
  %v1948 = vld [vmem:[#allocation2 + $0x80] sm:$0xf]
  %v1949 = vld [vmem:[#allocation2 + $0x84] sm:$0xf]
  %v1950 = vld [vmem:[#allocation2 + $0x88] sm:$0xf]
  %v1951 = vld [vmem:[#allocation2 + $0x8c] sm:$0xf]
  %v1952 = vld [vmem:[#allocation2 + $0x90] sm:$0xf]
  %v1953 = vld [vmem:[#allocation2 + $0x94] sm:$0xf]
  %v1954 = vld [vmem:[#allocation2 + $0x98] sm:$0xf]
  %v1955 = vld [vmem:[#allocation2 + $0x9c] sm:$0xf]
  %v1956 = vld [vmem:[#allocation2 + $0xa0] sm:$0xf]
  %v1957 = vld [vmem:[#allocation2 + $0xa4] sm:$0xf]
  %v1958 = vld [vmem:[#allocation2 + $0xa8] sm:$0xf]
  %v1959 = vld [vmem:[#allocation2 + $0xac] sm:$0xf]
  %v1960 = vld [vmem:[#allocation2 + $0xb0] sm:$0xf]
  %v1961 = vld [vmem:[#allocation2 + $0xb4] sm:$0xf]
  %v1962 = vld [vmem:[#allocation2 + $0xb8] sm:$0xf]
  %v1963 = vld [vmem:[#allocation2 + $0xbc] sm:$0xf]
  %v1964 = vld [vmem:[#allocation2 + $0xc0] sm:$0xf]
  %v1965 = vld [vmem:[#allocation2 + $0xc4] sm:$0xf]
  %v1966 = vld [vmem:[#allocation2 + $0xc8] sm:$0xf]
  %v1967 = vld [vmem:[#allocation2 + $0xcc] sm:$0xf]
  %v1968 = vld [vmem:[#allocation2 + $0xd0] sm:$0xf]
  %v1969 = vld [vmem:[#allocation2 + $0xd4] sm:$0xf]
  %v1970 = vld [vmem:[#allocation2 + $0xd8] sm:$0xf]
  %v1971 = vld [vmem:[#allocation2 + $0xdc] sm:$0xf]
  %v1972 = vld [vmem:[#allocation2 + $0xe0] sm:$0xf]
  %v1973 = vld [vmem:[#allocation2 + $0xe4] sm:$0xf]
  %v1974 = vld [vmem:[#allocation2 + $0xe8] sm:$0xf]
  %v1975 = vld [vmem:[#allocation2 + $0xec] sm:$0xf]
  %v1976 = vld [vmem:[#allocation2 + $0xf0] sm:$0xf]
  %v1977 = vld [vmem:[#allocation2 + $0xf4] sm:$0xf]
  %v1978 = vld [vmem:[#allocation2 + $0xf8] sm:$0xf]
  %v1979 = vld [vmem:[#allocation2 + $0xfc] sm:$0xf]
  %v1980 = vld [vmem:[#allocation2 + $0x100] sm:$0xf]
  %v1981 = vld [vmem:[#allocation2 + $0x104] sm:$0xf]
  %v1982 = vld [vmem:[#allocation2 + $0x108] sm:$0xf]
  %v1983 = vld [vmem:[#allocation2 + $0x10c] sm:$0xf]
  %v1984 = vld [vmem:[#allocation2 + $0x110] sm:$0xf]
  %v1985 = vld [vmem:[#allocation2 + $0x114] sm:$0xf]
  %v1986 = vld [vmem:[#allocation2 + $0x118] sm:$0xf]
  %v1987 = vld [vmem:[#allocation2 + $0x11c] sm:$0xf]
  %v1988 = vld [vmem:[#allocation2 + $0x120] sm:$0xf]
  %v1989 = vld [vmem:[#allocation2 + $0x124] sm:$0xf]
  %v1990 = vld [vmem:[#allocation2 + $0x128] sm:$0xf]
  %v1991 = vld [vmem:[#allocation2 + $0x12c] sm:$0xf]
  %v1992 = vld [vmem:[#allocation2 + $0x130] sm:$0xf]
  %v1993 = vld [vmem:[#allocation2 + $0x134] sm:$0xf]
  %v1994 = vld [vmem:[#allocation2 + $0x138] sm:$0xf]
  %v1995 = vld [vmem:[#allocation2 + $0x13c] sm:$0xf]
  %v1996 = vld [vmem:[%s3 + $0xc0] sm:$0xf]
  %v1997 = vld [vmem:[%s3 + $0xc4] sm:$0xf]
  %v1998 = vld [vmem:[%s3 + $0xc8] sm:$0xf]
  %v1999 = vld [vmem:[%s3 + $0xcc] sm:$0xf]
  %v2000 = vld [vmem:[%s3 + $0xd0] sm:$0xf]
  %v2001 = vld [vmem:[%s3 + $0xd4] sm:$0xf]
  %v2002 = vld [vmem:[%s3 + $0xd8] sm:$0xf]
  %v2003 = vld [vmem:[%s3 + $0xdc] sm:$0xf]
  %v2004 = vld [vmem:[%s3 + $0xe0] sm:$0xf]
  %v2005 = vld [vmem:[%s3 + $0xe4] sm:$0xf]
  %v2006 = vld [vmem:[%s3 + $0xe8] sm:$0xf]
  %v2007 = vld [vmem:[%s3 + $0xec] sm:$0xf]
  %v2008 = vld [vmem:[%s3 + $0xf0] sm:$0xf]
  %v2009 = vld [vmem:[%s3 + $0xf4] sm:$0xf]
  %v2010 = vld [vmem:[%s3 + $0xf8] sm:$0xf]
  %v2011 = vld [vmem:[%s3 + $0xfc] sm:$0xf]
  %v2077 = vunpack.c.l.b16 %v1931
  %v2078 = vunpack.c.l.b16 %v1932
  %v2079 = vunpack.c.l.b16 %v1933
  %v2080 = vunpack.c.l.b16 %v1934
  %v2081 = vunpack.c.l.b16 %v1935
  %v2082 = vunpack.c.l.b16 %v1936
  %v2083 = vunpack.c.l.b16 %v1937
  %v2084 = vunpack.c.l.b16 %v1938
  %v2085 = vunpack.c.l.b16 %v1939
  %v2086 = vunpack.c.l.b16 %v1940
  %v2087 = vunpack.c.l.b16 %v1941
  %v2088 = vunpack.c.l.b16 %v1942
  %v2089 = vunpack.c.l.b16 %v1943
  %v2090 = vunpack.c.l.b16 %v1944
  %v2091 = vunpack.c.l.b16 %v1945
  %v2092 = vunpack.c.l.b16 %v1946
  %v2093 = vunpack.c.l.b16 %v1947
  %v2094 = vunpack.c.l.b16 %v1948
  %v2095 = vunpack.c.l.b16 %v1949
  %v2096 = vunpack.c.l.b16 %v1950
  %v2097 = vunpack.c.l.b16 %v1951
  %v2098 = vunpack.c.l.b16 %v1952
  %v2099 = vunpack.c.l.b16 %v1953
  %v2100 = vunpack.c.l.b16 %v1954
  %v2101 = vunpack.c.l.b16 %v1955
  %v2102 = vunpack.c.l.b16 %v1956
  %v2103 = vunpack.c.l.b16 %v1957
  %v2104 = vunpack.c.l.b16 %v1958
  %v2105 = vunpack.c.l.b16 %v1959
  %v2106 = vunpack.c.l.b16 %v1960
  %v2107 = vunpack.c.l.b16 %v1961
  %v2108 = vunpack.c.l.b16 %v1962
  %v2109 = vunpack.c.l.b16 %v1963
  %v2110 = vunpack.c.l.b16 %v1964
  %v2111 = vunpack.c.l.b16 %v1965
  %v2112 = vunpack.c.l.b16 %v1966
  %v2113 = vunpack.c.l.b16 %v1967
  %v2114 = vunpack.c.l.b16 %v1968
  %v2115 = vunpack.c.l.b16 %v1969
  %v2116 = vunpack.c.l.b16 %v1970
  %v2117 = vunpack.c.l.b16 %v1971
  %v2118 = vunpack.c.l.b16 %v1972
  %v2119 = vunpack.c.l.b16 %v1973
  %v2120 = vunpack.c.l.b16 %v1974
  %v2121 = vunpack.c.l.b16 %v1975
  %v2122 = vunpack.c.l.b16 %v1976
  %v2123 = vunpack.c.l.b16 %v1977
  %v2124 = vunpack.c.l.b16 %v1978
  %v2125 = vunpack.c.l.b16 %v1979
  %v2126 = vunpack.c.l.b16 %v1980
  %v2127 = vunpack.c.l.b16 %v1981
  %v2128 = vunpack.c.l.b16 %v1982
  %v2129 = vunpack.c.l.b16 %v1983
  %v2130 = vunpack.c.l.b16 %v1984
  %v2131 = vunpack.c.l.b16 %v1985
  %v2132 = vunpack.c.l.b16 %v1986
  %v2133 = vunpack.c.l.b16 %v1987
  %v2134 = vunpack.c.l.b16 %v1988
  %v2135 = vunpack.c.l.b16 %v1989
  %v2136 = vunpack.c.l.b16 %v1990
  %v2137 = vunpack.c.l.b16 %v1991
  %v2138 = vunpack.c.l.b16 %v1992
  %v2139 = vunpack.c.l.b16 %v1993
  %v2140 = vunpack.c.l.b16 %v1994
  %v2141 = vunpack.c.l.b16 %v1995
  %v2142 = vpack.c.b16 %v2078, %v2077
  %v2143 = vpack.c.b16 %v2080, %v2079
  %v2144 = vpack.c.b16 %v2082, %v2081
  %v2145 = vpack.c.b16 %v2084, %v2083
  %v2146 = vpack.c.b16 %v2086, %v2085
  %v2147 = vpack.c.b16 %v2088, %v2087
  %v2148 = vpack.c.b16 %v2090, %v2089
  %v2149 = vpack.c.b16 %v2092, %v2091
  %v2150 = vpack.c.b16 %v2094, %v2093
  %v2151 = vpack.c.b16 %v2096, %v2095
  %v2152 = vpack.c.b16 %v2098, %v2097
  %v2153 = vpack.c.b16 %v2100, %v2099
  %v2154 = vpack.c.b16 %v2102, %v2101
  %v2155 = vpack.c.b16 %v2104, %v2103
  %v2156 = vpack.c.b16 %v2106, %v2105
  %v2157 = vpack.c.b16 %v2108, %v2107
  %v2158 = vpack.c.b16 %v2110, %v2109
  %v2159 = vpack.c.b16 %v2112, %v2111
  %v2160 = vpack.c.b16 %v2114, %v2113
  %v2161 = vpack.c.b16 %v2116, %v2115
  %v2162 = vpack.c.b16 %v2118, %v2117
  %v2163 = vpack.c.b16 %v2120, %v2119
  %v2164 = vpack.c.b16 %v2122, %v2121
  %v2165 = vpack.c.b16 %v2124, %v2123
  %v2166 = vpack.c.b16 %v2126, %v2125
  %v2167 = vpack.c.b16 %v2128, %v2127
  %v2168 = vpack.c.b16 %v2130, %v2129
  %v2169 = vpack.c.b16 %v2132, %v2131
  %v2170 = vpack.c.b16 %v2134, %v2133
  %v2171 = vpack.c.b16 %v2136, %v2135
  %v2172 = vpack.c.b16 %v2138, %v2137
  %v2173 = vpack.c.b16 %v2140, %v2139
  %v2174 = vpack.c.b16 %v2141, %v2141
  %v2176 = vshrl.u32 %v2142, 16
  %v2178 = vrot.slane %v2176, 3
  %v2179 = vshll.u32 %v2142, 16
  %v2181 = vrot.slane %v2179, 4
  %v2182 = vor.u32 %v2178, %v2181
  %v2184 = vshrl.u32 %v2143, 16
  %v2186 = vrot.slane %v2184, 3
  %v2187 = vshll.u32 %v2143, 16
  %v2189 = vrot.slane %v2187, 4
  %v2190 = vor.u32 %v2186, %v2189
  %v2191 = vsel %vm1476, %v2182, %v2190
  %v2193 = vshrl.u32 %v2144, 16
  %v2195 = vrot.slane %v2193, 3
  %v2196 = vshll.u32 %v2144, 16
  %v2198 = vrot.slane %v2196, 4
  %v2199 = vor.u32 %v2195, %v2198
  %v2200 = vsel %vm1476, %v2190, %v2199
  %v2202 = vshrl.u32 %v2145, 16
  %v2204 = vrot.slane %v2202, 3
  %v2205 = vshll.u32 %v2145, 16
  %v2207 = vrot.slane %v2205, 4
  %v2208 = vor.u32 %v2204, %v2207
  %v2209 = vsel %vm1476, %v2199, %v2208
  %v2211 = vshrl.u32 %v2146, 16
  %v2213 = vrot.slane %v2211, 3
  %v2214 = vshll.u32 %v2146, 16
  %v2216 = vrot.slane %v2214, 4
  %v2217 = vor.u32 %v2213, %v2216
  %v2218 = vsel %vm1476, %v2208, %v2217
  %v2220 = vshrl.u32 %v2147, 16
  %v2222 = vrot.slane %v2220, 3
  %v2223 = vshll.u32 %v2147, 16
  %v2225 = vrot.slane %v2223, 4
  %v2226 = vor.u32 %v2222, %v2225
  %v2227 = vsel %vm1476, %v2217, %v2226
  %v2229 = vshrl.u32 %v2148, 16
  %v2231 = vrot.slane %v2229, 3
  %v2232 = vshll.u32 %v2148, 16
  %v2234 = vrot.slane %v2232, 4
  %v2235 = vor.u32 %v2231, %v2234
  %v2236 = vsel %vm1476, %v2226, %v2235
  %v2238 = vshrl.u32 %v2149, 16
  %v2240 = vrot.slane %v2238, 3
  %v2241 = vshll.u32 %v2149, 16
  %v2243 = vrot.slane %v2241, 4
  %v2244 = vor.u32 %v2240, %v2243
  %v2245 = vsel %vm1476, %v2235, %v2244
  %v2247 = vshrl.u32 %v2150, 16
  %v2249 = vrot.slane %v2247, 3
  %v2250 = vshll.u32 %v2150, 16
  %v2252 = vrot.slane %v2250, 4
  %v2253 = vor.u32 %v2249, %v2252
  %v2254 = vsel %vm1476, %v2244, %v2253
  %v2256 = vshrl.u32 %v2151, 16
  %v2258 = vrot.slane %v2256, 3
  %v2259 = vshll.u32 %v2151, 16
  %v2261 = vrot.slane %v2259, 4
  %v2262 = vor.u32 %v2258, %v2261
  %v2263 = vsel %vm1476, %v2253, %v2262
  %v2265 = vshrl.u32 %v2152, 16
  %v2267 = vrot.slane %v2265, 3
  %v2268 = vshll.u32 %v2152, 16
  %v2270 = vrot.slane %v2268, 4
  %v2271 = vor.u32 %v2267, %v2270
  %v2272 = vsel %vm1476, %v2262, %v2271
  %v2274 = vshrl.u32 %v2153, 16
  %v2276 = vrot.slane %v2274, 3
  %v2277 = vshll.u32 %v2153, 16
  %v2279 = vrot.slane %v2277, 4
  %v2280 = vor.u32 %v2276, %v2279
  %v2281 = vsel %vm1476, %v2271, %v2280
  %v2283 = vshrl.u32 %v2154, 16
  %v2285 = vrot.slane %v2283, 3
  %v2286 = vshll.u32 %v2154, 16
  %v2288 = vrot.slane %v2286, 4
  %v2289 = vor.u32 %v2285, %v2288
  %v2290 = vsel %vm1476, %v2280, %v2289
  %v2292 = vshrl.u32 %v2155, 16
  %v2294 = vrot.slane %v2292, 3
  %v2295 = vshll.u32 %v2155, 16
  %v2297 = vrot.slane %v2295, 4
  %v2298 = vor.u32 %v2294, %v2297
  %v2299 = vsel %vm1476, %v2289, %v2298
  %v2301 = vshrl.u32 %v2156, 16
  %v2303 = vrot.slane %v2301, 3
  %v2304 = vshll.u32 %v2156, 16
  %v2306 = vrot.slane %v2304, 4
  %v2307 = vor.u32 %v2303, %v2306
  %v2308 = vsel %vm1476, %v2298, %v2307
  %v2310 = vshrl.u32 %v2157, 16
  %v2312 = vrot.slane %v2310, 3
  %v2313 = vshll.u32 %v2157, 16
  %v2315 = vrot.slane %v2313, 4
  %v2316 = vor.u32 %v2312, %v2315
  %v2317 = vsel %vm1476, %v2307, %v2316
  %v2319 = vshrl.u32 %v2158, 16
  %v2321 = vrot.slane %v2319, 3
  %v2322 = vshll.u32 %v2158, 16
  %v2324 = vrot.slane %v2322, 4
  %v2325 = vor.u32 %v2321, %v2324
  %v2326 = vsel %vm1476, %v2316, %v2325
  %v2328 = vshrl.u32 %v2159, 16
  %v2330 = vrot.slane %v2328, 3
  %v2331 = vshll.u32 %v2159, 16
  %v2333 = vrot.slane %v2331, 4
  %v2334 = vor.u32 %v2330, %v2333
  %v2335 = vsel %vm1476, %v2325, %v2334
  %v2337 = vshrl.u32 %v2160, 16
  %v2339 = vrot.slane %v2337, 3
  %v2340 = vshll.u32 %v2160, 16
  %v2342 = vrot.slane %v2340, 4
  %v2343 = vor.u32 %v2339, %v2342
  %v2344 = vsel %vm1476, %v2334, %v2343
  %v2346 = vshrl.u32 %v2161, 16
  %v2348 = vrot.slane %v2346, 3
  %v2349 = vshll.u32 %v2161, 16
  %v2351 = vrot.slane %v2349, 4
  %v2352 = vor.u32 %v2348, %v2351
  %v2353 = vsel %vm1476, %v2343, %v2352
  %v2355 = vshrl.u32 %v2162, 16
  %v2357 = vrot.slane %v2355, 3
  %v2358 = vshll.u32 %v2162, 16
  %v2360 = vrot.slane %v2358, 4
  %v2361 = vor.u32 %v2357, %v2360
  %v2362 = vsel %vm1476, %v2352, %v2361
  %v2364 = vshrl.u32 %v2163, 16
  %v2366 = vrot.slane %v2364, 3
  %v2367 = vshll.u32 %v2163, 16
  %v2369 = vrot.slane %v2367, 4
  %v2370 = vor.u32 %v2366, %v2369
  %v2371 = vsel %vm1476, %v2361, %v2370
  %v2373 = vshrl.u32 %v2164, 16
  %v2375 = vrot.slane %v2373, 3
  %v2376 = vshll.u32 %v2164, 16
  %v2378 = vrot.slane %v2376, 4
  %v2379 = vor.u32 %v2375, %v2378
  %v2380 = vsel %vm1476, %v2370, %v2379
  %v2382 = vshrl.u32 %v2165, 16
  %v2384 = vrot.slane %v2382, 3
  %v2385 = vshll.u32 %v2165, 16
  %v2387 = vrot.slane %v2385, 4
  %v2388 = vor.u32 %v2384, %v2387
  %v2389 = vsel %vm1476, %v2379, %v2388
  %v2391 = vshrl.u32 %v2166, 16
  %v2393 = vrot.slane %v2391, 3
  %v2394 = vshll.u32 %v2166, 16
  %v2396 = vrot.slane %v2394, 4
  %v2397 = vor.u32 %v2393, %v2396
  %v2398 = vsel %vm1476, %v2388, %v2397
  %v2400 = vshrl.u32 %v2167, 16
  %v2402 = vrot.slane %v2400, 3
  %v2403 = vshll.u32 %v2167, 16
  %v2405 = vrot.slane %v2403, 4
  %v2406 = vor.u32 %v2402, %v2405
  %v2407 = vsel %vm1476, %v2397, %v2406
  %v2409 = vshrl.u32 %v2168, 16
  %v2411 = vrot.slane %v2409, 3
  %v2412 = vshll.u32 %v2168, 16
  %v2414 = vrot.slane %v2412, 4
  %v2415 = vor.u32 %v2411, %v2414
  %v2416 = vsel %vm1476, %v2406, %v2415
  %v2418 = vshrl.u32 %v2169, 16
  %v2420 = vrot.slane %v2418, 3
  %v2421 = vshll.u32 %v2169, 16
  %v2423 = vrot.slane %v2421, 4
  %v2424 = vor.u32 %v2420, %v2423
  %v2425 = vsel %vm1476, %v2415, %v2424
  %v2427 = vshrl.u32 %v2170, 16
  %v2429 = vrot.slane %v2427, 3
  %v2430 = vshll.u32 %v2170, 16
  %v2432 = vrot.slane %v2430, 4
  %v2433 = vor.u32 %v2429, %v2432
  %v2434 = vsel %vm1476, %v2424, %v2433
  %v2436 = vshrl.u32 %v2171, 16
  %v2438 = vrot.slane %v2436, 3
  %v2439 = vshll.u32 %v2171, 16
  %v2441 = vrot.slane %v2439, 4
  %v2442 = vor.u32 %v2438, %v2441
  %v2443 = vsel %vm1476, %v2433, %v2442
  %v2445 = vshrl.u32 %v2172, 16
  %v2447 = vrot.slane %v2445, 3
  %v2448 = vshll.u32 %v2172, 16
  %v2450 = vrot.slane %v2448, 4
  %v2451 = vor.u32 %v2447, %v2450
  %v2452 = vsel %vm1476, %v2442, %v2451
  %v2454 = vshrl.u32 %v2173, 16
  %v2456 = vrot.slane %v2454, 3
  %v2457 = vshll.u32 %v2173, 16
  %v2459 = vrot.slane %v2457, 4
  %v2460 = vor.u32 %v2456, %v2459
  %v2461 = vsel %vm1476, %v2451, %v2460
  %v2463 = vshrl.u32 %v2174, 16
  %v2465 = vrot.slane %v2463, 3
  %v2466 = vshll.u32 %v2174, 16
  %v2468 = vrot.slane %v2466, 4
  %v2469 = vor.u32 %v2465, %v2468
  %v2470 = vsel %vm1476, %v2460, %v2469
  %v2519 = vunpack.c.l.b16 %v1996
  %v2520 = vunpack.c.l.b16 %v1997
  %v2521 = vunpack.c.l.b16 %v1998
  %v2522 = vunpack.c.l.b16 %v1999
  %v2523 = vunpack.c.l.b16 %v2000
  %v2524 = vunpack.c.l.b16 %v2001
  %v2525 = vunpack.c.l.b16 %v2002
  %v2526 = vunpack.c.l.b16 %v2003
  %v2527 = vunpack.c.l.b16 %v2004
  %v2528 = vunpack.c.l.b16 %v2005
  %v2529 = vunpack.c.l.b16 %v2006
  %v2530 = vunpack.c.l.b16 %v2007
  %v2531 = vunpack.c.l.b16 %v2008
  %v2532 = vunpack.c.l.b16 %v2009
  %v2533 = vunpack.c.l.b16 %v2010
  %v2534 = vunpack.c.l.b16 %v2011
  %v2535 = vpack.c.b16 %v2520, %v2519
  %v2536 = vpack.c.b16 %v2522, %v2521
  %v2537 = vpack.c.b16 %v2524, %v2523
  %v2538 = vpack.c.b16 %v2526, %v2525
  %v2539 = vpack.c.b16 %v2528, %v2527
  %v2540 = vpack.c.b16 %v2530, %v2529
  %v2541 = vpack.c.b16 %v2532, %v2531
  %v2542 = vpack.c.b16 %v2534, %v2533
  %2551 = vmatpush.bf16.msra.mxu0 %v2542
  %2552 = vmatpush.bf16.msra.mxu0 %v2541
  %2553 = vmatpush.bf16.msra.mxu0 %v2540
  %2554 = vmatpush.bf16.msra.mxu0 %v2539
  %2555 = vmatpush.bf16.msra.mxu0 %v2538
  %2556 = vmatpush.bf16.msra.mxu0 %v2537
  %2557 = vmatpush.bf16.msra.mxu0 %v2536
  %2558 = vmatpush.bf16.msra.mxu0 %v2535
  %2559 = vmatmul.bf16.gmra.mxu0 %v2191
  %v2560 = vpop.f32.mrf.mxu0
  %v2561 = vadd.f32 0.0, %v2560
  %v2562 = vpop.f32.mrf.mxu0
  %v2563 = vadd.f32 0.0, %v2562
  %2564 = vmatmul.bf16.gmra.mxu0 %v2200
  %v2565 = vpop.f32.mrf.mxu0
  %v2566 = vadd.f32 0.0, %v2565
  %v2567 = vpop.f32.mrf.mxu0
  %v2568 = vadd.f32 0.0, %v2567
  %2569 = vmatmul.bf16.gmra.mxu0 %v2209
  %v2570 = vpop.f32.mrf.mxu0
  %v2571 = vadd.f32 0.0, %v2570
  %v2572 = vpop.f32.mrf.mxu0
  %v2573 = vadd.f32 0.0, %v2572
  %2574 = vmatmul.bf16.gmra.mxu0 %v2218
  %v2575 = vpop.f32.mrf.mxu0
  %v2576 = vadd.f32 0.0, %v2575
  %v2577 = vpop.f32.mrf.mxu0
  %v2578 = vadd.f32 0.0, %v2577
  %2579 = vmatmul.bf16.gmra.mxu0 %v2227
  %v2580 = vpop.f32.mrf.mxu0
  %v2581 = vadd.f32 0.0, %v2580
  %v2582 = vpop.f32.mrf.mxu0
  %v2583 = vadd.f32 0.0, %v2582
  %2584 = vmatmul.bf16.gmra.mxu0 %v2236
  %v2585 = vpop.f32.mrf.mxu0
  %v2586 = vadd.f32 0.0, %v2585
  %v2587 = vpop.f32.mrf.mxu0
  %v2588 = vadd.f32 0.0, %v2587
  %2589 = vmatmul.bf16.gmra.mxu0 %v2245
  %v2590 = vpop.f32.mrf.mxu0
  %v2591 = vadd.f32 0.0, %v2590
  %v2592 = vpop.f32.mrf.mxu0
  %v2593 = vadd.f32 0.0, %v2592
  %2594 = vmatmul.bf16.gmra.mxu0 %v2254
  %v2595 = vpop.f32.mrf.mxu0
  %v2596 = vadd.f32 0.0, %v2595
  %v2597 = vpop.f32.mrf.mxu0
  %v2598 = vadd.f32 0.0, %v2597
  %2599 = vmatmul.bf16.gmra.mxu0 %v2263
  %v2600 = vpop.f32.mrf.mxu0
  %v2601 = vadd.f32 0.0, %v2600
  %v2602 = vpop.f32.mrf.mxu0
  %v2603 = vadd.f32 0.0, %v2602
  %2604 = vmatmul.bf16.gmra.mxu0 %v2272
  %v2605 = vpop.f32.mrf.mxu0
  %v2606 = vadd.f32 0.0, %v2605
  %v2607 = vpop.f32.mrf.mxu0
  %v2608 = vadd.f32 0.0, %v2607
  %2609 = vmatmul.bf16.gmra.mxu0 %v2281
  %v2610 = vpop.f32.mrf.mxu0
  %v2611 = vadd.f32 0.0, %v2610
  %v2612 = vpop.f32.mrf.mxu0
  %v2613 = vadd.f32 0.0, %v2612
  %2614 = vmatmul.bf16.gmra.mxu0 %v2290
  %v2615 = vpop.f32.mrf.mxu0
  %v2616 = vadd.f32 0.0, %v2615
  %v2617 = vpop.f32.mrf.mxu0
  %v2618 = vadd.f32 0.0, %v2617
  %2619 = vmatmul.bf16.gmra.mxu0 %v2299
  %v2620 = vpop.f32.mrf.mxu0
  %v2621 = vadd.f32 0.0, %v2620
  %v2622 = vpop.f32.mrf.mxu0
  %v2623 = vadd.f32 0.0, %v2622
  %2624 = vmatmul.bf16.gmra.mxu0 %v2308
  %v2625 = vpop.f32.mrf.mxu0
  %v2626 = vadd.f32 0.0, %v2625
  %v2627 = vpop.f32.mrf.mxu0
  %v2628 = vadd.f32 0.0, %v2627
  %2629 = vmatmul.bf16.gmra.mxu0 %v2317
  %v2630 = vpop.f32.mrf.mxu0
  %v2631 = vadd.f32 0.0, %v2630
  %v2632 = vpop.f32.mrf.mxu0
  %v2633 = vadd.f32 0.0, %v2632
  %2634 = vmatmul.bf16.gmra.mxu0 %v2326
  %v2635 = vpop.f32.mrf.mxu0
  %v2636 = vadd.f32 0.0, %v2635
  %v2637 = vpop.f32.mrf.mxu0
  %v2638 = vadd.f32 0.0, %v2637
  %2639 = vmatmul.bf16.gmra.mxu0 %v2335
  %v2640 = vpop.f32.mrf.mxu0
  %v2641 = vadd.f32 0.0, %v2640
  %v2642 = vpop.f32.mrf.mxu0
  %v2643 = vadd.f32 0.0, %v2642
  %2644 = vmatmul.bf16.gmra.mxu0 %v2344
  %v2645 = vpop.f32.mrf.mxu0
  %v2646 = vadd.f32 0.0, %v2645
  %v2647 = vpop.f32.mrf.mxu0
  %v2648 = vadd.f32 0.0, %v2647
  %2649 = vmatmul.bf16.gmra.mxu0 %v2353
  %v2650 = vpop.f32.mrf.mxu0
  %v2651 = vadd.f32 0.0, %v2650
  %v2652 = vpop.f32.mrf.mxu0
  %v2653 = vadd.f32 0.0, %v2652
  %2654 = vmatmul.bf16.gmra.mxu0 %v2362
  %v2655 = vpop.f32.mrf.mxu0
  %v2656 = vadd.f32 0.0, %v2655
  %v2657 = vpop.f32.mrf.mxu0
  %v2658 = vadd.f32 0.0, %v2657
  %2659 = vmatmul.bf16.gmra.mxu0 %v2371
  %v2660 = vpop.f32.mrf.mxu0
  %v2661 = vadd.f32 0.0, %v2660
  %v2662 = vpop.f32.mrf.mxu0
  %v2663 = vadd.f32 0.0, %v2662
  %2664 = vmatmul.bf16.gmra.mxu0 %v2380
  %v2665 = vpop.f32.mrf.mxu0
  %v2666 = vadd.f32 0.0, %v2665
  %v2667 = vpop.f32.mrf.mxu0
  %v2668 = vadd.f32 0.0, %v2667
  %2669 = vmatmul.bf16.gmra.mxu0 %v2389
  %v2670 = vpop.f32.mrf.mxu0
  %v2671 = vadd.f32 0.0, %v2670
  %v2672 = vpop.f32.mrf.mxu0
  %v2673 = vadd.f32 0.0, %v2672
  %2674 = vmatmul.bf16.gmra.mxu0 %v2398
  %v2675 = vpop.f32.mrf.mxu0
  %v2676 = vadd.f32 0.0, %v2675
  %v2677 = vpop.f32.mrf.mxu0
  %v2678 = vadd.f32 0.0, %v2677
  %2679 = vmatmul.bf16.gmra.mxu0 %v2407
  %v2680 = vpop.f32.mrf.mxu0
  %v2681 = vadd.f32 0.0, %v2680
  %v2682 = vpop.f32.mrf.mxu0
  %v2683 = vadd.f32 0.0, %v2682
  %2684 = vmatmul.bf16.gmra.mxu0 %v2416
  %v2685 = vpop.f32.mrf.mxu0
  %v2686 = vadd.f32 0.0, %v2685
  %v2687 = vpop.f32.mrf.mxu0
  %v2688 = vadd.f32 0.0, %v2687
  %2689 = vmatmul.bf16.gmra.mxu0 %v2425
  %v2690 = vpop.f32.mrf.mxu0
  %v2691 = vadd.f32 0.0, %v2690
  %v2692 = vpop.f32.mrf.mxu0
  %v2693 = vadd.f32 0.0, %v2692
  %2694 = vmatmul.bf16.gmra.mxu0 %v2434
  %v2695 = vpop.f32.mrf.mxu0
  %v2696 = vadd.f32 0.0, %v2695
  %v2697 = vpop.f32.mrf.mxu0
  %v2698 = vadd.f32 0.0, %v2697
  %2699 = vmatmul.bf16.gmra.mxu0 %v2443
  %v2700 = vpop.f32.mrf.mxu0
  %v2701 = vadd.f32 0.0, %v2700
  %v2702 = vpop.f32.mrf.mxu0
  %v2703 = vadd.f32 0.0, %v2702
  %2704 = vmatmul.bf16.gmra.mxu0 %v2452
  %v2705 = vpop.f32.mrf.mxu0
  %v2706 = vadd.f32 0.0, %v2705
  %v2707 = vpop.f32.mrf.mxu0
  %v2708 = vadd.f32 0.0, %v2707
  %2709 = vmatmul.bf16.gmra.mxu0 %v2461
  %v2710 = vpop.f32.mrf.mxu0
  %v2711 = vadd.f32 0.0, %v2710
  %v2712 = vpop.f32.mrf.mxu0
  %v2713 = vadd.f32 0.0, %v2712
  %2714 = vmatmul.bf16.gmra.mxu0 %v2470
  %v2715 = vpop.f32.mrf.mxu0
  %v2716 = vadd.f32 0.0, %v2715
  %v2717 = vpop.f32.mrf.mxu0
  %v2718 = vadd.f32 0.0, %v2717
  %2719 = vdwg.mxu0
  %v2720 = vadd.f32 %v1867, %v2561
  %v2721 = vadd.f32 %v1868, %v2563
  %v2722 = vadd.f32 %v1869, %v2566
  %v2723 = vadd.f32 %v1870, %v2568
  %v2724 = vadd.f32 %v1871, %v2571
  %v2725 = vadd.f32 %v1872, %v2573
  %v2726 = vadd.f32 %v1873, %v2576
  %v2727 = vadd.f32 %v1874, %v2578
  %v2728 = vadd.f32 %v1875, %v2581
  %v2729 = vadd.f32 %v1876, %v2583
  %v2730 = vadd.f32 %v1877, %v2586
  %v2731 = vadd.f32 %v1878, %v2588
  %v2732 = vadd.f32 %v1879, %v2591
  %v2733 = vadd.f32 %v1880, %v2593
  %v2734 = vadd.f32 %v1881, %v2596
  %v2735 = vadd.f32 %v1882, %v2598
  %v2736 = vadd.f32 %v1883, %v2601
  %v2737 = vadd.f32 %v1884, %v2603
  %v2738 = vadd.f32 %v1885, %v2606
  %v2739 = vadd.f32 %v1886, %v2608
  %v2740 = vadd.f32 %v1887, %v2611
  %v2741 = vadd.f32 %v1888, %v2613
  %v2742 = vadd.f32 %v1889, %v2616
  %v2743 = vadd.f32 %v1890, %v2618
  %v2744 = vadd.f32 %v1891, %v2621
  %v2745 = vadd.f32 %v1892, %v2623
  %v2746 = vadd.f32 %v1893, %v2626
  %v2747 = vadd.f32 %v1894, %v2628
  %v2748 = vadd.f32 %v1895, %v2631
  %v2749 = vadd.f32 %v1896, %v2633
  %v2750 = vadd.f32 %v1897, %v2636
  %v2751 = vadd.f32 %v1898, %v2638
  %v2752 = vadd.f32 %v1899, %v2641
  %v2753 = vadd.f32 %v1900, %v2643
  %v2754 = vadd.f32 %v1901, %v2646
  %v2755 = vadd.f32 %v1902, %v2648
  %v2756 = vadd.f32 %v1903, %v2651
  %v2757 = vadd.f32 %v1904, %v2653
  %v2758 = vadd.f32 %v1905, %v2656
  %v2759 = vadd.f32 %v1906, %v2658
  %v2760 = vadd.f32 %v1907, %v2661
  %v2761 = vadd.f32 %v1908, %v2663
  %v2762 = vadd.f32 %v1909, %v2666
  %v2763 = vadd.f32 %v1910, %v2668
  %v2764 = vadd.f32 %v1911, %v2671
  %v2765 = vadd.f32 %v1912, %v2673
  %v2766 = vadd.f32 %v1913, %v2676
  %v2767 = vadd.f32 %v1914, %v2678
  %v2768 = vadd.f32 %v1915, %v2681
  %v2769 = vadd.f32 %v1916, %v2683
  %v2770 = vadd.f32 %v1917, %v2686
  %v2771 = vadd.f32 %v1918, %v2688
  %v2772 = vadd.f32 %v1919, %v2691
  %v2773 = vadd.f32 %v1920, %v2693
  %v2774 = vadd.f32 %v1921, %v2696
  %v2775 = vadd.f32 %v1922, %v2698
  %v2776 = vadd.f32 %v1923, %v2701
  %v2777 = vadd.f32 %v1924, %v2703
  %v2778 = vadd.f32 %v1925, %v2706
  %v2779 = vadd.f32 %v1926, %v2708
  %v2780 = vadd.f32 %v1927, %v2711
  %v2781 = vadd.f32 %v1928, %v2713
  %v2782 = vadd.f32 %v1929, %v2716
  %v2783 = vadd.f32 %v1930, %v2718
  %v2784 = vld [vmem:[%s3 + $0x100] sm:$0xf]
  %v2785 = vld [vmem:[%s3 + $0x104] sm:$0xf]
  %v2786 = vld [vmem:[%s3 + $0x108] sm:$0xf]
  %v2787 = vld [vmem:[%s3 + $0x10c] sm:$0xf]
  %v2788 = vld [vmem:[%s3 + $0x110] sm:$0xf]
  %v2789 = vld [vmem:[%s3 + $0x114] sm:$0xf]
  %v2790 = vld [vmem:[%s3 + $0x118] sm:$0xf]
  %v2791 = vld [vmem:[%s3 + $0x11c] sm:$0xf]
  %v2792 = vld [vmem:[%s3 + $0x120] sm:$0xf]
  %v2793 = vld [vmem:[%s3 + $0x124] sm:$0xf]
  %v2794 = vld [vmem:[%s3 + $0x128] sm:$0xf]
  %v2795 = vld [vmem:[%s3 + $0x12c] sm:$0xf]
  %v2796 = vld [vmem:[%s3 + $0x130] sm:$0xf]
  %v2797 = vld [vmem:[%s3 + $0x134] sm:$0xf]
  %v2798 = vld [vmem:[%s3 + $0x138] sm:$0xf]
  %v2799 = vld [vmem:[%s3 + $0x13c] sm:$0xf]
  %v2800 = vpack.c.b16 %v2079, %v2078
  %v2801 = vpack.c.b16 %v2081, %v2080
  %v2802 = vpack.c.b16 %v2083, %v2082
  %v2803 = vpack.c.b16 %v2085, %v2084
  %v2804 = vpack.c.b16 %v2087, %v2086
  %v2805 = vpack.c.b16 %v2089, %v2088
  %v2806 = vpack.c.b16 %v2091, %v2090
  %v2807 = vpack.c.b16 %v2093, %v2092
  %v2808 = vpack.c.b16 %v2095, %v2094
  %v2809 = vpack.c.b16 %v2097, %v2096
  %v2810 = vpack.c.b16 %v2099, %v2098
  %v2811 = vpack.c.b16 %v2101, %v2100
  %v2812 = vpack.c.b16 %v2103, %v2102
  %v2813 = vpack.c.b16 %v2105, %v2104
  %v2814 = vpack.c.b16 %v2107, %v2106
  %v2815 = vpack.c.b16 %v2109, %v2108
  %v2816 = vpack.c.b16 %v2111, %v2110
  %v2817 = vpack.c.b16 %v2113, %v2112
  %v2818 = vpack.c.b16 %v2115, %v2114
  %v2819 = vpack.c.b16 %v2117, %v2116
  %v2820 = vpack.c.b16 %v2119, %v2118
  %v2821 = vpack.c.b16 %v2121, %v2120
  %v2822 = vpack.c.b16 %v2123, %v2122
  %v2823 = vpack.c.b16 %v2125, %v2124
  %v2824 = vpack.c.b16 %v2127, %v2126
  %v2825 = vpack.c.b16 %v2129, %v2128
  %v2826 = vpack.c.b16 %v2131, %v2130
  %v2827 = vpack.c.b16 %v2133, %v2132
  %v2828 = vpack.c.b16 %v2135, %v2134
  %v2829 = vpack.c.b16 %v2137, %v2136
  %v2830 = vpack.c.b16 %v2139, %v2138
  %v2831 = vpack.c.b16 %v2141, %v2140
  %v2880 = vunpack.c.l.b16 %v2784
  %v2881 = vunpack.c.l.b16 %v2785
  %v2882 = vunpack.c.l.b16 %v2786
  %v2883 = vunpack.c.l.b16 %v2787
  %v2884 = vunpack.c.l.b16 %v2788
  %v2885 = vunpack.c.l.b16 %v2789
  %v2886 = vunpack.c.l.b16 %v2790
  %v2887 = vunpack.c.l.b16 %v2791
  %v2888 = vunpack.c.l.b16 %v2792
  %v2889 = vunpack.c.l.b16 %v2793
  %v2890 = vunpack.c.l.b16 %v2794
  %v2891 = vunpack.c.l.b16 %v2795
  %v2892 = vunpack.c.l.b16 %v2796
  %v2893 = vunpack.c.l.b16 %v2797
  %v2894 = vunpack.c.l.b16 %v2798
  %v2895 = vunpack.c.l.b16 %v2799
  %v2896 = vpack.c.b16 %v2881, %v2880
  %v2897 = vpack.c.b16 %v2883, %v2882
  %v2898 = vpack.c.b16 %v2885, %v2884
  %v2899 = vpack.c.b16 %v2887, %v2886
  %v2900 = vpack.c.b16 %v2889, %v2888
  %v2901 = vpack.c.b16 %v2891, %v2890
  %v2902 = vpack.c.b16 %v2893, %v2892
  %v2903 = vpack.c.b16 %v2895, %v2894
  %2912 = vmatpush.bf16.msra.mxu0 %v2903
  %2913 = vmatpush.bf16.msra.mxu0 %v2902
  %2914 = vmatpush.bf16.msra.mxu0 %v2901
  %2915 = vmatpush.bf16.msra.mxu0 %v2900
  %2916 = vmatpush.bf16.msra.mxu0 %v2899
  %2917 = vmatpush.bf16.msra.mxu0 %v2898
  %2918 = vmatpush.bf16.msra.mxu0 %v2897
  %2919 = vmatpush.bf16.msra.mxu0 %v2896
  %2920 = vmatmul.bf16.gmra.mxu0 %v2800
  %v2921 = vpop.f32.mrf.mxu0
  %v2922 = vadd.f32 0.0, %v2921
  %v2923 = vpop.f32.mrf.mxu0
  %v2924 = vadd.f32 0.0, %v2923
  %2925 = vmatmul.bf16.gmra.mxu0 %v2801
  %v2926 = vpop.f32.mrf.mxu0
  %v2927 = vadd.f32 0.0, %v2926
  %v2928 = vpop.f32.mrf.mxu0
  %v2929 = vadd.f32 0.0, %v2928
  %2930 = vmatmul.bf16.gmra.mxu0 %v2802
  %v2931 = vpop.f32.mrf.mxu0
  %v2932 = vadd.f32 0.0, %v2931
  %v2933 = vpop.f32.mrf.mxu0
  %v2934 = vadd.f32 0.0, %v2933
  %2935 = vmatmul.bf16.gmra.mxu0 %v2803
  %v2936 = vpop.f32.mrf.mxu0
  %v2937 = vadd.f32 0.0, %v2936
  %v2938 = vpop.f32.mrf.mxu0
  %v2939 = vadd.f32 0.0, %v2938
  %2940 = vmatmul.bf16.gmra.mxu0 %v2804
  %v2941 = vpop.f32.mrf.mxu0
  %v2942 = vadd.f32 0.0, %v2941
  %v2943 = vpop.f32.mrf.mxu0
  %v2944 = vadd.f32 0.0, %v2943
  %2945 = vmatmul.bf16.gmra.mxu0 %v2805
  %v2946 = vpop.f32.mrf.mxu0
  %v2947 = vadd.f32 0.0, %v2946
  %v2948 = vpop.f32.mrf.mxu0
  %v2949 = vadd.f32 0.0, %v2948
  %2950 = vmatmul.bf16.gmra.mxu0 %v2806
  %v2951 = vpop.f32.mrf.mxu0
  %v2952 = vadd.f32 0.0, %v2951
  %v2953 = vpop.f32.mrf.mxu0
  %v2954 = vadd.f32 0.0, %v2953
  %2955 = vmatmul.bf16.gmra.mxu0 %v2807
  %v2956 = vpop.f32.mrf.mxu0
  %v2957 = vadd.f32 0.0, %v2956
  %v2958 = vpop.f32.mrf.mxu0
  %v2959 = vadd.f32 0.0, %v2958
  %2960 = vmatmul.bf16.gmra.mxu0 %v2808
  %v2961 = vpop.f32.mrf.mxu0
  %v2962 = vadd.f32 0.0, %v2961
  %v2963 = vpop.f32.mrf.mxu0
  %v2964 = vadd.f32 0.0, %v2963
  %2965 = vmatmul.bf16.gmra.mxu0 %v2809
  %v2966 = vpop.f32.mrf.mxu0
  %v2967 = vadd.f32 0.0, %v2966
  %v2968 = vpop.f32.mrf.mxu0
  %v2969 = vadd.f32 0.0, %v2968
  %2970 = vmatmul.bf16.gmra.mxu0 %v2810
  %v2971 = vpop.f32.mrf.mxu0
  %v2972 = vadd.f32 0.0, %v2971
  %v2973 = vpop.f32.mrf.mxu0
  %v2974 = vadd.f32 0.0, %v2973
  %2975 = vmatmul.bf16.gmra.mxu0 %v2811
  %v2976 = vpop.f32.mrf.mxu0
  %v2977 = vadd.f32 0.0, %v2976
  %v2978 = vpop.f32.mrf.mxu0
  %v2979 = vadd.f32 0.0, %v2978
  %2980 = vmatmul.bf16.gmra.mxu0 %v2812
  %v2981 = vpop.f32.mrf.mxu0
  %v2982 = vadd.f32 0.0, %v2981
  %v2983 = vpop.f32.mrf.mxu0
  %v2984 = vadd.f32 0.0, %v2983
  %2985 = vmatmul.bf16.gmra.mxu0 %v2813
  %v2986 = vpop.f32.mrf.mxu0
  %v2987 = vadd.f32 0.0, %v2986
  %v2988 = vpop.f32.mrf.mxu0
  %v2989 = vadd.f32 0.0, %v2988
  %2990 = vmatmul.bf16.gmra.mxu0 %v2814
  %v2991 = vpop.f32.mrf.mxu0
  %v2992 = vadd.f32 0.0, %v2991
  %v2993 = vpop.f32.mrf.mxu0
  %v2994 = vadd.f32 0.0, %v2993
  %2995 = vmatmul.bf16.gmra.mxu0 %v2815
  %v2996 = vpop.f32.mrf.mxu0
  %v2997 = vadd.f32 0.0, %v2996
  %v2998 = vpop.f32.mrf.mxu0
  %v2999 = vadd.f32 0.0, %v2998
  %3000 = vmatmul.bf16.gmra.mxu0 %v2816
  %v3001 = vpop.f32.mrf.mxu0
  %v3002 = vadd.f32 0.0, %v3001
  %v3003 = vpop.f32.mrf.mxu0
  %v3004 = vadd.f32 0.0, %v3003
  %3005 = vmatmul.bf16.gmra.mxu0 %v2817
  %v3006 = vpop.f32.mrf.mxu0
  %v3007 = vadd.f32 0.0, %v3006
  %v3008 = vpop.f32.mrf.mxu0
  %v3009 = vadd.f32 0.0, %v3008
  %3010 = vmatmul.bf16.gmra.mxu0 %v2818
  %v3011 = vpop.f32.mrf.mxu0
  %v3012 = vadd.f32 0.0, %v3011
  %v3013 = vpop.f32.mrf.mxu0
  %v3014 = vadd.f32 0.0, %v3013
  %3015 = vmatmul.bf16.gmra.mxu0 %v2819
  %v3016 = vpop.f32.mrf.mxu0
  %v3017 = vadd.f32 0.0, %v3016
  %v3018 = vpop.f32.mrf.mxu0
  %v3019 = vadd.f32 0.0, %v3018
  %3020 = vmatmul.bf16.gmra.mxu0 %v2820
  %v3021 = vpop.f32.mrf.mxu0
  %v3022 = vadd.f32 0.0, %v3021
  %v3023 = vpop.f32.mrf.mxu0
  %v3024 = vadd.f32 0.0, %v3023
  %3025 = vmatmul.bf16.gmra.mxu0 %v2821
  %v3026 = vpop.f32.mrf.mxu0
  %v3027 = vadd.f32 0.0, %v3026
  %v3028 = vpop.f32.mrf.mxu0
  %v3029 = vadd.f32 0.0, %v3028
  %3030 = vmatmul.bf16.gmra.mxu0 %v2822
  %v3031 = vpop.f32.mrf.mxu0
  %v3032 = vadd.f32 0.0, %v3031
  %v3033 = vpop.f32.mrf.mxu0
  %v3034 = vadd.f32 0.0, %v3033
  %3035 = vmatmul.bf16.gmra.mxu0 %v2823
  %v3036 = vpop.f32.mrf.mxu0
  %v3037 = vadd.f32 0.0, %v3036
  %v3038 = vpop.f32.mrf.mxu0
  %v3039 = vadd.f32 0.0, %v3038
  %3040 = vmatmul.bf16.gmra.mxu0 %v2824
  %v3041 = vpop.f32.mrf.mxu0
  %v3042 = vadd.f32 0.0, %v3041
  %v3043 = vpop.f32.mrf.mxu0
  %v3044 = vadd.f32 0.0, %v3043
  %3045 = vmatmul.bf16.gmra.mxu0 %v2825
  %v3046 = vpop.f32.mrf.mxu0
  %v3047 = vadd.f32 0.0, %v3046
  %v3048 = vpop.f32.mrf.mxu0
  %v3049 = vadd.f32 0.0, %v3048
  %3050 = vmatmul.bf16.gmra.mxu0 %v2826
  %v3051 = vpop.f32.mrf.mxu0
  %v3052 = vadd.f32 0.0, %v3051
  %v3053 = vpop.f32.mrf.mxu0
  %v3054 = vadd.f32 0.0, %v3053
  %3055 = vmatmul.bf16.gmra.mxu0 %v2827
  %v3056 = vpop.f32.mrf.mxu0
  %v3057 = vadd.f32 0.0, %v3056
  %v3058 = vpop.f32.mrf.mxu0
  %v3059 = vadd.f32 0.0, %v3058
  %3060 = vmatmul.bf16.gmra.mxu0 %v2828
  %v3061 = vpop.f32.mrf.mxu0
  %v3062 = vadd.f32 0.0, %v3061
  %v3063 = vpop.f32.mrf.mxu0
  %v3064 = vadd.f32 0.0, %v3063
  %3065 = vmatmul.bf16.gmra.mxu0 %v2829
  %v3066 = vpop.f32.mrf.mxu0
  %v3067 = vadd.f32 0.0, %v3066
  %v3068 = vpop.f32.mrf.mxu0
  %v3069 = vadd.f32 0.0, %v3068
  %3070 = vmatmul.bf16.gmra.mxu0 %v2830
  %v3071 = vpop.f32.mrf.mxu0
  %v3072 = vadd.f32 0.0, %v3071
  %v3073 = vpop.f32.mrf.mxu0
  %v3074 = vadd.f32 0.0, %v3073
  %3075 = vmatmul.bf16.gmra.mxu0 %v2831
  %v3076 = vpop.f32.mrf.mxu0
  %v3077 = vadd.f32 0.0, %v3076
  %v3078 = vpop.f32.mrf.mxu0
  %v3079 = vadd.f32 0.0, %v3078
  %3080 = vdwg.mxu0
  %v3081 = vadd.f32 %v2720, %v2922
  %v3082 = vadd.f32 %v2721, %v2924
  %v3083 = vadd.f32 %v2722, %v2927
  %v3084 = vadd.f32 %v2723, %v2929
  %v3085 = vadd.f32 %v2724, %v2932
  %v3086 = vadd.f32 %v2725, %v2934
  %v3087 = vadd.f32 %v2726, %v2937
  %v3088 = vadd.f32 %v2727, %v2939
  %v3089 = vadd.f32 %v2728, %v2942
  %v3090 = vadd.f32 %v2729, %v2944
  %v3091 = vadd.f32 %v2730, %v2947
  %v3092 = vadd.f32 %v2731, %v2949
  %v3093 = vadd.f32 %v2732, %v2952
  %v3094 = vadd.f32 %v2733, %v2954
  %v3095 = vadd.f32 %v2734, %v2957
  %v3096 = vadd.f32 %v2735, %v2959
  %v3097 = vadd.f32 %v2736, %v2962
  %v3098 = vadd.f32 %v2737, %v2964
  %v3099 = vadd.f32 %v2738, %v2967
  %v3100 = vadd.f32 %v2739, %v2969
  %v3101 = vadd.f32 %v2740, %v2972
  %v3102 = vadd.f32 %v2741, %v2974
  %v3103 = vadd.f32 %v2742, %v2977
  %v3104 = vadd.f32 %v2743, %v2979
  %v3105 = vadd.f32 %v2744, %v2982
  %v3106 = vadd.f32 %v2745, %v2984
  %v3107 = vadd.f32 %v2746, %v2987
  %v3108 = vadd.f32 %v2747, %v2989
  %v3109 = vadd.f32 %v2748, %v2992
  %v3110 = vadd.f32 %v2749, %v2994
  %v3111 = vadd.f32 %v2750, %v2997
  %v3112 = vadd.f32 %v2751, %v2999
  %v3113 = vadd.f32 %v2752, %v3002
  %v3114 = vadd.f32 %v2753, %v3004
  %v3115 = vadd.f32 %v2754, %v3007
  %v3116 = vadd.f32 %v2755, %v3009
  %v3117 = vadd.f32 %v2756, %v3012
  %v3118 = vadd.f32 %v2757, %v3014
  %v3119 = vadd.f32 %v2758, %v3017
  %v3120 = vadd.f32 %v2759, %v3019
  %v3121 = vadd.f32 %v2760, %v3022
  %v3122 = vadd.f32 %v2761, %v3024
  %v3123 = vadd.f32 %v2762, %v3027
  %v3124 = vadd.f32 %v2763, %v3029
  %v3125 = vadd.f32 %v2764, %v3032
  %v3126 = vadd.f32 %v2765, %v3034
  %v3127 = vadd.f32 %v2766, %v3037
  %v3128 = vadd.f32 %v2767, %v3039
  %v3129 = vadd.f32 %v2768, %v3042
  %v3130 = vadd.f32 %v2769, %v3044
  %v3131 = vadd.f32 %v2770, %v3047
  %v3132 = vadd.f32 %v2771, %v3049
  %v3133 = vadd.f32 %v2772, %v3052
  %v3134 = vadd.f32 %v2773, %v3054
  %v3135 = vadd.f32 %v2774, %v3057
  %v3136 = vadd.f32 %v2775, %v3059
  %v3137 = vadd.f32 %v2776, %v3062
  %v3138 = vadd.f32 %v2777, %v3064
  %v3139 = vadd.f32 %v2778, %v3067
  %v3140 = vadd.f32 %v2779, %v3069
  %v3141 = vadd.f32 %v2780, %v3072
  %v3142 = vadd.f32 %v2781, %v3074
  %v3143 = vadd.f32 %v2782, %v3077
  %v3144 = vadd.f32 %v2783, %v3079
  %v3145 = vld [vmem:[#allocation2 + $0x40] sm:$0xf]
  %v3146 = vld [vmem:[#allocation2 + $0x44] sm:$0xf]
  %v3147 = vld [vmem:[#allocation2 + $0x48] sm:$0xf]
  %v3148 = vld [vmem:[#allocation2 + $0x4c] sm:$0xf]
  %v3149 = vld [vmem:[#allocation2 + $0x50] sm:$0xf]
  %v3150 = vld [vmem:[#allocation2 + $0x54] sm:$0xf]
  %v3151 = vld [vmem:[#allocation2 + $0x58] sm:$0xf]
  %v3152 = vld [vmem:[#allocation2 + $0x5c] sm:$0xf]
  %v3153 = vld [vmem:[#allocation2 + $0x60] sm:$0xf]
  %v3154 = vld [vmem:[#allocation2 + $0x64] sm:$0xf]
  %v3155 = vld [vmem:[#allocation2 + $0x68] sm:$0xf]
  %v3156 = vld [vmem:[#allocation2 + $0x6c] sm:$0xf]
  %v3157 = vld [vmem:[#allocation2 + $0x70] sm:$0xf]
  %v3158 = vld [vmem:[#allocation2 + $0x74] sm:$0xf]
  %v3159 = vld [vmem:[#allocation2 + $0x78] sm:$0xf]
  %v3160 = vld [vmem:[#allocation2 + $0x7c] sm:$0xf]
  %v3161 = vld [vmem:[#allocation2 + $0x80] sm:$0xf]
  %v3162 = vld [vmem:[#allocation2 + $0x84] sm:$0xf]
  %v3163 = vld [vmem:[#allocation2 + $0x88] sm:$0xf]
  %v3164 = vld [vmem:[#allocation2 + $0x8c] sm:$0xf]
  %v3165 = vld [vmem:[#allocation2 + $0x90] sm:$0xf]
  %v3166 = vld [vmem:[#allocation2 + $0x94] sm:$0xf]
  %v3167 = vld [vmem:[#allocation2 + $0x98] sm:$0xf]
  %v3168 = vld [vmem:[#allocation2 + $0x9c] sm:$0xf]
  %v3169 = vld [vmem:[#allocation2 + $0xa0] sm:$0xf]
  %v3170 = vld [vmem:[#allocation2 + $0xa4] sm:$0xf]
  %v3171 = vld [vmem:[#allocation2 + $0xa8] sm:$0xf]
  %v3172 = vld [vmem:[#allocation2 + $0xac] sm:$0xf]
  %v3173 = vld [vmem:[#allocation2 + $0xb0] sm:$0xf]
  %v3174 = vld [vmem:[#allocation2 + $0xb4] sm:$0xf]
  %v3175 = vld [vmem:[#allocation2 + $0xb8] sm:$0xf]
  %v3176 = vld [vmem:[#allocation2 + $0xbc] sm:$0xf]
  %v3177 = vld [vmem:[#allocation2 + $0xc0] sm:$0xf]
  %v3178 = vld [vmem:[#allocation2 + $0xc4] sm:$0xf]
  %v3179 = vld [vmem:[#allocation2 + $0xc8] sm:$0xf]
  %v3180 = vld [vmem:[#allocation2 + $0xcc] sm:$0xf]
  %v3181 = vld [vmem:[#allocation2 + $0xd0] sm:$0xf]
  %v3182 = vld [vmem:[#allocation2 + $0xd4] sm:$0xf]
  %v3183 = vld [vmem:[#allocation2 + $0xd8] sm:$0xf]
  %v3184 = vld [vmem:[#allocation2 + $0xdc] sm:$0xf]
  %v3185 = vld [vmem:[#allocation2 + $0xe0] sm:$0xf]
  %v3186 = vld [vmem:[#allocation2 + $0xe4] sm:$0xf]
  %v3187 = vld [vmem:[#allocation2 + $0xe8] sm:$0xf]
  %v3188 = vld [vmem:[#allocation2 + $0xec] sm:$0xf]
  %v3189 = vld [vmem:[#allocation2 + $0xf0] sm:$0xf]
  %v3190 = vld [vmem:[#allocation2 + $0xf4] sm:$0xf]
  %v3191 = vld [vmem:[#allocation2 + $0xf8] sm:$0xf]
  %v3192 = vld [vmem:[#allocation2 + $0xfc] sm:$0xf]
  %v3193 = vld [vmem:[#allocation2 + $0x100] sm:$0xf]
  %v3194 = vld [vmem:[#allocation2 + $0x104] sm:$0xf]
  %v3195 = vld [vmem:[#allocation2 + $0x108] sm:$0xf]
  %v3196 = vld [vmem:[#allocation2 + $0x10c] sm:$0xf]
  %v3197 = vld [vmem:[#allocation2 + $0x110] sm:$0xf]
  %v3198 = vld [vmem:[#allocation2 + $0x114] sm:$0xf]
  %v3199 = vld [vmem:[#allocation2 + $0x118] sm:$0xf]
  %v3200 = vld [vmem:[#allocation2 + $0x11c] sm:$0xf]
  %v3201 = vld [vmem:[#allocation2 + $0x120] sm:$0xf]
  %v3202 = vld [vmem:[#allocation2 + $0x124] sm:$0xf]
  %v3203 = vld [vmem:[#allocation2 + $0x128] sm:$0xf]
  %v3204 = vld [vmem:[#allocation2 + $0x12c] sm:$0xf]
  %v3205 = vld [vmem:[#allocation2 + $0x130] sm:$0xf]
  %v3206 = vld [vmem:[#allocation2 + $0x134] sm:$0xf]
  %v3207 = vld [vmem:[#allocation2 + $0x138] sm:$0xf]
  %v3208 = vld [vmem:[#allocation2 + $0x13c] sm:$0xf]
  %v3209 = vld [vmem:[#allocation2 + $0x140] sm:$0x1]
  %v3210 = vld [vmem:[%s3 + $0x140] sm:$0xf]
  %v3211 = vld [vmem:[%s3 + $0x144] sm:$0xf]
  %v3212 = vld [vmem:[%s3 + $0x148] sm:$0xf]
  %v3213 = vld [vmem:[%s3 + $0x14c] sm:$0xf]
  %v3214 = vld [vmem:[%s3 + $0x150] sm:$0xf]
  %v3215 = vld [vmem:[%s3 + $0x154] sm:$0xf]
  %v3216 = vld [vmem:[%s3 + $0x158] sm:$0xf]
  %v3217 = vld [vmem:[%s3 + $0x15c] sm:$0xf]
  %v3218 = vld [vmem:[%s3 + $0x160] sm:$0xf]
  %v3219 = vld [vmem:[%s3 + $0x164] sm:$0xf]
  %v3220 = vld [vmem:[%s3 + $0x168] sm:$0xf]
  %v3221 = vld [vmem:[%s3 + $0x16c] sm:$0xf]
  %v3222 = vld [vmem:[%s3 + $0x170] sm:$0xf]
  %v3223 = vld [vmem:[%s3 + $0x174] sm:$0xf]
  %v3224 = vld [vmem:[%s3 + $0x178] sm:$0xf]
  %v3225 = vld [vmem:[%s3 + $0x17c] sm:$0xf]
  %v3291 = vunpack.c.l.b16 %v3145
  %v3292 = vunpack.c.l.b16 %v3146
  %v3293 = vunpack.c.l.b16 %v3147
  %v3294 = vunpack.c.l.b16 %v3148
  %v3295 = vunpack.c.l.b16 %v3149
  %v3296 = vunpack.c.l.b16 %v3150
  %v3297 = vunpack.c.l.b16 %v3151
  %v3298 = vunpack.c.l.b16 %v3152
  %v3299 = vunpack.c.l.b16 %v3153
  %v3300 = vunpack.c.l.b16 %v3154
  %v3301 = vunpack.c.l.b16 %v3155
  %v3302 = vunpack.c.l.b16 %v3156
  %v3303 = vunpack.c.l.b16 %v3157
  %v3304 = vunpack.c.l.b16 %v3158
  %v3305 = vunpack.c.l.b16 %v3159
  %v3306 = vunpack.c.l.b16 %v3160
  %v3307 = vunpack.c.l.b16 %v3161
  %v3308 = vunpack.c.l.b16 %v3162
  %v3309 = vunpack.c.l.b16 %v3163
  %v3310 = vunpack.c.l.b16 %v3164
  %v3311 = vunpack.c.l.b16 %v3165
  %v3312 = vunpack.c.l.b16 %v3166
  %v3313 = vunpack.c.l.b16 %v3167
  %v3314 = vunpack.c.l.b16 %v3168
  %v3315 = vunpack.c.l.b16 %v3169
  %v3316 = vunpack.c.l.b16 %v3170
  %v3317 = vunpack.c.l.b16 %v3171
  %v3318 = vunpack.c.l.b16 %v3172
  %v3319 = vunpack.c.l.b16 %v3173
  %v3320 = vunpack.c.l.b16 %v3174
  %v3321 = vunpack.c.l.b16 %v3175
  %v3322 = vunpack.c.l.b16 %v3176
  %v3323 = vunpack.c.l.b16 %v3177
  %v3324 = vunpack.c.l.b16 %v3178
  %v3325 = vunpack.c.l.b16 %v3179
  %v3326 = vunpack.c.l.b16 %v3180
  %v3327 = vunpack.c.l.b16 %v3181
  %v3328 = vunpack.c.l.b16 %v3182
  %v3329 = vunpack.c.l.b16 %v3183
  %v3330 = vunpack.c.l.b16 %v3184
  %v3331 = vunpack.c.l.b16 %v3185
  %v3332 = vunpack.c.l.b16 %v3186
  %v3333 = vunpack.c.l.b16 %v3187
  %v3334 = vunpack.c.l.b16 %v3188
  %v3335 = vunpack.c.l.b16 %v3189
  %v3336 = vunpack.c.l.b16 %v3190
  %v3337 = vunpack.c.l.b16 %v3191
  %v3338 = vunpack.c.l.b16 %v3192
  %v3339 = vunpack.c.l.b16 %v3193
  %v3340 = vunpack.c.l.b16 %v3194
  %v3341 = vunpack.c.l.b16 %v3195
  %v3342 = vunpack.c.l.b16 %v3196
  %v3343 = vunpack.c.l.b16 %v3197
  %v3344 = vunpack.c.l.b16 %v3198
  %v3345 = vunpack.c.l.b16 %v3199
  %v3346 = vunpack.c.l.b16 %v3200
  %v3347 = vunpack.c.l.b16 %v3201
  %v3348 = vunpack.c.l.b16 %v3202
  %v3349 = vunpack.c.l.b16 %v3203
  %v3350 = vunpack.c.l.b16 %v3204
  %v3351 = vunpack.c.l.b16 %v3205
  %v3352 = vunpack.c.l.b16 %v3206
  %v3353 = vunpack.c.l.b16 %v3207
  %v3354 = vunpack.c.l.b16 %v3208
  %v3355 = vunpack.c.l.b16 %v3209
  %v3356 = vpack.c.b16 %v3292, %v3291
  %v3357 = vpack.c.b16 %v3294, %v3293
  %v3358 = vpack.c.b16 %v3296, %v3295
  %v3359 = vpack.c.b16 %v3298, %v3297
  %v3360 = vpack.c.b16 %v3300, %v3299
  %v3361 = vpack.c.b16 %v3302, %v3301
  %v3362 = vpack.c.b16 %v3304, %v3303
  %v3363 = vpack.c.b16 %v3306, %v3305
  %v3364 = vpack.c.b16 %v3308, %v3307
  %v3365 = vpack.c.b16 %v3310, %v3309
  %v3366 = vpack.c.b16 %v3312, %v3311
  %v3367 = vpack.c.b16 %v3314, %v3313
  %v3368 = vpack.c.b16 %v3316, %v3315
  %v3369 = vpack.c.b16 %v3318, %v3317
  %v3370 = vpack.c.b16 %v3320, %v3319
  %v3371 = vpack.c.b16 %v3322, %v3321
  %v3372 = vpack.c.b16 %v3324, %v3323
  %v3373 = vpack.c.b16 %v3326, %v3325
  %v3374 = vpack.c.b16 %v3328, %v3327
  %v3375 = vpack.c.b16 %v3330, %v3329
  %v3376 = vpack.c.b16 %v3332, %v3331
  %v3377 = vpack.c.b16 %v3334, %v3333
  %v3378 = vpack.c.b16 %v3336, %v3335
  %v3379 = vpack.c.b16 %v3338, %v3337
  %v3380 = vpack.c.b16 %v3340, %v3339
  %v3381 = vpack.c.b16 %v3342, %v3341
  %v3382 = vpack.c.b16 %v3344, %v3343
  %v3383 = vpack.c.b16 %v3346, %v3345
  %v3384 = vpack.c.b16 %v3348, %v3347
  %v3385 = vpack.c.b16 %v3350, %v3349
  %v3386 = vpack.c.b16 %v3352, %v3351
  %v3387 = vpack.c.b16 %v3354, %v3353
  %v3388 = vpack.c.b16 %v3355, %v3355
  %vm3389 = vsmask.f32 7424
  %v3391 = vshrl.u32 %v3356, 16
  %v3393 = vshll.u32 %v3356, 16
  %v3395 = vrot.slane %v3393, 1
  %v3396 = vor.u32 %v3391, %v3395
  %v3398 = vshll.u32 %v3357, 16
  %v3400 = vrot.slane %v3398, 1
  %v3401 = vsel %vm3389, %v3396, %v3400
  %v3402 = vshrl.u32 %v3357, 16
  %v3404 = vor.u32 %v3402, %v3400
  %v3406 = vshll.u32 %v3358, 16
  %v3408 = vrot.slane %v3406, 1
  %v3409 = vsel %vm3389, %v3404, %v3408
  %v3410 = vshrl.u32 %v3358, 16
  %v3412 = vor.u32 %v3410, %v3408
  %v3414 = vshll.u32 %v3359, 16
  %v3416 = vrot.slane %v3414, 1
  %v3417 = vsel %vm3389, %v3412, %v3416
  %v3418 = vshrl.u32 %v3359, 16
  %v3420 = vor.u32 %v3418, %v3416
  %v3422 = vshll.u32 %v3360, 16
  %v3424 = vrot.slane %v3422, 1
  %v3425 = vsel %vm3389, %v3420, %v3424
  %v3426 = vshrl.u32 %v3360, 16
  %v3428 = vor.u32 %v3426, %v3424
  %v3430 = vshll.u32 %v3361, 16
  %v3432 = vrot.slane %v3430, 1
  %v3433 = vsel %vm3389, %v3428, %v3432
  %v3434 = vshrl.u32 %v3361, 16
  %v3436 = vor.u32 %v3434, %v3432
  %v3438 = vshll.u32 %v3362, 16
  %v3440 = vrot.slane %v3438, 1
  %v3441 = vsel %vm3389, %v3436, %v3440
  %v3442 = vshrl.u32 %v3362, 16
  %v3444 = vor.u32 %v3442, %v3440
  %v3446 = vshll.u32 %v3363, 16
  %v3448 = vrot.slane %v3446, 1
  %v3449 = vsel %vm3389, %v3444, %v3448
  %v3450 = vshrl.u32 %v3363, 16
  %v3452 = vor.u32 %v3450, %v3448
  %v3454 = vshll.u32 %v3364, 16
  %v3456 = vrot.slane %v3454, 1
  %v3457 = vsel %vm3389, %v3452, %v3456
  %v3458 = vshrl.u32 %v3364, 16
  %v3460 = vor.u32 %v3458, %v3456
  %v3462 = vshll.u32 %v3365, 16
  %v3464 = vrot.slane %v3462, 1
  %v3465 = vsel %vm3389, %v3460, %v3464
  %v3466 = vshrl.u32 %v3365, 16
  %v3468 = vor.u32 %v3466, %v3464
  %v3470 = vshll.u32 %v3366, 16
  %v3472 = vrot.slane %v3470, 1
  %v3473 = vsel %vm3389, %v3468, %v3472
  %v3474 = vshrl.u32 %v3366, 16
  %v3476 = vor.u32 %v3474, %v3472
  %v3478 = vshll.u32 %v3367, 16
  %v3480 = vrot.slane %v3478, 1
  %v3481 = vsel %vm3389, %v3476, %v3480
  %v3482 = vshrl.u32 %v3367, 16
  %v3484 = vor.u32 %v3482, %v3480
  %v3486 = vshll.u32 %v3368, 16
  %v3488 = vrot.slane %v3486, 1
  %v3489 = vsel %vm3389, %v3484, %v3488
  %v3490 = vshrl.u32 %v3368, 16
  %v3492 = vor.u32 %v3490, %v3488
  %v3494 = vshll.u32 %v3369, 16
  %v3496 = vrot.slane %v3494, 1
  %v3497 = vsel %vm3389, %v3492, %v3496
  %v3498 = vshrl.u32 %v3369, 16
  %v3500 = vor.u32 %v3498, %v3496
  %v3502 = vshll.u32 %v3370, 16
  %v3504 = vrot.slane %v3502, 1
  %v3505 = vsel %vm3389, %v3500, %v3504
  %v3506 = vshrl.u32 %v3370, 16
  %v3508 = vor.u32 %v3506, %v3504
  %v3510 = vshll.u32 %v3371, 16
  %v3512 = vrot.slane %v3510, 1
  %v3513 = vsel %vm3389, %v3508, %v3512
  %v3514 = vshrl.u32 %v3371, 16
  %v3516 = vor.u32 %v3514, %v3512
  %v3518 = vshll.u32 %v3372, 16
  %v3520 = vrot.slane %v3518, 1
  %v3521 = vsel %vm3389, %v3516, %v3520
  %v3522 = vshrl.u32 %v3372, 16
  %v3524 = vor.u32 %v3522, %v3520
  %v3526 = vshll.u32 %v3373, 16
  %v3528 = vrot.slane %v3526, 1
  %v3529 = vsel %vm3389, %v3524, %v3528
  %v3530 = vshrl.u32 %v3373, 16
  %v3532 = vor.u32 %v3530, %v3528
  %v3534 = vshll.u32 %v3374, 16
  %v3536 = vrot.slane %v3534, 1
  %v3537 = vsel %vm3389, %v3532, %v3536
  %v3538 = vshrl.u32 %v3374, 16
  %v3540 = vor.u32 %v3538, %v3536
  %v3542 = vshll.u32 %v3375, 16
  %v3544 = vrot.slane %v3542, 1
  %v3545 = vsel %vm3389, %v3540, %v3544
  %v3546 = vshrl.u32 %v3375, 16
  %v3548 = vor.u32 %v3546, %v3544
  %v3550 = vshll.u32 %v3376, 16
  %v3552 = vrot.slane %v3550, 1
  %v3553 = vsel %vm3389, %v3548, %v3552
  %v3554 = vshrl.u32 %v3376, 16
  %v3556 = vor.u32 %v3554, %v3552
  %v3558 = vshll.u32 %v3377, 16
  %v3560 = vrot.slane %v3558, 1
  %v3561 = vsel %vm3389, %v3556, %v3560
  %v3562 = vshrl.u32 %v3377, 16
  %v3564 = vor.u32 %v3562, %v3560
  %v3566 = vshll.u32 %v3378, 16
  %v3568 = vrot.slane %v3566, 1
  %v3569 = vsel %vm3389, %v3564, %v3568
  %v3570 = vshrl.u32 %v3378, 16
  %v3572 = vor.u32 %v3570, %v3568
  %v3574 = vshll.u32 %v3379, 16
  %v3576 = vrot.slane %v3574, 1
  %v3577 = vsel %vm3389, %v3572, %v3576
  %v3578 = vshrl.u32 %v3379, 16
  %v3580 = vor.u32 %v3578, %v3576
  %v3582 = vshll.u32 %v3380, 16
  %v3584 = vrot.slane %v3582, 1
  %v3585 = vsel %vm3389, %v3580, %v3584
  %v3586 = vshrl.u32 %v3380, 16
  %v3588 = vor.u32 %v3586, %v3584
  %v3590 = vshll.u32 %v3381, 16
  %v3592 = vrot.slane %v3590, 1
  %v3593 = vsel %vm3389, %v3588, %v3592
  %v3594 = vshrl.u32 %v3381, 16
  %v3596 = vor.u32 %v3594, %v3592
  %v3598 = vshll.u32 %v3382, 16
  %v3600 = vrot.slane %v3598, 1
  %v3601 = vsel %vm3389, %v3596, %v3600
  %v3602 = vshrl.u32 %v3382, 16
  %v3604 = vor.u32 %v3602, %v3600
  %v3606 = vshll.u32 %v3383, 16
  %v3608 = vrot.slane %v3606, 1
  %v3609 = vsel %vm3389, %v3604, %v3608
  %v3610 = vshrl.u32 %v3383, 16
  %v3612 = vor.u32 %v3610, %v3608
  %v3614 = vshll.u32 %v3384, 16
  %v3616 = vrot.slane %v3614, 1
  %v3617 = vsel %vm3389, %v3612, %v3616
  %v3618 = vshrl.u32 %v3384, 16
  %v3620 = vor.u32 %v3618, %v3616
  %v3622 = vshll.u32 %v3385, 16
  %v3624 = vrot.slane %v3622, 1
  %v3625 = vsel %vm3389, %v3620, %v3624
  %v3626 = vshrl.u32 %v3385, 16
  %v3628 = vor.u32 %v3626, %v3624
  %v3630 = vshll.u32 %v3386, 16
  %v3632 = vrot.slane %v3630, 1
  %v3633 = vsel %vm3389, %v3628, %v3632
  %v3634 = vshrl.u32 %v3386, 16
  %v3636 = vor.u32 %v3634, %v3632
  %v3638 = vshll.u32 %v3387, 16
  %v3640 = vrot.slane %v3638, 1
  %v3641 = vsel %vm3389, %v3636, %v3640
  %v3642 = vshrl.u32 %v3387, 16
  %v3644 = vor.u32 %v3642, %v3640
  %v3646 = vshll.u32 %v3388, 16
  %v3648 = vrot.slane %v3646, 1
  %v3649 = vsel %vm3389, %v3644, %v3648
  %v3698 = vunpack.c.l.b16 %v3210
  %v3699 = vunpack.c.l.b16 %v3211
  %v3700 = vunpack.c.l.b16 %v3212
  %v3701 = vunpack.c.l.b16 %v3213
  %v3702 = vunpack.c.l.b16 %v3214
  %v3703 = vunpack.c.l.b16 %v3215
  %v3704 = vunpack.c.l.b16 %v3216
  %v3705 = vunpack.c.l.b16 %v3217
  %v3706 = vunpack.c.l.b16 %v3218
  %v3707 = vunpack.c.l.b16 %v3219
  %v3708 = vunpack.c.l.b16 %v3220
  %v3709 = vunpack.c.l.b16 %v3221
  %v3710 = vunpack.c.l.b16 %v3222
  %v3711 = vunpack.c.l.b16 %v3223
  %v3712 = vunpack.c.l.b16 %v3224
  %v3713 = vunpack.c.l.b16 %v3225
  %v3714 = vpack.c.b16 %v3699, %v3698
  %v3715 = vpack.c.b16 %v3701, %v3700
  %v3716 = vpack.c.b16 %v3703, %v3702
  %v3717 = vpack.c.b16 %v3705, %v3704
  %v3718 = vpack.c.b16 %v3707, %v3706
  %v3719 = vpack.c.b16 %v3709, %v3708
  %v3720 = vpack.c.b16 %v3711, %v3710
  %v3721 = vpack.c.b16 %v3713, %v3712
  %3730 = vmatpush.bf16.msra.mxu0 %v3721
  %3731 = vmatpush.bf16.msra.mxu0 %v3720
  %3732 = vmatpush.bf16.msra.mxu0 %v3719
  %3733 = vmatpush.bf16.msra.mxu0 %v3718
  %3734 = vmatpush.bf16.msra.mxu0 %v3717
  %3735 = vmatpush.bf16.msra.mxu0 %v3716
  %3736 = vmatpush.bf16.msra.mxu0 %v3715
  %3737 = vmatpush.bf16.msra.mxu0 %v3714
  %3738 = vmatmul.bf16.gmra.mxu0 %v3401
  %v3739 = vpop.f32.mrf.mxu0
  %v3740 = vadd.f32 0.0, %v3739
  %v3741 = vpop.f32.mrf.mxu0
  %v3742 = vadd.f32 0.0, %v3741
  %3743 = vmatmul.bf16.gmra.mxu0 %v3409
  %v3744 = vpop.f32.mrf.mxu0
  %v3745 = vadd.f32 0.0, %v3744
  %v3746 = vpop.f32.mrf.mxu0
  %v3747 = vadd.f32 0.0, %v3746
  %3748 = vmatmul.bf16.gmra.mxu0 %v3417
  %v3749 = vpop.f32.mrf.mxu0
  %v3750 = vadd.f32 0.0, %v3749
  %v3751 = vpop.f32.mrf.mxu0
  %v3752 = vadd.f32 0.0, %v3751
  %3753 = vmatmul.bf16.gmra.mxu0 %v3425
  %v3754 = vpop.f32.mrf.mxu0
  %v3755 = vadd.f32 0.0, %v3754
  %v3756 = vpop.f32.mrf.mxu0
  %v3757 = vadd.f32 0.0, %v3756
  %3758 = vmatmul.bf16.gmra.mxu0 %v3433
  %v3759 = vpop.f32.mrf.mxu0
  %v3760 = vadd.f32 0.0, %v3759
  %v3761 = vpop.f32.mrf.mxu0
  %v3762 = vadd.f32 0.0, %v3761
  %3763 = vmatmul.bf16.gmra.mxu0 %v3441
  %v3764 = vpop.f32.mrf.mxu0
  %v3765 = vadd.f32 0.0, %v3764
  %v3766 = vpop.f32.mrf.mxu0
  %v3767 = vadd.f32 0.0, %v3766
  %3768 = vmatmul.bf16.gmra.mxu0 %v3449
  %v3769 = vpop.f32.mrf.mxu0
  %v3770 = vadd.f32 0.0, %v3769
  %v3771 = vpop.f32.mrf.mxu0
  %v3772 = vadd.f32 0.0, %v3771
  %3773 = vmatmul.bf16.gmra.mxu0 %v3457
  %v3774 = vpop.f32.mrf.mxu0
  %v3775 = vadd.f32 0.0, %v3774
  %v3776 = vpop.f32.mrf.mxu0
  %v3777 = vadd.f32 0.0, %v3776
  %3778 = vmatmul.bf16.gmra.mxu0 %v3465
  %v3779 = vpop.f32.mrf.mxu0
  %v3780 = vadd.f32 0.0, %v3779
  %v3781 = vpop.f32.mrf.mxu0
  %v3782 = vadd.f32 0.0, %v3781
  %3783 = vmatmul.bf16.gmra.mxu0 %v3473
  %v3784 = vpop.f32.mrf.mxu0
  %v3785 = vadd.f32 0.0, %v3784
  %v3786 = vpop.f32.mrf.mxu0
  %v3787 = vadd.f32 0.0, %v3786
  %3788 = vmatmul.bf16.gmra.mxu0 %v3481
  %v3789 = vpop.f32.mrf.mxu0
  %v3790 = vadd.f32 0.0, %v3789
  %v3791 = vpop.f32.mrf.mxu0
  %v3792 = vadd.f32 0.0, %v3791
  %3793 = vmatmul.bf16.gmra.mxu0 %v3489
  %v3794 = vpop.f32.mrf.mxu0
  %v3795 = vadd.f32 0.0, %v3794
  %v3796 = vpop.f32.mrf.mxu0
  %v3797 = vadd.f32 0.0, %v3796
  %3798 = vmatmul.bf16.gmra.mxu0 %v3497
  %v3799 = vpop.f32.mrf.mxu0
  %v3800 = vadd.f32 0.0, %v3799
  %v3801 = vpop.f32.mrf.mxu0
  %v3802 = vadd.f32 0.0, %v3801
  %3803 = vmatmul.bf16.gmra.mxu0 %v3505
  %v3804 = vpop.f32.mrf.mxu0
  %v3805 = vadd.f32 0.0, %v3804
  %v3806 = vpop.f32.mrf.mxu0
  %v3807 = vadd.f32 0.0, %v3806
  %3808 = vmatmul.bf16.gmra.mxu0 %v3513
  %v3809 = vpop.f32.mrf.mxu0
  %v3810 = vadd.f32 0.0, %v3809
  %v3811 = vpop.f32.mrf.mxu0
  %v3812 = vadd.f32 0.0, %v3811
  %3813 = vmatmul.bf16.gmra.mxu0 %v3521
  %v3814 = vpop.f32.mrf.mxu0
  %v3815 = vadd.f32 0.0, %v3814
  %v3816 = vpop.f32.mrf.mxu0
  %v3817 = vadd.f32 0.0, %v3816
  %3818 = vmatmul.bf16.gmra.mxu0 %v3529
  %v3819 = vpop.f32.mrf.mxu0
  %v3820 = vadd.f32 0.0, %v3819
  %v3821 = vpop.f32.mrf.mxu0
  %v3822 = vadd.f32 0.0, %v3821
  %3823 = vmatmul.bf16.gmra.mxu0 %v3537
  %v3824 = vpop.f32.mrf.mxu0
  %v3825 = vadd.f32 0.0, %v3824
  %v3826 = vpop.f32.mrf.mxu0
  %v3827 = vadd.f32 0.0, %v3826
  %3828 = vmatmul.bf16.gmra.mxu0 %v3545
  %v3829 = vpop.f32.mrf.mxu0
  %v3830 = vadd.f32 0.0, %v3829
  %v3831 = vpop.f32.mrf.mxu0
  %v3832 = vadd.f32 0.0, %v3831
  %3833 = vmatmul.bf16.gmra.mxu0 %v3553
  %v3834 = vpop.f32.mrf.mxu0
  %v3835 = vadd.f32 0.0, %v3834
  %v3836 = vpop.f32.mrf.mxu0
  %v3837 = vadd.f32 0.0, %v3836
  %3838 = vmatmul.bf16.gmra.mxu0 %v3561
  %v3839 = vpop.f32.mrf.mxu0
  %v3840 = vadd.f32 0.0, %v3839
  %v3841 = vpop.f32.mrf.mxu0
  %v3842 = vadd.f32 0.0, %v3841
  %3843 = vmatmul.bf16.gmra.mxu0 %v3569
  %v3844 = vpop.f32.mrf.mxu0
  %v3845 = vadd.f32 0.0, %v3844
  %v3846 = vpop.f32.mrf.mxu0
  %v3847 = vadd.f32 0.0, %v3846
  %3848 = vmatmul.bf16.gmra.mxu0 %v3577
  %v3849 = vpop.f32.mrf.mxu0
  %v3850 = vadd.f32 0.0, %v3849
  %v3851 = vpop.f32.mrf.mxu0
  %v3852 = vadd.f32 0.0, %v3851
  %3853 = vmatmul.bf16.gmra.mxu0 %v3585
  %v3854 = vpop.f32.mrf.mxu0
  %v3855 = vadd.f32 0.0, %v3854
  %v3856 = vpop.f32.mrf.mxu0
  %v3857 = vadd.f32 0.0, %v3856
  %3858 = vmatmul.bf16.gmra.mxu0 %v3593
  %v3859 = vpop.f32.mrf.mxu0
  %v3860 = vadd.f32 0.0, %v3859
  %v3861 = vpop.f32.mrf.mxu0
  %v3862 = vadd.f32 0.0, %v3861
  %3863 = vmatmul.bf16.gmra.mxu0 %v3601
  %v3864 = vpop.f32.mrf.mxu0
  %v3865 = vadd.f32 0.0, %v3864
  %v3866 = vpop.f32.mrf.mxu0
  %v3867 = vadd.f32 0.0, %v3866
  %3868 = vmatmul.bf16.gmra.mxu0 %v3609
  %v3869 = vpop.f32.mrf.mxu0
  %v3870 = vadd.f32 0.0, %v3869
  %v3871 = vpop.f32.mrf.mxu0
  %v3872 = vadd.f32 0.0, %v3871
  %3873 = vmatmul.bf16.gmra.mxu0 %v3617
  %v3874 = vpop.f32.mrf.mxu0
  %v3875 = vadd.f32 0.0, %v3874
  %v3876 = vpop.f32.mrf.mxu0
  %v3877 = vadd.f32 0.0, %v3876
  %3878 = vmatmul.bf16.gmra.mxu0 %v3625
  %v3879 = vpop.f32.mrf.mxu0
  %v3880 = vadd.f32 0.0, %v3879
  %v3881 = vpop.f32.mrf.mxu0
  %v3882 = vadd.f32 0.0, %v3881
  %3883 = vmatmul.bf16.gmra.mxu0 %v3633
  %v3884 = vpop.f32.mrf.mxu0
  %v3885 = vadd.f32 0.0, %v3884
  %v3886 = vpop.f32.mrf.mxu0
  %v3887 = vadd.f32 0.0, %v3886
  %3888 = vmatmul.bf16.gmra.mxu0 %v3641
  %v3889 = vpop.f32.mrf.mxu0
  %v3890 = vadd.f32 0.0, %v3889
  %v3891 = vpop.f32.mrf.mxu0
  %v3892 = vadd.f32 0.0, %v3891
  %3893 = vmatmul.bf16.gmra.mxu0 %v3649
  %v3894 = vpop.f32.mrf.mxu0
  %v3895 = vadd.f32 0.0, %v3894
  %v3896 = vpop.f32.mrf.mxu0
  %v3897 = vadd.f32 0.0, %v3896
  %3898 = vdwg.mxu0
  %v3899 = vadd.f32 %v3081, %v3740
  %v3900 = vadd.f32 %v3082, %v3742
  %v3901 = vadd.f32 %v3083, %v3745
  %v3902 = vadd.f32 %v3084, %v3747
  %v3903 = vadd.f32 %v3085, %v3750
  %v3904 = vadd.f32 %v3086, %v3752
  %v3905 = vadd.f32 %v3087, %v3755
  %v3906 = vadd.f32 %v3088, %v3757
  %v3907 = vadd.f32 %v3089, %v3760
  %v3908 = vadd.f32 %v3090, %v3762
  %v3909 = vadd.f32 %v3091, %v3765
  %v3910 = vadd.f32 %v3092, %v3767
  %v3911 = vadd.f32 %v3093, %v3770
  %v3912 = vadd.f32 %v3094, %v3772
  %v3913 = vadd.f32 %v3095, %v3775
  %v3914 = vadd.f32 %v3096, %v3777
  %v3915 = vadd.f32 %v3097, %v3780
  %v3916 = vadd.f32 %v3098, %v3782
  %v3917 = vadd.f32 %v3099, %v3785
  %v3918 = vadd.f32 %v3100, %v3787
  %v3919 = vadd.f32 %v3101, %v3790
  %v3920 = vadd.f32 %v3102, %v3792
  %v3921 = vadd.f32 %v3103, %v3795
  %v3922 = vadd.f32 %v3104, %v3797
  %v3923 = vadd.f32 %v3105, %v3800
  %v3924 = vadd.f32 %v3106, %v3802
  %v3925 = vadd.f32 %v3107, %v3805
  %v3926 = vadd.f32 %v3108, %v3807
  %v3927 = vadd.f32 %v3109, %v3810
  %v3928 = vadd.f32 %v3110, %v3812
  %v3929 = vadd.f32 %v3111, %v3815
  %v3930 = vadd.f32 %v3112, %v3817
  %v3931 = vadd.f32 %v3113, %v3820
  %v3932 = vadd.f32 %v3114, %v3822
  %v3933 = vadd.f32 %v3115, %v3825
  %v3934 = vadd.f32 %v3116, %v3827
  %v3935 = vadd.f32 %v3117, %v3830
  %v3936 = vadd.f32 %v3118, %v3832
  %v3937 = vadd.f32 %v3119, %v3835
  %v3938 = vadd.f32 %v3120, %v3837
  %v3939 = vadd.f32 %v3121, %v3840
  %v3940 = vadd.f32 %v3122, %v3842
  %v3941 = vadd.f32 %v3123, %v3845
  %v3942 = vadd.f32 %v3124, %v3847
  %v3943 = vadd.f32 %v3125, %v3850
  %v3944 = vadd.f32 %v3126, %v3852
  %v3945 = vadd.f32 %v3127, %v3855
  %v3946 = vadd.f32 %v3128, %v3857
  %v3947 = vadd.f32 %v3129, %v3860
  %v3948 = vadd.f32 %v3130, %v3862
  %v3949 = vadd.f32 %v3131, %v3865
  %v3950 = vadd.f32 %v3132, %v3867
  %v3951 = vadd.f32 %v3133, %v3870
  %v3952 = vadd.f32 %v3134, %v3872
  %v3953 = vadd.f32 %v3135, %v3875
  %v3954 = vadd.f32 %v3136, %v3877
  %v3955 = vadd.f32 %v3137, %v3880
  %v3956 = vadd.f32 %v3138, %v3882
  %v3957 = vadd.f32 %v3139, %v3885
  %v3958 = vadd.f32 %v3140, %v3887
  %v3959 = vadd.f32 %v3141, %v3890
  %v3960 = vadd.f32 %v3142, %v3892
  %v3961 = vadd.f32 %v3143, %v3895
  %v3962 = vadd.f32 %v3144, %v3897
  %v3963 = vld [vmem:[#allocation2 + $0x44] sm:$0xf]
  %v3964 = vld [vmem:[#allocation2 + $0x48] sm:$0xf]
  %v3965 = vld [vmem:[#allocation2 + $0x4c] sm:$0xf]
  %v3966 = vld [vmem:[#allocation2 + $0x50] sm:$0xf]
  %v3967 = vld [vmem:[#allocation2 + $0x54] sm:$0xf]
  %v3968 = vld [vmem:[#allocation2 + $0x58] sm:$0xf]
  %v3969 = vld [vmem:[#allocation2 + $0x5c] sm:$0xf]
  %v3970 = vld [vmem:[#allocation2 + $0x60] sm:$0xf]
  %v3971 = vld [vmem:[#allocation2 + $0x64] sm:$0xf]
  %v3972 = vld [vmem:[#allocation2 + $0x68] sm:$0xf]
  %v3973 = vld [vmem:[#allocation2 + $0x6c] sm:$0xf]
  %v3974 = vld [vmem:[#allocation2 + $0x70] sm:$0xf]
  %v3975 = vld [vmem:[#allocation2 + $0x74] sm:$0xf]
  %v3976 = vld [vmem:[#allocation2 + $0x78] sm:$0xf]
  %v3977 = vld [vmem:[#allocation2 + $0x7c] sm:$0xf]
  %v3978 = vld [vmem:[#allocation2 + $0x80] sm:$0xf]
  %v3979 = vld [vmem:[#allocation2 + $0x84] sm:$0xf]
  %v3980 = vld [vmem:[#allocation2 + $0x88] sm:$0xf]
  %v3981 = vld [vmem:[#allocation2 + $0x8c] sm:$0xf]
  %v3982 = vld [vmem:[#allocation2 + $0x90] sm:$0xf]
  %v3983 = vld [vmem:[#allocation2 + $0x94] sm:$0xf]
  %v3984 = vld [vmem:[#allocation2 + $0x98] sm:$0xf]
  %v3985 = vld [vmem:[#allocation2 + $0x9c] sm:$0xf]
  %v3986 = vld [vmem:[#allocation2 + $0xa0] sm:$0xf]
  %v3987 = vld [vmem:[#allocation2 + $0xa4] sm:$0xf]
  %v3988 = vld [vmem:[#allocation2 + $0xa8] sm:$0xf]
  %v3989 = vld [vmem:[#allocation2 + $0xac] sm:$0xf]
  %v3990 = vld [vmem:[#allocation2 + $0xb0] sm:$0xf]
  %v3991 = vld [vmem:[#allocation2 + $0xb4] sm:$0xf]
  %v3992 = vld [vmem:[#allocation2 + $0xb8] sm:$0xf]
  %v3993 = vld [vmem:[#allocation2 + $0xbc] sm:$0xf]
  %v3994 = vld [vmem:[#allocation2 + $0xc0] sm:$0xf]
  %v3995 = vld [vmem:[#allocation2 + $0xc4] sm:$0xf]
  %v3996 = vld [vmem:[#allocation2 + $0xc8] sm:$0xf]
  %v3997 = vld [vmem:[#allocation2 + $0xcc] sm:$0xf]
  %v3998 = vld [vmem:[#allocation2 + $0xd0] sm:$0xf]
  %v3999 = vld [vmem:[#allocation2 + $0xd4] sm:$0xf]
  %v4000 = vld [vmem:[#allocation2 + $0xd8] sm:$0xf]
  %v4001 = vld [vmem:[#allocation2 + $0xdc] sm:$0xf]
  %v4002 = vld [vmem:[#allocation2 + $0xe0] sm:$0xf]
  %v4003 = vld [vmem:[#allocation2 + $0xe4] sm:$0xf]
  %v4004 = vld [vmem:[#allocation2 + $0xe8] sm:$0xf]
  %v4005 = vld [vmem:[#allocation2 + $0xec] sm:$0xf]
  %v4006 = vld [vmem:[#allocation2 + $0xf0] sm:$0xf]
  %v4007 = vld [vmem:[#allocation2 + $0xf4] sm:$0xf]
  %v4008 = vld [vmem:[#allocation2 + $0xf8] sm:$0xf]
  %v4009 = vld [vmem:[#allocation2 + $0xfc] sm:$0xf]
  %v4010 = vld [vmem:[#allocation2 + $0x100] sm:$0xf]
  %v4011 = vld [vmem:[#allocation2 + $0x104] sm:$0xf]
  %v4012 = vld [vmem:[#allocation2 + $0x108] sm:$0xf]
  %v4013 = vld [vmem:[#allocation2 + $0x10c] sm:$0xf]
  %v4014 = vld [vmem:[#allocation2 + $0x110] sm:$0xf]
  %v4015 = vld [vmem:[#allocation2 + $0x114] sm:$0xf]
  %v4016 = vld [vmem:[#allocation2 + $0x118] sm:$0xf]
  %v4017 = vld [vmem:[#allocation2 + $0x11c] sm:$0xf]
  %v4018 = vld [vmem:[#allocation2 + $0x120] sm:$0xf]
  %v4019 = vld [vmem:[#allocation2 + $0x124] sm:$0xf]
  %v4020 = vld [vmem:[#allocation2 + $0x128] sm:$0xf]
  %v4021 = vld [vmem:[#allocation2 + $0x12c] sm:$0xf]
  %v4022 = vld [vmem:[#allocation2 + $0x130] sm:$0xf]
  %v4023 = vld [vmem:[#allocation2 + $0x134] sm:$0xf]
  %v4024 = vld [vmem:[#allocation2 + $0x138] sm:$0xf]
  %v4025 = vld [vmem:[#allocation2 + $0x13c] sm:$0xf]
  %v4026 = vld [vmem:[#allocation2 + $0x140] sm:$0xf]
  %v4027 = vld [vmem:[#allocation2 + $0x144] sm:$0x1]
  %v4028 = vld [vmem:[%s3 + $0x180] sm:$0xf]
  %v4029 = vld [vmem:[%s3 + $0x184] sm:$0xf]
  %v4030 = vld [vmem:[%s3 + $0x188] sm:$0xf]
  %v4031 = vld [vmem:[%s3 + $0x18c] sm:$0xf]
  %v4032 = vld [vmem:[%s3 + $0x190] sm:$0xf]
  %v4033 = vld [vmem:[%s3 + $0x194] sm:$0xf]
  %v4034 = vld [vmem:[%s3 + $0x198] sm:$0xf]
  %v4035 = vld [vmem:[%s3 + $0x19c] sm:$0xf]
  %v4036 = vld [vmem:[%s3 + $0x1a0] sm:$0xf]
  %v4037 = vld [vmem:[%s3 + $0x1a4] sm:$0xf]
  %v4038 = vld [vmem:[%s3 + $0x1a8] sm:$0xf]
  %v4039 = vld [vmem:[%s3 + $0x1ac] sm:$0xf]
  %v4040 = vld [vmem:[%s3 + $0x1b0] sm:$0xf]
  %v4041 = vld [vmem:[%s3 + $0x1b4] sm:$0xf]
  %v4042 = vld [vmem:[%s3 + $0x1b8] sm:$0xf]
  %v4043 = vld [vmem:[%s3 + $0x1bc] sm:$0xf]
  %v4109 = vunpack.c.l.b16 %v3963
  %v4110 = vunpack.c.l.b16 %v3964
  %v4111 = vunpack.c.l.b16 %v3965
  %v4112 = vunpack.c.l.b16 %v3966
  %v4113 = vunpack.c.l.b16 %v3967
  %v4114 = vunpack.c.l.b16 %v3968
  %v4115 = vunpack.c.l.b16 %v3969
  %v4116 = vunpack.c.l.b16 %v3970
  %v4117 = vunpack.c.l.b16 %v3971
  %v4118 = vunpack.c.l.b16 %v3972
  %v4119 = vunpack.c.l.b16 %v3973
  %v4120 = vunpack.c.l.b16 %v3974
  %v4121 = vunpack.c.l.b16 %v3975
  %v4122 = vunpack.c.l.b16 %v3976
  %v4123 = vunpack.c.l.b16 %v3977
  %v4124 = vunpack.c.l.b16 %v3978
  %v4125 = vunpack.c.l.b16 %v3979
  %v4126 = vunpack.c.l.b16 %v3980
  %v4127 = vunpack.c.l.b16 %v3981
  %v4128 = vunpack.c.l.b16 %v3982
  %v4129 = vunpack.c.l.b16 %v3983
  %v4130 = vunpack.c.l.b16 %v3984
  %v4131 = vunpack.c.l.b16 %v3985
  %v4132 = vunpack.c.l.b16 %v3986
  %v4133 = vunpack.c.l.b16 %v3987
  %v4134 = vunpack.c.l.b16 %v3988
  %v4135 = vunpack.c.l.b16 %v3989
  %v4136 = vunpack.c.l.b16 %v3990
  %v4137 = vunpack.c.l.b16 %v3991
  %v4138 = vunpack.c.l.b16 %v3992
  %v4139 = vunpack.c.l.b16 %v3993
  %v4140 = vunpack.c.l.b16 %v3994
  %v4141 = vunpack.c.l.b16 %v3995
  %v4142 = vunpack.c.l.b16 %v3996
  %v4143 = vunpack.c.l.b16 %v3997
  %v4144 = vunpack.c.l.b16 %v3998
  %v4145 = vunpack.c.l.b16 %v3999
  %v4146 = vunpack.c.l.b16 %v4000
  %v4147 = vunpack.c.l.b16 %v4001
  %v4148 = vunpack.c.l.b16 %v4002
  %v4149 = vunpack.c.l.b16 %v4003
  %v4150 = vunpack.c.l.b16 %v4004
  %v4151 = vunpack.c.l.b16 %v4005
  %v4152 = vunpack.c.l.b16 %v4006
  %v4153 = vunpack.c.l.b16 %v4007
  %v4154 = vunpack.c.l.b16 %v4008
  %v4155 = vunpack.c.l.b16 %v4009
  %v4156 = vunpack.c.l.b16 %v4010
  %v4157 = vunpack.c.l.b16 %v4011
  %v4158 = vunpack.c.l.b16 %v4012
  %v4159 = vunpack.c.l.b16 %v4013
  %v4160 = vunpack.c.l.b16 %v4014
  %v4161 = vunpack.c.l.b16 %v4015
  %v4162 = vunpack.c.l.b16 %v4016
  %v4163 = vunpack.c.l.b16 %v4017
  %v4164 = vunpack.c.l.b16 %v4018
  %v4165 = vunpack.c.l.b16 %v4019
  %v4166 = vunpack.c.l.b16 %v4020
  %v4167 = vunpack.c.l.b16 %v4021
  %v4168 = vunpack.c.l.b16 %v4022
  %v4169 = vunpack.c.l.b16 %v4023
  %v4170 = vunpack.c.l.b16 %v4024
  %v4171 = vunpack.c.l.b16 %v4025
  %v4172 = vunpack.c.l.b16 %v4026
  %v4173 = vunpack.c.l.b16 %v4027
  %v4174 = vpack.c.b16 %v4110, %v4109
  %v4175 = vpack.c.b16 %v4112, %v4111
  %v4176 = vpack.c.b16 %v4114, %v4113
  %v4177 = vpack.c.b16 %v4116, %v4115
  %v4178 = vpack.c.b16 %v4118, %v4117
  %v4179 = vpack.c.b16 %v4120, %v4119
  %v4180 = vpack.c.b16 %v4122, %v4121
  %v4181 = vpack.c.b16 %v4124, %v4123
  %v4182 = vpack.c.b16 %v4126, %v4125
  %v4183 = vpack.c.b16 %v4128, %v4127
  %v4184 = vpack.c.b16 %v4130, %v4129
  %v4185 = vpack.c.b16 %v4132, %v4131
  %v4186 = vpack.c.b16 %v4134, %v4133
  %v4187 = vpack.c.b16 %v4136, %v4135
  %v4188 = vpack.c.b16 %v4138, %v4137
  %v4189 = vpack.c.b16 %v4140, %v4139
  %v4190 = vpack.c.b16 %v4142, %v4141
  %v4191 = vpack.c.b16 %v4144, %v4143
  %v4192 = vpack.c.b16 %v4146, %v4145
  %v4193 = vpack.c.b16 %v4148, %v4147
  %v4194 = vpack.c.b16 %v4150, %v4149
  %v4195 = vpack.c.b16 %v4152, %v4151
  %v4196 = vpack.c.b16 %v4154, %v4153
  %v4197 = vpack.c.b16 %v4156, %v4155
  %v4198 = vpack.c.b16 %v4158, %v4157
  %v4199 = vpack.c.b16 %v4160, %v4159
  %v4200 = vpack.c.b16 %v4162, %v4161
  %v4201 = vpack.c.b16 %v4164, %v4163
  %v4202 = vpack.c.b16 %v4166, %v4165
  %v4203 = vpack.c.b16 %v4168, %v4167
  %v4204 = vpack.c.b16 %v4170, %v4169
  %v4205 = vpack.c.b16 %v4172, %v4171
  %v4206 = vpack.c.b16 %v4173, %v4173
  %v4208 = vshrl.u32 %v4174, 16
  %v4210 = vshll.u32 %v4174, 16
  %v4212 = vrot.slane %v4210, 1
  %v4213 = vor.u32 %v4208, %v4212
  %v4215 = vshll.u32 %v4175, 16
  %v4217 = vrot.slane %v4215, 1
  %v4218 = vsel %vm3389, %v4213, %v4217
  %v4219 = vshrl.u32 %v4175, 16
  %v4221 = vor.u32 %v4219, %v4217
  %v4223 = vshll.u32 %v4176, 16
  %v4225 = vrot.slane %v4223, 1
  %v4226 = vsel %vm3389, %v4221, %v4225
  %v4227 = vshrl.u32 %v4176, 16
  %v4229 = vor.u32 %v4227, %v4225
  %v4231 = vshll.u32 %v4177, 16
  %v4233 = vrot.slane %v4231, 1
  %v4234 = vsel %vm3389, %v4229, %v4233
  %v4235 = vshrl.u32 %v4177, 16
  %v4237 = vor.u32 %v4235, %v4233
  %v4239 = vshll.u32 %v4178, 16
  %v4241 = vrot.slane %v4239, 1
  %v4242 = vsel %vm3389, %v4237, %v4241
  %v4243 = vshrl.u32 %v4178, 16
  %v4245 = vor.u32 %v4243, %v4241
  %v4247 = vshll.u32 %v4179, 16
  %v4249 = vrot.slane %v4247, 1
  %v4250 = vsel %vm3389, %v4245, %v4249
  %v4251 = vshrl.u32 %v4179, 16
  %v4253 = vor.u32 %v4251, %v4249
  %v4255 = vshll.u32 %v4180, 16
  %v4257 = vrot.slane %v4255, 1
  %v4258 = vsel %vm3389, %v4253, %v4257
  %v4259 = vshrl.u32 %v4180, 16
  %v4261 = vor.u32 %v4259, %v4257
  %v4263 = vshll.u32 %v4181, 16
  %v4265 = vrot.slane %v4263, 1
  %v4266 = vsel %vm3389, %v4261, %v4265
  %v4267 = vshrl.u32 %v4181, 16
  %v4269 = vor.u32 %v4267, %v4265
  %v4271 = vshll.u32 %v4182, 16
  %v4273 = vrot.slane %v4271, 1
  %v4274 = vsel %vm3389, %v4269, %v4273
  %v4275 = vshrl.u32 %v4182, 16
  %v4277 = vor.u32 %v4275, %v4273
  %v4279 = vshll.u32 %v4183, 16
  %v4281 = vrot.slane %v4279, 1
  %v4282 = vsel %vm3389, %v4277, %v4281
  %v4283 = vshrl.u32 %v4183, 16
  %v4285 = vor.u32 %v4283, %v4281
  %v4287 = vshll.u32 %v4184, 16
  %v4289 = vrot.slane %v4287, 1
  %v4290 = vsel %vm3389, %v4285, %v4289
  %v4291 = vshrl.u32 %v4184, 16
  %v4293 = vor.u32 %v4291, %v4289
  %v4295 = vshll.u32 %v4185, 16
  %v4297 = vrot.slane %v4295, 1
  %v4298 = vsel %vm3389, %v4293, %v4297
  %v4299 = vshrl.u32 %v4185, 16
  %v4301 = vor.u32 %v4299, %v4297
  %v4303 = vshll.u32 %v4186, 16
  %v4305 = vrot.slane %v4303, 1
  %v4306 = vsel %vm3389, %v4301, %v4305
  %v4307 = vshrl.u32 %v4186, 16
  %v4309 = vor.u32 %v4307, %v4305
  %v4311 = vshll.u32 %v4187, 16
  %v4313 = vrot.slane %v4311, 1
  %v4314 = vsel %vm3389, %v4309, %v4313
  %v4315 = vshrl.u32 %v4187, 16
  %v4317 = vor.u32 %v4315, %v4313
  %v4319 = vshll.u32 %v4188, 16
  %v4321 = vrot.slane %v4319, 1
  %v4322 = vsel %vm3389, %v4317, %v4321
  %v4323 = vshrl.u32 %v4188, 16
  %v4325 = vor.u32 %v4323, %v4321
  %v4327 = vshll.u32 %v4189, 16
  %v4329 = vrot.slane %v4327, 1
  %v4330 = vsel %vm3389, %v4325, %v4329
  %v4331 = vshrl.u32 %v4189, 16
  %v4333 = vor.u32 %v4331, %v4329
  %v4335 = vshll.u32 %v4190, 16
  %v4337 = vrot.slane %v4335, 1
  %v4338 = vsel %vm3389, %v4333, %v4337
  %v4339 = vshrl.u32 %v4190, 16
  %v4341 = vor.u32 %v4339, %v4337
  %v4343 = vshll.u32 %v4191, 16
  %v4345 = vrot.slane %v4343, 1
  %v4346 = vsel %vm3389, %v4341, %v4345
  %v4347 = vshrl.u32 %v4191, 16
  %v4349 = vor.u32 %v4347, %v4345
  %v4351 = vshll.u32 %v4192, 16
  %v4353 = vrot.slane %v4351, 1
  %v4354 = vsel %vm3389, %v4349, %v4353
  %v4355 = vshrl.u32 %v4192, 16
  %v4357 = vor.u32 %v4355, %v4353
  %v4359 = vshll.u32 %v4193, 16
  %v4361 = vrot.slane %v4359, 1
  %v4362 = vsel %vm3389, %v4357, %v4361
  %v4363 = vshrl.u32 %v4193, 16
  %v4365 = vor.u32 %v4363, %v4361
  %v4367 = vshll.u32 %v4194, 16
  %v4369 = vrot.slane %v4367, 1
  %v4370 = vsel %vm3389, %v4365, %v4369
  %v4371 = vshrl.u32 %v4194, 16
  %v4373 = vor.u32 %v4371, %v4369
  %v4375 = vshll.u32 %v4195, 16
  %v4377 = vrot.slane %v4375, 1
  %v4378 = vsel %vm3389, %v4373, %v4377
  %v4379 = vshrl.u32 %v4195, 16
  %v4381 = vor.u32 %v4379, %v4377
  %v4383 = vshll.u32 %v4196, 16
  %v4385 = vrot.slane %v4383, 1
  %v4386 = vsel %vm3389, %v4381, %v4385
  %v4387 = vshrl.u32 %v4196, 16
  %v4389 = vor.u32 %v4387, %v4385
  %v4391 = vshll.u32 %v4197, 16
  %v4393 = vrot.slane %v4391, 1
  %v4394 = vsel %vm3389, %v4389, %v4393
  %v4395 = vshrl.u32 %v4197, 16
  %v4397 = vor.u32 %v4395, %v4393
  %v4399 = vshll.u32 %v4198, 16
  %v4401 = vrot.slane %v4399, 1
  %v4402 = vsel %vm3389, %v4397, %v4401
  %v4403 = vshrl.u32 %v4198, 16
  %v4405 = vor.u32 %v4403, %v4401
  %v4407 = vshll.u32 %v4199, 16
  %v4409 = vrot.slane %v4407, 1
  %v4410 = vsel %vm3389, %v4405, %v4409
  %v4411 = vshrl.u32 %v4199, 16
  %v4413 = vor.u32 %v4411, %v4409
  %v4415 = vshll.u32 %v4200, 16
  %v4417 = vrot.slane %v4415, 1
  %v4418 = vsel %vm3389, %v4413, %v4417
  %v4419 = vshrl.u32 %v4200, 16
  %v4421 = vor.u32 %v4419, %v4417
  %v4423 = vshll.u32 %v4201, 16
  %v4425 = vrot.slane %v4423, 1
  %v4426 = vsel %vm3389, %v4421, %v4425
  %v4427 = vshrl.u32 %v4201, 16
  %v4429 = vor.u32 %v4427, %v4425
  %v4431 = vshll.u32 %v4202, 16
  %v4433 = vrot.slane %v4431, 1
  %v4434 = vsel %vm3389, %v4429, %v4433
  %v4435 = vshrl.u32 %v4202, 16
  %v4437 = vor.u32 %v4435, %v4433
  %v4439 = vshll.u32 %v4203, 16
  %v4441 = vrot.slane %v4439, 1
  %v4442 = vsel %vm3389, %v4437, %v4441
  %v4443 = vshrl.u32 %v4203, 16
  %v4445 = vor.u32 %v4443, %v4441
  %v4447 = vshll.u32 %v4204, 16
  %v4449 = vrot.slane %v4447, 1
  %v4450 = vsel %vm3389, %v4445, %v4449
  %v4451 = vshrl.u32 %v4204, 16
  %v4453 = vor.u32 %v4451, %v4449
  %v4455 = vshll.u32 %v4205, 16
  %v4457 = vrot.slane %v4455, 1
  %v4458 = vsel %vm3389, %v4453, %v4457
  %v4459 = vshrl.u32 %v4205, 16
  %v4461 = vor.u32 %v4459, %v4457
  %v4463 = vshll.u32 %v4206, 16
  %v4465 = vrot.slane %v4463, 1
  %v4466 = vsel %vm3389, %v4461, %v4465
  %v4515 = vunpack.c.l.b16 %v4028
  %v4516 = vunpack.c.l.b16 %v4029
  %v4517 = vunpack.c.l.b16 %v4030
  %v4518 = vunpack.c.l.b16 %v4031
  %v4519 = vunpack.c.l.b16 %v4032
  %v4520 = vunpack.c.l.b16 %v4033
  %v4521 = vunpack.c.l.b16 %v4034
  %v4522 = vunpack.c.l.b16 %v4035
  %v4523 = vunpack.c.l.b16 %v4036
  %v4524 = vunpack.c.l.b16 %v4037
  %v4525 = vunpack.c.l.b16 %v4038
  %v4526 = vunpack.c.l.b16 %v4039
  %v4527 = vunpack.c.l.b16 %v4040
  %v4528 = vunpack.c.l.b16 %v4041
  %v4529 = vunpack.c.l.b16 %v4042
  %v4530 = vunpack.c.l.b16 %v4043
  %v4531 = vpack.c.b16 %v4516, %v4515
  %v4532 = vpack.c.b16 %v4518, %v4517
  %v4533 = vpack.c.b16 %v4520, %v4519
  %v4534 = vpack.c.b16 %v4522, %v4521
  %v4535 = vpack.c.b16 %v4524, %v4523
  %v4536 = vpack.c.b16 %v4526, %v4525
  %v4537 = vpack.c.b16 %v4528, %v4527
  %v4538 = vpack.c.b16 %v4530, %v4529
  %4547 = vmatpush.bf16.msra.mxu0 %v4538
  %4548 = vmatpush.bf16.msra.mxu0 %v4537
  %4549 = vmatpush.bf16.msra.mxu0 %v4536
  %4550 = vmatpush.bf16.msra.mxu0 %v4535
  %4551 = vmatpush.bf16.msra.mxu0 %v4534
  %4552 = vmatpush.bf16.msra.mxu0 %v4533
  %4553 = vmatpush.bf16.msra.mxu0 %v4532
  %4554 = vmatpush.bf16.msra.mxu0 %v4531
  %4555 = vmatmul.bf16.gmra.mxu0 %v4218
  %v4556 = vpop.f32.mrf.mxu0
  %v4557 = vadd.f32 0.0, %v4556
  %v4558 = vpop.f32.mrf.mxu0
  %v4559 = vadd.f32 0.0, %v4558
  %4560 = vmatmul.bf16.gmra.mxu0 %v4226
  %v4561 = vpop.f32.mrf.mxu0
  %v4562 = vadd.f32 0.0, %v4561
  %v4563 = vpop.f32.mrf.mxu0
  %v4564 = vadd.f32 0.0, %v4563
  %4565 = vmatmul.bf16.gmra.mxu0 %v4234
  %v4566 = vpop.f32.mrf.mxu0
  %v4567 = vadd.f32 0.0, %v4566
  %v4568 = vpop.f32.mrf.mxu0
  %v4569 = vadd.f32 0.0, %v4568
  %4570 = vmatmul.bf16.gmra.mxu0 %v4242
  %v4571 = vpop.f32.mrf.mxu0
  %v4572 = vadd.f32 0.0, %v4571
  %v4573 = vpop.f32.mrf.mxu0
  %v4574 = vadd.f32 0.0, %v4573
  %4575 = vmatmul.bf16.gmra.mxu0 %v4250
  %v4576 = vpop.f32.mrf.mxu0
  %v4577 = vadd.f32 0.0, %v4576
  %v4578 = vpop.f32.mrf.mxu0
  %v4579 = vadd.f32 0.0, %v4578
  %4580 = vmatmul.bf16.gmra.mxu0 %v4258
  %v4581 = vpop.f32.mrf.mxu0
  %v4582 = vadd.f32 0.0, %v4581
  %v4583 = vpop.f32.mrf.mxu0
  %v4584 = vadd.f32 0.0, %v4583
  %4585 = vmatmul.bf16.gmra.mxu0 %v4266
  %v4586 = vpop.f32.mrf.mxu0
  %v4587 = vadd.f32 0.0, %v4586
  %v4588 = vpop.f32.mrf.mxu0
  %v4589 = vadd.f32 0.0, %v4588
  %4590 = vmatmul.bf16.gmra.mxu0 %v4274
  %v4591 = vpop.f32.mrf.mxu0
  %v4592 = vadd.f32 0.0, %v4591
  %v4593 = vpop.f32.mrf.mxu0
  %v4594 = vadd.f32 0.0, %v4593
  %4595 = vmatmul.bf16.gmra.mxu0 %v4282
  %v4596 = vpop.f32.mrf.mxu0
  %v4597 = vadd.f32 0.0, %v4596
  %v4598 = vpop.f32.mrf.mxu0
  %v4599 = vadd.f32 0.0, %v4598
  %4600 = vmatmul.bf16.gmra.mxu0 %v4290
  %v4601 = vpop.f32.mrf.mxu0
  %v4602 = vadd.f32 0.0, %v4601
  %v4603 = vpop.f32.mrf.mxu0
  %v4604 = vadd.f32 0.0, %v4603
  %4605 = vmatmul.bf16.gmra.mxu0 %v4298
  %v4606 = vpop.f32.mrf.mxu0
  %v4607 = vadd.f32 0.0, %v4606
  %v4608 = vpop.f32.mrf.mxu0
  %v4609 = vadd.f32 0.0, %v4608
  %4610 = vmatmul.bf16.gmra.mxu0 %v4306
  %v4611 = vpop.f32.mrf.mxu0
  %v4612 = vadd.f32 0.0, %v4611
  %v4613 = vpop.f32.mrf.mxu0
  %v4614 = vadd.f32 0.0, %v4613
  %4615 = vmatmul.bf16.gmra.mxu0 %v4314
  %v4616 = vpop.f32.mrf.mxu0
  %v4617 = vadd.f32 0.0, %v4616
  %v4618 = vpop.f32.mrf.mxu0
  %v4619 = vadd.f32 0.0, %v4618
  %4620 = vmatmul.bf16.gmra.mxu0 %v4322
  %v4621 = vpop.f32.mrf.mxu0
  %v4622 = vadd.f32 0.0, %v4621
  %v4623 = vpop.f32.mrf.mxu0
  %v4624 = vadd.f32 0.0, %v4623
  %4625 = vmatmul.bf16.gmra.mxu0 %v4330
  %v4626 = vpop.f32.mrf.mxu0
  %v4627 = vadd.f32 0.0, %v4626
  %v4628 = vpop.f32.mrf.mxu0
  %v4629 = vadd.f32 0.0, %v4628
  %4630 = vmatmul.bf16.gmra.mxu0 %v4338
  %v4631 = vpop.f32.mrf.mxu0
  %v4632 = vadd.f32 0.0, %v4631
  %v4633 = vpop.f32.mrf.mxu0
  %v4634 = vadd.f32 0.0, %v4633
  %4635 = vmatmul.bf16.gmra.mxu0 %v4346
  %v4636 = vpop.f32.mrf.mxu0
  %v4637 = vadd.f32 0.0, %v4636
  %v4638 = vpop.f32.mrf.mxu0
  %v4639 = vadd.f32 0.0, %v4638
  %4640 = vmatmul.bf16.gmra.mxu0 %v4354
  %v4641 = vpop.f32.mrf.mxu0
  %v4642 = vadd.f32 0.0, %v4641
  %v4643 = vpop.f32.mrf.mxu0
  %v4644 = vadd.f32 0.0, %v4643
  %4645 = vmatmul.bf16.gmra.mxu0 %v4362
  %v4646 = vpop.f32.mrf.mxu0
  %v4647 = vadd.f32 0.0, %v4646
  %v4648 = vpop.f32.mrf.mxu0
  %v4649 = vadd.f32 0.0, %v4648
  %4650 = vmatmul.bf16.gmra.mxu0 %v4370
  %v4651 = vpop.f32.mrf.mxu0
  %v4652 = vadd.f32 0.0, %v4651
  %v4653 = vpop.f32.mrf.mxu0
  %v4654 = vadd.f32 0.0, %v4653
  %4655 = vmatmul.bf16.gmra.mxu0 %v4378
  %v4656 = vpop.f32.mrf.mxu0
  %v4657 = vadd.f32 0.0, %v4656
  %v4658 = vpop.f32.mrf.mxu0
  %v4659 = vadd.f32 0.0, %v4658
  %4660 = vmatmul.bf16.gmra.mxu0 %v4386
  %v4661 = vpop.f32.mrf.mxu0
  %v4662 = vadd.f32 0.0, %v4661
  %v4663 = vpop.f32.mrf.mxu0
  %v4664 = vadd.f32 0.0, %v4663
  %4665 = vmatmul.bf16.gmra.mxu0 %v4394
  %v4666 = vpop.f32.mrf.mxu0
  %v4667 = vadd.f32 0.0, %v4666
  %v4668 = vpop.f32.mrf.mxu0
  %v4669 = vadd.f32 0.0, %v4668
  %4670 = vmatmul.bf16.gmra.mxu0 %v4402
  %v4671 = vpop.f32.mrf.mxu0
  %v4672 = vadd.f32 0.0, %v4671
  %v4673 = vpop.f32.mrf.mxu0
  %v4674 = vadd.f32 0.0, %v4673
  %4675 = vmatmul.bf16.gmra.mxu0 %v4410
  %v4676 = vpop.f32.mrf.mxu0
  %v4677 = vadd.f32 0.0, %v4676
  %v4678 = vpop.f32.mrf.mxu0
  %v4679 = vadd.f32 0.0, %v4678
  %4680 = vmatmul.bf16.gmra.mxu0 %v4418
  %v4681 = vpop.f32.mrf.mxu0
  %v4682 = vadd.f32 0.0, %v4681
  %v4683 = vpop.f32.mrf.mxu0
  %v4684 = vadd.f32 0.0, %v4683
  %4685 = vmatmul.bf16.gmra.mxu0 %v4426
  %v4686 = vpop.f32.mrf.mxu0
  %v4687 = vadd.f32 0.0, %v4686
  %v4688 = vpop.f32.mrf.mxu0
  %v4689 = vadd.f32 0.0, %v4688
  %4690 = vmatmul.bf16.gmra.mxu0 %v4434
  %v4691 = vpop.f32.mrf.mxu0
  %v4692 = vadd.f32 0.0, %v4691
  %v4693 = vpop.f32.mrf.mxu0
  %v4694 = vadd.f32 0.0, %v4693
  %4695 = vmatmul.bf16.gmra.mxu0 %v4442
  %v4696 = vpop.f32.mrf.mxu0
  %v4697 = vadd.f32 0.0, %v4696
  %v4698 = vpop.f32.mrf.mxu0
  %v4699 = vadd.f32 0.0, %v4698
  %4700 = vmatmul.bf16.gmra.mxu0 %v4450
  %v4701 = vpop.f32.mrf.mxu0
  %v4702 = vadd.f32 0.0, %v4701
  %v4703 = vpop.f32.mrf.mxu0
  %v4704 = vadd.f32 0.0, %v4703
  %4705 = vmatmul.bf16.gmra.mxu0 %v4458
  %v4706 = vpop.f32.mrf.mxu0
  %v4707 = vadd.f32 0.0, %v4706
  %v4708 = vpop.f32.mrf.mxu0
  %v4709 = vadd.f32 0.0, %v4708
  %4710 = vmatmul.bf16.gmra.mxu0 %v4466
  %v4711 = vpop.f32.mrf.mxu0
  %v4712 = vadd.f32 0.0, %v4711
  %v4713 = vpop.f32.mrf.mxu0
  %v4714 = vadd.f32 0.0, %v4713
  %4715 = vdwg.mxu0
  %v4716 = vadd.f32 %v3899, %v4557
  %v4717 = vadd.f32 %v3900, %v4559
  %v4718 = vadd.f32 %v3901, %v4562
  %v4719 = vadd.f32 %v3902, %v4564
  %v4720 = vadd.f32 %v3903, %v4567
  %v4721 = vadd.f32 %v3904, %v4569
  %v4722 = vadd.f32 %v3905, %v4572
  %v4723 = vadd.f32 %v3906, %v4574
  %v4724 = vadd.f32 %v3907, %v4577
  %v4725 = vadd.f32 %v3908, %v4579
  %v4726 = vadd.f32 %v3909, %v4582
  %v4727 = vadd.f32 %v3910, %v4584
  %v4728 = vadd.f32 %v3911, %v4587
  %v4729 = vadd.f32 %v3912, %v4589
  %v4730 = vadd.f32 %v3913, %v4592
  %v4731 = vadd.f32 %v3914, %v4594
  %v4732 = vadd.f32 %v3915, %v4597
  %v4733 = vadd.f32 %v3916, %v4599
  %v4734 = vadd.f32 %v3917, %v4602
  %v4735 = vadd.f32 %v3918, %v4604
  %v4736 = vadd.f32 %v3919, %v4607
  %v4737 = vadd.f32 %v3920, %v4609
  %v4738 = vadd.f32 %v3921, %v4612
  %v4739 = vadd.f32 %v3922, %v4614
  %v4740 = vadd.f32 %v3923, %v4617
  %v4741 = vadd.f32 %v3924, %v4619
  %v4742 = vadd.f32 %v3925, %v4622
  %v4743 = vadd.f32 %v3926, %v4624
  %v4744 = vadd.f32 %v3927, %v4627
  %v4745 = vadd.f32 %v3928, %v4629
  %v4746 = vadd.f32 %v3929, %v4632
  %v4747 = vadd.f32 %v3930, %v4634
  %v4748 = vadd.f32 %v3931, %v4637
  %v4749 = vadd.f32 %v3932, %v4639
  %v4750 = vadd.f32 %v3933, %v4642
  %v4751 = vadd.f32 %v3934, %v4644
  %v4752 = vadd.f32 %v3935, %v4647
  %v4753 = vadd.f32 %v3936, %v4649
  %v4754 = vadd.f32 %v3937, %v4652
  %v4755 = vadd.f32 %v3938, %v4654
  %v4756 = vadd.f32 %v3939, %v4657
  %v4757 = vadd.f32 %v3940, %v4659
  %v4758 = vadd.f32 %v3941, %v4662
  %v4759 = vadd.f32 %v3942, %v4664
  %v4760 = vadd.f32 %v3943, %v4667
  %v4761 = vadd.f32 %v3944, %v4669
  %v4762 = vadd.f32 %v3945, %v4672
  %v4763 = vadd.f32 %v3946, %v4674
  %v4764 = vadd.f32 %v3947, %v4677
  %v4765 = vadd.f32 %v3948, %v4679
  %v4766 = vadd.f32 %v3949, %v4682
  %v4767 = vadd.f32 %v3950, %v4684
  %v4768 = vadd.f32 %v3951, %v4687
  %v4769 = vadd.f32 %v3952, %v4689
  %v4770 = vadd.f32 %v3953, %v4692
  %v4771 = vadd.f32 %v3954, %v4694
  %v4772 = vadd.f32 %v3955, %v4697
  %v4773 = vadd.f32 %v3956, %v4699
  %v4774 = vadd.f32 %v3957, %v4702
  %v4775 = vadd.f32 %v3958, %v4704
  %v4776 = vadd.f32 %v3959, %v4707
  %v4777 = vadd.f32 %v3960, %v4709
  %v4778 = vadd.f32 %v3961, %v4712
  %v4779 = vadd.f32 %v3962, %v4714
  %v4780 = vld [vmem:[#allocation2 + $0x44] sm:$0xe]
  %v4781 = vld [vmem:[%s3 + $0x1c0] sm:$0xf]
  %v4782 = vld [vmem:[%s3 + $0x1c4] sm:$0xf]
  %v4783 = vld [vmem:[%s3 + $0x1c8] sm:$0xf]
  %v4784 = vld [vmem:[%s3 + $0x1cc] sm:$0xf]
  %v4785 = vld [vmem:[%s3 + $0x1d0] sm:$0xf]
  %v4786 = vld [vmem:[%s3 + $0x1d4] sm:$0xf]
  %v4787 = vld [vmem:[%s3 + $0x1d8] sm:$0xf]
  %v4788 = vld [vmem:[%s3 + $0x1dc] sm:$0xf]
  %v4789 = vld [vmem:[%s3 + $0x1e0] sm:$0xf]
  %v4790 = vld [vmem:[%s3 + $0x1e4] sm:$0xf]
  %v4791 = vld [vmem:[%s3 + $0x1e8] sm:$0xf]
  %v4792 = vld [vmem:[%s3 + $0x1ec] sm:$0xf]
  %v4793 = vld [vmem:[%s3 + $0x1f0] sm:$0xf]
  %v4794 = vld [vmem:[%s3 + $0x1f4] sm:$0xf]
  %v4795 = vld [vmem:[%s3 + $0x1f8] sm:$0xf]
  %v4796 = vld [vmem:[%s3 + $0x1fc] sm:$0xf]
  %v4798 = vunpack.c.l.b16 %v4780
  %v4799 = vpack.c.b16 %v4110, %v4798
  %vm4800 = vcmask 1046528
  %v4801 = vrot.slane %v4799, 1
  %v4802 = vrot.slane %v4175, 1
  %v4803 = vsel %vm4800, %v4801, %v4802
  %v4804 = vrot.slane %v4176, 1
  %v4805 = vsel %vm4800, %v4802, %v4804
  %v4806 = vrot.slane %v4177, 1
  %v4807 = vsel %vm4800, %v4804, %v4806
  %v4808 = vrot.slane %v4178, 1
  %v4809 = vsel %vm4800, %v4806, %v4808
  %v4810 = vrot.slane %v4179, 1
  %v4811 = vsel %vm4800, %v4808, %v4810
  %v4812 = vrot.slane %v4180, 1
  %v4813 = vsel %vm4800, %v4810, %v4812
  %v4814 = vrot.slane %v4181, 1
  %v4815 = vsel %vm4800, %v4812, %v4814
  %v4816 = vrot.slane %v4182, 1
  %v4817 = vsel %vm4800, %v4814, %v4816
  %v4818 = vrot.slane %v4183, 1
  %v4819 = vsel %vm4800, %v4816, %v4818
  %v4820 = vrot.slane %v4184, 1
  %v4821 = vsel %vm4800, %v4818, %v4820
  %v4822 = vrot.slane %v4185, 1
  %v4823 = vsel %vm4800, %v4820, %v4822
  %v4824 = vrot.slane %v4186, 1
  %v4825 = vsel %vm4800, %v4822, %v4824
  %v4826 = vrot.slane %v4187, 1
  %v4827 = vsel %vm4800, %v4824, %v4826
  %v4828 = vrot.slane %v4188, 1
  %v4829 = vsel %vm4800, %v4826, %v4828
  %v4830 = vrot.slane %v4189, 1
  %v4831 = vsel %vm4800, %v4828, %v4830
  %v4832 = vrot.slane %v4190, 1
  %v4833 = vsel %vm4800, %v4830, %v4832
  %v4834 = vrot.slane %v4191, 1
  %v4835 = vsel %vm4800, %v4832, %v4834
  %v4836 = vrot.slane %v4192, 1
  %v4837 = vsel %vm4800, %v4834, %v4836
  %v4838 = vrot.slane %v4193, 1
  %v4839 = vsel %vm4800, %v4836, %v4838
  %v4840 = vrot.slane %v4194, 1
  %v4841 = vsel %vm4800, %v4838, %v4840
  %v4842 = vrot.slane %v4195, 1
  %v4843 = vsel %vm4800, %v4840, %v4842
  %v4844 = vrot.slane %v4196, 1
  %v4845 = vsel %vm4800, %v4842, %v4844
  %v4846 = vrot.slane %v4197, 1
  %v4847 = vsel %vm4800, %v4844, %v4846
  %v4848 = vrot.slane %v4198, 1
  %v4849 = vsel %vm4800, %v4846, %v4848
  %v4850 = vrot.slane %v4199, 1
  %v4851 = vsel %vm4800, %v4848, %v4850
  %v4852 = vrot.slane %v4200, 1
  %v4853 = vsel %vm4800, %v4850, %v4852
  %v4854 = vrot.slane %v4201, 1
  %v4855 = vsel %vm4800, %v4852, %v4854
  %v4856 = vrot.slane %v4202, 1
  %v4857 = vsel %vm4800, %v4854, %v4856
  %v4858 = vrot.slane %v4203, 1
  %v4859 = vsel %vm4800, %v4856, %v4858
  %v4860 = vrot.slane %v4204, 1
  %v4861 = vsel %vm4800, %v4858, %v4860
  %v4862 = vrot.slane %v4205, 1
  %v4863 = vsel %vm4800, %v4860, %v4862
  %v4864 = vrot.slane %v4206, 1
  %v4865 = vsel %vm4800, %v4862, %v4864
  %v4914 = vunpack.c.l.b16 %v4781
  %v4915 = vunpack.c.l.b16 %v4782
  %v4916 = vunpack.c.l.b16 %v4783
  %v4917 = vunpack.c.l.b16 %v4784
  %v4918 = vunpack.c.l.b16 %v4785
  %v4919 = vunpack.c.l.b16 %v4786
  %v4920 = vunpack.c.l.b16 %v4787
  %v4921 = vunpack.c.l.b16 %v4788
  %v4922 = vunpack.c.l.b16 %v4789
  %v4923 = vunpack.c.l.b16 %v4790
  %v4924 = vunpack.c.l.b16 %v4791
  %v4925 = vunpack.c.l.b16 %v4792
  %v4926 = vunpack.c.l.b16 %v4793
  %v4927 = vunpack.c.l.b16 %v4794
  %v4928 = vunpack.c.l.b16 %v4795
  %v4929 = vunpack.c.l.b16 %v4796
  %v4930 = vpack.c.b16 %v4915, %v4914
  %v4931 = vpack.c.b16 %v4917, %v4916
  %v4932 = vpack.c.b16 %v4919, %v4918
  %v4933 = vpack.c.b16 %v4921, %v4920
  %v4934 = vpack.c.b16 %v4923, %v4922
  %v4935 = vpack.c.b16 %v4925, %v4924
  %v4936 = vpack.c.b16 %v4927, %v4926
  %v4937 = vpack.c.b16 %v4929, %v4928
  %4946 = vmatpush.bf16.msra.mxu0 %v4937
  %4947 = vmatpush.bf16.msra.mxu0 %v4936
  %4948 = vmatpush.bf16.msra.mxu0 %v4935
  %4949 = vmatpush.bf16.msra.mxu0 %v4934
  %4950 = vmatpush.bf16.msra.mxu0 %v4933
  %4951 = vmatpush.bf16.msra.mxu0 %v4932
  %4952 = vmatpush.bf16.msra.mxu0 %v4931
  %4953 = vmatpush.bf16.msra.mxu0 %v4930
  %4954 = vmatmul.bf16.gmra.mxu0 %v4803
  %v4955 = vpop.f32.mrf.mxu0
  %v4956 = vadd.f32 0.0, %v4955
  %v4957 = vpop.f32.mrf.mxu0
  %v4958 = vadd.f32 0.0, %v4957
  %4959 = vmatmul.bf16.gmra.mxu0 %v4805
  %v4960 = vpop.f32.mrf.mxu0
  %v4961 = vadd.f32 0.0, %v4960
  %v4962 = vpop.f32.mrf.mxu0
  %v4963 = vadd.f32 0.0, %v4962
  %4964 = vmatmul.bf16.gmra.mxu0 %v4807
  %v4965 = vpop.f32.mrf.mxu0
  %v4966 = vadd.f32 0.0, %v4965
  %v4967 = vpop.f32.mrf.mxu0
  %v4968 = vadd.f32 0.0, %v4967
  %4969 = vmatmul.bf16.gmra.mxu0 %v4809
  %v4970 = vpop.f32.mrf.mxu0
  %v4971 = vadd.f32 0.0, %v4970
  %v4972 = vpop.f32.mrf.mxu0
  %v4973 = vadd.f32 0.0, %v4972
  %4974 = vmatmul.bf16.gmra.mxu0 %v4811
  %v4975 = vpop.f32.mrf.mxu0
  %v4976 = vadd.f32 0.0, %v4975
  %v4977 = vpop.f32.mrf.mxu0
  %v4978 = vadd.f32 0.0, %v4977
  %4979 = vmatmul.bf16.gmra.mxu0 %v4813
  %v4980 = vpop.f32.mrf.mxu0
  %v4981 = vadd.f32 0.0, %v4980
  %v4982 = vpop.f32.mrf.mxu0
  %v4983 = vadd.f32 0.0, %v4982
  %4984 = vmatmul.bf16.gmra.mxu0 %v4815
  %v4985 = vpop.f32.mrf.mxu0
  %v4986 = vadd.f32 0.0, %v4985
  %v4987 = vpop.f32.mrf.mxu0
  %v4988 = vadd.f32 0.0, %v4987
  %4989 = vmatmul.bf16.gmra.mxu0 %v4817
  %v4990 = vpop.f32.mrf.mxu0
  %v4991 = vadd.f32 0.0, %v4990
  %v4992 = vpop.f32.mrf.mxu0
  %v4993 = vadd.f32 0.0, %v4992
  %4994 = vmatmul.bf16.gmra.mxu0 %v4819
  %v4995 = vpop.f32.mrf.mxu0
  %v4996 = vadd.f32 0.0, %v4995
  %v4997 = vpop.f32.mrf.mxu0
  %v4998 = vadd.f32 0.0, %v4997
  %4999 = vmatmul.bf16.gmra.mxu0 %v4821
  %v5000 = vpop.f32.mrf.mxu0
  %v5001 = vadd.f32 0.0, %v5000
  %v5002 = vpop.f32.mrf.mxu0
  %v5003 = vadd.f32 0.0, %v5002
  %5004 = vmatmul.bf16.gmra.mxu0 %v4823
  %v5005 = vpop.f32.mrf.mxu0
  %v5006 = vadd.f32 0.0, %v5005
  %v5007 = vpop.f32.mrf.mxu0
  %v5008 = vadd.f32 0.0, %v5007
  %5009 = vmatmul.bf16.gmra.mxu0 %v4825
  %v5010 = vpop.f32.mrf.mxu0
  %v5011 = vadd.f32 0.0, %v5010
  %v5012 = vpop.f32.mrf.mxu0
  %v5013 = vadd.f32 0.0, %v5012
  %5014 = vmatmul.bf16.gmra.mxu0 %v4827
  %v5015 = vpop.f32.mrf.mxu0
  %v5016 = vadd.f32 0.0, %v5015
  %v5017 = vpop.f32.mrf.mxu0
  %v5018 = vadd.f32 0.0, %v5017
  %5019 = vmatmul.bf16.gmra.mxu0 %v4829
  %v5020 = vpop.f32.mrf.mxu0
  %v5021 = vadd.f32 0.0, %v5020
  %v5022 = vpop.f32.mrf.mxu0
  %v5023 = vadd.f32 0.0, %v5022
  %5024 = vmatmul.bf16.gmra.mxu0 %v4831
  %v5025 = vpop.f32.mrf.mxu0
  %v5026 = vadd.f32 0.0, %v5025
  %v5027 = vpop.f32.mrf.mxu0
  %v5028 = vadd.f32 0.0, %v5027
  %5029 = vmatmul.bf16.gmra.mxu0 %v4833
  %v5030 = vpop.f32.mrf.mxu0
  %v5031 = vadd.f32 0.0, %v5030
  %v5032 = vpop.f32.mrf.mxu0
  %v5033 = vadd.f32 0.0, %v5032
  %5034 = vmatmul.bf16.gmra.mxu0 %v4835
  %v5035 = vpop.f32.mrf.mxu0
  %v5036 = vadd.f32 0.0, %v5035
  %v5037 = vpop.f32.mrf.mxu0
  %v5038 = vadd.f32 0.0, %v5037
  %5039 = vmatmul.bf16.gmra.mxu0 %v4837
  %v5040 = vpop.f32.mrf.mxu0
  %v5041 = vadd.f32 0.0, %v5040
  %v5042 = vpop.f32.mrf.mxu0
  %v5043 = vadd.f32 0.0, %v5042
  %5044 = vmatmul.bf16.gmra.mxu0 %v4839
  %v5045 = vpop.f32.mrf.mxu0
  %v5046 = vadd.f32 0.0, %v5045
  %v5047 = vpop.f32.mrf.mxu0
  %v5048 = vadd.f32 0.0, %v5047
  %5049 = vmatmul.bf16.gmra.mxu0 %v4841
  %v5050 = vpop.f32.mrf.mxu0
  %v5051 = vadd.f32 0.0, %v5050
  %v5052 = vpop.f32.mrf.mxu0
  %v5053 = vadd.f32 0.0, %v5052
  %5054 = vmatmul.bf16.gmra.mxu0 %v4843
  %v5055 = vpop.f32.mrf.mxu0
  %v5056 = vadd.f32 0.0, %v5055
  %v5057 = vpop.f32.mrf.mxu0
  %v5058 = vadd.f32 0.0, %v5057
  %5059 = vmatmul.bf16.gmra.mxu0 %v4845
  %v5060 = vpop.f32.mrf.mxu0
  %v5061 = vadd.f32 0.0, %v5060
  %v5062 = vpop.f32.mrf.mxu0
  %v5063 = vadd.f32 0.0, %v5062
  %5064 = vmatmul.bf16.gmra.mxu0 %v4847
  %v5065 = vpop.f32.mrf.mxu0
  %v5066 = vadd.f32 0.0, %v5065
  %v5067 = vpop.f32.mrf.mxu0
  %v5068 = vadd.f32 0.0, %v5067
  %5069 = vmatmul.bf16.gmra.mxu0 %v4849
  %v5070 = vpop.f32.mrf.mxu0
  %v5071 = vadd.f32 0.0, %v5070
  %v5072 = vpop.f32.mrf.mxu0
  %v5073 = vadd.f32 0.0, %v5072
  %5074 = vmatmul.bf16.gmra.mxu0 %v4851
  %v5075 = vpop.f32.mrf.mxu0
  %v5076 = vadd.f32 0.0, %v5075
  %v5077 = vpop.f32.mrf.mxu0
  %v5078 = vadd.f32 0.0, %v5077
  %5079 = vmatmul.bf16.gmra.mxu0 %v4853
  %v5080 = vpop.f32.mrf.mxu0
  %v5081 = vadd.f32 0.0, %v5080
  %v5082 = vpop.f32.mrf.mxu0
  %v5083 = vadd.f32 0.0, %v5082
  %5084 = vmatmul.bf16.gmra.mxu0 %v4855
  %v5085 = vpop.f32.mrf.mxu0
  %v5086 = vadd.f32 0.0, %v5085
  %v5087 = vpop.f32.mrf.mxu0
  %v5088 = vadd.f32 0.0, %v5087
  %5089 = vmatmul.bf16.gmra.mxu0 %v4857
  %v5090 = vpop.f32.mrf.mxu0
  %v5091 = vadd.f32 0.0, %v5090
  %v5092 = vpop.f32.mrf.mxu0
  %v5093 = vadd.f32 0.0, %v5092
  %5094 = vmatmul.bf16.gmra.mxu0 %v4859
  %v5095 = vpop.f32.mrf.mxu0
  %v5096 = vadd.f32 0.0, %v5095
  %v5097 = vpop.f32.mrf.mxu0
  %v5098 = vadd.f32 0.0, %v5097
  %5099 = vmatmul.bf16.gmra.mxu0 %v4861
  %v5100 = vpop.f32.mrf.mxu0
  %v5101 = vadd.f32 0.0, %v5100
  %v5102 = vpop.f32.mrf.mxu0
  %v5103 = vadd.f32 0.0, %v5102
  %5104 = vmatmul.bf16.gmra.mxu0 %v4863
  %v5105 = vpop.f32.mrf.mxu0
  %v5106 = vadd.f32 0.0, %v5105
  %v5107 = vpop.f32.mrf.mxu0
  %v5108 = vadd.f32 0.0, %v5107
  %5109 = vmatmul.bf16.gmra.mxu0 %v4865
  %v5110 = vpop.f32.mrf.mxu0
  %v5111 = vadd.f32 0.0, %v5110
  %v5112 = vpop.f32.mrf.mxu0
  %v5113 = vadd.f32 0.0, %v5112
  %5114 = vdwg.mxu0
  %v5115 = vadd.f32 %v4716, %v4956
  %v5116 = vadd.f32 %v4717, %v4958
  %v5117 = vadd.f32 %v4718, %v4961
  %v5118 = vadd.f32 %v4719, %v4963
  %v5119 = vadd.f32 %v4720, %v4966
  %v5120 = vadd.f32 %v4721, %v4968
  %v5121 = vadd.f32 %v4722, %v4971
  %v5122 = vadd.f32 %v4723, %v4973
  %v5123 = vadd.f32 %v4724, %v4976
  %v5124 = vadd.f32 %v4725, %v4978
  %v5125 = vadd.f32 %v4726, %v4981
  %v5126 = vadd.f32 %v4727, %v4983
  %v5127 = vadd.f32 %v4728, %v4986
  %v5128 = vadd.f32 %v4729, %v4988
  %v5129 = vadd.f32 %v4730, %v4991
  %v5130 = vadd.f32 %v4731, %v4993
  %v5131 = vadd.f32 %v4732, %v4996
  %v5132 = vadd.f32 %v4733, %v4998
  %v5133 = vadd.f32 %v4734, %v5001
  %v5134 = vadd.f32 %v4735, %v5003
  %v5135 = vadd.f32 %v4736, %v5006
  %v5136 = vadd.f32 %v4737, %v5008
  %v5137 = vadd.f32 %v4738, %v5011
  %v5138 = vadd.f32 %v4739, %v5013
  %v5139 = vadd.f32 %v4740, %v5016
  %v5140 = vadd.f32 %v4741, %v5018
  %v5141 = vadd.f32 %v4742, %v5021
  %v5142 = vadd.f32 %v4743, %v5023
  %v5143 = vadd.f32 %v4744, %v5026
  %v5144 = vadd.f32 %v4745, %v5028
  %v5145 = vadd.f32 %v4746, %v5031
  %v5146 = vadd.f32 %v4747, %v5033
  %v5147 = vadd.f32 %v4748, %v5036
  %v5148 = vadd.f32 %v4749, %v5038
  %v5149 = vadd.f32 %v4750, %v5041
  %v5150 = vadd.f32 %v4751, %v5043
  %v5151 = vadd.f32 %v4752, %v5046
  %v5152 = vadd.f32 %v4753, %v5048
  %v5153 = vadd.f32 %v4754, %v5051
  %v5154 = vadd.f32 %v4755, %v5053
  %v5155 = vadd.f32 %v4756, %v5056
  %v5156 = vadd.f32 %v4757, %v5058
  %v5157 = vadd.f32 %v4758, %v5061
  %v5158 = vadd.f32 %v4759, %v5063
  %v5159 = vadd.f32 %v4760, %v5066
  %v5160 = vadd.f32 %v4761, %v5068
  %v5161 = vadd.f32 %v4762, %v5071
  %v5162 = vadd.f32 %v4763, %v5073
  %v5163 = vadd.f32 %v4764, %v5076
  %v5164 = vadd.f32 %v4765, %v5078
  %v5165 = vadd.f32 %v4766, %v5081
  %v5166 = vadd.f32 %v4767, %v5083
  %v5167 = vadd.f32 %v4768, %v5086
  %v5168 = vadd.f32 %v4769, %v5088
  %v5169 = vadd.f32 %v4770, %v5091
  %v5170 = vadd.f32 %v4771, %v5093
  %v5171 = vadd.f32 %v4772, %v5096
  %v5172 = vadd.f32 %v4773, %v5098
  %v5173 = vadd.f32 %v4774, %v5101
  %v5174 = vadd.f32 %v4775, %v5103
  %v5175 = vadd.f32 %v4776, %v5106
  %v5176 = vadd.f32 %v4777, %v5108
  %v5177 = vadd.f32 %v4778, %v5111
  %v5178 = vadd.f32 %v4779, %v5113
  %v5179 = vld [vmem:[#allocation2 + $0x144] sm:$0x3]
  %v5180 = vld [vmem:[%s3 + $0x200] sm:$0xf]
  %v5181 = vld [vmem:[%s3 + $0x204] sm:$0xf]
  %v5182 = vld [vmem:[%s3 + $0x208] sm:$0xf]
  %v5183 = vld [vmem:[%s3 + $0x20c] sm:$0xf]
  %v5184 = vld [vmem:[%s3 + $0x210] sm:$0xf]
  %v5185 = vld [vmem:[%s3 + $0x214] sm:$0xf]
  %v5186 = vld [vmem:[%s3 + $0x218] sm:$0xf]
  %v5187 = vld [vmem:[%s3 + $0x21c] sm:$0xf]
  %v5188 = vld [vmem:[%s3 + $0x220] sm:$0xf]
  %v5189 = vld [vmem:[%s3 + $0x224] sm:$0xf]
  %v5190 = vld [vmem:[%s3 + $0x228] sm:$0xf]
  %v5191 = vld [vmem:[%s3 + $0x22c] sm:$0xf]
  %v5192 = vld [vmem:[%s3 + $0x230] sm:$0xf]
  %v5193 = vld [vmem:[%s3 + $0x234] sm:$0xf]
  %v5194 = vld [vmem:[%s3 + $0x238] sm:$0xf]
  %v5195 = vld [vmem:[%s3 + $0x23c] sm:$0xf]
  %v5197 = vunpack.c.l.b16 %v5179
  %v5198 = vpack.c.b16 %v5197, %v5197
  %vm5199 = vsmask.f32 6400
  %v5201 = vshrl.u32 %v4799, 16
  %v5203 = vrot.slane %v5201, 1
  %v5204 = vshll.u32 %v4799, 16
  %v5206 = vrot.slane %v5204, 2
  %v5207 = vor.u32 %v5203, %v5206
  %v5208 = vrot.slane %v4219, 1
  %v5209 = vrot.slane %v4215, 2
  %v5210 = vor.u32 %v5208, %v5209
  %v5211 = vsel %vm5199, %v5207, %v5210
  %v5212 = vrot.slane %v4227, 1
  %v5213 = vrot.slane %v4223, 2
  %v5214 = vor.u32 %v5212, %v5213
  %v5215 = vsel %vm5199, %v5210, %v5214
  %v5216 = vrot.slane %v4235, 1
  %v5217 = vrot.slane %v4231, 2
  %v5218 = vor.u32 %v5216, %v5217
  %v5219 = vsel %vm5199, %v5214, %v5218
  %v5220 = vrot.slane %v4243, 1
  %v5221 = vrot.slane %v4239, 2
  %v5222 = vor.u32 %v5220, %v5221
  %v5223 = vsel %vm5199, %v5218, %v5222
  %v5224 = vrot.slane %v4251, 1
  %v5225 = vrot.slane %v4247, 2
  %v5226 = vor.u32 %v5224, %v5225
  %v5227 = vsel %vm5199, %v5222, %v5226
  %v5228 = vrot.slane %v4259, 1
  %v5229 = vrot.slane %v4255, 2
  %v5230 = vor.u32 %v5228, %v5229
  %v5231 = vsel %vm5199, %v5226, %v5230
  %v5232 = vrot.slane %v4267, 1
  %v5233 = vrot.slane %v4263, 2
  %v5234 = vor.u32 %v5232, %v5233
  %v5235 = vsel %vm5199, %v5230, %v5234
  %v5236 = vrot.slane %v4275, 1
  %v5237 = vrot.slane %v4271, 2
  %v5238 = vor.u32 %v5236, %v5237
  %v5239 = vsel %vm5199, %v5234, %v5238
  %v5240 = vrot.slane %v4283, 1
  %v5241 = vrot.slane %v4279, 2
  %v5242 = vor.u32 %v5240, %v5241
  %v5243 = vsel %vm5199, %v5238, %v5242
  %v5244 = vrot.slane %v4291, 1
  %v5245 = vrot.slane %v4287, 2
  %v5246 = vor.u32 %v5244, %v5245
  %v5247 = vsel %vm5199, %v5242, %v5246
  %v5248 = vrot.slane %v4299, 1
  %v5249 = vrot.slane %v4295, 2
  %v5250 = vor.u32 %v5248, %v5249
  %v5251 = vsel %vm5199, %v5246, %v5250
  %v5252 = vrot.slane %v4307, 1
  %v5253 = vrot.slane %v4303, 2
  %v5254 = vor.u32 %v5252, %v5253
  %v5255 = vsel %vm5199, %v5250, %v5254
  %v5256 = vrot.slane %v4315, 1
  %v5257 = vrot.slane %v4311, 2
  %v5258 = vor.u32 %v5256, %v5257
  %v5259 = vsel %vm5199, %v5254, %v5258
  %v5260 = vrot.slane %v4323, 1
  %v5261 = vrot.slane %v4319, 2
  %v5262 = vor.u32 %v5260, %v5261
  %v5263 = vsel %vm5199, %v5258, %v5262
  %v5264 = vrot.slane %v4331, 1
  %v5265 = vrot.slane %v4327, 2
  %v5266 = vor.u32 %v5264, %v5265
  %v5267 = vsel %vm5199, %v5262, %v5266
  %v5268 = vrot.slane %v4339, 1
  %v5269 = vrot.slane %v4335, 2
  %v5270 = vor.u32 %v5268, %v5269
  %v5271 = vsel %vm5199, %v5266, %v5270
  %v5272 = vrot.slane %v4347, 1
  %v5273 = vrot.slane %v4343, 2
  %v5274 = vor.u32 %v5272, %v5273
  %v5275 = vsel %vm5199, %v5270, %v5274
  %v5276 = vrot.slane %v4355, 1
  %v5277 = vrot.slane %v4351, 2
  %v5278 = vor.u32 %v5276, %v5277
  %v5279 = vsel %vm5199, %v5274, %v5278
  %v5280 = vrot.slane %v4363, 1
  %v5281 = vrot.slane %v4359, 2
  %v5282 = vor.u32 %v5280, %v5281
  %v5283 = vsel %vm5199, %v5278, %v5282
  %v5284 = vrot.slane %v4371, 1
  %v5285 = vrot.slane %v4367, 2
  %v5286 = vor.u32 %v5284, %v5285
  %v5287 = vsel %vm5199, %v5282, %v5286
  %v5288 = vrot.slane %v4379, 1
  %v5289 = vrot.slane %v4375, 2
  %v5290 = vor.u32 %v5288, %v5289
  %v5291 = vsel %vm5199, %v5286, %v5290
  %v5292 = vrot.slane %v4387, 1
  %v5293 = vrot.slane %v4383, 2
  %v5294 = vor.u32 %v5292, %v5293
  %v5295 = vsel %vm5199, %v5290, %v5294
  %v5296 = vrot.slane %v4395, 1
  %v5297 = vrot.slane %v4391, 2
  %v5298 = vor.u32 %v5296, %v5297
  %v5299 = vsel %vm5199, %v5294, %v5298
  %v5300 = vrot.slane %v4403, 1
  %v5301 = vrot.slane %v4399, 2
  %v5302 = vor.u32 %v5300, %v5301
  %v5303 = vsel %vm5199, %v5298, %v5302
  %v5304 = vrot.slane %v4411, 1
  %v5305 = vrot.slane %v4407, 2
  %v5306 = vor.u32 %v5304, %v5305
  %v5307 = vsel %vm5199, %v5302, %v5306
  %v5308 = vrot.slane %v4419, 1
  %v5309 = vrot.slane %v4415, 2
  %v5310 = vor.u32 %v5308, %v5309
  %v5311 = vsel %vm5199, %v5306, %v5310
  %v5312 = vrot.slane %v4427, 1
  %v5313 = vrot.slane %v4423, 2
  %v5314 = vor.u32 %v5312, %v5313
  %v5315 = vsel %vm5199, %v5310, %v5314
  %v5316 = vrot.slane %v4435, 1
  %v5317 = vrot.slane %v4431, 2
  %v5318 = vor.u32 %v5316, %v5317
  %v5319 = vsel %vm5199, %v5314, %v5318
  %v5320 = vrot.slane %v4443, 1
  %v5321 = vrot.slane %v4439, 2
  %v5322 = vor.u32 %v5320, %v5321
  %v5323 = vsel %vm5199, %v5318, %v5322
  %v5324 = vrot.slane %v4451, 1
  %v5325 = vrot.slane %v4447, 2
  %v5326 = vor.u32 %v5324, %v5325
  %v5327 = vsel %vm5199, %v5322, %v5326
  %v5328 = vrot.slane %v4459, 1
  %v5329 = vrot.slane %v4455, 2
  %v5330 = vor.u32 %v5328, %v5329
  %v5331 = vsel %vm5199, %v5326, %v5330
  %v5333 = vshrl.u32 %v5198, 16
  %v5335 = vrot.slane %v5333, 1
  %v5336 = vshll.u32 %v5198, 16
  %v5338 = vrot.slane %v5336, 2
  %v5339 = vor.u32 %v5335, %v5338
  %v5340 = vsel %vm5199, %v5330, %v5339
  %v5389 = vunpack.c.l.b16 %v5180
  %v5390 = vunpack.c.l.b16 %v5181
  %v5391 = vunpack.c.l.b16 %v5182
  %v5392 = vunpack.c.l.b16 %v5183
  %v5393 = vunpack.c.l.b16 %v5184
  %v5394 = vunpack.c.l.b16 %v5185
  %v5395 = vunpack.c.l.b16 %v5186
  %v5396 = vunpack.c.l.b16 %v5187
  %v5397 = vunpack.c.l.b16 %v5188
  %v5398 = vunpack.c.l.b16 %v5189
  %v5399 = vunpack.c.l.b16 %v5190
  %v5400 = vunpack.c.l.b16 %v5191
  %v5401 = vunpack.c.l.b16 %v5192
  %v5402 = vunpack.c.l.b16 %v5193
  %v5403 = vunpack.c.l.b16 %v5194
  %v5404 = vunpack.c.l.b16 %v5195
  %v5405 = vpack.c.b16 %v5390, %v5389
  %v5406 = vpack.c.b16 %v5392, %v5391
  %v5407 = vpack.c.b16 %v5394, %v5393
  %v5408 = vpack.c.b16 %v5396, %v5395
  %v5409 = vpack.c.b16 %v5398, %v5397
  %v5410 = vpack.c.b16 %v5400, %v5399
  %v5411 = vpack.c.b16 %v5402, %v5401
  %v5412 = vpack.c.b16 %v5404, %v5403
  %5421 = vmatpush.bf16.msra.mxu0 %v5412
  %5422 = vmatpush.bf16.msra.mxu0 %v5411
  %5423 = vmatpush.bf16.msra.mxu0 %v5410
  %5424 = vmatpush.bf16.msra.mxu0 %v5409
  %5425 = vmatpush.bf16.msra.mxu0 %v5408
  %5426 = vmatpush.bf16.msra.mxu0 %v5407
  %5427 = vmatpush.bf16.msra.mxu0 %v5406
  %5428 = vmatpush.bf16.msra.mxu0 %v5405
  %5429 = vmatmul.bf16.gmra.mxu0 %v5211
  %v5430 = vpop.f32.mrf.mxu0
  %v5431 = vadd.f32 0.0, %v5430
  %v5432 = vpop.f32.mrf.mxu0
  %v5433 = vadd.f32 0.0, %v5432
  %5434 = vmatmul.bf16.gmra.mxu0 %v5215
  %v5435 = vpop.f32.mrf.mxu0
  %v5436 = vadd.f32 0.0, %v5435
  %v5437 = vpop.f32.mrf.mxu0
  %v5438 = vadd.f32 0.0, %v5437
  %5439 = vmatmul.bf16.gmra.mxu0 %v5219
  %v5440 = vpop.f32.mrf.mxu0
  %v5441 = vadd.f32 0.0, %v5440
  %v5442 = vpop.f32.mrf.mxu0
  %v5443 = vadd.f32 0.0, %v5442
  %5444 = vmatmul.bf16.gmra.mxu0 %v5223
  %v5445 = vpop.f32.mrf.mxu0
  %v5446 = vadd.f32 0.0, %v5445
  %v5447 = vpop.f32.mrf.mxu0
  %v5448 = vadd.f32 0.0, %v5447
  %5449 = vmatmul.bf16.gmra.mxu0 %v5227
  %v5450 = vpop.f32.mrf.mxu0
  %v5451 = vadd.f32 0.0, %v5450
  %v5452 = vpop.f32.mrf.mxu0
  %v5453 = vadd.f32 0.0, %v5452
  %5454 = vmatmul.bf16.gmra.mxu0 %v5231
  %v5455 = vpop.f32.mrf.mxu0
  %v5456 = vadd.f32 0.0, %v5455
  %v5457 = vpop.f32.mrf.mxu0
  %v5458 = vadd.f32 0.0, %v5457
  %5459 = vmatmul.bf16.gmra.mxu0 %v5235
  %v5460 = vpop.f32.mrf.mxu0
  %v5461 = vadd.f32 0.0, %v5460
  %v5462 = vpop.f32.mrf.mxu0
  %v5463 = vadd.f32 0.0, %v5462
  %5464 = vmatmul.bf16.gmra.mxu0 %v5239
  %v5465 = vpop.f32.mrf.mxu0
  %v5466 = vadd.f32 0.0, %v5465
  %v5467 = vpop.f32.mrf.mxu0
  %v5468 = vadd.f32 0.0, %v5467
  %5469 = vmatmul.bf16.gmra.mxu0 %v5243
  %v5470 = vpop.f32.mrf.mxu0
  %v5471 = vadd.f32 0.0, %v5470
  %v5472 = vpop.f32.mrf.mxu0
  %v5473 = vadd.f32 0.0, %v5472
  %5474 = vmatmul.bf16.gmra.mxu0 %v5247
  %v5475 = vpop.f32.mrf.mxu0
  %v5476 = vadd.f32 0.0, %v5475
  %v5477 = vpop.f32.mrf.mxu0
  %v5478 = vadd.f32 0.0, %v5477
  %5479 = vmatmul.bf16.gmra.mxu0 %v5251
  %v5480 = vpop.f32.mrf.mxu0
  %v5481 = vadd.f32 0.0, %v5480
  %v5482 = vpop.f32.mrf.mxu0
  %v5483 = vadd.f32 0.0, %v5482
  %5484 = vmatmul.bf16.gmra.mxu0 %v5255
  %v5485 = vpop.f32.mrf.mxu0
  %v5486 = vadd.f32 0.0, %v5485
  %v5487 = vpop.f32.mrf.mxu0
  %v5488 = vadd.f32 0.0, %v5487
  %5489 = vmatmul.bf16.gmra.mxu0 %v5259
  %v5490 = vpop.f32.mrf.mxu0
  %v5491 = vadd.f32 0.0, %v5490
  %v5492 = vpop.f32.mrf.mxu0
  %v5493 = vadd.f32 0.0, %v5492
  %5494 = vmatmul.bf16.gmra.mxu0 %v5263
  %v5495 = vpop.f32.mrf.mxu0
  %v5496 = vadd.f32 0.0, %v5495
  %v5497 = vpop.f32.mrf.mxu0
  %v5498 = vadd.f32 0.0, %v5497
  %5499 = vmatmul.bf16.gmra.mxu0 %v5267
  %v5500 = vpop.f32.mrf.mxu0
  %v5501 = vadd.f32 0.0, %v5500
  %v5502 = vpop.f32.mrf.mxu0
  %v5503 = vadd.f32 0.0, %v5502
  %5504 = vmatmul.bf16.gmra.mxu0 %v5271
  %v5505 = vpop.f32.mrf.mxu0
  %v5506 = vadd.f32 0.0, %v5505
  %v5507 = vpop.f32.mrf.mxu0
  %v5508 = vadd.f32 0.0, %v5507
  %5509 = vmatmul.bf16.gmra.mxu0 %v5275
  %v5510 = vpop.f32.mrf.mxu0
  %v5511 = vadd.f32 0.0, %v5510
  %v5512 = vpop.f32.mrf.mxu0
  %v5513 = vadd.f32 0.0, %v5512
  %5514 = vmatmul.bf16.gmra.mxu0 %v5279
  %v5515 = vpop.f32.mrf.mxu0
  %v5516 = vadd.f32 0.0, %v5515
  %v5517 = vpop.f32.mrf.mxu0
  %v5518 = vadd.f32 0.0, %v5517
  %5519 = vmatmul.bf16.gmra.mxu0 %v5283
  %v5520 = vpop.f32.mrf.mxu0
  %v5521 = vadd.f32 0.0, %v5520
  %v5522 = vpop.f32.mrf.mxu0
  %v5523 = vadd.f32 0.0, %v5522
  %5524 = vmatmul.bf16.gmra.mxu0 %v5287
  %v5525 = vpop.f32.mrf.mxu0
  %v5526 = vadd.f32 0.0, %v5525
  %v5527 = vpop.f32.mrf.mxu0
  %v5528 = vadd.f32 0.0, %v5527
  %5529 = vmatmul.bf16.gmra.mxu0 %v5291
  %v5530 = vpop.f32.mrf.mxu0
  %v5531 = vadd.f32 0.0, %v5530
  %v5532 = vpop.f32.mrf.mxu0
  %v5533 = vadd.f32 0.0, %v5532
  %5534 = vmatmul.bf16.gmra.mxu0 %v5295
  %v5535 = vpop.f32.mrf.mxu0
  %v5536 = vadd.f32 0.0, %v5535
  %v5537 = vpop.f32.mrf.mxu0
  %v5538 = vadd.f32 0.0, %v5537
  %5539 = vmatmul.bf16.gmra.mxu0 %v5299
  %v5540 = vpop.f32.mrf.mxu0
  %v5541 = vadd.f32 0.0, %v5540
  %v5542 = vpop.f32.mrf.mxu0
  %v5543 = vadd.f32 0.0, %v5542
  %5544 = vmatmul.bf16.gmra.mxu0 %v5303
  %v5545 = vpop.f32.mrf.mxu0
  %v5546 = vadd.f32 0.0, %v5545
  %v5547 = vpop.f32.mrf.mxu0
  %v5548 = vadd.f32 0.0, %v5547
  %5549 = vmatmul.bf16.gmra.mxu0 %v5307
  %v5550 = vpop.f32.mrf.mxu0
  %v5551 = vadd.f32 0.0, %v5550
  %v5552 = vpop.f32.mrf.mxu0
  %v5553 = vadd.f32 0.0, %v5552
  %5554 = vmatmul.bf16.gmra.mxu0 %v5311
  %v5555 = vpop.f32.mrf.mxu0
  %v5556 = vadd.f32 0.0, %v5555
  %v5557 = vpop.f32.mrf.mxu0
  %v5558 = vadd.f32 0.0, %v5557
  %5559 = vmatmul.bf16.gmra.mxu0 %v5315
  %v5560 = vpop.f32.mrf.mxu0
  %v5561 = vadd.f32 0.0, %v5560
  %v5562 = vpop.f32.mrf.mxu0
  %v5563 = vadd.f32 0.0, %v5562
  %5564 = vmatmul.bf16.gmra.mxu0 %v5319
  %v5565 = vpop.f32.mrf.mxu0
  %v5566 = vadd.f32 0.0, %v5565
  %v5567 = vpop.f32.mrf.mxu0
  %v5568 = vadd.f32 0.0, %v5567
  %5569 = vmatmul.bf16.gmra.mxu0 %v5323
  %v5570 = vpop.f32.mrf.mxu0
  %v5571 = vadd.f32 0.0, %v5570
  %v5572 = vpop.f32.mrf.mxu0
  %v5573 = vadd.f32 0.0, %v5572
  %5574 = vmatmul.bf16.gmra.mxu0 %v5327
  %v5575 = vpop.f32.mrf.mxu0
  %v5576 = vadd.f32 0.0, %v5575
  %v5577 = vpop.f32.mrf.mxu0
  %v5578 = vadd.f32 0.0, %v5577
  %5579 = vmatmul.bf16.gmra.mxu0 %v5331
  %v5580 = vpop.f32.mrf.mxu0
  %v5581 = vadd.f32 0.0, %v5580
  %v5582 = vpop.f32.mrf.mxu0
  %v5583 = vadd.f32 0.0, %v5582
  %5584 = vmatmul.bf16.gmra.mxu0 %v5340
  %v5585 = vpop.f32.mrf.mxu0
  %v5586 = vadd.f32 0.0, %v5585
  %v5587 = vpop.f32.mrf.mxu0
  %v5588 = vadd.f32 0.0, %v5587
  %5589 = vdwg.mxu0
  %v5590 = vadd.f32 %v5115, %v5431
  %v5591 = vadd.f32 %v5116, %v5433
  %v5592 = vadd.f32 %v5117, %v5436
  %v5593 = vadd.f32 %v5118, %v5438
  %v5594 = vadd.f32 %v5119, %v5441
  %v5595 = vadd.f32 %v5120, %v5443
  %v5596 = vadd.f32 %v5121, %v5446
  %v5597 = vadd.f32 %v5122, %v5448
  %v5598 = vadd.f32 %v5123, %v5451
  %v5599 = vadd.f32 %v5124, %v5453
  %v5600 = vadd.f32 %v5125, %v5456
  %v5601 = vadd.f32 %v5126, %v5458
  %v5602 = vadd.f32 %v5127, %v5461
  %v5603 = vadd.f32 %v5128, %v5463
  %v5604 = vadd.f32 %v5129, %v5466
  %v5605 = vadd.f32 %v5130, %v5468
  %v5606 = vadd.f32 %v5131, %v5471
  %v5607 = vadd.f32 %v5132, %v5473
  %v5608 = vadd.f32 %v5133, %v5476
  %v5609 = vadd.f32 %v5134, %v5478
  %v5610 = vadd.f32 %v5135, %v5481
  %v5611 = vadd.f32 %v5136, %v5483
  %v5612 = vadd.f32 %v5137, %v5486
  %v5613 = vadd.f32 %v5138, %v5488
  %v5614 = vadd.f32 %v5139, %v5491
  %v5615 = vadd.f32 %v5140, %v5493
  %v5616 = vadd.f32 %v5141, %v5496
  %v5617 = vadd.f32 %v5142, %v5498
  %v5618 = vadd.f32 %v5143, %v5501
  %v5619 = vadd.f32 %v5144, %v5503
  %v5620 = vadd.f32 %v5145, %v5506
  %v5621 = vadd.f32 %v5146, %v5508
  %v5622 = vadd.f32 %v5147, %v5511
  %v5623 = vadd.f32 %v5148, %v5513
  %v5624 = vadd.f32 %v5149, %v5516
  %v5625 = vadd.f32 %v5150, %v5518
  %v5626 = vadd.f32 %v5151, %v5521
  %v5627 = vadd.f32 %v5152, %v5523
  %v5628 = vadd.f32 %v5153, %v5526
  %v5629 = vadd.f32 %v5154, %v5528
  %v5630 = vadd.f32 %v5155, %v5531
  %v5631 = vadd.f32 %v5156, %v5533
  %v5632 = vadd.f32 %v5157, %v5536
  %v5633 = vadd.f32 %v5158, %v5538
  %v5634 = vadd.f32 %v5159, %v5541
  %v5635 = vadd.f32 %v5160, %v5543
  %v5636 = vadd.f32 %v5161, %v5546
  %v5637 = vadd.f32 %v5162, %v5548
  %v5638 = vadd.f32 %v5163, %v5551
  %v5639 = vadd.f32 %v5164, %v5553
  %v5640 = vadd.f32 %v5165, %v5556
  %v5641 = vadd.f32 %v5166, %v5558
  %v5642 = vadd.f32 %v5167, %v5561
  %v5643 = vadd.f32 %v5168, %v5563
  %v5644 = vadd.f32 %v5169, %v5566
  %v5645 = vadd.f32 %v5170, %v5568
  %v5646 = vadd.f32 %v5171, %v5571
  %v5647 = vadd.f32 %v5172, %v5573
  %v5648 = vadd.f32 %v5173, %v5576
  %v5649 = vadd.f32 %v5174, %v5578
  %v5650 = vadd.f32 %v5175, %v5581
  %v5651 = vadd.f32 %v5176, %v5583
  %v5652 = vadd.f32 %v5177, %v5586
  %v5653 = vadd.f32 %v5178, %v5588
  %v5654 = vpack.c.bf16 %v5590, %v5590
  %v5655 = vpack.c.bf16 %v5591, %v5591
  %v5656 = vpack.c.bf16 %v5592, %v5592
  %v5657 = vpack.c.bf16 %v5593, %v5593
  %v5658 = vpack.c.bf16 %v5594, %v5594
  %v5659 = vpack.c.bf16 %v5595, %v5595
  %v5660 = vpack.c.bf16 %v5596, %v5596
  %v5661 = vpack.c.bf16 %v5597, %v5597
  %v5662 = vpack.c.bf16 %v5598, %v5598
  %v5663 = vpack.c.bf16 %v5599, %v5599
  %v5664 = vpack.c.bf16 %v5600, %v5600
  %v5665 = vpack.c.bf16 %v5601, %v5601
  %v5666 = vpack.c.bf16 %v5602, %v5602
  %v5667 = vpack.c.bf16 %v5603, %v5603
  %v5668 = vpack.c.bf16 %v5604, %v5604
  %v5669 = vpack.c.bf16 %v5605, %v5605
  %v5670 = vpack.c.bf16 %v5606, %v5606
  %v5671 = vpack.c.bf16 %v5607, %v5607
  %v5672 = vpack.c.bf16 %v5608, %v5608
  %v5673 = vpack.c.bf16 %v5609, %v5609
  %v5674 = vpack.c.bf16 %v5610, %v5610
  %v5675 = vpack.c.bf16 %v5611, %v5611
  %v5676 = vpack.c.bf16 %v5612, %v5612
  %v5677 = vpack.c.bf16 %v5613, %v5613
  %v5678 = vpack.c.bf16 %v5614, %v5614
  %v5679 = vpack.c.bf16 %v5615, %v5615
  %v5680 = vpack.c.bf16 %v5616, %v5616
  %v5681 = vpack.c.bf16 %v5617, %v5617
  %v5682 = vpack.c.bf16 %v5618, %v5618
  %v5683 = vpack.c.bf16 %v5619, %v5619
  %v5684 = vpack.c.bf16 %v5620, %v5620
  %v5685 = vpack.c.bf16 %v5621, %v5621
  %v5686 = vpack.c.bf16 %v5622, %v5622
  %v5687 = vpack.c.bf16 %v5623, %v5623
  %v5688 = vpack.c.bf16 %v5624, %v5624
  %v5689 = vpack.c.bf16 %v5625, %v5625
  %v5690 = vpack.c.bf16 %v5626, %v5626
  %v5691 = vpack.c.bf16 %v5627, %v5627
  %v5692 = vpack.c.bf16 %v5628, %v5628
  %v5693 = vpack.c.bf16 %v5629, %v5629
  %v5694 = vpack.c.bf16 %v5630, %v5630
  %v5695 = vpack.c.bf16 %v5631, %v5631
  %v5696 = vpack.c.bf16 %v5632, %v5632
  %v5697 = vpack.c.bf16 %v5633, %v5633
  %v5698 = vpack.c.bf16 %v5634, %v5634
  %v5699 = vpack.c.bf16 %v5635, %v5635
  %v5700 = vpack.c.bf16 %v5636, %v5636
  %v5701 = vpack.c.bf16 %v5637, %v5637
  %v5702 = vpack.c.bf16 %v5638, %v5638
  %v5703 = vpack.c.bf16 %v5639, %v5639
  %v5704 = vpack.c.bf16 %v5640, %v5640
  %v5705 = vpack.c.bf16 %v5641, %v5641
  %v5706 = vpack.c.bf16 %v5642, %v5642
  %v5707 = vpack.c.bf16 %v5643, %v5643
  %v5708 = vpack.c.bf16 %v5644, %v5644
  %v5709 = vpack.c.bf16 %v5645, %v5645
  %v5710 = vpack.c.bf16 %v5646, %v5646
  %v5711 = vpack.c.bf16 %v5647, %v5647
  %v5712 = vpack.c.bf16 %v5648, %v5648
  %v5713 = vpack.c.bf16 %v5649, %v5649
  %v5714 = vpack.c.bf16 %v5650, %v5650
  %v5715 = vpack.c.bf16 %v5651, %v5651
  %v5716 = vpack.c.bf16 %v5652, %v5652
  %v5717 = vpack.c.bf16 %v5653, %v5653
  %5718 = vst [vmem:[%s136] sm:$0xf] %v5654
  %5719 = vst [vmem:[%s136 + $0x4] sm:$0xf] %v5655
  %5720 = vst [vmem:[%s136 + $0x8] sm:$0xf] %v5656
  %5721 = vst [vmem:[%s136 + $0xc] sm:$0xf] %v5657
  %5722 = vst [vmem:[%s136 + $0x10] sm:$0xf] %v5658
  %5723 = vst [vmem:[%s136 + $0x14] sm:$0xf] %v5659
  %5724 = vst [vmem:[%s136 + $0x18] sm:$0xf] %v5660
  %5725 = vst [vmem:[%s136 + $0x1c] sm:$0xf] %v5661
  %5726 = vst [vmem:[%s136 + $0x20] sm:$0xf] %v5662
  %5727 = vst [vmem:[%s136 + $0x24] sm:$0xf] %v5663
  %5728 = vst [vmem:[%s136 + $0x28] sm:$0xf] %v5664
  %5729 = vst [vmem:[%s136 + $0x2c] sm:$0xf] %v5665
  %5730 = vst [vmem:[%s136 + $0x30] sm:$0xf] %v5666
  %5731 = vst [vmem:[%s136 + $0x34] sm:$0xf] %v5667
  %5732 = vst [vmem:[%s136 + $0x38] sm:$0xf] %v5668
  %5733 = vst [vmem:[%s136 + $0x3c] sm:$0xf] %v5669
  %5734 = vst [vmem:[%s136 + $0x40] sm:$0xf] %v5670
  %5735 = vst [vmem:[%s136 + $0x44] sm:$0xf] %v5671
  %5736 = vst [vmem:[%s136 + $0x48] sm:$0xf] %v5672
  %5737 = vst [vmem:[%s136 + $0x4c] sm:$0xf] %v5673
  %5738 = vst [vmem:[%s136 + $0x50] sm:$0xf] %v5674
  %5739 = vst [vmem:[%s136 + $0x54] sm:$0xf] %v5675
  %5740 = vst [vmem:[%s136 + $0x58] sm:$0xf] %v5676
  %5741 = vst [vmem:[%s136 + $0x5c] sm:$0xf] %v5677
  %5742 = vst [vmem:[%s136 + $0x60] sm:$0xf] %v5678
  %5743 = vst [vmem:[%s136 + $0x64] sm:$0xf] %v5679
  %5744 = vst [vmem:[%s136 + $0x68] sm:$0xf] %v5680
  %5745 = vst [vmem:[%s136 + $0x6c] sm:$0xf] %v5681
  %5746 = vst [vmem:[%s136 + $0x70] sm:$0xf] %v5682
  %5747 = vst [vmem:[%s136 + $0x74] sm:$0xf] %v5683
  %5748 = vst [vmem:[%s136 + $0x78] sm:$0xf] %v5684
  %5749 = vst [vmem:[%s136 + $0x7c] sm:$0xf] %v5685
  %5750 = vst [vmem:[%s136 + $0x80] sm:$0xf] %v5686
  %5751 = vst [vmem:[%s136 + $0x84] sm:$0xf] %v5687
  %5752 = vst [vmem:[%s136 + $0x88] sm:$0xf] %v5688
  %5753 = vst [vmem:[%s136 + $0x8c] sm:$0xf] %v5689
  %5754 = vst [vmem:[%s136 + $0x90] sm:$0xf] %v5690
  %5755 = vst [vmem:[%s136 + $0x94] sm:$0xf] %v5691
  %5756 = vst [vmem:[%s136 + $0x98] sm:$0xf] %v5692
  %5757 = vst [vmem:[%s136 + $0x9c] sm:$0xf] %v5693
  %5758 = vst [vmem:[%s136 + $0xa0] sm:$0xf] %v5694
  %5759 = vst [vmem:[%s136 + $0xa4] sm:$0xf] %v5695
  %5760 = vst [vmem:[%s136 + $0xa8] sm:$0xf] %v5696
  %5761 = vst [vmem:[%s136 + $0xac] sm:$0xf] %v5697
  %5762 = vst [vmem:[%s136 + $0xb0] sm:$0xf] %v5698
  %5763 = vst [vmem:[%s136 + $0xb4] sm:$0xf] %v5699
  %5764 = vst [vmem:[%s136 + $0xb8] sm:$0xf] %v5700
  %5765 = vst [vmem:[%s136 + $0xbc] sm:$0xf] %v5701
  %5766 = vst [vmem:[%s136 + $0xc0] sm:$0xf] %v5702
  %5767 = vst [vmem:[%s136 + $0xc4] sm:$0xf] %v5703
  %5768 = vst [vmem:[%s136 + $0xc8] sm:$0xf] %v5704
  %5769 = vst [vmem:[%s136 + $0xcc] sm:$0xf] %v5705
  %5770 = vst [vmem:[%s136 + $0xd0] sm:$0xf] %v5706
  %5771 = vst [vmem:[%s136 + $0xd4] sm:$0xf] %v5707
  %5772 = vst [vmem:[%s136 + $0xd8] sm:$0xf] %v5708
  %5773 = vst [vmem:[%s136 + $0xdc] sm:$0xf] %v5709
  %5774 = vst [vmem:[%s136 + $0xe0] sm:$0xf] %v5710
  %5775 = vst [vmem:[%s136 + $0xe4] sm:$0xf] %v5711
  %5776 = vst [vmem:[%s136 + $0xe8] sm:$0xf] %v5712
  %5777 = vst [vmem:[%s136 + $0xec] sm:$0xf] %v5713
  %5778 = vst [vmem:[%s136 + $0xf0] sm:$0xf] %v5714
  %5779 = vst [vmem:[%s136 + $0xf4] sm:$0xf] %v5715
  %5780 = vst [vmem:[%s136 + $0xf8] sm:$0xf] %v5716
  %5781 = vst [vmem:[%s136 + $0xfc] sm:$0xf] %v5717
  %v5782 = vld [vmem:[%s128] sm:$0xff]
  %v5783 = vld [vmem:[%s128 + $0x8] sm:$0xff]
  %v5784 = vld [vmem:[%s128 + $0x10] sm:$0xff]
  %v5785 = vld [vmem:[%s128 + $0x18] sm:$0xff]
  %v5786 = vld [vmem:[%s128 + $0x20] sm:$0xff]
  %v5787 = vld [vmem:[%s128 + $0x28] sm:$0xff]
  %v5788 = vld [vmem:[%s128 + $0x30] sm:$0xff]
  %v5789 = vld [vmem:[%s128 + $0x38] sm:$0xff]
  %v5790 = vld [vmem:[%s128 + $0x40] sm:$0xff]
  %v5791 = vld [vmem:[%s128 + $0x48] sm:$0xff]
  %v5792 = vld [vmem:[%s128 + $0x50] sm:$0xff]
  %v5793 = vld [vmem:[%s128 + $0x58] sm:$0xff]
  %v5794 = vld [vmem:[%s128 + $0x60] sm:$0xff]
  %v5795 = vld [vmem:[%s128 + $0x68] sm:$0xff]
  %v5796 = vld [vmem:[%s128 + $0x70] sm:$0xff]
  %v5797 = vld [vmem:[%s128 + $0x78] sm:$0xff]
  %v5798 = vld [vmem:[%s128 + $0x80] sm:$0xff]
  %v5799 = vld [vmem:[%s128 + $0x88] sm:$0xff]
  %v5800 = vld [vmem:[%s128 + $0x90] sm:$0xff]
  %v5801 = vld [vmem:[%s128 + $0x98] sm:$0xff]
  %v5802 = vld [vmem:[%s128 + $0xa0] sm:$0xff]
  %v5803 = vld [vmem:[%s128 + $0xa8] sm:$0xff]
  %v5804 = vld [vmem:[%s128 + $0xb0] sm:$0xff]
  %v5805 = vld [vmem:[%s128 + $0xb8] sm:$0xff]
  %v5806 = vld [vmem:[%s128 + $0xc0] sm:$0xff]
  %v5807 = vld [vmem:[%s128 + $0xc8] sm:$0xff]
  %v5808 = vld [vmem:[%s128 + $0xd0] sm:$0xff]
  %v5809 = vld [vmem:[%s128 + $0xd8] sm:$0xff]
  %v5810 = vld [vmem:[%s128 + $0xe0] sm:$0xff]
  %v5811 = vld [vmem:[%s128 + $0xe8] sm:$0xff]
  %v5812 = vld [vmem:[%s128 + $0xf0] sm:$0xff]
  %v5813 = vld [vmem:[%s128 + $0xf8] sm:$0xff]
  %v5814 = vld [vmem:[%s128 + $0x100] sm:$0xff]
  %v5815 = vld [vmem:[%s128 + $0x108] sm:$0xff]
  %v5816 = vld [vmem:[%s128 + $0x110] sm:$0xff]
  %v5817 = vld [vmem:[%s128 + $0x118] sm:$0xff]
  %v5818 = vld [vmem:[%s128 + $0x120] sm:$0xff]
  %v5819 = vld [vmem:[%s128 + $0x128] sm:$0xff]
  %v5820 = vld [vmem:[%s128 + $0x130] sm:$0xff]
  %v5821 = vld [vmem:[%s128 + $0x138] sm:$0xff]
  %v5822 = vld [vmem:[%s128 + $0x140] sm:$0xff]
  %v5823 = vld [vmem:[%s128 + $0x148] sm:$0xff]
  %v5824 = vld [vmem:[%s128 + $0x150] sm:$0xff]
  %v5825 = vld [vmem:[%s128 + $0x158] sm:$0xff]
  %v5826 = vld [vmem:[%s128 + $0x160] sm:$0xff]
  %v5827 = vld [vmem:[%s128 + $0x168] sm:$0xff]
  %v5828 = vld [vmem:[%s128 + $0x170] sm:$0xff]
  %v5829 = vld [vmem:[%s128 + $0x178] sm:$0xff]
  %v5830 = vld [vmem:[%s128 + $0x180] sm:$0xff]
  %v5831 = vld [vmem:[%s128 + $0x188] sm:$0xff]
  %v5832 = vld [vmem:[%s128 + $0x190] sm:$0xff]
  %v5833 = vld [vmem:[%s128 + $0x198] sm:$0xff]
  %v5834 = vld [vmem:[%s128 + $0x1a0] sm:$0xff]
  %v5835 = vld [vmem:[%s128 + $0x1a8] sm:$0xff]
  %v5836 = vld [vmem:[%s128 + $0x1b0] sm:$0xff]
  %v5837 = vld [vmem:[%s128 + $0x1b8] sm:$0xff]
  %v5838 = vld [vmem:[%s128 + $0x1c0] sm:$0xff]
  %v5839 = vld [vmem:[%s128 + $0x1c8] sm:$0xff]
  %v5840 = vld [vmem:[%s128 + $0x1d0] sm:$0xff]
  %v5841 = vld [vmem:[%s128 + $0x1d8] sm:$0xff]
  %v5842 = vld [vmem:[%s128 + $0x1e0] sm:$0xff]
  %v5843 = vld [vmem:[%s128 + $0x1e8] sm:$0xff]
  %v5844 = vld [vmem:[%s128 + $0x1f0] sm:$0xff]
  %v5845 = vld [vmem:[%s128 + $0x1f8] sm:$0xff]
  %vm5846 = vcmp.gt.f32.partialorder %v5782, 0.5
  %vm5847 = vcmp.gt.f32.partialorder %v5783, 0.5
  %vm5848 = vcmp.gt.f32.partialorder %v5784, 0.5
  %vm5849 = vcmp.gt.f32.partialorder %v5785, 0.5
  %vm5850 = vcmp.gt.f32.partialorder %v5786, 0.5
  %vm5851 = vcmp.gt.f32.partialorder %v5787, 0.5
  %vm5852 = vcmp.gt.f32.partialorder %v5788, 0.5
  %vm5853 = vcmp.gt.f32.partialorder %v5789, 0.5
  %vm5854 = vcmp.gt.f32.partialorder %v5790, 0.5
  %vm5855 = vcmp.gt.f32.partialorder %v5791, 0.5
  %vm5856 = vcmp.gt.f32.partialorder %v5792, 0.5
  %vm5857 = vcmp.gt.f32.partialorder %v5793, 0.5
  %vm5858 = vcmp.gt.f32.partialorder %v5794, 0.5
  %vm5859 = vcmp.gt.f32.partialorder %v5795, 0.5
  %vm5860 = vcmp.gt.f32.partialorder %v5796, 0.5
  %vm5861 = vcmp.gt.f32.partialorder %v5797, 0.5
  %vm5862 = vcmp.gt.f32.partialorder %v5798, 0.5
  %vm5863 = vcmp.gt.f32.partialorder %v5799, 0.5
  %vm5864 = vcmp.gt.f32.partialorder %v5800, 0.5
  %vm5865 = vcmp.gt.f32.partialorder %v5801, 0.5
  %vm5866 = vcmp.gt.f32.partialorder %v5802, 0.5
  %vm5867 = vcmp.gt.f32.partialorder %v5803, 0.5
  %vm5868 = vcmp.gt.f32.partialorder %v5804, 0.5
  %vm5869 = vcmp.gt.f32.partialorder %v5805, 0.5
  %vm5870 = vcmp.gt.f32.partialorder %v5806, 0.5
  %vm5871 = vcmp.gt.f32.partialorder %v5807, 0.5
  %vm5872 = vcmp.gt.f32.partialorder %v5808, 0.5
  %vm5873 = vcmp.gt.f32.partialorder %v5809, 0.5
  %vm5874 = vcmp.gt.f32.partialorder %v5810, 0.5
  %vm5875 = vcmp.gt.f32.partialorder %v5811, 0.5
  %vm5876 = vcmp.gt.f32.partialorder %v5812, 0.5
  %vm5877 = vcmp.gt.f32.partialorder %v5813, 0.5
  %vm5878 = vcmp.gt.f32.partialorder %v5814, 0.5
  %vm5879 = vcmp.gt.f32.partialorder %v5815, 0.5
  %vm5880 = vcmp.gt.f32.partialorder %v5816, 0.5
  %vm5881 = vcmp.gt.f32.partialorder %v5817, 0.5
  %vm5882 = vcmp.gt.f32.partialorder %v5818, 0.5
  %vm5883 = vcmp.gt.f32.partialorder %v5819, 0.5
  %vm5884 = vcmp.gt.f32.partialorder %v5820, 0.5
  %vm5885 = vcmp.gt.f32.partialorder %v5821, 0.5
  %vm5886 = vcmp.gt.f32.partialorder %v5822, 0.5
  %vm5887 = vcmp.gt.f32.partialorder %v5823, 0.5
  %vm5888 = vcmp.gt.f32.partialorder %v5824, 0.5
  %vm5889 = vcmp.gt.f32.partialorder %v5825, 0.5
  %vm5890 = vcmp.gt.f32.partialorder %v5826, 0.5
  %vm5891 = vcmp.gt.f32.partialorder %v5827, 0.5
  %vm5892 = vcmp.gt.f32.partialorder %v5828, 0.5
  %vm5893 = vcmp.gt.f32.partialorder %v5829, 0.5
  %vm5894 = vcmp.gt.f32.partialorder %v5830, 0.5
  %vm5895 = vcmp.gt.f32.partialorder %v5831, 0.5
  %vm5896 = vcmp.gt.f32.partialorder %v5832, 0.5
  %vm5897 = vcmp.gt.f32.partialorder %v5833, 0.5
  %vm5898 = vcmp.gt.f32.partialorder %v5834, 0.5
  %vm5899 = vcmp.gt.f32.partialorder %v5835, 0.5
  %vm5900 = vcmp.gt.f32.partialorder %v5836, 0.5
  %vm5901 = vcmp.gt.f32.partialorder %v5837, 0.5
  %vm5902 = vcmp.gt.f32.partialorder %v5838, 0.5
  %vm5903 = vcmp.gt.f32.partialorder %v5839, 0.5
  %vm5904 = vcmp.gt.f32.partialorder %v5840, 0.5
  %vm5905 = vcmp.gt.f32.partialorder %v5841, 0.5
  %vm5906 = vcmp.gt.f32.partialorder %v5842, 0.5
  %vm5907 = vcmp.gt.f32.partialorder %v5843, 0.5
  %vm5908 = vcmp.gt.f32.partialorder %v5844, 0.5
  %vm5909 = vcmp.gt.f32.partialorder %v5845, 0.5
  %v5910 = vsel %vm5846, 1, 0
  %v5911 = vsel %vm5847, 1, 0
  %v5912 = vsel %vm5848, 1, 0
  %v5913 = vsel %vm5849, 1, 0
  %v5914 = vsel %vm5850, 1, 0
  %v5915 = vsel %vm5851, 1, 0
  %v5916 = vsel %vm5852, 1, 0
  %v5917 = vsel %vm5853, 1, 0
  %v5918 = vsel %vm5854, 1, 0
  %v5919 = vsel %vm5855, 1, 0
  %v5920 = vsel %vm5856, 1, 0
  %v5921 = vsel %vm5857, 1, 0
  %v5922 = vsel %vm5858, 1, 0
  %v5923 = vsel %vm5859, 1, 0
  %v5924 = vsel %vm5860, 1, 0
  %v5925 = vsel %vm5861, 1, 0
  %v5926 = vsel %vm5862, 1, 0
  %v5927 = vsel %vm5863, 1, 0
  %v5928 = vsel %vm5864, 1, 0
  %v5929 = vsel %vm5865, 1, 0
  %v5930 = vsel %vm5866, 1, 0
  %v5931 = vsel %vm5867, 1, 0
  %v5932 = vsel %vm5868, 1, 0
  %v5933 = vsel %vm5869, 1, 0
  %v5934 = vsel %vm5870, 1, 0
  %v5935 = vsel %vm5871, 1, 0
  %v5936 = vsel %vm5872, 1, 0
  %v5937 = vsel %vm5873, 1, 0
  %v5938 = vsel %vm5874, 1, 0
  %v5939 = vsel %vm5875, 1, 0
  %v5940 = vsel %vm5876, 1, 0
  %v5941 = vsel %vm5877, 1, 0
  %v5942 = vsel %vm5878, 1, 0
  %v5943 = vsel %vm5879, 1, 0
  %v5944 = vsel %vm5880, 1, 0
  %v5945 = vsel %vm5881, 1, 0
  %v5946 = vsel %vm5882, 1, 0
  %v5947 = vsel %vm5883, 1, 0
  %v5948 = vsel %vm5884, 1, 0
  %v5949 = vsel %vm5885, 1, 0
  %v5950 = vsel %vm5886, 1, 0
  %v5951 = vsel %vm5887, 1, 0
  %v5952 = vsel %vm5888, 1, 0
  %v5953 = vsel %vm5889, 1, 0
  %v5954 = vsel %vm5890, 1, 0
  %v5955 = vsel %vm5891, 1, 0
  %v5956 = vsel %vm5892, 1, 0
  %v5957 = vsel %vm5893, 1, 0
  %v5958 = vsel %vm5894, 1, 0
  %v5959 = vsel %vm5895, 1, 0
  %v5960 = vsel %vm5896, 1, 0
  %v5961 = vsel %vm5897, 1, 0
  %v5962 = vsel %vm5898, 1, 0
  %v5963 = vsel %vm5899, 1, 0
  %v5964 = vsel %vm5900, 1, 0
  %v5965 = vsel %vm5901, 1, 0
  %v5966 = vsel %vm5902, 1, 0
  %v5967 = vsel %vm5903, 1, 0
  %v5968 = vsel %vm5904, 1, 0
  %v5969 = vsel %vm5905, 1, 0
  %v5970 = vsel %vm5906, 1, 0
  %v5971 = vsel %vm5907, 1, 0
  %v5972 = vsel %vm5908, 1, 0
  %v5973 = vsel %vm5909, 1, 0
  %5974 = vset.pattern.permute.xlu0 0
  %5975 = vperm.xlu0 %5974, %v5910
  %v5976 = vpop.permute.xlu0 %5975
  %5977 = vset.pattern.permute.xlu0 0
  %5978 = vperm.xlu0 %5977, %v5911
  %v5979 = vpop.permute.xlu0 %5978
  %5980 = vset.pattern.permute.xlu0 0
  %5981 = vperm.xlu0 %5980, %v5912
  %v5982 = vpop.permute.xlu0 %5981
  %5983 = vset.pattern.permute.xlu0 0
  %5984 = vperm.xlu0 %5983, %v5913
  %v5985 = vpop.permute.xlu0 %5984
  %5986 = vset.pattern.permute.xlu0 0
  %5987 = vperm.xlu0 %5986, %v5914
  %v5988 = vpop.permute.xlu0 %5987
  %5989 = vset.pattern.permute.xlu0 0
  %5990 = vperm.xlu0 %5989, %v5915
  %v5991 = vpop.permute.xlu0 %5990
  %5992 = vset.pattern.permute.xlu0 0
  %5993 = vperm.xlu0 %5992, %v5916
  %v5994 = vpop.permute.xlu0 %5993
  %5995 = vset.pattern.permute.xlu0 0
  %5996 = vperm.xlu0 %5995, %v5917
  %v5997 = vpop.permute.xlu0 %5996
  %5998 = vset.pattern.permute.xlu0 0
  %5999 = vperm.xlu0 %5998, %v5918
  %v6000 = vpop.permute.xlu0 %5999
  %6001 = vset.pattern.permute.xlu0 0
  %6002 = vperm.xlu0 %6001, %v5919
  %v6003 = vpop.permute.xlu0 %6002
  %6004 = vset.pattern.permute.xlu0 0
  %6005 = vperm.xlu0 %6004, %v5920
  %v6006 = vpop.permute.xlu0 %6005
  %6007 = vset.pattern.permute.xlu0 0
  %6008 = vperm.xlu0 %6007, %v5921
  %v6009 = vpop.permute.xlu0 %6008
  %6010 = vset.pattern.permute.xlu0 0
  %6011 = vperm.xlu0 %6010, %v5922
  %v6012 = vpop.permute.xlu0 %6011
  %6013 = vset.pattern.permute.xlu0 0
  %6014 = vperm.xlu0 %6013, %v5923
  %v6015 = vpop.permute.xlu0 %6014
  %6016 = vset.pattern.permute.xlu0 0
  %6017 = vperm.xlu0 %6016, %v5924
  %v6018 = vpop.permute.xlu0 %6017
  %6019 = vset.pattern.permute.xlu0 0
  %6020 = vperm.xlu0 %6019, %v5925
  %v6021 = vpop.permute.xlu0 %6020
  %6022 = vset.pattern.permute.xlu0 0
  %6023 = vperm.xlu0 %6022, %v5926
  %v6024 = vpop.permute.xlu0 %6023
  %6025 = vset.pattern.permute.xlu0 0
  %6026 = vperm.xlu0 %6025, %v5927
  %v6027 = vpop.permute.xlu0 %6026
  %6028 = vset.pattern.permute.xlu0 0
  %6029 = vperm.xlu0 %6028, %v5928
  %v6030 = vpop.permute.xlu0 %6029
  %6031 = vset.pattern.permute.xlu0 0
  %6032 = vperm.xlu0 %6031, %v5929
  %v6033 = vpop.permute.xlu0 %6032
  %6034 = vset.pattern.permute.xlu0 0
  %6035 = vperm.xlu0 %6034, %v5930
  %v6036 = vpop.permute.xlu0 %6035
  %6037 = vset.pattern.permute.xlu0 0
  %6038 = vperm.xlu0 %6037, %v5931
  %v6039 = vpop.permute.xlu0 %6038
  %6040 = vset.pattern.permute.xlu0 0
  %6041 = vperm.xlu0 %6040, %v5932
  %v6042 = vpop.permute.xlu0 %6041
  %6043 = vset.pattern.permute.xlu0 0
  %6044 = vperm.xlu0 %6043, %v5933
  %v6045 = vpop.permute.xlu0 %6044
  %6046 = vset.pattern.permute.xlu0 0
  %6047 = vperm.xlu0 %6046, %v5934
  %v6048 = vpop.permute.xlu0 %6047
  %6049 = vset.pattern.permute.xlu0 0
  %6050 = vperm.xlu0 %6049, %v5935
  %v6051 = vpop.permute.xlu0 %6050
  %6052 = vset.pattern.permute.xlu0 0
  %6053 = vperm.xlu0 %6052, %v5936
  %v6054 = vpop.permute.xlu0 %6053
  %6055 = vset.pattern.permute.xlu0 0
  %6056 = vperm.xlu0 %6055, %v5937
  %v6057 = vpop.permute.xlu0 %6056
  %6058 = vset.pattern.permute.xlu0 0
  %6059 = vperm.xlu0 %6058, %v5938
  %v6060 = vpop.permute.xlu0 %6059
  %6061 = vset.pattern.permute.xlu0 0
  %6062 = vperm.xlu0 %6061, %v5939
  %v6063 = vpop.permute.xlu0 %6062
  %6064 = vset.pattern.permute.xlu0 0
  %6065 = vperm.xlu0 %6064, %v5940
  %v6066 = vpop.permute.xlu0 %6065
  %6067 = vset.pattern.permute.xlu0 0
  %6068 = vperm.xlu0 %6067, %v5941
  %v6069 = vpop.permute.xlu0 %6068
  %6070 = vset.pattern.permute.xlu0 0
  %6071 = vperm.xlu0 %6070, %v5942
  %v6072 = vpop.permute.xlu0 %6071
  %6073 = vset.pattern.permute.xlu0 0
  %6074 = vperm.xlu0 %6073, %v5943
  %v6075 = vpop.permute.xlu0 %6074
  %6076 = vset.pattern.permute.xlu0 0
  %6077 = vperm.xlu0 %6076, %v5944
  %v6078 = vpop.permute.xlu0 %6077
  %6079 = vset.pattern.permute.xlu0 0
  %6080 = vperm.xlu0 %6079, %v5945
  %v6081 = vpop.permute.xlu0 %6080
  %6082 = vset.pattern.permute.xlu0 0
  %6083 = vperm.xlu0 %6082, %v5946
  %v6084 = vpop.permute.xlu0 %6083
  %6085 = vset.pattern.permute.xlu0 0
  %6086 = vperm.xlu0 %6085, %v5947
  %v6087 = vpop.permute.xlu0 %6086
  %6088 = vset.pattern.permute.xlu0 0
  %6089 = vperm.xlu0 %6088, %v5948
  %v6090 = vpop.permute.xlu0 %6089
  %6091 = vset.pattern.permute.xlu0 0
  %6092 = vperm.xlu0 %6091, %v5949
  %v6093 = vpop.permute.xlu0 %6092
  %6094 = vset.pattern.permute.xlu0 0
  %6095 = vperm.xlu0 %6094, %v5950
  %v6096 = vpop.permute.xlu0 %6095
  %6097 = vset.pattern.permute.xlu0 0
  %6098 = vperm.xlu0 %6097, %v5951
  %v6099 = vpop.permute.xlu0 %6098
  %6100 = vset.pattern.permute.xlu0 0
  %6101 = vperm.xlu0 %6100, %v5952
  %v6102 = vpop.permute.xlu0 %6101
  %6103 = vset.pattern.permute.xlu0 0
  %6104 = vperm.xlu0 %6103, %v5953
  %v6105 = vpop.permute.xlu0 %6104
  %6106 = vset.pattern.permute.xlu0 0
  %6107 = vperm.xlu0 %6106, %v5954
  %v6108 = vpop.permute.xlu0 %6107
  %6109 = vset.pattern.permute.xlu0 0
  %6110 = vperm.xlu0 %6109, %v5955
  %v6111 = vpop.permute.xlu0 %6110
  %6112 = vset.pattern.permute.xlu0 0
  %6113 = vperm.xlu0 %6112, %v5956
  %v6114 = vpop.permute.xlu0 %6113
  %6115 = vset.pattern.permute.xlu0 0
  %6116 = vperm.xlu0 %6115, %v5957
  %v6117 = vpop.permute.xlu0 %6116
  %6118 = vset.pattern.permute.xlu0 0
  %6119 = vperm.xlu0 %6118, %v5958
  %v6120 = vpop.permute.xlu0 %6119
  %6121 = vset.pattern.permute.xlu0 0
  %6122 = vperm.xlu0 %6121, %v5959
  %v6123 = vpop.permute.xlu0 %6122
  %6124 = vset.pattern.permute.xlu0 0
  %6125 = vperm.xlu0 %6124, %v5960
  %v6126 = vpop.permute.xlu0 %6125
  %6127 = vset.pattern.permute.xlu0 0
  %6128 = vperm.xlu0 %6127, %v5961
  %v6129 = vpop.permute.xlu0 %6128
  %6130 = vset.pattern.permute.xlu0 0
  %6131 = vperm.xlu0 %6130, %v5962
  %v6132 = vpop.permute.xlu0 %6131
  %6133 = vset.pattern.permute.xlu0 0
  %6134 = vperm.xlu0 %6133, %v5963
  %v6135 = vpop.permute.xlu0 %6134
  %6136 = vset.pattern.permute.xlu0 0
  %6137 = vperm.xlu0 %6136, %v5964
  %v6138 = vpop.permute.xlu0 %6137
  %6139 = vset.pattern.permute.xlu0 0
  %6140 = vperm.xlu0 %6139, %v5965
  %v6141 = vpop.permute.xlu0 %6140
  %6142 = vset.pattern.permute.xlu0 0
  %6143 = vperm.xlu0 %6142, %v5966
  %v6144 = vpop.permute.xlu0 %6143
  %6145 = vset.pattern.permute.xlu0 0
  %6146 = vperm.xlu0 %6145, %v5967
  %v6147 = vpop.permute.xlu0 %6146
  %6148 = vset.pattern.permute.xlu0 0
  %6149 = vperm.xlu0 %6148, %v5968
  %v6150 = vpop.permute.xlu0 %6149
  %6151 = vset.pattern.permute.xlu0 0
  %6152 = vperm.xlu0 %6151, %v5969
  %v6153 = vpop.permute.xlu0 %6152
  %6154 = vset.pattern.permute.xlu0 0
  %6155 = vperm.xlu0 %6154, %v5970
  %v6156 = vpop.permute.xlu0 %6155
  %6157 = vset.pattern.permute.xlu0 0
  %6158 = vperm.xlu0 %6157, %v5971
  %v6159 = vpop.permute.xlu0 %6158
  %6160 = vset.pattern.permute.xlu0 0
  %6161 = vperm.xlu0 %6160, %v5972
  %v6162 = vpop.permute.xlu0 %6161
  %6163 = vset.pattern.permute.xlu0 0
  %6164 = vperm.xlu0 %6163, %v5973
  %v6165 = vpop.permute.xlu0 %6164
  %vm6166 = vcmp.eq.s32.totalorder %v5976, 1
  %vm6167 = vcmp.eq.s32.totalorder %v5979, 1
  %vm6168 = vcmp.eq.s32.totalorder %v5982, 1
  %vm6169 = vcmp.eq.s32.totalorder %v5985, 1
  %vm6170 = vcmp.eq.s32.totalorder %v5988, 1
  %vm6171 = vcmp.eq.s32.totalorder %v5991, 1
  %vm6172 = vcmp.eq.s32.totalorder %v5994, 1
  %vm6173 = vcmp.eq.s32.totalorder %v5997, 1
  %vm6174 = vcmp.eq.s32.totalorder %v6000, 1
  %vm6175 = vcmp.eq.s32.totalorder %v6003, 1
  %vm6176 = vcmp.eq.s32.totalorder %v6006, 1
  %vm6177 = vcmp.eq.s32.totalorder %v6009, 1
  %vm6178 = vcmp.eq.s32.totalorder %v6012, 1
  %vm6179 = vcmp.eq.s32.totalorder %v6015, 1
  %vm6180 = vcmp.eq.s32.totalorder %v6018, 1
  %vm6181 = vcmp.eq.s32.totalorder %v6021, 1
  %vm6182 = vcmp.eq.s32.totalorder %v6024, 1
  %vm6183 = vcmp.eq.s32.totalorder %v6027, 1
  %vm6184 = vcmp.eq.s32.totalorder %v6030, 1
  %vm6185 = vcmp.eq.s32.totalorder %v6033, 1
  %vm6186 = vcmp.eq.s32.totalorder %v6036, 1
  %vm6187 = vcmp.eq.s32.totalorder %v6039, 1
  %vm6188 = vcmp.eq.s32.totalorder %v6042, 1
  %vm6189 = vcmp.eq.s32.totalorder %v6045, 1
  %vm6190 = vcmp.eq.s32.totalorder %v6048, 1
  %vm6191 = vcmp.eq.s32.totalorder %v6051, 1
  %vm6192 = vcmp.eq.s32.totalorder %v6054, 1
  %vm6193 = vcmp.eq.s32.totalorder %v6057, 1
  %vm6194 = vcmp.eq.s32.totalorder %v6060, 1
  %vm6195 = vcmp.eq.s32.totalorder %v6063, 1
  %vm6196 = vcmp.eq.s32.totalorder %v6066, 1
  %vm6197 = vcmp.eq.s32.totalorder %v6069, 1
  %vm6198 = vcmp.eq.s32.totalorder %v6072, 1
  %vm6199 = vcmp.eq.s32.totalorder %v6075, 1
  %vm6200 = vcmp.eq.s32.totalorder %v6078, 1
  %vm6201 = vcmp.eq.s32.totalorder %v6081, 1
  %vm6202 = vcmp.eq.s32.totalorder %v6084, 1
  %vm6203 = vcmp.eq.s32.totalorder %v6087, 1
  %vm6204 = vcmp.eq.s32.totalorder %v6090, 1
  %vm6205 = vcmp.eq.s32.totalorder %v6093, 1
  %vm6206 = vcmp.eq.s32.totalorder %v6096, 1
  %vm6207 = vcmp.eq.s32.totalorder %v6099, 1
  %vm6208 = vcmp.eq.s32.totalorder %v6102, 1
  %vm6209 = vcmp.eq.s32.totalorder %v6105, 1
  %vm6210 = vcmp.eq.s32.totalorder %v6108, 1
  %vm6211 = vcmp.eq.s32.totalorder %v6111, 1
  %vm6212 = vcmp.eq.s32.totalorder %v6114, 1
  %vm6213 = vcmp.eq.s32.totalorder %v6117, 1
  %vm6214 = vcmp.eq.s32.totalorder %v6120, 1
  %vm6215 = vcmp.eq.s32.totalorder %v6123, 1
  %vm6216 = vcmp.eq.s32.totalorder %v6126, 1
  %vm6217 = vcmp.eq.s32.totalorder %v6129, 1
  %vm6218 = vcmp.eq.s32.totalorder %v6132, 1
  %vm6219 = vcmp.eq.s32.totalorder %v6135, 1
  %vm6220 = vcmp.eq.s32.totalorder %v6138, 1
  %vm6221 = vcmp.eq.s32.totalorder %v6141, 1
  %vm6222 = vcmp.eq.s32.totalorder %v6144, 1
  %vm6223 = vcmp.eq.s32.totalorder %v6147, 1
  %vm6224 = vcmp.eq.s32.totalorder %v6150, 1
  %vm6225 = vcmp.eq.s32.totalorder %v6153, 1
  %vm6226 = vcmp.eq.s32.totalorder %v6156, 1
  %vm6227 = vcmp.eq.s32.totalorder %v6159, 1
  %vm6228 = vcmp.eq.s32.totalorder %v6162, 1
  %vm6229 = vcmp.eq.s32.totalorder %v6165, 1
  %v6230 = vsel %vm6166, %v5590, 0.0
  %v6231 = vsel %vm6167, %v5591, 0.0
  %v6232 = vsel %vm6168, %v5592, 0.0
  %v6233 = vsel %vm6169, %v5593, 0.0
  %v6234 = vsel %vm6170, %v5594, 0.0
  %v6235 = vsel %vm6171, %v5595, 0.0
  %v6236 = vsel %vm6172, %v5596, 0.0
  %v6237 = vsel %vm6173, %v5597, 0.0
  %v6238 = vsel %vm6174, %v5598, 0.0
  %v6239 = vsel %vm6175, %v5599, 0.0
  %v6240 = vsel %vm6176, %v5600, 0.0
  %v6241 = vsel %vm6177, %v5601, 0.0
  %v6242 = vsel %vm6178, %v5602, 0.0
  %v6243 = vsel %vm6179, %v5603, 0.0
  %v6244 = vsel %vm6180, %v5604, 0.0
  %v6245 = vsel %vm6181, %v5605, 0.0
  %v6246 = vsel %vm6182, %v5606, 0.0
  %v6247 = vsel %vm6183, %v5607, 0.0
  %v6248 = vsel %vm6184, %v5608, 0.0
  %v6249 = vsel %vm6185, %v5609, 0.0
  %v6250 = vsel %vm6186, %v5610, 0.0
  %v6251 = vsel %vm6187, %v5611, 0.0
  %v6252 = vsel %vm6188, %v5612, 0.0
  %v6253 = vsel %vm6189, %v5613, 0.0
  %v6254 = vsel %vm6190, %v5614, 0.0
  %v6255 = vsel %vm6191, %v5615, 0.0
  %v6256 = vsel %vm6192, %v5616, 0.0
  %v6257 = vsel %vm6193, %v5617, 0.0
  %v6258 = vsel %vm6194, %v5618, 0.0
  %v6259 = vsel %vm6195, %v5619, 0.0
  %v6260 = vsel %vm6196, %v5620, 0.0
  %v6261 = vsel %vm6197, %v5621, 0.0
  %v6262 = vsel %vm6198, %v5622, 0.0
  %v6263 = vsel %vm6199, %v5623, 0.0
  %v6264 = vsel %vm6200, %v5624, 0.0
  %v6265 = vsel %vm6201, %v5625, 0.0
  %v6266 = vsel %vm6202, %v5626, 0.0
  %v6267 = vsel %vm6203, %v5627, 0.0
  %v6268 = vsel %vm6204, %v5628, 0.0
  %v6269 = vsel %vm6205, %v5629, 0.0
  %v6270 = vsel %vm6206, %v5630, 0.0
  %v6271 = vsel %vm6207, %v5631, 0.0
  %v6272 = vsel %vm6208, %v5632, 0.0
  %v6273 = vsel %vm6209, %v5633, 0.0
  %v6274 = vsel %vm6210, %v5634, 0.0
  %v6275 = vsel %vm6211, %v5635, 0.0
  %v6276 = vsel %vm6212, %v5636, 0.0
  %v6277 = vsel %vm6213, %v5637, 0.0
  %v6278 = vsel %vm6214, %v5638, 0.0
  %v6279 = vsel %vm6215, %v5639, 0.0
  %v6280 = vsel %vm6216, %v5640, 0.0
  %v6281 = vsel %vm6217, %v5641, 0.0
  %v6282 = vsel %vm6218, %v5642, 0.0
  %v6283 = vsel %vm6219, %v5643, 0.0
  %v6284 = vsel %vm6220, %v5644, 0.0
  %v6285 = vsel %vm6221, %v5645, 0.0
  %v6286 = vsel %vm6222, %v5646, 0.0
  %v6287 = vsel %vm6223, %v5647, 0.0
  %v6288 = vsel %vm6224, %v5648, 0.0
  %v6289 = vsel %vm6225, %v5649, 0.0
  %v6290 = vsel %vm6226, %v5650, 0.0
  %v6291 = vsel %vm6227, %v5651, 0.0
  %v6292 = vsel %vm6228, %v5652, 0.0
  %v6293 = vsel %vm6229, %v5653, 0.0
  %v6294 = vadd.f32 %v6230, %v6231
  %v6295 = vadd.f32 %v6294, %v6232
  %v6296 = vadd.f32 %v6295, %v6233
  %v6297 = vadd.f32 %v6296, %v6234
  %v6298 = vadd.f32 %v6297, %v6235
  %v6299 = vadd.f32 %v6298, %v6236
  %v6300 = vadd.f32 %v6299, %v6237
  %v6301 = vadd.f32 %v6300, %v6238
  %v6302 = vadd.f32 %v6301, %v6239
  %v6303 = vadd.f32 %v6302, %v6240
  %v6304 = vadd.f32 %v6303, %v6241
  %v6305 = vadd.f32 %v6304, %v6242
  %v6306 = vadd.f32 %v6305, %v6243
  %v6307 = vadd.f32 %v6306, %v6244
  %v6308 = vadd.f32 %v6307, %v6245
  %v6309 = vadd.f32 %v6308, %v6246
  %v6310 = vadd.f32 %v6309, %v6247
  %v6311 = vadd.f32 %v6310, %v6248
  %v6312 = vadd.f32 %v6311, %v6249
  %v6313 = vadd.f32 %v6312, %v6250
  %v6314 = vadd.f32 %v6313, %v6251
  %v6315 = vadd.f32 %v6314, %v6252
  %v6316 = vadd.f32 %v6315, %v6253
  %v6317 = vadd.f32 %v6316, %v6254
  %v6318 = vadd.f32 %v6317, %v6255
  %v6319 = vadd.f32 %v6318, %v6256
  %v6320 = vadd.f32 %v6319, %v6257
  %v6321 = vadd.f32 %v6320, %v6258
  %v6322 = vadd.f32 %v6321, %v6259
  %v6323 = vadd.f32 %v6322, %v6260
  %v6324 = vadd.f32 %v6323, %v6261
  %v6325 = vadd.f32 %v6324, %v6262
  %v6326 = vadd.f32 %v6325, %v6263
  %v6327 = vadd.f32 %v6326, %v6264
  %v6328 = vadd.f32 %v6327, %v6265
  %v6329 = vadd.f32 %v6328, %v6266
  %v6330 = vadd.f32 %v6329, %v6267
  %v6331 = vadd.f32 %v6330, %v6268
  %v6332 = vadd.f32 %v6331, %v6269
  %v6333 = vadd.f32 %v6332, %v6270
  %v6334 = vadd.f32 %v6333, %v6271
  %v6335 = vadd.f32 %v6334, %v6272
  %v6336 = vadd.f32 %v6335, %v6273
  %v6337 = vadd.f32 %v6336, %v6274
  %v6338 = vadd.f32 %v6337, %v6275
  %v6339 = vadd.f32 %v6338, %v6276
  %v6340 = vadd.f32 %v6339, %v6277
  %v6341 = vadd.f32 %v6340, %v6278
  %v6342 = vadd.f32 %v6341, %v6279
  %v6343 = vadd.f32 %v6342, %v6280
  %v6344 = vadd.f32 %v6343, %v6281
  %v6345 = vadd.f32 %v6344, %v6282
  %v6346 = vadd.f32 %v6345, %v6283
  %v6347 = vadd.f32 %v6346, %v6284
  %v6348 = vadd.f32 %v6347, %v6285
  %v6349 = vadd.f32 %v6348, %v6286
  %v6350 = vadd.f32 %v6349, %v6287
  %v6351 = vadd.f32 %v6350, %v6288
  %v6352 = vadd.f32 %v6351, %v6289
  %v6353 = vadd.f32 %v6352, %v6290
  %v6354 = vadd.f32 %v6353, %v6291
  %v6355 = vadd.f32 %v6354, %v6292
  %v6356 = vadd.f32 %v6355, %v6293
  %v6357 = vrot.slane %v6356, 4
  %v6358 = vadd.f32 %v6356, %v6357
  %v6359 = vrot.slane %v6358, 2
  %v6360 = vadd.f32 %v6358, %v6359
  %v6361 = vrot.slane %v6360, 1
  %v6362 = vadd.f32 %v6360, %v6361
  %v6363 = vmul.f32 %v6230, %v6230
  %v6364 = vmul.f32 %v6231, %v6231
  %v6365 = vmul.f32 %v6232, %v6232
  %v6366 = vmul.f32 %v6233, %v6233
  %v6367 = vmul.f32 %v6234, %v6234
  %v6368 = vmul.f32 %v6235, %v6235
  %v6369 = vmul.f32 %v6236, %v6236
  %v6370 = vmul.f32 %v6237, %v6237
  %v6371 = vmul.f32 %v6238, %v6238
  %v6372 = vmul.f32 %v6239, %v6239
  %v6373 = vmul.f32 %v6240, %v6240
  %v6374 = vmul.f32 %v6241, %v6241
  %v6375 = vmul.f32 %v6242, %v6242
  %v6376 = vmul.f32 %v6243, %v6243
  %v6377 = vmul.f32 %v6244, %v6244
  %v6378 = vmul.f32 %v6245, %v6245
  %v6379 = vmul.f32 %v6246, %v6246
  %v6380 = vmul.f32 %v6247, %v6247
  %v6381 = vmul.f32 %v6248, %v6248
  %v6382 = vmul.f32 %v6249, %v6249
  %v6383 = vmul.f32 %v6250, %v6250
  %v6384 = vmul.f32 %v6251, %v6251
  %v6385 = vmul.f32 %v6252, %v6252
  %v6386 = vmul.f32 %v6253, %v6253
  %v6387 = vmul.f32 %v6254, %v6254
  %v6388 = vmul.f32 %v6255, %v6255
  %v6389 = vmul.f32 %v6256, %v6256
  %v6390 = vmul.f32 %v6257, %v6257
  %v6391 = vmul.f32 %v6258, %v6258
  %v6392 = vmul.f32 %v6259, %v6259
  %v6393 = vmul.f32 %v6260, %v6260
  %v6394 = vmul.f32 %v6261, %v6261
  %v6395 = vmul.f32 %v6262, %v6262
  %v6396 = vmul.f32 %v6263, %v6263
  %v6397 = vmul.f32 %v6264, %v6264
  %v6398 = vmul.f32 %v6265, %v6265
  %v6399 = vmul.f32 %v6266, %v6266
  %v6400 = vmul.f32 %v6267, %v6267
  %v6401 = vmul.f32 %v6268, %v6268
  %v6402 = vmul.f32 %v6269, %v6269
  %v6403 = vmul.f32 %v6270, %v6270
  %v6404 = vmul.f32 %v6271, %v6271
  %v6405 = vmul.f32 %v6272, %v6272
  %v6406 = vmul.f32 %v6273, %v6273
  %v6407 = vmul.f32 %v6274, %v6274
  %v6408 = vmul.f32 %v6275, %v6275
  %v6409 = vmul.f32 %v6276, %v6276
  %v6410 = vmul.f32 %v6277, %v6277
  %v6411 = vmul.f32 %v6278, %v6278
  %v6412 = vmul.f32 %v6279, %v6279
  %v6413 = vmul.f32 %v6280, %v6280
  %v6414 = vmul.f32 %v6281, %v6281
  %v6415 = vmul.f32 %v6282, %v6282
  %v6416 = vmul.f32 %v6283, %v6283
  %v6417 = vmul.f32 %v6284, %v6284
  %v6418 = vmul.f32 %v6285, %v6285
  %v6419 = vmul.f32 %v6286, %v6286
  %v6420 = vmul.f32 %v6287, %v6287
  %v6421 = vmul.f32 %v6288, %v6288
  %v6422 = vmul.f32 %v6289, %v6289
  %v6423 = vmul.f32 %v6290, %v6290
  %v6424 = vmul.f32 %v6291, %v6291
  %v6425 = vmul.f32 %v6292, %v6292
  %v6426 = vmul.f32 %v6293, %v6293
  %v6427 = vadd.f32 %v6363, %v6364
  %v6428 = vadd.f32 %v6427, %v6365
  %v6429 = vadd.f32 %v6428, %v6366
  %v6430 = vadd.f32 %v6429, %v6367
  %v6431 = vadd.f32 %v6430, %v6368
  %v6432 = vadd.f32 %v6431, %v6369
  %v6433 = vadd.f32 %v6432, %v6370
  %v6434 = vadd.f32 %v6433, %v6371
  %v6435 = vadd.f32 %v6434, %v6372
  %v6436 = vadd.f32 %v6435, %v6373
  %v6437 = vadd.f32 %v6436, %v6374
  %v6438 = vadd.f32 %v6437, %v6375
  %v6439 = vadd.f32 %v6438, %v6376
  %v6440 = vadd.f32 %v6439, %v6377
  %v6441 = vadd.f32 %v6440, %v6378
  %v6442 = vadd.f32 %v6441, %v6379
  %v6443 = vadd.f32 %v6442, %v6380
  %v6444 = vadd.f32 %v6443, %v6381
  %v6445 = vadd.f32 %v6444, %v6382
  %v6446 = vadd.f32 %v6445, %v6383
  %v6447 = vadd.f32 %v6446, %v6384
  %v6448 = vadd.f32 %v6447, %v6385
  %v6449 = vadd.f32 %v6448, %v6386
  %v6450 = vadd.f32 %v6449, %v6387
  %v6451 = vadd.f32 %v6450, %v6388
  %v6452 = vadd.f32 %v6451, %v6389
  %v6453 = vadd.f32 %v6452, %v6390
  %v6454 = vadd.f32 %v6453, %v6391
  %v6455 = vadd.f32 %v6454, %v6392
  %v6456 = vadd.f32 %v6455, %v6393
  %v6457 = vadd.f32 %v6456, %v6394
  %v6458 = vadd.f32 %v6457, %v6395
  %v6459 = vadd.f32 %v6458, %v6396
  %v6460 = vadd.f32 %v6459, %v6397
  %v6461 = vadd.f32 %v6460, %v6398
  %v6462 = vadd.f32 %v6461, %v6399
  %v6463 = vadd.f32 %v6462, %v6400
  %v6464 = vadd.f32 %v6463, %v6401
  %v6465 = vadd.f32 %v6464, %v6402
  %v6466 = vadd.f32 %v6465, %v6403
  %v6467 = vadd.f32 %v6466, %v6404
  %v6468 = vadd.f32 %v6467, %v6405
  %v6469 = vadd.f32 %v6468, %v6406
  %v6470 = vadd.f32 %v6469, %v6407
  %v6471 = vadd.f32 %v6470, %v6408
  %v6472 = vadd.f32 %v6471, %v6409
  %v6473 = vadd.f32 %v6472, %v6410
  %v6474 = vadd.f32 %v6473, %v6411
  %v6475 = vadd.f32 %v6474, %v6412
  %v6476 = vadd.f32 %v6475, %v6413
  %v6477 = vadd.f32 %v6476, %v6414
  %v6478 = vadd.f32 %v6477, %v6415
  %v6479 = vadd.f32 %v6478, %v6416
  %v6480 = vadd.f32 %v6479, %v6417
  %v6481 = vadd.f32 %v6480, %v6418
  %v6482 = vadd.f32 %v6481, %v6419
  %v6483 = vadd.f32 %v6482, %v6420
  %v6484 = vadd.f32 %v6483, %v6421
  %v6485 = vadd.f32 %v6484, %v6422
  %v6486 = vadd.f32 %v6485, %v6423
  %v6487 = vadd.f32 %v6486, %v6424
  %v6488 = vadd.f32 %v6487, %v6425
  %v6489 = vadd.f32 %v6488, %v6426
  %v6490 = vrot.slane %v6489, 4
  %v6491 = vadd.f32 %v6489, %v6490
  %v6492 = vrot.slane %v6491, 2
  %v6493 = vadd.f32 %v6491, %v6492
  %v6494 = vrot.slane %v6493, 1
  %v6495 = vadd.f32 %v6493, %v6494
  %vm6496 = vcmask 1040384
  %v6497 = vsel %vm6496, %v6362, %v6495
  %vm6498 = vcmask 1041408
  %v6499 = vsel %vm6498, %v6497, 0.0
  %6500 = vst [vmem:[%s6] sm:$0xff] %v6499
  %s6501 = sadd.s32 0, 1
  %s6502 = smul.u32 64, %s6501
  %p6503 = scmp.lt.s32.totalorder %s6502, 191
  %s6504 = scalar_select %p6503, %s6502, 191
  %s6505 = smul.addr %s6504, 4
  %s6506 = scalar_lea.vmem %s5, %s6505
  // Predicated region
  $region22: #{down_forward.6} parent=0 // pred_check
    _
  $region23: #{down_forward.6} parent=0 // pred_check_branch
    %6508 = sbr.rel (0) target = $region25
  $region24: #{down_forward.6} parent=0 // pred_region
    %s6509 = sadd.s32 0, 1
    %s6510 = smul.u32 64, %s6509
  $region25: #{down_forward.6} parent=0 // pred_fallthru
    _
  // Predicated region
  $region26: #{down_forward.6} parent=0 // pred_check
    _
  $region27: #{down_forward.6} parent=0 // pred_check_branch
    %6512 = sbr.rel (0) target = $region29
  $region28: #{down_forward.6} parent=0 // pred_region
    _
  $region29: #{down_forward.6} parent=0 // pred_fallthru
    _
  // Predicated region
  $region30: #{down_forward.6} parent=0 // pred_check
    _
  $region31: #{down_forward.6} parent=0 // pred_check_branch
    %6514 = sbr.rel (0) target = $region33
  $region32: #{down_forward.6} parent=0 // pred_region
    %s6515 = sadd.s32 0, 1
    %s6516 = smul.u32 64, %s6515
    %p6517 = scmp.lt.s32.totalorder %s6516, 191
    %s6518 = scalar_select %p6517, %s6516, 191
    %s6519 = smul.addr %s6518, 4
    %s6520 = scalar_lea.vmem %s5, %s6519
  $region33: #{down_forward.6} parent=0 // pred_fallthru
    _
  // Predicated region
  $region34: #{down_forward.6} parent=0 // pred_check
    _
  $region35: #{down_forward.6} parent=0 // pred_check_branch
    %6522 = sbr.rel (0) target = $region37
  $region36: #{down_forward.6} parent=0 // pred_region
    _
  $region37: #{down_forward.6} parent=0 // pred_fallthru
    _

</llo_original>
